<compile_context>
chip_gen: v6e
topology: v6e:2x2x1
jax: 0.10.0
libtpu: 0.0.40
codegen_flags: <defaults>
</compile_context>

<pallas_src>
import functools

import jax
import jax.numpy as jnp
from jax.experimental import pallas as pl
from jax.experimental.pallas import tpu as pltpu


# ------------------------------------------------------------------------------------
# pallas_call helper: single grid step, every array is one full VMEM block
# (shapes are tiny, so whole-array blocks are the right tiling here).
# ------------------------------------------------------------------------------------
def _spec(x):
    nd = len(x.shape)
    return pl.BlockSpec(tuple(x.shape), lambda i, _nd=nd: (0,) * _nd)


def pcall(kernel, out_shape, *args, scratch_shapes=()):
    return pl.pallas_call(
        kernel,
        grid=(1,),
        in_specs=[_spec(a) for a in args],
        out_specs=_spec(out_shape),
        out_shape=out_shape,
        scratch_shapes=list(scratch_shapes),
    )(*args)


# ------------------------------------------------------------------------------------
# Conv 3x3 (stride 1, pad 1) + ReLU.
# Input is the zero-padded image flattened to (B*(H+2)*(W+2) + tail, Cin); the kernel
# accumulates 9 row-shifted (N, Cin) @ (Cin, Cout) dots — no im2col in HBM.
# ------------------------------------------------------------------------------------
def _conv3x3_relu_kernel(xp_ref, w_ref, b_ref, o_ref, *, Wp, n_out):
    acc = None
    k = 0
    for dy in range(3):
        for dx in range(3):
            off = dy * Wp + dx                                   # static row shift
            xs = xp_ref[off:off + n_out, :].astype(jnp.bfloat16)  # (n_out, Cin)
            d = jnp.dot(xs, w_ref[k], preferred_element_type=jnp.float32)
            acc = d if acc is None else acc + d
            k += 1
    o_ref[...] = jnp.maximum(acc + b_ref[...], 0.0)


def conv3x3_relu(x_nhwc, w9, b):
    """x_nhwc: [B,H,W,Cin]; w9: (9, Cin, Cout) bf16; b: (1, Cout) f32."""
    B, H, W, Cin = x_nhwc.shape
    Cout = w9.shape[2]
    Hp, Wp = H + 2, W + 2
    xp = jnp.pad(x_nhwc, ((0, 0), (1, 1), (1, 1), (0, 0)))        # zero pad (glue)
    n_out = B * Hp * Wp
    xflat = xp.reshape(n_out, Cin)
    xflat = jnp.pad(xflat, ((0, 2 * Wp + 2), (0, 0)))             # tail rows so shifts stay in-bounds
    y = pcall(
        functools.partial(_conv3x3_relu_kernel, Wp=Wp, n_out=n_out),
        jax.ShapeDtypeStruct((n_out, Cout), jnp.float32),
        xflat, w9, b)
    # back to NHWC in padded coordinates; drop the border rows (junk), keep the valid HxW
    return y.reshape(B, Hp, Wp, Cout)[:, :H, :W, :]


def maxpool2(x_nhwc):
    # glue: tiny 2x2 max-pool (not a hot path)
    B, H, W, C = x_nhwc.shape
    return jnp.max(x_nhwc.reshape(B, H // 2, 2, W // 2, 2, C), axis=(2, 4))


# ------------------------------------------------------------------------------------
# Fused dense tail: classifier tail + img fc + L2 norm, LSTM + qst fc, answer head.
# ------------------------------------------------------------------------------------
def _make_tail_kernel(BP, T, H, L):
    f32, bf16 = jnp.float32, jnp.bfloat16

    def kernel(*refs):
        (feat, x2d,
         aw, ab, bw, bb, iw, ib,
         qw, qb, f1w, f1b, f2w, f2b) = refs[:14]
        lstm = refs[14:14 + 3 * L]
        out_ref = refs[14 + 3 * L]
        xg_scr = refs[14 + 3 * L + 1]                    # (T*BP, 4H) hoisted input gates
        seq_scr = refs[14 + 3 * L + 2] if L > 1 else None

        # ---------------- image branch: truncated classifier -> fc -> L2 normalize ----
        h1 = jnp.maximum(
            jnp.dot(feat[...].astype(bf16), aw[...], preferred_element_type=f32) + ab[...], 0.0)
        h2 = jnp.maximum(
            jnp.dot(h1.astype(bf16), bw[...], preferred_element_type=f32) + bb[...], 0.0)
        img = jnp.dot(h2.astype(bf16), iw[...], preferred_element_type=f32) + ib[...]
        img = img * jax.lax.rsqrt(jnp.sum(img * img, axis=1, keepdims=True) + 1e-12)

        # ---------------- question branch: LSTM with hoisted input projection ---------
        states = []
        for l in range(L):
            wih, whh, bl = lstm[3 * l], lstm[3 * l + 1], lstm[3 * l + 2]
            if l == 0:
                xin = jnp.tanh(x2d[...])                 # tanh on word embeddings
            else:
                xin = seq_scr[...]
            # one (T*BP, in) @ (in, 4H) matmul instead of T tiny per-step dots
            xg_scr[...] = jnp.dot(xin.astype(bf16), wih[...],
                                  preferred_element_type=f32) + bl[...]
            whh_v = whh[...]                             # (H, 4H) bf16, loop-invariant

            def step(t, carry, _l=l):
                h, c = carry
                start = pl.multiple_of(t * BP, BP)       # 8-aligned dynamic sublane slice
                gates = xg_scr[pl.ds(start, BP), :] + jnp.dot(
                    h.astype(bf16), whh_v, preferred_element_type=f32)
                sg = jax.nn.sigmoid(gates)               # whole-tile EUP passes
                tg = jnp.tanh(gates)
                i_g = sg[:, 0:H]
                f_g = sg[:, H:2 * H]
                o_g = sg[:, 3 * H:4 * H]
                g_g = tg[:, 2 * H:3 * H]
                c_new = f_g * c + i_g * g_g
                h_new = o_g * jnp.tanh(c_new)
                if _l + 1 < L:                           # feed next layer (only if L > 1)
                    seq_scr[pl.ds(start, BP), :] = h_new
                return (h_new, c_new)

            h0 = jnp.zeros((BP, H), f32)
            c0 = jnp.zeros((BP, H), f32)
            h_last, c_last = jax.lax.fori_loop(0, T, step, (h0, c0), unroll=True)
            states.append((h_last, c_last))

        # qst_fc(tanh(cat(h, c))) without an explicit concat: split the fc weight rows.
        qacc = None
        for l in range(L):
            h_l, c_l = states[l]
            part = (jnp.dot(jnp.tanh(h_l).astype(bf16), qw[2 * l * H:(2 * l + 1) * H, :],
                            preferred_element_type=f32)
                    + jnp.dot(jnp.tanh(c_l).astype(bf16), qw[(2 * l + 1) * H:(2 * l + 2) * H, :],
                              preferred_element_type=f32))
            qacc = part if qacc is None else qacc + part
        qst = qacc + qb[...]

        # ---------------- answer head (dropout = identity, inference) -----------------
        comb = jnp.tanh(img * qst)
        hh = jnp.tanh(jnp.dot(comb.astype(bf16), f1w[...],
                              preferred_element_type=f32) + f1b[...])
        out_ref[...] = jnp.dot(hh.astype(bf16), f2w[...],
                               preferred_element_type=f32) + f2b[...]

    return kernel


# ------------------------------------------------------------------------------------
# Model configuration & parameters (weights pre-transposed / pre-packed at init).
# ------------------------------------------------------------------------------------
CFG = dict(
    embed_size=32,
    qst_vocab_size=50,
    ans_vocab_size=32,
    word_embed_size=32,
    num_layers=1,
    hidden_size=32,
    img_channels=3,
    img_size=16,
    seq_len=8,
    conv1_ch=8,
    conv2_ch=16,
    in_features=64,      # stand-in for VGG19's 4096 classifier width
)


def init_params(key, cfg):
    f32, bf16 = jnp.float32, jnp.bfloat16

    def nrm(k, shape, scale=0.1, dtype=f32):
        return (scale * jax.random.normal(k, shape, dtype=f32)).astype(dtype)

    L = cfg["num_layers"]
    keys = jax.random.split(key, 17 + 4 * L)
    ki = iter(keys)
    C1, C2, Cin = cfg["conv1_ch"], cfg["conv2_ch"], cfg["img_channels"]
    S = cfg["img_size"]
    flat = C2 * (S // 4) * (S // 4)
    F, E, A = cfg["in_features"], cfg["embed_size"], cfg["ans_vocab_size"]
    H, We = cfg["hidden_size"], cfg["word_embed_size"]

    p = {}
    # --- VGG19-style backbone (reduced width); conv weights packed (9, Cin, Cout) bf16 ---
    p["conv1_w"] = nrm(next(ki), (9, Cin, C1), dtype=bf16)
    p["conv1_b"] = nrm(next(ki), (1, C1))
    p["conv2_w"] = nrm(next(ki), (9, C1, C2), dtype=bf16)
    p["conv2_b"] = nrm(next(ki), (1, C2))
    p["cls_a_w"] = nrm(next(ki), (flat, F), dtype=bf16)
    p["cls_a_b"] = nrm(next(ki), (1, F))
    p["cls_b_w"] = nrm(next(ki), (F, F), dtype=bf16)
    p["cls_b_b"] = nrm(next(ki), (1, F))
    # --- ImgEncoder.fc ---
    p["img_fc_w"] = nrm(next(ki), (F, E), dtype=bf16)
    p["img_fc_b"] = nrm(next(ki), (1, E))
    # --- QstEncoder ---
    p["emb"] = nrm(next(ki), (cfg["qst_vocab_size"], We), scale=0.5)
    for l in range(L):
        in_dim = We if l == 0 else H
        p[f"lstm_w_ih_{l}"] = nrm(next(ki), (in_dim, 4 * H), dtype=bf16)   # [in, 4H]
        p[f"lstm_w_hh_{l}"] = nrm(next(ki), (H, 4 * H), dtype=bf16)        # [H, 4H]
        p[f"lstm_b_{l}"] = nrm(next(ki), (1, 4 * H)) + nrm(next(ki), (1, 4 * H))  # b_ih + b_hh
    p["qst_fc_w"] = nrm(next(ki), (2 * L * H, E), dtype=bf16)
    p["qst_fc_b"] = nrm(next(ki), (1, E))
    # --- VQA head ---
    p["fc1_w"] = nrm(next(ki), (E, A), dtype=bf16)
    p["fc1_b"] = nrm(next(ki), (1, A))
    p["fc2_w"] = nrm(next(ki), (A, A), dtype=bf16)
    p["fc2_b"] = nrm(next(ki), (1, A))
    return p


# ------------------------------------------------------------------------------------
# Forward pass (mirrors VQAModel.forward)
# ------------------------------------------------------------------------------------
def vqa_forward(params, image_nchw, question):
    cfg = CFG
    B = image_nchw.shape[0]
    E, A = cfg["embed_size"], cfg["ans_vocab_size"]
    H, L, We = cfg["hidden_size"], cfg["num_layers"], cfg["word_embed_size"]
    T = question.shape[1]
    BP = ((B + 7) // 8) * 8          # sublane-dense padded batch for the dense tail

    # ===================== ImgEncoder backbone (2 conv kernels) =====================
    x = jnp.transpose(image_nchw, (0, 2, 3, 1))                  # NCHW -> NHWC (glue)
    x = conv3x3_relu(x, params["conv1_w"], params["conv1_b"])
    x = maxpool2(x)
    x = conv3x3_relu(x, params["conv2_w"], params["conv2_b"])
    x = maxpool2(x)
    feat = x.reshape(B, -1)
    feat = jnp.pad(feat, ((0, BP - B), (0, 0)))                  # pad batch to 8 rows

    # ===================== Question path inputs (gather + pack, glue) ===============
    emb = params["emb"][question]                                # (B,T,We)
    xq = jnp.transpose(emb, (1, 0, 2))                           # (T,B,We) batch_first=False
    xq = jnp.pad(xq, ((0, 0), (0, BP - B), (0, 0)))              # (T,BP,We)
    x2d = xq.reshape(T * BP, We)

    # ===================== Single fused dense-tail kernel ===========================
    args = [feat, x2d,
            params["cls_a_w"], params["cls_a_b"],
            params["cls_b_w"], params["cls_b_b"],
            params["img_fc_w"], params["img_fc_b"],
            params["qst_fc_w"], params["qst_fc_b"],
            params["fc1_w"], params["fc1_b"],
            params["fc2_w"], params["fc2_b"]]
    for l in range(L):
        args += [params[f"lstm_w_ih_{l}"], params[f"lstm_w_hh_{l}"], params[f"lstm_b_{l}"]]
    scratch = [pltpu.VMEM((T * BP, 4 * H), jnp.float32)]
    if L > 1:
        scratch.append(pltpu.VMEM((T * BP, H), jnp.float32))

    out = pcall(_make_tail_kernel(BP, T, H, L),
                jax.ShapeDtypeStruct((BP, A), jnp.float32),
                *args, scratch_shapes=scratch)
    return out[:B]


# ------------------------------------------------------------------------------------
if __name__ == "__main__":
    key = jax.random.PRNGKey(0)
    k_p, k_img, k_q = jax.random.split(key, 3)

    params = init_params(k_p, CFG)
    image = jax.random.normal(
        k_img, (2, CFG["img_channels"], CFG["img_size"], CFG["img_size"]), dtype=jnp.float32)
    question = jax.random.randint(
        k_q, (2, CFG["seq_len"]), 0, CFG["qst_vocab_size"], dtype=jnp.int32)

    fwd = jax.jit(vqa_forward)
    out = fwd(params, image, question)
    jax.block_until_ready(out)
    assert out.shape == (2, CFG["ans_vocab_size"])
    assert bool(jnp.all(jnp.isfinite(out)))
    print("KERNEL_OK")
</pallas_src>

<mosaic_0001>
module attributes {stable_mosaic.version = 11 : i64} {
  func.func @_conv3x3_relu_kernel(%arg0: i32, %arg1: memref<686x3xf32, #tpu.memory_space<vmem>>, %arg2: memref<9x3x8xbf16, #tpu.memory_space<vmem>>, %arg3: memref<1x8xf32, #tpu.memory_space<vmem>>, %arg4: memref<648x8xf32, #tpu.memory_space<vmem>>) attributes {dimension_semantics = [#tpu.dimension_semantics<arbitrary>], iteration_bounds = array<i64: 1>, scalar_prefetch = 0 : i64, scratch_operands = 0 : i64, tpu.core_type = #tpu.core_type<tc>, window_params = [{pipeline_mode = #tpu.pipeline_mode<synchronous>, transform_indices = @transform_0, window_bounds = array<i64: 686, 3>}, {pipeline_mode = #tpu.pipeline_mode<synchronous>, transform_indices = @transform_1, window_bounds = array<i64: 9, 3, 8>}, {pipeline_mode = #tpu.pipeline_mode<synchronous>, transform_indices = @transform_2, window_bounds = array<i64: 1, 8>}, {pipeline_mode = #tpu.pipeline_mode<synchronous>, transform_indices = @transform_3, window_bounds = array<i64: 648, 8>}]} {
    %c0 = arith.constant 0 : index
    %c0_0 = arith.constant 0 : index
    %0 = vector.load %arg1[%c0, %c0_0] : memref<686x3xf32, #tpu.memory_space<vmem>>, vector<648x3xf32>
    %1 = arith.truncf %0 : vector<648x3xf32> to vector<648x3xbf16>
    %c0_1 = arith.constant 0 : index
    %c0_2 = arith.constant 0 : index
    %c0_3 = arith.constant 0 : index
    %2 = vector.load %arg2[%c0_1, %c0_2, %c0_3] : memref<9x3x8xbf16, #tpu.memory_space<vmem>>, vector<1x3x8xbf16>
    %3 = vector.shape_cast %2 : vector<1x3x8xbf16> to vector<3x8xbf16>
    %cst = arith.constant dense<0.000000e+00> : vector<648x8xf32>
    %4 = tpu.matmul %1, %3, %cst {dimension_numbers = #tpu.dot_dimension_numbers<[1], [0], [0], [1], [0, 0, 1, 1], [], []>} : vector<648x3xbf16>, vector<3x8xbf16>, vector<648x8xf32> -> vector<648x8xf32>
    %c1 = arith.constant 1 : index
    %c0_4 = arith.constant 0 : index
    %5 = vector.load %arg1[%c1, %c0_4] : memref<686x3xf32, #tpu.memory_space<vmem>>, vector<648x3xf32>
    %6 = arith.truncf %5 : vector<648x3xf32> to vector<648x3xbf16>
    %c1_5 = arith.constant 1 : index
    %c0_6 = arith.constant 0 : index
    %c0_7 = arith.constant 0 : index
    %7 = vector.load %arg2[%c1_5, %c0_6, %c0_7] : memref<9x3x8xbf16, #tpu.memory_space<vmem>>, vector<1x3x8xbf16>
    %8 = vector.shape_cast %7 : vector<1x3x8xbf16> to vector<3x8xbf16>
    %cst_8 = arith.constant dense<0.000000e+00> : vector<648x8xf32>
    %9 = tpu.matmul %6, %8, %cst_8 {dimension_numbers = #tpu.dot_dimension_numbers<[1], [0], [0], [1], [0, 0, 1, 1], [], []>} : vector<648x3xbf16>, vector<3x8xbf16>, vector<648x8xf32> -> vector<648x8xf32>
    %10 = arith.addf %4, %9 : vector<648x8xf32>
    %c2 = arith.constant 2 : index
    %c0_9 = arith.constant 0 : index
    %11 = vector.load %arg1[%c2, %c0_9] : memref<686x3xf32, #tpu.memory_space<vmem>>, vector<648x3xf32>
    %12 = arith.truncf %11 : vector<648x3xf32> to vector<648x3xbf16>
    %c2_10 = arith.constant 2 : index
    %c0_11 = arith.constant 0 : index
    %c0_12 = arith.constant 0 : index
    %13 = vector.load %arg2[%c2_10, %c0_11, %c0_12] : memref<9x3x8xbf16, #tpu.memory_space<vmem>>, vector<1x3x8xbf16>
    %14 = vector.shape_cast %13 : vector<1x3x8xbf16> to vector<3x8xbf16>
    %cst_13 = arith.constant dense<0.000000e+00> : vector<648x8xf32>
    %15 = tpu.matmul %12, %14, %cst_13 {dimension_numbers = #tpu.dot_dimension_numbers<[1], [0], [0], [1], [0, 0, 1, 1], [], []>} : vector<648x3xbf16>, vector<3x8xbf16>, vector<648x8xf32> -> vector<648x8xf32>
    %16 = arith.addf %10, %15 : vector<648x8xf32>
    %c18 = arith.constant 18 : index
    %c0_14 = arith.constant 0 : index
    %17 = vector.load %arg1[%c18, %c0_14] : memref<686x3xf32, #tpu.memory_space<vmem>>, vector<648x3xf32>
    %18 = arith.truncf %17 : vector<648x3xf32> to vector<648x3xbf16>
    %c3 = arith.constant 3 : index
    %c0_15 = arith.constant 0 : index
    %c0_16 = arith.constant 0 : index
    %19 = vector.load %arg2[%c3, %c0_15, %c0_16] : memref<9x3x8xbf16, #tpu.memory_space<vmem>>, vector<1x3x8xbf16>
    %20 = vector.shape_cast %19 : vector<1x3x8xbf16> to vector<3x8xbf16>
    %cst_17 = arith.constant dense<0.000000e+00> : vector<648x8xf32>
    %21 = tpu.matmul %18, %20, %cst_17 {dimension_numbers = #tpu.dot_dimension_numbers<[1], [0], [0], [1], [0, 0, 1, 1], [], []>} : vector<648x3xbf16>, vector<3x8xbf16>, vector<648x8xf32> -> vector<648x8xf32>
    %22 = arith.addf %16, %21 : vector<648x8xf32>
    %c19 = arith.constant 19 : index
    %c0_18 = arith.constant 0 : index
    %23 = vector.load %arg1[%c19, %c0_18] : memref<686x3xf32, #tpu.memory_space<vmem>>, vector<648x3xf32>
    %24 = arith.truncf %23 : vector<648x3xf32> to vector<648x3xbf16>
    %c4 = arith.constant 4 : index
    %c0_19 = arith.constant 0 : index
    %c0_20 = arith.constant 0 : index
    %25 = vector.load %arg2[%c4, %c0_19, %c0_20] : memref<9x3x8xbf16, #tpu.memory_space<vmem>>, vector<1x3x8xbf16>
    %26 = vector.shape_cast %25 : vector<1x3x8xbf16> to vector<3x8xbf16>
    %cst_21 = arith.constant dense<0.000000e+00> : vector<648x8xf32>
    %27 = tpu.matmul %24, %26, %cst_21 {dimension_numbers = #tpu.dot_dimension_numbers<[1], [0], [0], [1], [0, 0, 1, 1], [], []>} : vector<648x3xbf16>, vector<3x8xbf16>, vector<648x8xf32> -> vector<648x8xf32>
    %28 = arith.addf %22, %27 : vector<648x8xf32>
    %c20 = arith.constant 20 : index
    %c0_22 = arith.constant 0 : index
    %29 = vector.load %arg1[%c20, %c0_22] : memref<686x3xf32, #tpu.memory_space<vmem>>, vector<648x3xf32>
    %30 = arith.truncf %29 : vector<648x3xf32> to vector<648x3xbf16>
    %c5 = arith.constant 5 : index
    %c0_23 = arith.constant 0 : index
    %c0_24 = arith.constant 0 : index
    %31 = vector.load %arg2[%c5, %c0_23, %c0_24] : memref<9x3x8xbf16, #tpu.memory_space<vmem>>, vector<1x3x8xbf16>
    %32 = vector.shape_cast %31 : vector<1x3x8xbf16> to vector<3x8xbf16>
    %cst_25 = arith.constant dense<0.000000e+00> : vector<648x8xf32>
    %33 = tpu.matmul %30, %32, %cst_25 {dimension_numbers = #tpu.dot_dimension_numbers<[1], [0], [0], [1], [0, 0, 1, 1], [], []>} : vector<648x3xbf16>, vector<3x8xbf16>, vector<648x8xf32> -> vector<648x8xf32>
    %34 = arith.addf %28, %33 : vector<648x8xf32>
    %c36 = arith.constant 36 : index
    %c0_26 = arith.constant 0 : index
    %35 = vector.load %arg1[%c36, %c0_26] : memref<686x3xf32, #tpu.memory_space<vmem>>, vector<648x3xf32>
    %36 = arith.truncf %35 : vector<648x3xf32> to vector<648x3xbf16>
    %c6 = arith.constant 6 : index
    %c0_27 = arith.constant 0 : index
    %c0_28 = arith.constant 0 : index
    %37 = vector.load %arg2[%c6, %c0_27, %c0_28] : memref<9x3x8xbf16, #tpu.memory_space<vmem>>, vector<1x3x8xbf16>
    %38 = vector.shape_cast %37 : vector<1x3x8xbf16> to vector<3x8xbf16>
    %cst_29 = arith.constant dense<0.000000e+00> : vector<648x8xf32>
    %39 = tpu.matmul %36, %38, %cst_29 {dimension_numbers = #tpu.dot_dimension_numbers<[1], [0], [0], [1], [0, 0, 1, 1], [], []>} : vector<648x3xbf16>, vector<3x8xbf16>, vector<648x8xf32> -> vector<648x8xf32>
    %40 = arith.addf %34, %39 : vector<648x8xf32>
    %c37 = arith.constant 37 : index
    %c0_30 = arith.constant 0 : index
    %41 = vector.load %arg1[%c37, %c0_30] : memref<686x3xf32, #tpu.memory_space<vmem>>, vector<648x3xf32>
    %42 = arith.truncf %41 : vector<648x3xf32> to vector<648x3xbf16>
    %c7 = arith.constant 7 : index
    %c0_31 = arith.constant 0 : index
    %c0_32 = arith.constant 0 : index
    %43 = vector.load %arg2[%c7, %c0_31, %c0_32] : memref<9x3x8xbf16, #tpu.memory_space<vmem>>, vector<1x3x8xbf16>
    %44 = vector.shape_cast %43 : vector<1x3x8xbf16> to vector<3x8xbf16>
    %cst_33 = arith.constant dense<0.000000e+00> : vector<648x8xf32>
    %45 = tpu.matmul %42, %44, %cst_33 {dimension_numbers = #tpu.dot_dimension_numbers<[1], [0], [0], [1], [0, 0, 1, 1], [], []>} : vector<648x3xbf16>, vector<3x8xbf16>, vector<648x8xf32> -> vector<648x8xf32>
    %46 = arith.addf %40, %45 : vector<648x8xf32>
    %c38 = arith.constant 38 : index
    %c0_34 = arith.constant 0 : index
    %47 = vector.load %arg1[%c38, %c0_34] : memref<686x3xf32, #tpu.memory_space<vmem>>, vector<648x3xf32>
    %48 = arith.truncf %47 : vector<648x3xf32> to vector<648x3xbf16>
    %c8 = arith.constant 8 : index
    %c0_35 = arith.constant 0 : index
    %c0_36 = arith.constant 0 : index
    %49 = vector.load %arg2[%c8, %c0_35, %c0_36] : memref<9x3x8xbf16, #tpu.memory_space<vmem>>, vector<1x3x8xbf16>
    %50 = vector.shape_cast %49 : vector<1x3x8xbf16> to vector<3x8xbf16>
    %cst_37 = arith.constant dense<0.000000e+00> : vector<648x8xf32>
    %51 = tpu.matmul %48, %50, %cst_37 {dimension_numbers = #tpu.dot_dimension_numbers<[1], [0], [0], [1], [0, 0, 1, 1], [], []>} : vector<648x3xbf16>, vector<3x8xbf16>, vector<648x8xf32> -> vector<648x8xf32>
    %52 = arith.addf %46, %51 : vector<648x8xf32>
    %c0_38 = arith.constant 0 : index
    %c0_39 = arith.constant 0 : index
    %53 = vector.load %arg3[%c0_38, %c0_39] : memref<1x8xf32, #tpu.memory_space<vmem>>, vector<1x8xf32>
    %54 = vector.broadcast %53 : vector<1x8xf32> to vector<648x8xf32>
    %55 = arith.addf %52, %54 : vector<648x8xf32>
    %cst_40 = arith.constant 0.000000e+00 : f32
    %56 = vector.broadcast %cst_40 : f32 to vector<648x8xf32>
    %57 = arith.maximumf %55, %56 : vector<648x8xf32>
    %c0_41 = arith.constant 0 : index
    %c0_42 = arith.constant 0 : index
    %58 = vector.load %arg4[%c0_41, %c0_42] : memref<648x8xf32, #tpu.memory_space<vmem>>, vector<648x8xf32>
    tpu.vector_store %arg4[%c0_41, %c0_42], %57 {strides = array<i32>} : memref<648x8xf32, #tpu.memory_space<vmem>>, vector<648x8xf32>,
    return
  }
  func.func @transform_0(%arg0: i32) -> (i32, i32) {
    %c0_i32 = arith.constant 0 : i32
    %c0_i32_0 = arith.constant 0 : i32
    %c0_i32_1 = arith.constant 0 : i32
    return %c0_i32, %c0_i32_0 : i32, i32
  }
  func.func @transform_1(%arg0: i32) -> (i32, i32, i32) {
    %c0_i32 = arith.constant 0 : i32
    %c0_i32_0 = arith.constant 0 : i32
    %c0_i32_1 = arith.constant 0 : i32
    %c0_i32_2 = arith.constant 0 : i32
    return %c0_i32, %c0_i32_0, %c0_i32_1 : i32, i32, i32
  }
  func.func @transform_2(%arg0: i32) -> (i32, i32) {
    %c0_i32 = arith.constant 0 : i32
    %c0_i32_0 = arith.constant 0 : i32
    %c0_i32_1 = arith.constant 0 : i32
    return %c0_i32, %c0_i32_0 : i32, i32
  }
  func.func @transform_3(%arg0: i32) -> (i32, i32) {
    %c0_i32 = arith.constant 0 : i32
    %c0_i32_0 = arith.constant 0 : i32
    %c0_i32_1 = arith.constant 0 : i32
    return %c0_i32, %c0_i32_0 : i32, i32
  }
}

module attributes {stable_mosaic.version = 11 : i64} {
  func.func @_conv3x3_relu_kernel(%arg0: i32, %arg1: memref<222x8xf32, #tpu.memory_space<vmem>>, %arg2: memref<9x8x16xbf16, #tpu.memory_space<vmem>>, %arg3: memref<1x16xf32, #tpu.memory_space<vmem>>, %arg4: memref<200x16xf32, #tpu.memory_space<vmem>>) attributes {dimension_semantics = [#tpu.dimension_semantics<arbitrary>], iteration_bounds = array<i64: 1>, scalar_prefetch = 0 : i64, scratch_operands = 0 : i64, tpu.core_type = #tpu.core_type<tc>, window_params = [{pipeline_mode = #tpu.pipeline_mode<synchronous>, transform_indices = @transform_0, window_bounds = array<i64: 222, 8>}, {pipeline_mode = #tpu.pipeline_mode<synchronous>, transform_indices = @transform_1, window_bounds = array<i64: 9, 8, 16>}, {pipeline_mode = #tpu.pipeline_mode<synchronous>, transform_indices = @transform_2, window_bounds = array<i64: 1, 16>}, {pipeline_mode = #tpu.pipeline_mode<synchronous>, transform_indices = @transform_3, window_bounds = array<i64: 200, 16>}]} {
    %c0 = arith.constant 0 : index
    %c0_0 = arith.constant 0 : index
    %0 = vector.load %arg1[%c0, %c0_0] : memref<222x8xf32, #tpu.memory_space<vmem>>, vector<200x8xf32>
    %1 = arith.truncf %0 : vector<200x8xf32> to vector<200x8xbf16>
    %c0_1 = arith.constant 0 : index
    %c0_2 = arith.constant 0 : index
    %c0_3 = arith.constant 0 : index
    %2 = vector.load %arg2[%c0_1, %c0_2, %c0_3] : memref<9x8x16xbf16, #tpu.memory_space<vmem>>, vector<1x8x16xbf16>
    %3 = vector.shape_cast %2 : vector<1x8x16xbf16> to vector<8x16xbf16>
    %cst = arith.constant dense<0.000000e+00> : vector<200x16xf32>
    %4 = tpu.matmul %1, %3, %cst {dimension_numbers = #tpu.dot_dimension_numbers<[1], [0], [0], [1], [0, 0, 1, 1], [], []>} : vector<200x8xbf16>, vector<8x16xbf16>, vector<200x16xf32> -> vector<200x16xf32>
    %c1 = arith.constant 1 : index
    %c0_4 = arith.constant 0 : index
    %5 = vector.load %arg1[%c1, %c0_4] : memref<222x8xf32, #tpu.memory_space<vmem>>, vector<200x8xf32>
    %6 = arith.truncf %5 : vector<200x8xf32> to vector<200x8xbf16>
    %c1_5 = arith.constant 1 : index
    %c0_6 = arith.constant 0 : index
    %c0_7 = arith.constant 0 : index
    %7 = vector.load %arg2[%c1_5, %c0_6, %c0_7] : memref<9x8x16xbf16, #tpu.memory_space<vmem>>, vector<1x8x16xbf16>
    %8 = vector.shape_cast %7 : vector<1x8x16xbf16> to vector<8x16xbf16>
    %cst_8 = arith.constant dense<0.000000e+00> : vector<200x16xf32>
    %9 = tpu.matmul %6, %8, %cst_8 {dimension_numbers = #tpu.dot_dimension_numbers<[1], [0], [0], [1], [0, 0, 1, 1], [], []>} : vector<200x8xbf16>, vector<8x16xbf16>, vector<200x16xf32> -> vector<200x16xf32>
    %10 = arith.addf %4, %9 : vector<200x16xf32>
    %c2 = arith.constant 2 : index
    %c0_9 = arith.constant 0 : index
    %11 = vector.load %arg1[%c2, %c0_9] : memref<222x8xf32, #tpu.memory_space<vmem>>, vector<200x8xf32>
    %12 = arith.truncf %11 : vector<200x8xf32> to vector<200x8xbf16>
    %c2_10 = arith.constant 2 : index
    %c0_11 = arith.constant 0 : index
    %c0_12 = arith.constant 0 : index
    %13 = vector.load %arg2[%c2_10, %c0_11, %c0_12] : memref<9x8x16xbf16, #tpu.memory_space<vmem>>, vector<1x8x16xbf16>
    %14 = vector.shape_cast %13 : vector<1x8x16xbf16> to vector<8x16xbf16>
    %cst_13 = arith.constant dense<0.000000e+00> : vector<200x16xf32>
    %15 = tpu.matmul %12, %14, %cst_13 {dimension_numbers = #tpu.dot_dimension_numbers<[1], [0], [0], [1], [0, 0, 1, 1], [], []>} : vector<200x8xbf16>, vector<8x16xbf16>, vector<200x16xf32> -> vector<200x16xf32>
    %16 = arith.addf %10, %15 : vector<200x16xf32>
    %c10 = arith.constant 10 : index
    %c0_14 = arith.constant 0 : index
    %17 = vector.load %arg1[%c10, %c0_14] : memref<222x8xf32, #tpu.memory_space<vmem>>, vector<200x8xf32>
    %18 = arith.truncf %17 : vector<200x8xf32> to vector<200x8xbf16>
    %c3 = arith.constant 3 : index
    %c0_15 = arith.constant 0 : index
    %c0_16 = arith.constant 0 : index
    %19 = vector.load %arg2[%c3, %c0_15, %c0_16] : memref<9x8x16xbf16, #tpu.memory_space<vmem>>, vector<1x8x16xbf16>
    %20 = vector.shape_cast %19 : vector<1x8x16xbf16> to vector<8x16xbf16>
    %cst_17 = arith.constant dense<0.000000e+00> : vector<200x16xf32>
    %21 = tpu.matmul %18, %20, %cst_17 {dimension_numbers = #tpu.dot_dimension_numbers<[1], [0], [0], [1], [0, 0, 1, 1], [], []>} : vector<200x8xbf16>, vector<8x16xbf16>, vector<200x16xf32> -> vector<200x16xf32>
    %22 = arith.addf %16, %21 : vector<200x16xf32>
    %c11 = arith.constant 11 : index
    %c0_18 = arith.constant 0 : index
    %23 = vector.load %arg1[%c11, %c0_18] : memref<222x8xf32, #tpu.memory_space<vmem>>, vector<200x8xf32>
    %24 = arith.truncf %23 : vector<200x8xf32> to vector<200x8xbf16>
    %c4 = arith.constant 4 : index
    %c0_19 = arith.constant 0 : index
    %c0_20 = arith.constant 0 : index
    %25 = vector.load %arg2[%c4, %c0_19, %c0_20] : memref<9x8x16xbf16, #tpu.memory_space<vmem>>, vector<1x8x16xbf16>
    %26 = vector.shape_cast %25 : vector<1x8x16xbf16> to vector<8x16xbf16>
    %cst_21 = arith.constant dense<0.000000e+00> : vector<200x16xf32>
    %27 = tpu.matmul %24, %26, %cst_21 {dimension_numbers = #tpu.dot_dimension_numbers<[1], [0], [0], [1], [0, 0, 1, 1], [], []>} : vector<200x8xbf16>, vector<8x16xbf16>, vector<200x16xf32> -> vector<200x16xf32>
    %28 = arith.addf %22, %27 : vector<200x16xf32>
    %c12 = arith.constant 12 : index
    %c0_22 = arith.constant 0 : index
    %29 = vector.load %arg1[%c12, %c0_22] : memref<222x8xf32, #tpu.memory_space<vmem>>, vector<200x8xf32>
    %30 = arith.truncf %29 : vector<200x8xf32> to vector<200x8xbf16>
    %c5 = arith.constant 5 : index
    %c0_23 = arith.constant 0 : index
    %c0_24 = arith.constant 0 : index
    %31 = vector.load %arg2[%c5, %c0_23, %c0_24] : memref<9x8x16xbf16, #tpu.memory_space<vmem>>, vector<1x8x16xbf16>
    %32 = vector.shape_cast %31 : vector<1x8x16xbf16> to vector<8x16xbf16>
    %cst_25 = arith.constant dense<0.000000e+00> : vector<200x16xf32>
    %33 = tpu.matmul %30, %32, %cst_25 {dimension_numbers = #tpu.dot_dimension_numbers<[1], [0], [0], [1], [0, 0, 1, 1], [], []>} : vector<200x8xbf16>, vector<8x16xbf16>, vector<200x16xf32> -> vector<200x16xf32>
    %34 = arith.addf %28, %33 : vector<200x16xf32>
    %c20 = arith.constant 20 : index
    %c0_26 = arith.constant 0 : index
    %35 = vector.load %arg1[%c20, %c0_26] : memref<222x8xf32, #tpu.memory_space<vmem>>, vector<200x8xf32>
    %36 = arith.truncf %35 : vector<200x8xf32> to vector<200x8xbf16>
    %c6 = arith.constant 6 : index
    %c0_27 = arith.constant 0 : index
    %c0_28 = arith.constant 0 : index
    %37 = vector.load %arg2[%c6, %c0_27, %c0_28] : memref<9x8x16xbf16, #tpu.memory_space<vmem>>, vector<1x8x16xbf16>
    %38 = vector.shape_cast %37 : vector<1x8x16xbf16> to vector<8x16xbf16>
    %cst_29 = arith.constant dense<0.000000e+00> : vector<200x16xf32>
    %39 = tpu.matmul %36, %38, %cst_29 {dimension_numbers = #tpu.dot_dimension_numbers<[1], [0], [0], [1], [0, 0, 1, 1], [], []>} : vector<200x8xbf16>, vector<8x16xbf16>, vector<200x16xf32> -> vector<200x16xf32>
    %40 = arith.addf %34, %39 : vector<200x16xf32>
    %c21 = arith.constant 21 : index
    %c0_30 = arith.constant 0 : index
    %41 = vector.load %arg1[%c21, %c0_30] : memref<222x8xf32, #tpu.memory_space<vmem>>, vector<200x8xf32>
    %42 = arith.truncf %41 : vector<200x8xf32> to vector<200x8xbf16>
    %c7 = arith.constant 7 : index
    %c0_31 = arith.constant 0 : index
    %c0_32 = arith.constant 0 : index
    %43 = vector.load %arg2[%c7, %c0_31, %c0_32] : memref<9x8x16xbf16, #tpu.memory_space<vmem>>, vector<1x8x16xbf16>
    %44 = vector.shape_cast %43 : vector<1x8x16xbf16> to vector<8x16xbf16>
    %cst_33 = arith.constant dense<0.000000e+00> : vector<200x16xf32>
    %45 = tpu.matmul %42, %44, %cst_33 {dimension_numbers = #tpu.dot_dimension_numbers<[1], [0], [0], [1], [0, 0, 1, 1], [], []>} : vector<200x8xbf16>, vector<8x16xbf16>, vector<200x16xf32> -> vector<200x16xf32>
    %46 = arith.addf %40, %45 : vector<200x16xf32>
    %c22 = arith.constant 22 : index
    %c0_34 = arith.constant 0 : index
    %47 = vector.load %arg1[%c22, %c0_34] : memref<222x8xf32, #tpu.memory_space<vmem>>, vector<200x8xf32>
    %48 = arith.truncf %47 : vector<200x8xf32> to vector<200x8xbf16>
    %c8 = arith.constant 8 : index
    %c0_35 = arith.constant 0 : index
    %c0_36 = arith.constant 0 : index
    %49 = vector.load %arg2[%c8, %c0_35, %c0_36] : memref<9x8x16xbf16, #tpu.memory_space<vmem>>, vector<1x8x16xbf16>
    %50 = vector.shape_cast %49 : vector<1x8x16xbf16> to vector<8x16xbf16>
    %cst_37 = arith.constant dense<0.000000e+00> : vector<200x16xf32>
    %51 = tpu.matmul %48, %50, %cst_37 {dimension_numbers = #tpu.dot_dimension_numbers<[1], [0], [0], [1], [0, 0, 1, 1], [], []>} : vector<200x8xbf16>, vector<8x16xbf16>, vector<200x16xf32> -> vector<200x16xf32>
    %52 = arith.addf %46, %51 : vector<200x16xf32>
    %c0_38 = arith.constant 0 : index
    %c0_39 = arith.constant 0 : index
    %53 = vector.load %arg3[%c0_38, %c0_39] : memref<1x16xf32, #tpu.memory_space<vmem>>, vector<1x16xf32>
    %54 = vector.broadcast %53 : vector<1x16xf32> to vector<200x16xf32>
    %55 = arith.addf %52, %54 : vector<200x16xf32>
    %cst_40 = arith.constant 0.000000e+00 : f32
    %56 = vector.broadcast %cst_40 : f32 to vector<200x16xf32>
    %57 = arith.maximumf %55, %56 : vector<200x16xf32>
    %c0_41 = arith.constant 0 : index
    %c0_42 = arith.constant 0 : index
    %58 = vector.load %arg4[%c0_41, %c0_42] : memref<200x16xf32, #tpu.memory_space<vmem>>, vector<200x16xf32>
    tpu.vector_store %arg4[%c0_41, %c0_42], %57 {strides = array<i32>} : memref<200x16xf32, #tpu.memory_space<vmem>>, vector<200x16xf32>,
    return
  }
  func.func @transform_0(%arg0: i32) -> (i32, i32) {
    %c0_i32 = arith.constant 0 : i32
    %c0_i32_0 = arith.constant 0 : i32
    %c0_i32_1 = arith.constant 0 : i32
    return %c0_i32, %c0_i32_0 : i32, i32
  }
  func.func @transform_1(%arg0: i32) -> (i32, i32, i32) {
    %c0_i32 = arith.constant 0 : i32
    %c0_i32_0 = arith.constant 0 : i32
    %c0_i32_1 = arith.constant 0 : i32
    %c0_i32_2 = arith.constant 0 : i32
    return %c0_i32, %c0_i32_0, %c0_i32_1 : i32, i32, i32
  }
  func.func @transform_2(%arg0: i32) -> (i32, i32) {
    %c0_i32 = arith.constant 0 : i32
    %c0_i32_0 = arith.constant 0 : i32
    %c0_i32_1 = arith.constant 0 : i32
    return %c0_i32, %c0_i32_0 : i32, i32
  }
  func.func @transform_3(%arg0: i32) -> (i32, i32) {
    %c0_i32 = arith.constant 0 : i32
    %c0_i32_0 = arith.constant 0 : i32
    %c0_i32_1 = arith.constant 0 : i32
    return %c0_i32, %c0_i32_0 : i32, i32
  }
}

module attributes {stable_mosaic.version = 11 : i64} {
  func.func @kernel(%arg0: i32, %arg1: memref<8x256xf32, #tpu.memory_space<vmem>>, %arg2: memref<64x32xf32, #tpu.memory_space<vmem>>, %arg3: memref<256x64xbf16, #tpu.memory_space<vmem>>, %arg4: memref<1x64xf32, #tpu.memory_space<vmem>>, %arg5: memref<64x64xbf16, #tpu.memory_space<vmem>>, %arg6: memref<1x64xf32, #tpu.memory_space<vmem>>, %arg7: memref<64x32xbf16, #tpu.memory_space<vmem>>, %arg8: memref<1x32xf32, #tpu.memory_space<vmem>>, %arg9: memref<64x32xbf16, #tpu.memory_space<vmem>>, %arg10: memref<1x32xf32, #tpu.memory_space<vmem>>, %arg11: memref<32x32xbf16, #tpu.memory_space<vmem>>, %arg12: memref<1x32xf32, #tpu.memory_space<vmem>>, %arg13: memref<32x32xbf16, #tpu.memory_space<vmem>>, %arg14: memref<1x32xf32, #tpu.memory_space<vmem>>, %arg15: memref<32x128xbf16, #tpu.memory_space<vmem>>, %arg16: memref<32x128xbf16, #tpu.memory_space<vmem>>, %arg17: memref<1x128xf32, #tpu.memory_space<vmem>>, %arg18: memref<8x32xf32, #tpu.memory_space<vmem>>, %arg19: memref<64x128xf32, #tpu.memory_space<vmem>>) attributes {dimension_semantics = [#tpu.dimension_semantics<arbitrary>], iteration_bounds = array<i64: 1>, scalar_prefetch = 0 : i64, scratch_operands = 1 : i64, tpu.core_type = #tpu.core_type<tc>, window_params = [{pipeline_mode = #tpu.pipeline_mode<synchronous>, transform_indices = @transform_0, window_bounds = array<i64: 8, 256>}, {pipeline_mode = #tpu.pipeline_mode<synchronous>, transform_indices = @transform_1, window_bounds = array<i64: 64, 32>}, {pipeline_mode = #tpu.pipeline_mode<synchronous>, transform_indices = @transform_2, window_bounds = array<i64: 256, 64>}, {pipeline_mode = #tpu.pipeline_mode<synchronous>, transform_indices = @transform_3, window_bounds = array<i64: 1, 64>}, {pipeline_mode = #tpu.pipeline_mode<synchronous>, transform_indices = @transform_4, window_bounds = array<i64: 64, 64>}, {pipeline_mode = #tpu.pipeline_mode<synchronous>, transform_indices = @transform_5, window_bounds = array<i64: 1, 64>}, {pipeline_mode = #tpu.pipeline_mode<synchronous>, transform_indices = @transform_6, window_bounds = array<i64: 64, 32>}, {pipeline_mode = #tpu.pipeline_mode<synchronous>, transform_indices = @transform_7, window_bounds = array<i64: 1, 32>}, {pipeline_mode = #tpu.pipeline_mode<synchronous>, transform_indices = @transform_8, window_bounds = array<i64: 64, 32>}, {pipeline_mode = #tpu.pipeline_mode<synchronous>, transform_indices = @transform_9, window_bounds = array<i64: 1, 32>}, {pipeline_mode = #tpu.pipeline_mode<synchronous>, transform_indices = @transform_10, window_bounds = array<i64: 32, 32>}, {pipeline_mode = #tpu.pipeline_mode<synchronous>, transform_indices = @transform_11, window_bounds = array<i64: 1, 32>}, {pipeline_mode = #tpu.pipeline_mode<synchronous>, transform_indices = @transform_12, window_bounds = array<i64: 32, 32>}, {pipeline_mode = #tpu.pipeline_mode<synchronous>, transform_indices = @transform_13, window_bounds = array<i64: 1, 32>}, {pipeline_mode = #tpu.pipeline_mode<synchronous>, transform_indices = @transform_14, window_bounds = array<i64: 32, 128>}, {pipeline_mode = #tpu.pipeline_mode<synchronous>, transform_indices = @transform_15, window_bounds = array<i64: 32, 128>}, {pipeline_mode = #tpu.pipeline_mode<synchronous>, transform_indices = @transform_16, window_bounds = array<i64: 1, 128>}, {pipeline_mode = #tpu.pipeline_mode<synchronous>, transform_indices = @transform_17, window_bounds = array<i64: 8, 32>}]} {
    %c0 = arith.constant 0 : index
    %c0_0 = arith.constant 0 : index
    %0 = vector.load %arg1[%c0, %c0_0] : memref<8x256xf32, #tpu.memory_space<vmem>>, vector<8x256xf32>
    %1 = arith.truncf %0 : vector<8x256xf32> to vector<8x256xbf16>
    %c0_1 = arith.constant 0 : index
    %c0_2 = arith.constant 0 : index
    %2 = vector.load %arg3[%c0_1, %c0_2] : memref<256x64xbf16, #tpu.memory_space<vmem>>, vector<256x64xbf16>
    %cst = arith.constant dense<0.000000e+00> : vector<8x64xf32>
    %3 = tpu.matmul %1, %2, %cst {dimension_numbers = #tpu.dot_dimension_numbers<[1], [0], [0], [1], [0, 0, 1, 1], [], []>} : vector<8x256xbf16>, vector<256x64xbf16>, vector<8x64xf32> -> vector<8x64xf32>
    %c0_3 = arith.constant 0 : index
    %c0_4 = arith.constant 0 : index
    %4 = vector.load %arg4[%c0_3, %c0_4] : memref<1x64xf32, #tpu.memory_space<vmem>>, vector<1x64xf32>
    %5 = vector.broadcast %4 : vector<1x64xf32> to vector<8x64xf32>
    %6 = arith.addf %3, %5 : vector<8x64xf32>
    %cst_5 = arith.constant 0.000000e+00 : f32
    %7 = vector.broadcast %cst_5 : f32 to vector<8x64xf32>
    %8 = arith.maximumf %6, %7 : vector<8x64xf32>
    %9 = arith.truncf %8 : vector<8x64xf32> to vector<8x64xbf16>
    %c0_6 = arith.constant 0 : index
    %c0_7 = arith.constant 0 : index
    %10 = vector.load %arg5[%c0_6, %c0_7] : memref<64x64xbf16, #tpu.memory_space<vmem>>, vector<64x64xbf16>
    %cst_8 = arith.constant dense<0.000000e+00> : vector<8x64xf32>
    %11 = tpu.matmul %9, %10, %cst_8 {dimension_numbers = #tpu.dot_dimension_numbers<[1], [0], [0], [1], [0, 0, 1, 1], [], []>} : vector<8x64xbf16>, vector<64x64xbf16>, vector<8x64xf32> -> vector<8x64xf32>
    %c0_9 = arith.constant 0 : index
    %c0_10 = arith.constant 0 : index
    %12 = vector.load %arg6[%c0_9, %c0_10] : memref<1x64xf32, #tpu.memory_space<vmem>>, vector<1x64xf32>
    %13 = vector.broadcast %12 : vector<1x64xf32> to vector<8x64xf32>
    %14 = arith.addf %11, %13 : vector<8x64xf32>
    %cst_11 = arith.constant 0.000000e+00 : f32
    %15 = vector.broadcast %cst_11 : f32 to vector<8x64xf32>
    %16 = arith.maximumf %14, %15 : vector<8x64xf32>
    %17 = arith.truncf %16 : vector<8x64xf32> to vector<8x64xbf16>
    %c0_12 = arith.constant 0 : index
    %c0_13 = arith.constant 0 : index
    %18 = vector.load %arg7[%c0_12, %c0_13] : memref<64x32xbf16, #tpu.memory_space<vmem>>, vector<64x32xbf16>
    %cst_14 = arith.constant dense<0.000000e+00> : vector<8x32xf32>
    %19 = tpu.matmul %17, %18, %cst_14 {dimension_numbers = #tpu.dot_dimension_numbers<[1], [0], [0], [1], [0, 0, 1, 1], [], []>} : vector<8x64xbf16>, vector<64x32xbf16>, vector<8x32xf32> -> vector<8x32xf32>
    %c0_15 = arith.constant 0 : index
    %c0_16 = arith.constant 0 : index
    %20 = vector.load %arg8[%c0_15, %c0_16] : memref<1x32xf32, #tpu.memory_space<vmem>>, vector<1x32xf32>
    %21 = vector.broadcast %20 : vector<1x32xf32> to vector<8x32xf32>
    %22 = arith.addf %19, %21 : vector<8x32xf32>
    %23 = arith.mulf %22, %22 : vector<8x32xf32>
    %cst_17 = arith.constant dense<0.000000e+00> : vector<8xf32>
    %24 = vector.multi_reduction <add>, %23, %cst_17 [1] : vector<8x32xf32> to vector<8xf32>
    %25 = vector.shape_cast %24 : vector<8xf32> to vector<8x1xf32>
    %cst_18 = arith.constant 9.99999996E-13 : f32
    %26 = vector.broadcast %cst_18 : f32 to vector<8x1xf32>
    %27 = arith.addf %25, %26 : vector<8x1xf32>
    %28 = math.rsqrt %27 : vector<8x1xf32>
    %29 = vector.broadcast %28 : vector<8x1xf32> to vector<8x32xf32>
    %30 = arith.mulf %22, %29 : vector<8x32xf32>
    %c0_19 = arith.constant 0 : index
    %c0_20 = arith.constant 0 : index
    %31 = vector.load %arg2[%c0_19, %c0_20] : memref<64x32xf32, #tpu.memory_space<vmem>>, vector<64x32xf32>
    %32 = math.tanh %31 : vector<64x32xf32>
    %33 = arith.truncf %32 : vector<64x32xf32> to vector<64x32xbf16>
    %c0_21 = arith.constant 0 : index
    %c0_22 = arith.constant 0 : index
    %34 = vector.load %arg15[%c0_21, %c0_22] : memref<32x128xbf16, #tpu.memory_space<vmem>>, vector<32x128xbf16>
    %cst_23 = arith.constant dense<0.000000e+00> : vector<64x128xf32>
    %35 = tpu.matmul %33, %34, %cst_23 {dimension_numbers = #tpu.dot_dimension_numbers<[1], [0], [0], [1], [0, 0, 1, 1], [], []>} : vector<64x32xbf16>, vector<32x128xbf16>, vector<64x128xf32> -> vector<64x128xf32>
    %c0_24 = arith.constant 0 : index
    %c0_25 = arith.constant 0 : index
    %36 = vector.load %arg17[%c0_24, %c0_25] : memref<1x128xf32, #tpu.memory_space<vmem>>, vector<1x128xf32>
    %37 = vector.broadcast %36 : vector<1x128xf32> to vector<64x128xf32>
    %38 = arith.addf %35, %37 : vector<64x128xf32>
    %c0_26 = arith.constant 0 : index
    %c0_27 = arith.constant 0 : index
    %39 = vector.load %arg19[%c0_26, %c0_27] : memref<64x128xf32, #tpu.memory_space<vmem>>, vector<64x128xf32>
    tpu.vector_store %arg19[%c0_26, %c0_27], %38 {strides = array<i32>} : memref<64x128xf32, #tpu.memory_space<vmem>>, vector<64x128xf32>,
    %c0_28 = arith.constant 0 : index
    %c0_29 = arith.constant 0 : index
    %40 = vector.load %arg16[%c0_28, %c0_29] : memref<32x128xbf16, #tpu.memory_space<vmem>>, vector<32x128xbf16>
    %cst_30 = arith.constant 0.000000e+00 : f32
    %41 = vector.broadcast %cst_30 : f32 to vector<8x32xf32>
    %cst_31 = arith.constant 0.000000e+00 : f32
    %42 = vector.broadcast %cst_31 : f32 to vector<8x32xf32>
    %c0_i32 = arith.constant 0 : i32
    %c8_i32 = arith.constant 8 : i32
    %43 = arith.muli %c0_i32, %c8_i32 : i32
    %44 = tpu.assume_multiple %43, 8 : i32
    %45 = arith.index_cast %44 : i32 to index
    %c0_32 = arith.constant 0 : index
    %46 = vector.load %arg19[%45, %c0_32] : memref<64x128xf32, #tpu.memory_space<vmem>>, vector<8x128xf32>
    %47 = arith.truncf %41 : vector<8x32xf32> to vector<8x32xbf16>
    %cst_33 = arith.constant dense<0.000000e+00> : vector<8x128xf32>
    %48 = tpu.matmul %47, %40, %cst_33 {dimension_numbers = #tpu.dot_dimension_numbers<[1], [0], [0], [1], [0, 0, 1, 1], [], []>} : vector<8x32xbf16>, vector<32x128xbf16>, vector<8x128xf32> -> vector<8x128xf32>
    %49 = arith.addf %46, %48 : vector<8x128xf32>
    %50 = arith.negf %49 : vector<8x128xf32>
    %51 = math.exp %50 : vector<8x128xf32>
    %cst_34 = arith.constant 1.000000e+00 : f32
    %52 = vector.broadcast %cst_34 : f32 to vector<8x128xf32>
    %53 = arith.addf %52, %51 : vector<8x128xf32>
    %54 = arith.divf %52, %53 : vector<8x128xf32>
    %55 = math.tanh %49 : vector<8x128xf32>
    %56 = vector.extract_strided_slice %54 {offsets = [0, 0], sizes = [8, 32], strides = [1, 1]} : vector<8x128xf32> to vector<8x32xf32>
    %57 = vector.extract_strided_slice %54 {offsets = [0, 32], sizes = [8, 32], strides = [1, 1]} : vector<8x128xf32> to vector<8x32xf32>
    %58 = vector.extract_strided_slice %54 {offsets = [0, 96], sizes = [8, 32], strides = [1, 1]} : vector<8x128xf32> to vector<8x32xf32>
    %59 = vector.extract_strided_slice %55 {offsets = [0, 64], sizes = [8, 32], strides = [1, 1]} : vector<8x128xf32> to vector<8x32xf32>
    %60 = arith.mulf %57, %42 : vector<8x32xf32>
    %61 = arith.mulf %56, %59 : vector<8x32xf32>
    %62 = arith.addf %60, %61 : vector<8x32xf32>
    %63 = math.tanh %62 : vector<8x32xf32>
    %64 = arith.mulf %58, %63 : vector<8x32xf32>
    %c1_i32 = arith.constant 1 : i32
    %c8_i32_35 = arith.constant 8 : i32
    %65 = arith.muli %c1_i32, %c8_i32_35 : i32
    %66 = tpu.assume_multiple %65, 8 : i32
    %67 = arith.index_cast %66 : i32 to index
    %c0_36 = arith.constant 0 : index
    %68 = vector.load %arg19[%67, %c0_36] : memref<64x128xf32, #tpu.memory_space<vmem>>, vector<8x128xf32>
    %69 = arith.truncf %64 : vector<8x32xf32> to vector<8x32xbf16>
    %cst_37 = arith.constant dense<0.000000e+00> : vector<8x128xf32>
    %70 = tpu.matmul %69, %40, %cst_37 {dimension_numbers = #tpu.dot_dimension_numbers<[1], [0], [0], [1], [0, 0, 1, 1], [], []>} : vector<8x32xbf16>, vector<32x128xbf16>, vector<8x128xf32> -> vector<8x128xf32>
    %71 = arith.addf %68, %70 : vector<8x128xf32>
    %72 = arith.negf %71 : vector<8x128xf32>
    %73 = math.exp %72 : vector<8x128xf32>
    %cst_38 = arith.constant 1.000000e+00 : f32
    %74 = vector.broadcast %cst_38 : f32 to vector<8x128xf32>
    %75 = arith.addf %74, %73 : vector<8x128xf32>
    %76 = arith.divf %74, %75 : vector<8x128xf32>
    %77 = math.tanh %71 : vector<8x128xf32>
    %78 = vector.extract_strided_slice %76 {offsets = [0, 0], sizes = [8, 32], strides = [1, 1]} : vector<8x128xf32> to vector<8x32xf32>
    %79 = vector.extract_strided_slice %76 {offsets = [0, 32], sizes = [8, 32], strides = [1, 1]} : vector<8x128xf32> to vector<8x32xf32>
    %80 = vector.extract_strided_slice %76 {offsets = [0, 96], sizes = [8, 32], strides = [1, 1]} : vector<8x128xf32> to vector<8x32xf32>
    %81 = vector.extract_strided_slice %77 {offsets = [0, 64], sizes = [8, 32], strides = [1, 1]} : vector<8x128xf32> to vector<8x32xf32>
    %82 = arith.mulf %79, %62 : vector<8x32xf32>
    %83 = arith.mulf %78, %81 : vector<8x32xf32>
    %84 = arith.addf %82, %83 : vector<8x32xf32>
    %85 = math.tanh %84 : vector<8x32xf32>
    %86 = arith.mulf %80, %85 : vector<8x32xf32>
    %c2_i32 = arith.constant 2 : i32
    %c8_i32_39 = arith.constant 8 : i32
    %87 = arith.muli %c2_i32, %c8_i32_39 : i32
    %88 = tpu.assume_multiple %87, 8 : i32
    %89 = arith.index_cast %88 : i32 to index
    %c0_40 = arith.constant 0 : index
    %90 = vector.load %arg19[%89, %c0_40] : memref<64x128xf32, #tpu.memory_space<vmem>>, vector<8x128xf32>
    %91 = arith.truncf %86 : vector<8x32xf32> to vector<8x32xbf16>
    %cst_41 = arith.constant dense<0.000000e+00> : vector<8x128xf32>
    %92 = tpu.matmul %91, %40, %cst_41 {dimension_numbers = #tpu.dot_dimension_numbers<[1], [0], [0], [1], [0, 0, 1, 1], [], []>} : vector<8x32xbf16>, vector<32x128xbf16>, vector<8x128xf32> -> vector<8x128xf32>
    %93 = arith.addf %90, %92 : vector<8x128xf32>
    %94 = arith.negf %93 : vector<8x128xf32>
    %95 = math.exp %94 : vector<8x128xf32>
    %cst_42 = arith.constant 1.000000e+00 : f32
    %96 = vector.broadcast %cst_42 : f32 to vector<8x128xf32>
    %97 = arith.addf %96, %95 : vector<8x128xf32>
    %98 = arith.divf %96, %97 : vector<8x128xf32>
    %99 = math.tanh %93 : vector<8x128xf32>
    %100 = vector.extract_strided_slice %98 {offsets = [0, 0], sizes = [8, 32], strides = [1, 1]} : vector<8x128xf32> to vector<8x32xf32>
    %101 = vector.extract_strided_slice %98 {offsets = [0, 32], sizes = [8, 32], strides = [1, 1]} : vector<8x128xf32> to vector<8x32xf32>
    %102 = vector.extract_strided_slice %98 {offsets = [0, 96], sizes = [8, 32], strides = [1, 1]} : vector<8x128xf32> to vector<8x32xf32>
    %103 = vector.extract_strided_slice %99 {offsets = [0, 64], sizes = [8, 32], strides = [1, 1]} : vector<8x128xf32> to vector<8x32xf32>
    %104 = arith.mulf %101, %84 : vector<8x32xf32>
    %105 = arith.mulf %100, %103 : vector<8x32xf32>
    %106 = arith.addf %104, %105 : vector<8x32xf32>
    %107 = math.tanh %106 : vector<8x32xf32>
    %108 = arith.mulf %102, %107 : vector<8x32xf32>
    %c3_i32 = arith.constant 3 : i32
    %c8_i32_43 = arith.constant 8 : i32
    %109 = arith.muli %c3_i32, %c8_i32_43 : i32
    %110 = tpu.assume_multiple %109, 8 : i32
    %111 = arith.index_cast %110 : i32 to index
    %c0_44 = arith.constant 0 : index
    %112 = vector.load %arg19[%111, %c0_44] : memref<64x128xf32, #tpu.memory_space<vmem>>, vector<8x128xf32>
    %113 = arith.truncf %108 : vector<8x32xf32> to vector<8x32xbf16>
    %cst_45 = arith.constant dense<0.000000e+00> : vector<8x128xf32>
    %114 = tpu.matmul %113, %40, %cst_45 {dimension_numbers = #tpu.dot_dimension_numbers<[1], [0], [0], [1], [0, 0, 1, 1], [], []>} : vector<8x32xbf16>, vector<32x128xbf16>, vector<8x128xf32> -> vector<8x128xf32>
    %115 = arith.addf %112, %114 : vector<8x128xf32>
    %116 = arith.negf %115 : vector<8x128xf32>
    %117 = math.exp %116 : vector<8x128xf32>
    %cst_46 = arith.constant 1.000000e+00 : f32
    %118 = vector.broadcast %cst_46 : f32 to vector<8x128xf32>
    %119 = arith.addf %118, %117 : vector<8x128xf32>
    %120 = arith.divf %118, %119 : vector<8x128xf32>
    %121 = math.tanh %115 : vector<8x128xf32>
    %122 = vector.extract_strided_slice %120 {offsets = [0, 0], sizes = [8, 32], strides = [1, 1]} : vector<8x128xf32> to vector<8x32xf32>
    %123 = vector.extract_strided_slice %120 {offsets = [0, 32], sizes = [8, 32], strides = [1, 1]} : vector<8x128xf32> to vector<8x32xf32>
    %124 = vector.extract_strided_slice %120 {offsets = [0, 96], sizes = [8, 32], strides = [1, 1]} : vector<8x128xf32> to vector<8x32xf32>
    %125 = vector.extract_strided_slice %121 {offsets = [0, 64], sizes = [8, 32], strides = [1, 1]} : vector<8x128xf32> to vector<8x32xf32>
    %126 = arith.mulf %123, %106 : vector<8x32xf32>
    %127 = arith.mulf %122, %125 : vector<8x32xf32>
    %128 = arith.addf %126, %127 : vector<8x32xf32>
    %129 = math.tanh %128 : vector<8x32xf32>
    %130 = arith.mulf %124, %129 : vector<8x32xf32>
    %c4_i32 = arith.constant 4 : i32
    %c8_i32_47 = arith.constant 8 : i32
    %131 = arith.muli %c4_i32, %c8_i32_47 : i32
    %132 = tpu.assume_multiple %131, 8 : i32
    %133 = arith.index_cast %132 : i32 to index
    %c0_48 = arith.constant 0 : index
    %134 = vector.load %arg19[%133, %c0_48] : memref<64x128xf32, #tpu.memory_space<vmem>>, vector<8x128xf32>
    %135 = arith.truncf %130 : vector<8x32xf32> to vector<8x32xbf16>
    %cst_49 = arith.constant dense<0.000000e+00> : vector<8x128xf32>
    %136 = tpu.matmul %135, %40, %cst_49 {dimension_numbers = #tpu.dot_dimension_numbers<[1], [0], [0], [1], [0, 0, 1, 1], [], []>} : vector<8x32xbf16>, vector<32x128xbf16>, vector<8x128xf32> -> vector<8x128xf32>
    %137 = arith.addf %134, %136 : vector<8x128xf32>
    %138 = arith.negf %137 : vector<8x128xf32>
    %139 = math.exp %138 : vector<8x128xf32>
    %cst_50 = arith.constant 1.000000e+00 : f32
    %140 = vector.broadcast %cst_50 : f32 to vector<8x128xf32>
    %141 = arith.addf %140, %139 : vector<8x128xf32>
    %142 = arith.divf %140, %141 : vector<8x128xf32>
    %143 = math.tanh %137 : vector<8x128xf32>
    %144 = vector.extract_strided_slice %142 {offsets = [0, 0], sizes = [8, 32], strides = [1, 1]} : vector<8x128xf32> to vector<8x32xf32>
    %145 = vector.extract_strided_slice %142 {offsets = [0, 32], sizes = [8, 32], strides = [1, 1]} : vector<8x128xf32> to vector<8x32xf32>
    %146 = vector.extract_strided_slice %142 {offsets = [0, 96], sizes = [8, 32], strides = [1, 1]} : vector<8x128xf32> to vector<8x32xf32>
    %147 = vector.extract_strided_slice %143 {offsets = [0, 64], sizes = [8, 32], strides = [1, 1]} : vector<8x128xf32> to vector<8x32xf32>
    %148 = arith.mulf %145, %128 : vector<8x32xf32>
    %149 = arith.mulf %144, %147 : vector<8x32xf32>
    %150 = arith.addf %148, %149 : vector<8x32xf32>
    %151 = math.tanh %150 : vector<8x32xf32>
    %152 = arith.mulf %146, %151 : vector<8x32xf32>
    %c5_i32 = arith.constant 5 : i32
    %c8_i32_51 = arith.constant 8 : i32
    %153 = arith.muli %c5_i32, %c8_i32_51 : i32
    %154 = tpu.assume_multiple %153, 8 : i32
    %155 = arith.index_cast %154 : i32 to index
    %c0_52 = arith.constant 0 : index
    %156 = vector.load %arg19[%155, %c0_52] : memref<64x128xf32, #tpu.memory_space<vmem>>, vector<8x128xf32>
    %157 = arith.truncf %152 : vector<8x32xf32> to vector<8x32xbf16>
    %cst_53 = arith.constant dense<0.000000e+00> : vector<8x128xf32>
    %158 = tpu.matmul %157, %40, %cst_53 {dimension_numbers = #tpu.dot_dimension_numbers<[1], [0], [0], [1], [0, 0, 1, 1], [], []>} : vector<8x32xbf16>, vector<32x128xbf16>, vector<8x128xf32> -> vector<8x128xf32>
    %159 = arith.addf %156, %158 : vector<8x128xf32>
    %160 = arith.negf %159 : vector<8x128xf32>
    %161 = math.exp %160 : vector<8x128xf32>
    %cst_54 = arith.constant 1.000000e+00 : f32
    %162 = vector.broadcast %cst_54 : f32 to vector<8x128xf32>
    %163 = arith.addf %162, %161 : vector<8x128xf32>
    %164 = arith.divf %162, %163 : vector<8x128xf32>
    %165 = math.tanh %159 : vector<8x128xf32>
    %166 = vector.extract_strided_slice %164 {offsets = [0, 0], sizes = [8, 32], strides = [1, 1]} : vector<8x128xf32> to vector<8x32xf32>
    %167 = vector.extract_strided_slice %164 {offsets = [0, 32], sizes = [8, 32], strides = [1, 1]} : vector<8x128xf32> to vector<8x32xf32>
    %168 = vector.extract_strided_slice %164 {offsets = [0, 96], sizes = [8, 32], strides = [1, 1]} : vector<8x128xf32> to vector<8x32xf32>
    %169 = vector.extract_strided_slice %165 {offsets = [0, 64], sizes = [8, 32], strides = [1, 1]} : vector<8x128xf32> to vector<8x32xf32>
    %170 = arith.mulf %167, %150 : vector<8x32xf32>
    %171 = arith.mulf %166, %169 : vector<8x32xf32>
    %172 = arith.addf %170, %171 : vector<8x32xf32>
    %173 = math.tanh %172 : vector<8x32xf32>
    %174 = arith.mulf %168, %173 : vector<8x32xf32>
    %c6_i32 = arith.constant 6 : i32
    %c8_i32_55 = arith.constant 8 : i32
    %175 = arith.muli %c6_i32, %c8_i32_55 : i32
    %176 = tpu.assume_multiple %175, 8 : i32
    %177 = arith.index_cast %176 : i32 to index
    %c0_56 = arith.constant 0 : index
    %178 = vector.load %arg19[%177, %c0_56] : memref<64x128xf32, #tpu.memory_space<vmem>>, vector<8x128xf32>
    %179 = arith.truncf %174 : vector<8x32xf32> to vector<8x32xbf16>
    %cst_57 = arith.constant dense<0.000000e+00> : vector<8x128xf32>
    %180 = tpu.matmul %179, %40, %cst_57 {dimension_numbers = #tpu.dot_dimension_numbers<[1], [0], [0], [1], [0, 0, 1, 1], [], []>} : vector<8x32xbf16>, vector<32x128xbf16>, vector<8x128xf32> -> vector<8x128xf32>
    %181 = arith.addf %178, %180 : vector<8x128xf32>
    %182 = arith.negf %181 : vector<8x128xf32>
    %183 = math.exp %182 : vector<8x128xf32>
    %cst_58 = arith.constant 1.000000e+00 : f32
    %184 = vector.broadcast %cst_58 : f32 to vector<8x128xf32>
    %185 = arith.addf %184, %183 : vector<8x128xf32>
    %186 = arith.divf %184, %185 : vector<8x128xf32>
    %187 = math.tanh %181 : vector<8x128xf32>
    %188 = vector.extract_strided_slice %186 {offsets = [0, 0], sizes = [8, 32], strides = [1, 1]} : vector<8x128xf32> to vector<8x32xf32>
    %189 = vector.extract_strided_slice %186 {offsets = [0, 32], sizes = [8, 32], strides = [1, 1]} : vector<8x128xf32> to vector<8x32xf32>
    %190 = vector.extract_strided_slice %186 {offsets = [0, 96], sizes = [8, 32], strides = [1, 1]} : vector<8x128xf32> to vector<8x32xf32>
    %191 = vector.extract_strided_slice %187 {offsets = [0, 64], sizes = [8, 32], strides = [1, 1]} : vector<8x128xf32> to vector<8x32xf32>
    %192 = arith.mulf %189, %172 : vector<8x32xf32>
    %193 = arith.mulf %188, %191 : vector<8x32xf32>
    %194 = arith.addf %192, %193 : vector<8x32xf32>
    %195 = math.tanh %194 : vector<8x32xf32>
    %196 = arith.mulf %190, %195 : vector<8x32xf32>
    %c7_i32 = arith.constant 7 : i32
    %c8_i32_59 = arith.constant 8 : i32
    %197 = arith.muli %c7_i32, %c8_i32_59 : i32
    %198 = tpu.assume_multiple %197, 8 : i32
    %199 = arith.index_cast %198 : i32 to index
    %c0_60 = arith.constant 0 : index
    %200 = vector.load %arg19[%199, %c0_60] : memref<64x128xf32, #tpu.memory_space<vmem>>, vector<8x128xf32>
    %201 = arith.truncf %196 : vector<8x32xf32> to vector<8x32xbf16>
    %cst_61 = arith.constant dense<0.000000e+00> : vector<8x128xf32>
    %202 = tpu.matmul %201, %40, %cst_61 {dimension_numbers = #tpu.dot_dimension_numbers<[1], [0], [0], [1], [0, 0, 1, 1], [], []>} : vector<8x32xbf16>, vector<32x128xbf16>, vector<8x128xf32> -> vector<8x128xf32>
    %203 = arith.addf %200, %202 : vector<8x128xf32>
    %204 = arith.negf %203 : vector<8x128xf32>
    %205 = math.exp %204 : vector<8x128xf32>
    %cst_62 = arith.constant 1.000000e+00 : f32
    %206 = vector.broadcast %cst_62 : f32 to vector<8x128xf32>
    %207 = arith.addf %206, %205 : vector<8x128xf32>
    %208 = arith.divf %206, %207 : vector<8x128xf32>
    %209 = math.tanh %203 : vector<8x128xf32>
    %210 = vector.extract_strided_slice %208 {offsets = [0, 0], sizes = [8, 32], strides = [1, 1]} : vector<8x128xf32> to vector<8x32xf32>
    %211 = vector.extract_strided_slice %208 {offsets = [0, 32], sizes = [8, 32], strides = [1, 1]} : vector<8x128xf32> to vector<8x32xf32>
    %212 = vector.extract_strided_slice %208 {offsets = [0, 96], sizes = [8, 32], strides = [1, 1]} : vector<8x128xf32> to vector<8x32xf32>
    %213 = vector.extract_strided_slice %209 {offsets = [0, 64], sizes = [8, 32], strides = [1, 1]} : vector<8x128xf32> to vector<8x32xf32>
    %214 = arith.mulf %211, %194 : vector<8x32xf32>
    %215 = arith.mulf %210, %213 : vector<8x32xf32>
    %216 = arith.addf %214, %215 : vector<8x32xf32>
    %217 = math.tanh %216 : vector<8x32xf32>
    %218 = arith.mulf %212, %217 : vector<8x32xf32>
    %c8_i32_63 = arith.constant 8 : i32
    %219 = math.tanh %218 : vector<8x32xf32>
    %220 = arith.truncf %219 : vector<8x32xf32> to vector<8x32xbf16>
    %c0_64 = arith.constant 0 : index
    %c0_65 = arith.constant 0 : index
    %221 = vector.load %arg9[%c0_64, %c0_65] : memref<64x32xbf16, #tpu.memory_space<vmem>>, vector<32x32xbf16>
    %cst_66 = arith.constant dense<0.000000e+00> : vector<8x32xf32>
    %222 = tpu.matmul %220, %221, %cst_66 {dimension_numbers = #tpu.dot_dimension_numbers<[1], [0], [0], [1], [0, 0, 1, 1], [], []>} : vector<8x32xbf16>, vector<32x32xbf16>, vector<8x32xf32> -> vector<8x32xf32>
    %223 = math.tanh %216 : vector<8x32xf32>
    %224 = arith.truncf %223 : vector<8x32xf32> to vector<8x32xbf16>
    %c32 = arith.constant 32 : index
    %c0_67 = arith.constant 0 : index
    %225 = vector.load %arg9[%c32, %c0_67] : memref<64x32xbf16, #tpu.memory_space<vmem>>, vector<32x32xbf16>
    %cst_68 = arith.constant dense<0.000000e+00> : vector<8x32xf32>
    %226 = tpu.matmul %224, %225, %cst_68 {dimension_numbers = #tpu.dot_dimension_numbers<[1], [0], [0], [1], [0, 0, 1, 1], [], []>} : vector<8x32xbf16>, vector<32x32xbf16>, vector<8x32xf32> -> vector<8x32xf32>
    %227 = arith.addf %222, %226 : vector<8x32xf32>
    %c0_69 = arith.constant 0 : index
    %c0_70 = arith.constant 0 : index
    %228 = vector.load %arg10[%c0_69, %c0_70] : memref<1x32xf32, #tpu.memory_space<vmem>>, vector<1x32xf32>
    %229 = vector.broadcast %228 : vector<1x32xf32> to vector<8x32xf32>
    %230 = arith.addf %227, %229 : vector<8x32xf32>
    %231 = arith.mulf %30, %230 : vector<8x32xf32>
    %232 = math.tanh %231 : vector<8x32xf32>
    %233 = arith.truncf %232 : vector<8x32xf32> to vector<8x32xbf16>
    %c0_71 = arith.constant 0 : index
    %c0_72 = arith.constant 0 : index
    %234 = vector.load %arg11[%c0_71, %c0_72] : memref<32x32xbf16, #tpu.memory_space<vmem>>, vector<32x32xbf16>
    %cst_73 = arith.constant dense<0.000000e+00> : vector<8x32xf32>
    %235 = tpu.matmul %233, %234, %cst_73 {dimension_numbers = #tpu.dot_dimension_numbers<[1], [0], [0], [1], [0, 0, 1, 1], [], []>} : vector<8x32xbf16>, vector<32x32xbf16>, vector<8x32xf32> -> vector<8x32xf32>
    %c0_74 = arith.constant 0 : index
    %c0_75 = arith.constant 0 : index
    %236 = vector.load %arg12[%c0_74, %c0_75] : memref<1x32xf32, #tpu.memory_space<vmem>>, vector<1x32xf32>
    %237 = vector.broadcast %236 : vector<1x32xf32> to vector<8x32xf32>
    %238 = arith.addf %235, %237 : vector<8x32xf32>
    %239 = math.tanh %238 : vector<8x32xf32>
    %240 = arith.truncf %239 : vector<8x32xf32> to vector<8x32xbf16>
    %c0_76 = arith.constant 0 : index
    %c0_77 = arith.constant 0 : index
    %241 = vector.load %arg13[%c0_76, %c0_77] : memref<32x32xbf16, #tpu.memory_space<vmem>>, vector<32x32xbf16>
    %cst_78 = arith.constant dense<0.000000e+00> : vector<8x32xf32>
    %242 = tpu.matmul %240, %241, %cst_78 {dimension_numbers = #tpu.dot_dimension_numbers<[1], [0], [0], [1], [0, 0, 1, 1], [], []>} : vector<8x32xbf16>, vector<32x32xbf16>, vector<8x32xf32> -> vector<8x32xf32>
    %c0_79 = arith.constant 0 : index
    %c0_80 = arith.constant 0 : index
    %243 = vector.load %arg14[%c0_79, %c0_80] : memref<1x32xf32, #tpu.memory_space<vmem>>, vector<1x32xf32>
    %244 = vector.broadcast %243 : vector<1x32xf32> to vector<8x32xf32>
    %245 = arith.addf %242, %244 : vector<8x32xf32>
    %c0_81 = arith.constant 0 : index
    %c0_82 = arith.constant 0 : index
    %246 = vector.load %arg18[%c0_81, %c0_82] : memref<8x32xf32, #tpu.memory_space<vmem>>, vector<8x32xf32>
    tpu.vector_store %arg18[%c0_81, %c0_82], %245 {strides = array<i32>} : memref<8x32xf32, #tpu.memory_space<vmem>>, vector<8x32xf32>,
    return
  }
  func.func @transform_0(%arg0: i32) -> (i32, i32) {
    %c0_i32 = arith.constant 0 : i32
    %c0_i32_0 = arith.constant 0 : i32
    %c0_i32_1 = arith.constant 0 : i32
    return %c0_i32, %c0_i32_0 : i32, i32
  }
  func.func @transform_1(%arg0: i32) -> (i32, i32) {
    %c0_i32 = arith.constant 0 : i32
    %c0_i32_0 = arith.constant 0 : i32
    %c0_i32_1 = arith.constant 0 : i32
    return %c0_i32, %c0_i32_0 : i32, i32
  }
  func.func @transform_2(%arg0: i32) -> (i32, i32) {
    %c0_i32 = arith.constant 0 : i32
    %c0_i32_0 = arith.constant 0 : i32
    %c0_i32_1 = arith.constant 0 : i32
    return %c0_i32, %c0_i32_0 : i32, i32
  }
  func.func @transform_3(%arg0: i32) -> (i32, i32) {
    %c0_i32 = arith.constant 0 : i32
    %c0_i32_0 = arith.constant 0 : i32
    %c0_i32_1 = arith.constant 0 : i32
    return %c0_i32, %c0_i32_0 : i32, i32
  }
  func.func @transform_4(%arg0: i32) -> (i32, i32) {
    %c0_i32 = arith.constant 0 : i32
    %c0_i32_0 = arith.constant 0 : i32
    %c0_i32_1 = arith.constant 0 : i32
    return %c0_i32, %c0_i32_0 : i32, i32
  }
  func.func @transform_5(%arg0: i32) -> (i32, i32) {
    %c0_i32 = arith.constant 0 : i32
    %c0_i32_0 = arith.constant 0 : i32
    %c0_i32_1 = arith.constant 0 : i32
    return %c0_i32, %c0_i32_0 : i32, i32
  }
  func.func @transform_6(%arg0: i32) -> (i32, i32) {
    %c0_i32 = arith.constant 0 : i32
    %c0_i32_0 = arith.constant 0 : i32
    %c0_i32_1 = arith.constant 0 : i32
    return %c0_i32, %c0_i32_0 : i32, i32
  }
  func.func @transform_7(%arg0: i32) -> (i32, i32) {
    %c0_i32 = arith.constant 0 : i32
    %c0_i32_0 = arith.constant 0 : i32
    %c0_i32_1 = arith.constant 0 : i32
    return %c0_i32, %c0_i32_0 : i32, i32
  }
  func.func @transform_8(%arg0: i32) -> (i32, i32) {
    %c0_i32 = arith.constant 0 : i32
    %c0_i32_0 = arith.constant 0 : i32
    %c0_i32_1 = arith.constant 0 : i32
    return %c0_i32, %c0_i32_0 : i32, i32
  }
  func.func @transform_9(%arg0: i32) -> (i32, i32) {
    %c0_i32 = arith.constant 0 : i32
    %c0_i32_0 = arith.constant 0 : i32
    %c0_i32_1 = arith.constant 0 : i32
    return %c0_i32, %c0_i32_0 : i32, i32
  }
  func.func @transform_10(%arg0: i32) -> (i32, i32) {
    %c0_i32 = arith.constant 0 : i32
    %c0_i32_0 = arith.constant 0 : i32
    %c0_i32_1 = arith.constant 0 : i32
    return %c0_i32, %c0_i32_0 : i32, i32
  }
  func.func @transform_11(%arg0: i32) -> (i32, i32) {
    %c0_i32 = arith.constant 0 : i32
    %c0_i32_0 = arith.constant 0 : i32
    %c0_i32_1 = arith.constant 0 : i32
    return %c0_i32, %c0_i32_0 : i32, i32
  }
  func.func @transform_12(%arg0: i32) -> (i32, i32) {
    %c0_i32 = arith.constant 0 : i32
    %c0_i32_0 = arith.constant 0 : i32
    %c0_i32_1 = arith.constant 0 : i32
    return %c0_i32, %c0_i32_0 : i32, i32
  }
  func.func @transform_13(%arg0: i32) -> (i32, i32) {
    %c0_i32 = arith.constant 0 : i32
    %c0_i32_0 = arith.constant 0 : i32
    %c0_i32_1 = arith.constant 0 : i32
    return %c0_i32, %c0_i32_0 : i32, i32
  }
  func.func @transform_14(%arg0: i32) -> (i32, i32) {
    %c0_i32 = arith.constant 0 : i32
    %c0_i32_0 = arith.constant 0 : i32
    %c0_i32_1 = arith.constant 0 : i32
    return %c0_i32, %c0_i32_0 : i32, i32
  }
  func.func @transform_15(%arg0: i32) -> (i32, i32) {
    %c0_i32 = arith.constant 0 : i32
    %c0_i32_0 = arith.constant 0 : i32
    %c0_i32_1 = arith.constant 0 : i32
    return %c0_i32, %c0_i32_0 : i32, i32
  }
  func.func @transform_16(%arg0: i32) -> (i32, i32) {
    %c0_i32 = arith.constant 0 : i32
    %c0_i32_0 = arith.constant 0 : i32
    %c0_i32_1 = arith.constant 0 : i32
    return %c0_i32, %c0_i32_0 : i32, i32
  }
  func.func @transform_17(%arg0: i32) -> (i32, i32) {
    %c0_i32 = arith.constant 0 : i32
    %c0_i32_0 = arith.constant 0 : i32
    %c0_i32_1 = arith.constant 0 : i32
    return %c0_i32, %c0_i32_0 : i32, i32
  }
}

</mosaic_0001>

<llo_original>
// kernel: vqa_forward.4
$region0: #{vqa_forward.4}
  #allocation0 [shape = 'u32[]', space=smem, size = 0x4, offset = 0x4, fixed_abs, tag = 'smem constant byte address 0x4 - core index']
  #allocation1 [shape = 'u32[144,128]{1,0:T(1,128)}', space=vmem, size = 0x12000, scoped, tag = 'internal scratch']
  %s0 = inlined_call_operand.vmem [shape: f32[222,8], index: 0, kind: input, shape index: {}]
  %s1 = inlined_call_operand.vmem [shape: bf16[9,8,16], index: 1, kind: input, shape index: {}]
  %s2 = inlined_call_operand.vmem [shape: f32[1,16], index: 2, kind: input, shape index: {}]
  %s3 = inlined_call_operand.vmem [shape: f32[200,16], index: 3, kind: output, shape index: {}]
  %s4 = sld [smem:[#allocation0]]
  $region22: #{vqa_forward.4} parent=0
    _
  %s6 = ssub.s32 1, %s4
  %s7 = scalar_select 0, %s6, %s4
  // Predicated region
  $region2: #{vqa_forward.4} parent=0 // pred_check
    _
  $region3: #{vqa_forward.4} parent=0 // pred_check_branch
    %9 = sbr.rel (0) target = $region5
  $region4: #{vqa_forward.4} parent=0 // pred_region
    _
  $region5: #{vqa_forward.4} parent=0 // pred_fallthru
    _
  // Predicated region
  $region6: #{vqa_forward.4} parent=0 // pred_check
    _
  $region7: #{vqa_forward.4} parent=0 // pred_check_branch
    %11 = sbr.rel (0) target = $region9
  $region8: #{vqa_forward.4} parent=0 // pred_region
    _
  $region9: #{vqa_forward.4} parent=0 // pred_fallthru
    _
  // Predicated region
  $region10: #{vqa_forward.4} parent=0 // pred_check
    _
  $region11: #{vqa_forward.4} parent=0 // pred_check_branch
    %13 = sbr.rel (0) target = $region13
  $region12: #{vqa_forward.4} parent=0 // pred_region
    _
  $region13: #{vqa_forward.4} parent=0 // pred_fallthru
    _
  %v15 = vld [vmem:[%s0] sm:$0xff]
  %v16 = vld [vmem:[%s0 + $0x8] sm:$0xff]
  %v17 = vld [vmem:[%s0 + $0x10] sm:$0xff]
  %v18 = vld [vmem:[%s0 + $0x18] sm:$0xff]
  %v19 = vld [vmem:[%s0 + $0x20] sm:$0xff]
  %v20 = vld [vmem:[%s0 + $0x28] sm:$0xff]
  %v21 = vld [vmem:[%s0 + $0x30] sm:$0xff]
  %v22 = vld [vmem:[%s0 + $0x38] sm:$0xff]
  %v23 = vld [vmem:[%s0 + $0x40] sm:$0xff]
  %v24 = vld [vmem:[%s0 + $0x48] sm:$0xff]
  %v25 = vld [vmem:[%s0 + $0x50] sm:$0xff]
  %v26 = vld [vmem:[%s0 + $0x58] sm:$0xff]
  %v27 = vld [vmem:[%s0 + $0x60] sm:$0xff]
  %v28 = vld [vmem:[%s0 + $0x68] sm:$0xff]
  %v29 = vld [vmem:[%s0 + $0x70] sm:$0xff]
  %v30 = vld [vmem:[%s0 + $0x78] sm:$0xff]
  %v31 = vld [vmem:[%s0 + $0x80] sm:$0xff]
  %v32 = vld [vmem:[%s0 + $0x88] sm:$0xff]
  %v33 = vld [vmem:[%s0 + $0x90] sm:$0xff]
  %v34 = vld [vmem:[%s0 + $0x98] sm:$0xff]
  %v35 = vld [vmem:[%s0 + $0xa0] sm:$0xff]
  %v36 = vld [vmem:[%s0 + $0xa8] sm:$0xff]
  %v37 = vld [vmem:[%s0 + $0xb0] sm:$0xff]
  %v38 = vld [vmem:[%s0 + $0xb8] sm:$0xff]
  %v39 = vld [vmem:[%s0 + $0xc0] sm:$0xff]
  %v40 = vpack.c.bf16 %v16, %v15
  %v41 = vpack.c.bf16 %v18, %v17
  %v42 = vpack.c.bf16 %v20, %v19
  %v43 = vpack.c.bf16 %v22, %v21
  %v44 = vpack.c.bf16 %v24, %v23
  %v45 = vpack.c.bf16 %v26, %v25
  %v46 = vpack.c.bf16 %v28, %v27
  %v47 = vpack.c.bf16 %v30, %v29
  %v48 = vpack.c.bf16 %v32, %v31
  %v49 = vpack.c.bf16 %v34, %v33
  %v50 = vpack.c.bf16 %v36, %v35
  %v51 = vpack.c.bf16 %v38, %v37
  %v52 = vpack.c.bf16 %v39, %v39
  %v53 = vld [vmem:[%s1] sm:$0xf]
  %v54 = vld [vmem:[%s0 + $0x1] sm:$0xff]
  %v55 = vld [vmem:[%s0 + $0x9] sm:$0xff]
  %v56 = vld [vmem:[%s0 + $0x11] sm:$0xff]
  %v57 = vld [vmem:[%s0 + $0x19] sm:$0xff]
  %v58 = vld [vmem:[%s0 + $0x21] sm:$0xff]
  %v59 = vld [vmem:[%s0 + $0x29] sm:$0xff]
  %v60 = vld [vmem:[%s0 + $0x31] sm:$0xff]
  %v61 = vld [vmem:[%s0 + $0x39] sm:$0xff]
  %v62 = vld [vmem:[%s0 + $0x41] sm:$0xff]
  %v63 = vld [vmem:[%s0 + $0x49] sm:$0xff]
  %v64 = vld [vmem:[%s0 + $0x51] sm:$0xff]
  %v65 = vld [vmem:[%s0 + $0x59] sm:$0xff]
  %v66 = vld [vmem:[%s0 + $0x61] sm:$0xff]
  %v67 = vld [vmem:[%s0 + $0x69] sm:$0xff]
  %v68 = vld [vmem:[%s0 + $0x71] sm:$0xff]
  %v69 = vld [vmem:[%s0 + $0x79] sm:$0xff]
  %v70 = vld [vmem:[%s0 + $0x81] sm:$0xff]
  %v71 = vld [vmem:[%s0 + $0x89] sm:$0xff]
  %v72 = vld [vmem:[%s0 + $0x91] sm:$0xff]
  %v73 = vld [vmem:[%s0 + $0x99] sm:$0xff]
  %v74 = vld [vmem:[%s0 + $0xa1] sm:$0xff]
  %v75 = vld [vmem:[%s0 + $0xa9] sm:$0xff]
  %v76 = vld [vmem:[%s0 + $0xb1] sm:$0xff]
  %v77 = vld [vmem:[%s0 + $0xb9] sm:$0xff]
  %v78 = vld [vmem:[%s0 + $0xc1] sm:$0xff]
  %v79 = vpack.c.bf16 %v55, %v54
  %v80 = vpack.c.bf16 %v57, %v56
  %v81 = vpack.c.bf16 %v59, %v58
  %v82 = vpack.c.bf16 %v61, %v60
  %v83 = vpack.c.bf16 %v63, %v62
  %v84 = vpack.c.bf16 %v65, %v64
  %v85 = vpack.c.bf16 %v67, %v66
  %v86 = vpack.c.bf16 %v69, %v68
  %v87 = vpack.c.bf16 %v71, %v70
  %v88 = vpack.c.bf16 %v73, %v72
  %v89 = vpack.c.bf16 %v75, %v74
  %v90 = vpack.c.bf16 %v77, %v76
  %v91 = vpack.c.bf16 %v78, %v78
  %s92 = scalar_lea.vmem %s1, 4
  %v93 = vld [vmem:[%s92] sm:$0xf]
  %vm94 = vcmask 64512
  %v96 = vsel %vm94, %v79, 0
  %v99 = vsel %vm94, %v80, 0
  %v102 = vsel %vm94, %v81, 0
  %v105 = vsel %vm94, %v82, 0
  %v108 = vsel %vm94, %v83, 0
  %v111 = vsel %vm94, %v84, 0
  %v114 = vsel %vm94, %v85, 0
  %v117 = vsel %vm94, %v86, 0
  %v120 = vsel %vm94, %v87, 0
  %v123 = vsel %vm94, %v88, 0
  %v126 = vsel %vm94, %v89, 0
  %v129 = vsel %vm94, %v90, 0
  %v132 = vsel %vm94, %v91, 0
  %vm134 = vcmask 1043456
  %v136 = vsel %vm134, %v93, 0
  %138 = vmatprep.subr.bf16.mxu0 0
  %139 = vmatpush1.bf16.msra.mxu0 0
  %140 = vmatprep.subr.bf16.mxu0 0
  %141 = vmatpush1.bf16.msra.mxu0 0
  %142 = vmatprep.subr.bf16.mxu0 0
  %143 = vmatpush1.bf16.msra.mxu0 0
  %144 = vmatprep.subr.bf16.mxu0 0
  %145 = vmatpush1.bf16.msra.mxu0 0
  %146 = vmatprep.subr.bf16.mxu0 0
  %147 = vmatpush1.bf16.msra.mxu0 0
  %148 = vmatprep.subr.bf16.mxu0 0
  %149 = vmatpush1.bf16.msra.mxu0 0
  %150 = vmatprep.subr.bf16.mxu0 0
  %151 = vmatpush1.bf16.msra.mxu0 0
  %152 = vmatprep.subr.bf16.mxu0 0
  %153 = vmatpush1.bf16.msra.mxu0 %v136
  %154 = vmatprep.subr.bf16.mxu0 0
  %155 = vmatpush2.bf16.msra.mxu0 0
  %156 = vmatprep.subr.bf16.mxu0 0
  %157 = vmatpush2.bf16.msra.mxu0 0
  %158 = vmatprep.subr.bf16.mxu0 0
  %159 = vmatpush2.bf16.msra.mxu0 0
  %160 = vmatprep.subr.bf16.mxu0 0
  %161 = vmatpush2.bf16.msra.mxu0 0
  %162 = vmatprep.subr.bf16.mxu0 0
  %163 = vmatpush2.bf16.msra.mxu0 0
  %164 = vmatprep.subr.bf16.mxu0 0
  %165 = vmatpush2.bf16.msra.mxu0 0
  %166 = vmatprep.subr.bf16.mxu0 0
  %167 = vmatpush2.bf16.msra.mxu0 0
  %168 = vmatprep.subr.bf16.mxu0 0
  %169 = vmatpush2.bf16.msra.mxu0 0
  %170 = vmatprep.mubr.bf16.mxu0 0
  %171 = vmatmul.mubr.bf16.gmra.mxu0 %v96
  %v172 = vpop.f32.mrf.mxu0
  %v173 = vadd.f32 0.0, %v172
  %v174 = vpop.f32.mrf.mxu0
  %v175 = vpop.f32.mrf.mxu0
  %v176 = vadd.f32 0.0, %v175
  %v177 = vpop.f32.mrf.mxu0
  %178 = vmatprep.mubr.bf16.mxu0 0
  %179 = vmatmul.mubr.bf16.gmra.mxu0 %v99
  %v180 = vpop.f32.mrf.mxu0
  %v181 = vadd.f32 0.0, %v180
  %v182 = vpop.f32.mrf.mxu0
  %v183 = vpop.f32.mrf.mxu0
  %v184 = vadd.f32 0.0, %v183
  %v185 = vpop.f32.mrf.mxu0
  %186 = vmatprep.mubr.bf16.mxu0 0
  %187 = vmatmul.mubr.bf16.gmra.mxu0 %v102
  %v188 = vpop.f32.mrf.mxu0
  %v189 = vadd.f32 0.0, %v188
  %v190 = vpop.f32.mrf.mxu0
  %v191 = vpop.f32.mrf.mxu0
  %v192 = vadd.f32 0.0, %v191
  %v193 = vpop.f32.mrf.mxu0
  %194 = vmatprep.mubr.bf16.mxu0 0
  %195 = vmatmul.mubr.bf16.gmra.mxu0 %v105
  %v196 = vpop.f32.mrf.mxu0
  %v197 = vadd.f32 0.0, %v196
  %v198 = vpop.f32.mrf.mxu0
  %v199 = vpop.f32.mrf.mxu0
  %v200 = vadd.f32 0.0, %v199
  %v201 = vpop.f32.mrf.mxu0
  %202 = vmatprep.mubr.bf16.mxu0 0
  %203 = vmatmul.mubr.bf16.gmra.mxu0 %v108
  %v204 = vpop.f32.mrf.mxu0
  %v205 = vadd.f32 0.0, %v204
  %v206 = vpop.f32.mrf.mxu0
  %v207 = vpop.f32.mrf.mxu0
  %v208 = vadd.f32 0.0, %v207
  %v209 = vpop.f32.mrf.mxu0
  %210 = vmatprep.mubr.bf16.mxu0 0
  %211 = vmatmul.mubr.bf16.gmra.mxu0 %v111
  %v212 = vpop.f32.mrf.mxu0
  %v213 = vadd.f32 0.0, %v212
  %v214 = vpop.f32.mrf.mxu0
  %v215 = vpop.f32.mrf.mxu0
  %v216 = vadd.f32 0.0, %v215
  %v217 = vpop.f32.mrf.mxu0
  %218 = vmatprep.mubr.bf16.mxu0 0
  %219 = vmatmul.mubr.bf16.gmra.mxu0 %v114
  %v220 = vpop.f32.mrf.mxu0
  %v221 = vadd.f32 0.0, %v220
  %v222 = vpop.f32.mrf.mxu0
  %v223 = vpop.f32.mrf.mxu0
  %v224 = vadd.f32 0.0, %v223
  %v225 = vpop.f32.mrf.mxu0
  %226 = vmatprep.mubr.bf16.mxu0 0
  %227 = vmatmul.mubr.bf16.gmra.mxu0 %v117
  %v228 = vpop.f32.mrf.mxu0
  %v229 = vadd.f32 0.0, %v228
  %v230 = vpop.f32.mrf.mxu0
  %v231 = vpop.f32.mrf.mxu0
  %v232 = vadd.f32 0.0, %v231
  %v233 = vpop.f32.mrf.mxu0
  %234 = vmatprep.mubr.bf16.mxu0 0
  %235 = vmatmul.mubr.bf16.gmra.mxu0 %v120
  %v236 = vpop.f32.mrf.mxu0
  %v237 = vadd.f32 0.0, %v236
  %v238 = vpop.f32.mrf.mxu0
  %v239 = vpop.f32.mrf.mxu0
  %v240 = vadd.f32 0.0, %v239
  %v241 = vpop.f32.mrf.mxu0
  %242 = vmatprep.mubr.bf16.mxu0 0
  %243 = vmatmul.mubr.bf16.gmra.mxu0 %v123
  %v244 = vpop.f32.mrf.mxu0
  %v245 = vadd.f32 0.0, %v244
  %v246 = vpop.f32.mrf.mxu0
  %v247 = vpop.f32.mrf.mxu0
  %v248 = vadd.f32 0.0, %v247
  %v249 = vpop.f32.mrf.mxu0
  %250 = vmatprep.mubr.bf16.mxu0 0
  %251 = vmatmul.mubr.bf16.gmra.mxu0 %v126
  %v252 = vpop.f32.mrf.mxu0
  %v253 = vadd.f32 0.0, %v252
  %v254 = vpop.f32.mrf.mxu0
  %v255 = vpop.f32.mrf.mxu0
  %v256 = vadd.f32 0.0, %v255
  %v257 = vpop.f32.mrf.mxu0
  %258 = vmatprep.mubr.bf16.mxu0 0
  %259 = vmatmul.mubr.bf16.gmra.mxu0 %v129
  %v260 = vpop.f32.mrf.mxu0
  %v261 = vadd.f32 0.0, %v260
  %v262 = vpop.f32.mrf.mxu0
  %v263 = vpop.f32.mrf.mxu0
  %v264 = vadd.f32 0.0, %v263
  %v265 = vpop.f32.mrf.mxu0
  %266 = vmatprep.mubr.bf16.mxu0 0
  %267 = vmatmul.mubr.bf16.gmra.mxu0 %v132
  %v268 = vpop.f32.mrf.mxu0
  %v269 = vadd.f32 0.0, %v268
  %v270 = vpop.f32.mrf.mxu0
  %v271 = vpop.f32.mrf.mxu0
  %v272 = vpop.f32.mrf.mxu0
  %273 = vdwg.mxu0
  %v275 = vsel %vm94, %v40, 0
  %v278 = vsel %vm94, %v41, 0
  %v281 = vsel %vm94, %v42, 0
  %v284 = vsel %vm94, %v43, 0
  %v287 = vsel %vm94, %v44, 0
  %v290 = vsel %vm94, %v45, 0
  %v293 = vsel %vm94, %v46, 0
  %v296 = vsel %vm94, %v47, 0
  %v299 = vsel %vm94, %v48, 0
  %v302 = vsel %vm94, %v49, 0
  %v305 = vsel %vm94, %v50, 0
  %v308 = vsel %vm94, %v51, 0
  %v311 = vsel %vm94, %v52, 0
  %v314 = vsel %vm134, %v53, 0
  %316 = vmatprep.subr.bf16.mxu0 0
  %317 = vmatpush1.bf16.msra.mxu0 0
  %318 = vmatprep.subr.bf16.mxu0 0
  %319 = vmatpush1.bf16.msra.mxu0 0
  %320 = vmatprep.subr.bf16.mxu0 0
  %321 = vmatpush1.bf16.msra.mxu0 0
  %322 = vmatprep.subr.bf16.mxu0 0
  %323 = vmatpush1.bf16.msra.mxu0 0
  %324 = vmatprep.subr.bf16.mxu0 0
  %325 = vmatpush1.bf16.msra.mxu0 0
  %326 = vmatprep.subr.bf16.mxu0 0
  %327 = vmatpush1.bf16.msra.mxu0 0
  %328 = vmatprep.subr.bf16.mxu0 0
  %329 = vmatpush1.bf16.msra.mxu0 0
  %330 = vmatprep.subr.bf16.mxu0 0
  %331 = vmatpush1.bf16.msra.mxu0 %v314
  %332 = vmatprep.subr.bf16.mxu0 0
  %333 = vmatpush2.bf16.msra.mxu0 0
  %334 = vmatprep.subr.bf16.mxu0 0
  %335 = vmatpush2.bf16.msra.mxu0 0
  %336 = vmatprep.subr.bf16.mxu0 0
  %337 = vmatpush2.bf16.msra.mxu0 0
  %338 = vmatprep.subr.bf16.mxu0 0
  %339 = vmatpush2.bf16.msra.mxu0 0
  %340 = vmatprep.subr.bf16.mxu0 0
  %341 = vmatpush2.bf16.msra.mxu0 0
  %342 = vmatprep.subr.bf16.mxu0 0
  %343 = vmatpush2.bf16.msra.mxu0 0
  %344 = vmatprep.subr.bf16.mxu0 0
  %345 = vmatpush2.bf16.msra.mxu0 0
  %346 = vmatprep.subr.bf16.mxu0 0
  %347 = vmatpush2.bf16.msra.mxu0 0
  %348 = vmatprep.mubr.bf16.mxu0 0
  %349 = vmatmul.mubr.bf16.gmra.mxu0 %v275
  %v350 = vpop.f32.mrf.mxu0
  %v351 = vadd.f32 %v173, %v350
  %v352 = vpop.f32.mrf.mxu0
  %v353 = vpop.f32.mrf.mxu0
  %v354 = vadd.f32 %v176, %v353
  %v355 = vpop.f32.mrf.mxu0
  %356 = vmatprep.mubr.bf16.mxu0 0
  %357 = vmatmul.mubr.bf16.gmra.mxu0 %v278
  %v358 = vpop.f32.mrf.mxu0
  %v359 = vadd.f32 %v181, %v358
  %v360 = vpop.f32.mrf.mxu0
  %v361 = vpop.f32.mrf.mxu0
  %v362 = vadd.f32 %v184, %v361
  %v363 = vpop.f32.mrf.mxu0
  %364 = vmatprep.mubr.bf16.mxu0 0
  %365 = vmatmul.mubr.bf16.gmra.mxu0 %v281
  %v366 = vpop.f32.mrf.mxu0
  %v367 = vadd.f32 %v189, %v366
  %v368 = vpop.f32.mrf.mxu0
  %v369 = vpop.f32.mrf.mxu0
  %v370 = vadd.f32 %v192, %v369
  %v371 = vpop.f32.mrf.mxu0
  %372 = vmatprep.mubr.bf16.mxu0 0
  %373 = vmatmul.mubr.bf16.gmra.mxu0 %v284
  %v374 = vpop.f32.mrf.mxu0
  %v375 = vadd.f32 %v197, %v374
  %v376 = vpop.f32.mrf.mxu0
  %v377 = vpop.f32.mrf.mxu0
  %v378 = vadd.f32 %v200, %v377
  %v379 = vpop.f32.mrf.mxu0
  %380 = vmatprep.mubr.bf16.mxu0 0
  %381 = vmatmul.mubr.bf16.gmra.mxu0 %v287
  %v382 = vpop.f32.mrf.mxu0
  %v383 = vadd.f32 %v205, %v382
  %v384 = vpop.f32.mrf.mxu0
  %v385 = vpop.f32.mrf.mxu0
  %v386 = vadd.f32 %v208, %v385
  %v387 = vpop.f32.mrf.mxu0
  %388 = vmatprep.mubr.bf16.mxu0 0
  %389 = vmatmul.mubr.bf16.gmra.mxu0 %v290
  %v390 = vpop.f32.mrf.mxu0
  %v391 = vadd.f32 %v213, %v390
  %v392 = vpop.f32.mrf.mxu0
  %v393 = vpop.f32.mrf.mxu0
  %v394 = vadd.f32 %v216, %v393
  %v395 = vpop.f32.mrf.mxu0
  %396 = vmatprep.mubr.bf16.mxu0 0
  %397 = vmatmul.mubr.bf16.gmra.mxu0 %v293
  %v398 = vpop.f32.mrf.mxu0
  %v399 = vadd.f32 %v221, %v398
  %v400 = vpop.f32.mrf.mxu0
  %v401 = vpop.f32.mrf.mxu0
  %v402 = vadd.f32 %v224, %v401
  %v403 = vpop.f32.mrf.mxu0
  %404 = vmatprep.mubr.bf16.mxu0 0
  %405 = vmatmul.mubr.bf16.gmra.mxu0 %v296
  %v406 = vpop.f32.mrf.mxu0
  %v407 = vadd.f32 %v229, %v406
  %v408 = vpop.f32.mrf.mxu0
  %v409 = vpop.f32.mrf.mxu0
  %v410 = vadd.f32 %v232, %v409
  %v411 = vpop.f32.mrf.mxu0
  %412 = vmatprep.mubr.bf16.mxu0 0
  %413 = vmatmul.mubr.bf16.gmra.mxu0 %v299
  %v414 = vpop.f32.mrf.mxu0
  %v415 = vadd.f32 %v237, %v414
  %v416 = vpop.f32.mrf.mxu0
  %v417 = vpop.f32.mrf.mxu0
  %v418 = vadd.f32 %v240, %v417
  %v419 = vpop.f32.mrf.mxu0
  %420 = vmatprep.mubr.bf16.mxu0 0
  %421 = vmatmul.mubr.bf16.gmra.mxu0 %v302
  %v422 = vpop.f32.mrf.mxu0
  %v423 = vadd.f32 %v245, %v422
  %v424 = vpop.f32.mrf.mxu0
  %v425 = vpop.f32.mrf.mxu0
  %v426 = vadd.f32 %v248, %v425
  %v427 = vpop.f32.mrf.mxu0
  %428 = vmatprep.mubr.bf16.mxu0 0
  %429 = vmatmul.mubr.bf16.gmra.mxu0 %v305
  %v430 = vpop.f32.mrf.mxu0
  %v431 = vadd.f32 %v253, %v430
  %v432 = vpop.f32.mrf.mxu0
  %v433 = vpop.f32.mrf.mxu0
  %v434 = vadd.f32 %v256, %v433
  %v435 = vpop.f32.mrf.mxu0
  %436 = vmatprep.mubr.bf16.mxu0 0
  %437 = vmatmul.mubr.bf16.gmra.mxu0 %v308
  %v438 = vpop.f32.mrf.mxu0
  %v439 = vadd.f32 %v261, %v438
  %v440 = vpop.f32.mrf.mxu0
  %v441 = vpop.f32.mrf.mxu0
  %v442 = vadd.f32 %v264, %v441
  %v443 = vpop.f32.mrf.mxu0
  %444 = vmatprep.mubr.bf16.mxu0 0
  %445 = vmatmul.mubr.bf16.gmra.mxu0 %v311
  %v446 = vpop.f32.mrf.mxu0
  %v447 = vadd.f32 %v269, %v446
  %v448 = vpop.f32.mrf.mxu0
  %v449 = vpop.f32.mrf.mxu0
  %v450 = vpop.f32.mrf.mxu0
  %451 = vdwg.mxu0
  %v452 = vld [vmem:[%s0 + $0x2] sm:$0xff]
  %v453 = vld [vmem:[%s0 + $0xa] sm:$0xff]
  %v454 = vld [vmem:[%s0 + $0x12] sm:$0xff]
  %v455 = vld [vmem:[%s0 + $0x1a] sm:$0xff]
  %v456 = vld [vmem:[%s0 + $0x22] sm:$0xff]
  %v457 = vld [vmem:[%s0 + $0x2a] sm:$0xff]
  %v458 = vld [vmem:[%s0 + $0x32] sm:$0xff]
  %v459 = vld [vmem:[%s0 + $0x3a] sm:$0xff]
  %v460 = vld [vmem:[%s0 + $0x42] sm:$0xff]
  %v461 = vld [vmem:[%s0 + $0x4a] sm:$0xff]
  %v462 = vld [vmem:[%s0 + $0x52] sm:$0xff]
  %v463 = vld [vmem:[%s0 + $0x5a] sm:$0xff]
  %v464 = vld [vmem:[%s0 + $0x62] sm:$0xff]
  %v465 = vld [vmem:[%s0 + $0x6a] sm:$0xff]
  %v466 = vld [vmem:[%s0 + $0x72] sm:$0xff]
  %v467 = vld [vmem:[%s0 + $0x7a] sm:$0xff]
  %v468 = vld [vmem:[%s0 + $0x82] sm:$0xff]
  %v469 = vld [vmem:[%s0 + $0x8a] sm:$0xff]
  %v470 = vld [vmem:[%s0 + $0x92] sm:$0xff]
  %v471 = vld [vmem:[%s0 + $0x9a] sm:$0xff]
  %v472 = vld [vmem:[%s0 + $0xa2] sm:$0xff]
  %v473 = vld [vmem:[%s0 + $0xaa] sm:$0xff]
  %v474 = vld [vmem:[%s0 + $0xb2] sm:$0xff]
  %v475 = vld [vmem:[%s0 + $0xba] sm:$0xff]
  %v476 = vld [vmem:[%s0 + $0xc2] sm:$0xff]
  %v477 = vpack.c.bf16 %v453, %v452
  %v478 = vpack.c.bf16 %v455, %v454
  %v479 = vpack.c.bf16 %v457, %v456
  %v480 = vpack.c.bf16 %v459, %v458
  %v481 = vpack.c.bf16 %v461, %v460
  %v482 = vpack.c.bf16 %v463, %v462
  %v483 = vpack.c.bf16 %v465, %v464
  %v484 = vpack.c.bf16 %v467, %v466
  %v485 = vpack.c.bf16 %v469, %v468
  %v486 = vpack.c.bf16 %v471, %v470
  %v487 = vpack.c.bf16 %v473, %v472
  %v488 = vpack.c.bf16 %v475, %v474
  %v489 = vpack.c.bf16 %v476, %v476
  %s490 = scalar_lea.vmem %s1, 8
  %v491 = vld [vmem:[%s490] sm:$0xf]
  %v493 = vsel %vm94, %v477, 0
  %v496 = vsel %vm94, %v478, 0
  %v499 = vsel %vm94, %v479, 0
  %v502 = vsel %vm94, %v480, 0
  %v505 = vsel %vm94, %v481, 0
  %v508 = vsel %vm94, %v482, 0
  %v511 = vsel %vm94, %v483, 0
  %v514 = vsel %vm94, %v484, 0
  %v517 = vsel %vm94, %v485, 0
  %v520 = vsel %vm94, %v486, 0
  %v523 = vsel %vm94, %v487, 0
  %v526 = vsel %vm94, %v488, 0
  %v529 = vsel %vm94, %v489, 0
  %v532 = vsel %vm134, %v491, 0
  %534 = vmatprep.subr.bf16.mxu0 0
  %535 = vmatpush1.bf16.msra.mxu0 0
  %536 = vmatprep.subr.bf16.mxu0 0
  %537 = vmatpush1.bf16.msra.mxu0 0
  %538 = vmatprep.subr.bf16.mxu0 0
  %539 = vmatpush1.bf16.msra.mxu0 0
  %540 = vmatprep.subr.bf16.mxu0 0
  %541 = vmatpush1.bf16.msra.mxu0 0
  %542 = vmatprep.subr.bf16.mxu0 0
  %543 = vmatpush1.bf16.msra.mxu0 0
  %544 = vmatprep.subr.bf16.mxu0 0
  %545 = vmatpush1.bf16.msra.mxu0 0
  %546 = vmatprep.subr.bf16.mxu0 0
  %547 = vmatpush1.bf16.msra.mxu0 0
  %548 = vmatprep.subr.bf16.mxu0 0
  %549 = vmatpush1.bf16.msra.mxu0 %v532
  %550 = vmatprep.subr.bf16.mxu0 0
  %551 = vmatpush2.bf16.msra.mxu0 0
  %552 = vmatprep.subr.bf16.mxu0 0
  %553 = vmatpush2.bf16.msra.mxu0 0
  %554 = vmatprep.subr.bf16.mxu0 0
  %555 = vmatpush2.bf16.msra.mxu0 0
  %556 = vmatprep.subr.bf16.mxu0 0
  %557 = vmatpush2.bf16.msra.mxu0 0
  %558 = vmatprep.subr.bf16.mxu0 0
  %559 = vmatpush2.bf16.msra.mxu0 0
  %560 = vmatprep.subr.bf16.mxu0 0
  %561 = vmatpush2.bf16.msra.mxu0 0
  %562 = vmatprep.subr.bf16.mxu0 0
  %563 = vmatpush2.bf16.msra.mxu0 0
  %564 = vmatprep.subr.bf16.mxu0 0
  %565 = vmatpush2.bf16.msra.mxu0 0
  %566 = vmatprep.mubr.bf16.mxu0 0
  %567 = vmatmul.mubr.bf16.gmra.mxu0 %v493
  %v568 = vpop.f32.mrf.mxu0
  %v569 = vadd.f32 0.0, %v568
  %v570 = vpop.f32.mrf.mxu0
  %v571 = vpop.f32.mrf.mxu0
  %v572 = vadd.f32 0.0, %v571
  %v573 = vpop.f32.mrf.mxu0
  %574 = vmatprep.mubr.bf16.mxu0 0
  %575 = vmatmul.mubr.bf16.gmra.mxu0 %v496
  %v576 = vpop.f32.mrf.mxu0
  %v577 = vadd.f32 0.0, %v576
  %v578 = vpop.f32.mrf.mxu0
  %v579 = vpop.f32.mrf.mxu0
  %v580 = vadd.f32 0.0, %v579
  %v581 = vpop.f32.mrf.mxu0
  %582 = vmatprep.mubr.bf16.mxu0 0
  %583 = vmatmul.mubr.bf16.gmra.mxu0 %v499
  %v584 = vpop.f32.mrf.mxu0
  %v585 = vadd.f32 0.0, %v584
  %v586 = vpop.f32.mrf.mxu0
  %v587 = vpop.f32.mrf.mxu0
  %v588 = vadd.f32 0.0, %v587
  %v589 = vpop.f32.mrf.mxu0
  %590 = vmatprep.mubr.bf16.mxu0 0
  %591 = vmatmul.mubr.bf16.gmra.mxu0 %v502
  %v592 = vpop.f32.mrf.mxu0
  %v593 = vadd.f32 0.0, %v592
  %v594 = vpop.f32.mrf.mxu0
  %v595 = vpop.f32.mrf.mxu0
  %v596 = vadd.f32 0.0, %v595
  %v597 = vpop.f32.mrf.mxu0
  %598 = vmatprep.mubr.bf16.mxu0 0
  %599 = vmatmul.mubr.bf16.gmra.mxu0 %v505
  %v600 = vpop.f32.mrf.mxu0
  %v601 = vadd.f32 0.0, %v600
  %v602 = vpop.f32.mrf.mxu0
  %v603 = vpop.f32.mrf.mxu0
  %v604 = vadd.f32 0.0, %v603
  %v605 = vpop.f32.mrf.mxu0
  %606 = vmatprep.mubr.bf16.mxu0 0
  %607 = vmatmul.mubr.bf16.gmra.mxu0 %v508
  %v608 = vpop.f32.mrf.mxu0
  %v609 = vadd.f32 0.0, %v608
  %v610 = vpop.f32.mrf.mxu0
  %v611 = vpop.f32.mrf.mxu0
  %v612 = vadd.f32 0.0, %v611
  %v613 = vpop.f32.mrf.mxu0
  %614 = vmatprep.mubr.bf16.mxu0 0
  %615 = vmatmul.mubr.bf16.gmra.mxu0 %v511
  %v616 = vpop.f32.mrf.mxu0
  %v617 = vadd.f32 0.0, %v616
  %v618 = vpop.f32.mrf.mxu0
  %v619 = vpop.f32.mrf.mxu0
  %v620 = vadd.f32 0.0, %v619
  %v621 = vpop.f32.mrf.mxu0
  %622 = vmatprep.mubr.bf16.mxu0 0
  %623 = vmatmul.mubr.bf16.gmra.mxu0 %v514
  %v624 = vpop.f32.mrf.mxu0
  %v625 = vadd.f32 0.0, %v624
  %v626 = vpop.f32.mrf.mxu0
  %v627 = vpop.f32.mrf.mxu0
  %v628 = vadd.f32 0.0, %v627
  %v629 = vpop.f32.mrf.mxu0
  %630 = vmatprep.mubr.bf16.mxu0 0
  %631 = vmatmul.mubr.bf16.gmra.mxu0 %v517
  %v632 = vpop.f32.mrf.mxu0
  %v633 = vadd.f32 0.0, %v632
  %v634 = vpop.f32.mrf.mxu0
  %v635 = vpop.f32.mrf.mxu0
  %v636 = vadd.f32 0.0, %v635
  %v637 = vpop.f32.mrf.mxu0
  %638 = vmatprep.mubr.bf16.mxu0 0
  %639 = vmatmul.mubr.bf16.gmra.mxu0 %v520
  %v640 = vpop.f32.mrf.mxu0
  %v641 = vadd.f32 0.0, %v640
  %v642 = vpop.f32.mrf.mxu0
  %v643 = vpop.f32.mrf.mxu0
  %v644 = vadd.f32 0.0, %v643
  %v645 = vpop.f32.mrf.mxu0
  %646 = vmatprep.mubr.bf16.mxu0 0
  %647 = vmatmul.mubr.bf16.gmra.mxu0 %v523
  %v648 = vpop.f32.mrf.mxu0
  %v649 = vadd.f32 0.0, %v648
  %v650 = vpop.f32.mrf.mxu0
  %v651 = vpop.f32.mrf.mxu0
  %v652 = vadd.f32 0.0, %v651
  %v653 = vpop.f32.mrf.mxu0
  %654 = vmatprep.mubr.bf16.mxu0 0
  %655 = vmatmul.mubr.bf16.gmra.mxu0 %v526
  %v656 = vpop.f32.mrf.mxu0
  %v657 = vadd.f32 0.0, %v656
  %v658 = vpop.f32.mrf.mxu0
  %v659 = vpop.f32.mrf.mxu0
  %v660 = vadd.f32 0.0, %v659
  %v661 = vpop.f32.mrf.mxu0
  %662 = vmatprep.mubr.bf16.mxu0 0
  %663 = vmatmul.mubr.bf16.gmra.mxu0 %v529
  %v664 = vpop.f32.mrf.mxu0
  %v665 = vadd.f32 0.0, %v664
  %v666 = vpop.f32.mrf.mxu0
  %v667 = vpop.f32.mrf.mxu0
  %v668 = vpop.f32.mrf.mxu0
  %669 = vdwg.mxu0
  %v670 = vadd.f32 %v351, %v569
  %v671 = vadd.f32 %v354, %v572
  %v672 = vadd.f32 %v359, %v577
  %v673 = vadd.f32 %v362, %v580
  %v674 = vadd.f32 %v367, %v585
  %v675 = vadd.f32 %v370, %v588
  %v676 = vadd.f32 %v375, %v593
  %v677 = vadd.f32 %v378, %v596
  %v678 = vadd.f32 %v383, %v601
  %v679 = vadd.f32 %v386, %v604
  %v680 = vadd.f32 %v391, %v609
  %v681 = vadd.f32 %v394, %v612
  %v682 = vadd.f32 %v399, %v617
  %v683 = vadd.f32 %v402, %v620
  %v684 = vadd.f32 %v407, %v625
  %v685 = vadd.f32 %v410, %v628
  %v686 = vadd.f32 %v415, %v633
  %v687 = vadd.f32 %v418, %v636
  %v688 = vadd.f32 %v423, %v641
  %v689 = vadd.f32 %v426, %v644
  %v690 = vadd.f32 %v431, %v649
  %v691 = vadd.f32 %v434, %v652
  %v692 = vadd.f32 %v439, %v657
  %v693 = vadd.f32 %v442, %v660
  %v694 = vadd.f32 %v447, %v665
  %v695 = vld [vmem:[%s0 + $0xa] sm:$0xff]
  %v696 = vld [vmem:[%s0 + $0x12] sm:$0xff]
  %v697 = vld [vmem:[%s0 + $0x1a] sm:$0xff]
  %v698 = vld [vmem:[%s0 + $0x22] sm:$0xff]
  %v699 = vld [vmem:[%s0 + $0x2a] sm:$0xff]
  %v700 = vld [vmem:[%s0 + $0x32] sm:$0xff]
  %v701 = vld [vmem:[%s0 + $0x3a] sm:$0xff]
  %v702 = vld [vmem:[%s0 + $0x42] sm:$0xff]
  %v703 = vld [vmem:[%s0 + $0x4a] sm:$0xff]
  %v704 = vld [vmem:[%s0 + $0x52] sm:$0xff]
  %v705 = vld [vmem:[%s0 + $0x5a] sm:$0xff]
  %v706 = vld [vmem:[%s0 + $0x62] sm:$0xff]
  %v707 = vld [vmem:[%s0 + $0x6a] sm:$0xff]
  %v708 = vld [vmem:[%s0 + $0x72] sm:$0xff]
  %v709 = vld [vmem:[%s0 + $0x7a] sm:$0xff]
  %v710 = vld [vmem:[%s0 + $0x82] sm:$0xff]
  %v711 = vld [vmem:[%s0 + $0x8a] sm:$0xff]
  %v712 = vld [vmem:[%s0 + $0x92] sm:$0xff]
  %v713 = vld [vmem:[%s0 + $0x9a] sm:$0xff]
  %v714 = vld [vmem:[%s0 + $0xa2] sm:$0xff]
  %v715 = vld [vmem:[%s0 + $0xaa] sm:$0xff]
  %v716 = vld [vmem:[%s0 + $0xb2] sm:$0xff]
  %v717 = vld [vmem:[%s0 + $0xba] sm:$0xff]
  %v718 = vld [vmem:[%s0 + $0xc2] sm:$0xff]
  %v719 = vld [vmem:[%s0 + $0xca] sm:$0xff]
  %v720 = vpack.c.bf16 %v696, %v695
  %v721 = vpack.c.bf16 %v698, %v697
  %v722 = vpack.c.bf16 %v700, %v699
  %v723 = vpack.c.bf16 %v702, %v701
  %v724 = vpack.c.bf16 %v704, %v703
  %v725 = vpack.c.bf16 %v706, %v705
  %v726 = vpack.c.bf16 %v708, %v707
  %v727 = vpack.c.bf16 %v710, %v709
  %v728 = vpack.c.bf16 %v712, %v711
  %v729 = vpack.c.bf16 %v714, %v713
  %v730 = vpack.c.bf16 %v716, %v715
  %v731 = vpack.c.bf16 %v718, %v717
  %v732 = vpack.c.bf16 %v719, %v719
  %s733 = scalar_lea.vmem %s1, 12
  %v734 = vld [vmem:[%s733] sm:$0xf]
  %v736 = vsel %vm94, %v720, 0
  %v739 = vsel %vm94, %v721, 0
  %v742 = vsel %vm94, %v722, 0
  %v745 = vsel %vm94, %v723, 0
  %v748 = vsel %vm94, %v724, 0
  %v751 = vsel %vm94, %v725, 0
  %v754 = vsel %vm94, %v726, 0
  %v757 = vsel %vm94, %v727, 0
  %v760 = vsel %vm94, %v728, 0
  %v763 = vsel %vm94, %v729, 0
  %v766 = vsel %vm94, %v730, 0
  %v769 = vsel %vm94, %v731, 0
  %v772 = vsel %vm94, %v732, 0
  %v775 = vsel %vm134, %v734, 0
  %777 = vmatprep.subr.bf16.mxu0 0
  %778 = vmatpush1.bf16.msra.mxu0 0
  %779 = vmatprep.subr.bf16.mxu0 0
  %780 = vmatpush1.bf16.msra.mxu0 0
  %781 = vmatprep.subr.bf16.mxu0 0
  %782 = vmatpush1.bf16.msra.mxu0 0
  %783 = vmatprep.subr.bf16.mxu0 0
  %784 = vmatpush1.bf16.msra.mxu0 0
  %785 = vmatprep.subr.bf16.mxu0 0
  %786 = vmatpush1.bf16.msra.mxu0 0
  %787 = vmatprep.subr.bf16.mxu0 0
  %788 = vmatpush1.bf16.msra.mxu0 0
  %789 = vmatprep.subr.bf16.mxu0 0
  %790 = vmatpush1.bf16.msra.mxu0 0
  %791 = vmatprep.subr.bf16.mxu0 0
  %792 = vmatpush1.bf16.msra.mxu0 %v775
  %793 = vmatprep.subr.bf16.mxu0 0
  %794 = vmatpush2.bf16.msra.mxu0 0
  %795 = vmatprep.subr.bf16.mxu0 0
  %796 = vmatpush2.bf16.msra.mxu0 0
  %797 = vmatprep.subr.bf16.mxu0 0
  %798 = vmatpush2.bf16.msra.mxu0 0
  %799 = vmatprep.subr.bf16.mxu0 0
  %800 = vmatpush2.bf16.msra.mxu0 0
  %801 = vmatprep.subr.bf16.mxu0 0
  %802 = vmatpush2.bf16.msra.mxu0 0
  %803 = vmatprep.subr.bf16.mxu0 0
  %804 = vmatpush2.bf16.msra.mxu0 0
  %805 = vmatprep.subr.bf16.mxu0 0
  %806 = vmatpush2.bf16.msra.mxu0 0
  %807 = vmatprep.subr.bf16.mxu0 0
  %808 = vmatpush2.bf16.msra.mxu0 0
  %809 = vmatprep.mubr.bf16.mxu0 0
  %810 = vmatmul.mubr.bf16.gmra.mxu0 %v736
  %v811 = vpop.f32.mrf.mxu0
  %v812 = vadd.f32 0.0, %v811
  %v813 = vpop.f32.mrf.mxu0
  %v814 = vpop.f32.mrf.mxu0
  %v815 = vadd.f32 0.0, %v814
  %v816 = vpop.f32.mrf.mxu0
  %817 = vmatprep.mubr.bf16.mxu0 0
  %818 = vmatmul.mubr.bf16.gmra.mxu0 %v739
  %v819 = vpop.f32.mrf.mxu0
  %v820 = vadd.f32 0.0, %v819
  %v821 = vpop.f32.mrf.mxu0
  %v822 = vpop.f32.mrf.mxu0
  %v823 = vadd.f32 0.0, %v822
  %v824 = vpop.f32.mrf.mxu0
  %825 = vmatprep.mubr.bf16.mxu0 0
  %826 = vmatmul.mubr.bf16.gmra.mxu0 %v742
  %v827 = vpop.f32.mrf.mxu0
  %v828 = vadd.f32 0.0, %v827
  %v829 = vpop.f32.mrf.mxu0
  %v830 = vpop.f32.mrf.mxu0
  %v831 = vadd.f32 0.0, %v830
  %v832 = vpop.f32.mrf.mxu0
  %833 = vmatprep.mubr.bf16.mxu0 0
  %834 = vmatmul.mubr.bf16.gmra.mxu0 %v745
  %v835 = vpop.f32.mrf.mxu0
  %v836 = vadd.f32 0.0, %v835
  %v837 = vpop.f32.mrf.mxu0
  %v838 = vpop.f32.mrf.mxu0
  %v839 = vadd.f32 0.0, %v838
  %v840 = vpop.f32.mrf.mxu0
  %841 = vmatprep.mubr.bf16.mxu0 0
  %842 = vmatmul.mubr.bf16.gmra.mxu0 %v748
  %v843 = vpop.f32.mrf.mxu0
  %v844 = vadd.f32 0.0, %v843
  %v845 = vpop.f32.mrf.mxu0
  %v846 = vpop.f32.mrf.mxu0
  %v847 = vadd.f32 0.0, %v846
  %v848 = vpop.f32.mrf.mxu0
  %849 = vmatprep.mubr.bf16.mxu0 0
  %850 = vmatmul.mubr.bf16.gmra.mxu0 %v751
  %v851 = vpop.f32.mrf.mxu0
  %v852 = vadd.f32 0.0, %v851
  %v853 = vpop.f32.mrf.mxu0
  %v854 = vpop.f32.mrf.mxu0
  %v855 = vadd.f32 0.0, %v854
  %v856 = vpop.f32.mrf.mxu0
  %857 = vmatprep.mubr.bf16.mxu0 0
  %858 = vmatmul.mubr.bf16.gmra.mxu0 %v754
  %v859 = vpop.f32.mrf.mxu0
  %v860 = vadd.f32 0.0, %v859
  %v861 = vpop.f32.mrf.mxu0
  %v862 = vpop.f32.mrf.mxu0
  %v863 = vadd.f32 0.0, %v862
  %v864 = vpop.f32.mrf.mxu0
  %865 = vmatprep.mubr.bf16.mxu0 0
  %866 = vmatmul.mubr.bf16.gmra.mxu0 %v757
  %v867 = vpop.f32.mrf.mxu0
  %v868 = vadd.f32 0.0, %v867
  %v869 = vpop.f32.mrf.mxu0
  %v870 = vpop.f32.mrf.mxu0
  %v871 = vadd.f32 0.0, %v870
  %v872 = vpop.f32.mrf.mxu0
  %873 = vmatprep.mubr.bf16.mxu0 0
  %874 = vmatmul.mubr.bf16.gmra.mxu0 %v760
  %v875 = vpop.f32.mrf.mxu0
  %v876 = vadd.f32 0.0, %v875
  %v877 = vpop.f32.mrf.mxu0
  %v878 = vpop.f32.mrf.mxu0
  %v879 = vadd.f32 0.0, %v878
  %v880 = vpop.f32.mrf.mxu0
  %881 = vmatprep.mubr.bf16.mxu0 0
  %882 = vmatmul.mubr.bf16.gmra.mxu0 %v763
  %v883 = vpop.f32.mrf.mxu0
  %v884 = vadd.f32 0.0, %v883
  %v885 = vpop.f32.mrf.mxu0
  %v886 = vpop.f32.mrf.mxu0
  %v887 = vadd.f32 0.0, %v886
  %v888 = vpop.f32.mrf.mxu0
  %889 = vmatprep.mubr.bf16.mxu0 0
  %890 = vmatmul.mubr.bf16.gmra.mxu0 %v766
  %v891 = vpop.f32.mrf.mxu0
  %v892 = vadd.f32 0.0, %v891
  %v893 = vpop.f32.mrf.mxu0
  %v894 = vpop.f32.mrf.mxu0
  %v895 = vadd.f32 0.0, %v894
  %v896 = vpop.f32.mrf.mxu0
  %897 = vmatprep.mubr.bf16.mxu0 0
  %898 = vmatmul.mubr.bf16.gmra.mxu0 %v769
  %v899 = vpop.f32.mrf.mxu0
  %v900 = vadd.f32 0.0, %v899
  %v901 = vpop.f32.mrf.mxu0
  %v902 = vpop.f32.mrf.mxu0
  %v903 = vadd.f32 0.0, %v902
  %v904 = vpop.f32.mrf.mxu0
  %905 = vmatprep.mubr.bf16.mxu0 0
  %906 = vmatmul.mubr.bf16.gmra.mxu0 %v772
  %v907 = vpop.f32.mrf.mxu0
  %v908 = vadd.f32 0.0, %v907
  %v909 = vpop.f32.mrf.mxu0
  %v910 = vpop.f32.mrf.mxu0
  %v911 = vpop.f32.mrf.mxu0
  %912 = vdwg.mxu0
  %v913 = vadd.f32 %v670, %v812
  %v914 = vadd.f32 %v671, %v815
  %v915 = vadd.f32 %v672, %v820
  %v916 = vadd.f32 %v673, %v823
  %v917 = vadd.f32 %v674, %v828
  %v918 = vadd.f32 %v675, %v831
  %v919 = vadd.f32 %v676, %v836
  %v920 = vadd.f32 %v677, %v839
  %v921 = vadd.f32 %v678, %v844
  %v922 = vadd.f32 %v679, %v847
  %v923 = vadd.f32 %v680, %v852
  %v924 = vadd.f32 %v681, %v855
  %v925 = vadd.f32 %v682, %v860
  %v926 = vadd.f32 %v683, %v863
  %v927 = vadd.f32 %v684, %v868
  %v928 = vadd.f32 %v685, %v871
  %v929 = vadd.f32 %v686, %v876
  %v930 = vadd.f32 %v687, %v879
  %v931 = vadd.f32 %v688, %v884
  %v932 = vadd.f32 %v689, %v887
  %v933 = vadd.f32 %v690, %v892
  %v934 = vadd.f32 %v691, %v895
  %v935 = vadd.f32 %v692, %v900
  %v936 = vadd.f32 %v693, %v903
  %v937 = vadd.f32 %v694, %v908
  %v938 = vld [vmem:[%s0 + $0xb] sm:$0xff]
  %v939 = vld [vmem:[%s0 + $0x13] sm:$0xff]
  %v940 = vld [vmem:[%s0 + $0x1b] sm:$0xff]
  %v941 = vld [vmem:[%s0 + $0x23] sm:$0xff]
  %v942 = vld [vmem:[%s0 + $0x2b] sm:$0xff]
  %v943 = vld [vmem:[%s0 + $0x33] sm:$0xff]
  %v944 = vld [vmem:[%s0 + $0x3b] sm:$0xff]
  %v945 = vld [vmem:[%s0 + $0x43] sm:$0xff]
  %v946 = vld [vmem:[%s0 + $0x4b] sm:$0xff]
  %v947 = vld [vmem:[%s0 + $0x53] sm:$0xff]
  %v948 = vld [vmem:[%s0 + $0x5b] sm:$0xff]
  %v949 = vld [vmem:[%s0 + $0x63] sm:$0xff]
  %v950 = vld [vmem:[%s0 + $0x6b] sm:$0xff]
  %v951 = vld [vmem:[%s0 + $0x73] sm:$0xff]
  %v952 = vld [vmem:[%s0 + $0x7b] sm:$0xff]
  %v953 = vld [vmem:[%s0 + $0x83] sm:$0xff]
  %v954 = vld [vmem:[%s0 + $0x8b] sm:$0xff]
  %v955 = vld [vmem:[%s0 + $0x93] sm:$0xff]
  %v956 = vld [vmem:[%s0 + $0x9b] sm:$0xff]
  %v957 = vld [vmem:[%s0 + $0xa3] sm:$0xff]
  %v958 = vld [vmem:[%s0 + $0xab] sm:$0xff]
  %v959 = vld [vmem:[%s0 + $0xb3] sm:$0xff]
  %v960 = vld [vmem:[%s0 + $0xbb] sm:$0xff]
  %v961 = vld [vmem:[%s0 + $0xc3] sm:$0xff]
  %v962 = vld [vmem:[%s0 + $0xcb] sm:$0xff]
  %v963 = vpack.c.bf16 %v939, %v938
  %v964 = vpack.c.bf16 %v941, %v940
  %v965 = vpack.c.bf16 %v943, %v942
  %v966 = vpack.c.bf16 %v945, %v944
  %v967 = vpack.c.bf16 %v947, %v946
  %v968 = vpack.c.bf16 %v949, %v948
  %v969 = vpack.c.bf16 %v951, %v950
  %v970 = vpack.c.bf16 %v953, %v952
  %v971 = vpack.c.bf16 %v955, %v954
  %v972 = vpack.c.bf16 %v957, %v956
  %v973 = vpack.c.bf16 %v959, %v958
  %v974 = vpack.c.bf16 %v961, %v960
  %v975 = vpack.c.bf16 %v962, %v962
  %s976 = scalar_lea.vmem %s1, 16
  %v977 = vld [vmem:[%s976] sm:$0xf]
  %v979 = vsel %vm94, %v963, 0
  %v982 = vsel %vm94, %v964, 0
  %v985 = vsel %vm94, %v965, 0
  %v988 = vsel %vm94, %v966, 0
  %v991 = vsel %vm94, %v967, 0
  %v994 = vsel %vm94, %v968, 0
  %v997 = vsel %vm94, %v969, 0
  %v1000 = vsel %vm94, %v970, 0
  %v1003 = vsel %vm94, %v971, 0
  %v1006 = vsel %vm94, %v972, 0
  %v1009 = vsel %vm94, %v973, 0
  %v1012 = vsel %vm94, %v974, 0
  %v1015 = vsel %vm94, %v975, 0
  %v1018 = vsel %vm134, %v977, 0
  %1020 = vmatprep.subr.bf16.mxu0 0
  %1021 = vmatpush1.bf16.msra.mxu0 0
  %1022 = vmatprep.subr.bf16.mxu0 0
  %1023 = vmatpush1.bf16.msra.mxu0 0
  %1024 = vmatprep.subr.bf16.mxu0 0
  %1025 = vmatpush1.bf16.msra.mxu0 0
  %1026 = vmatprep.subr.bf16.mxu0 0
  %1027 = vmatpush1.bf16.msra.mxu0 0
  %1028 = vmatprep.subr.bf16.mxu0 0
  %1029 = vmatpush1.bf16.msra.mxu0 0
  %1030 = vmatprep.subr.bf16.mxu0 0
  %1031 = vmatpush1.bf16.msra.mxu0 0
  %1032 = vmatprep.subr.bf16.mxu0 0
  %1033 = vmatpush1.bf16.msra.mxu0 0
  %1034 = vmatprep.subr.bf16.mxu0 0
  %1035 = vmatpush1.bf16.msra.mxu0 %v1018
  %1036 = vmatprep.subr.bf16.mxu0 0
  %1037 = vmatpush2.bf16.msra.mxu0 0
  %1038 = vmatprep.subr.bf16.mxu0 0
  %1039 = vmatpush2.bf16.msra.mxu0 0
  %1040 = vmatprep.subr.bf16.mxu0 0
  %1041 = vmatpush2.bf16.msra.mxu0 0
  %1042 = vmatprep.subr.bf16.mxu0 0
  %1043 = vmatpush2.bf16.msra.mxu0 0
  %1044 = vmatprep.subr.bf16.mxu0 0
  %1045 = vmatpush2.bf16.msra.mxu0 0
  %1046 = vmatprep.subr.bf16.mxu0 0
  %1047 = vmatpush2.bf16.msra.mxu0 0
  %1048 = vmatprep.subr.bf16.mxu0 0
  %1049 = vmatpush2.bf16.msra.mxu0 0
  %1050 = vmatprep.subr.bf16.mxu0 0
  %1051 = vmatpush2.bf16.msra.mxu0 0
  %1052 = vmatprep.mubr.bf16.mxu0 0
  %1053 = vmatmul.mubr.bf16.gmra.mxu0 %v979
  %v1054 = vpop.f32.mrf.mxu0
  %v1055 = vadd.f32 0.0, %v1054
  %v1056 = vpop.f32.mrf.mxu0
  %v1057 = vpop.f32.mrf.mxu0
  %v1058 = vadd.f32 0.0, %v1057
  %v1059 = vpop.f32.mrf.mxu0
  %1060 = vmatprep.mubr.bf16.mxu0 0
  %1061 = vmatmul.mubr.bf16.gmra.mxu0 %v982
  %v1062 = vpop.f32.mrf.mxu0
  %v1063 = vadd.f32 0.0, %v1062
  %v1064 = vpop.f32.mrf.mxu0
  %v1065 = vpop.f32.mrf.mxu0
  %v1066 = vadd.f32 0.0, %v1065
  %v1067 = vpop.f32.mrf.mxu0
  %1068 = vmatprep.mubr.bf16.mxu0 0
  %1069 = vmatmul.mubr.bf16.gmra.mxu0 %v985
  %v1070 = vpop.f32.mrf.mxu0
  %v1071 = vadd.f32 0.0, %v1070
  %v1072 = vpop.f32.mrf.mxu0
  %v1073 = vpop.f32.mrf.mxu0
  %v1074 = vadd.f32 0.0, %v1073
  %v1075 = vpop.f32.mrf.mxu0
  %1076 = vmatprep.mubr.bf16.mxu0 0
  %1077 = vmatmul.mubr.bf16.gmra.mxu0 %v988
  %v1078 = vpop.f32.mrf.mxu0
  %v1079 = vadd.f32 0.0, %v1078
  %v1080 = vpop.f32.mrf.mxu0
  %v1081 = vpop.f32.mrf.mxu0
  %v1082 = vadd.f32 0.0, %v1081
  %v1083 = vpop.f32.mrf.mxu0
  %1084 = vmatprep.mubr.bf16.mxu0 0
  %1085 = vmatmul.mubr.bf16.gmra.mxu0 %v991
  %v1086 = vpop.f32.mrf.mxu0
  %v1087 = vadd.f32 0.0, %v1086
  %v1088 = vpop.f32.mrf.mxu0
  %v1089 = vpop.f32.mrf.mxu0
  %v1090 = vadd.f32 0.0, %v1089
  %v1091 = vpop.f32.mrf.mxu0
  %1092 = vmatprep.mubr.bf16.mxu0 0
  %1093 = vmatmul.mubr.bf16.gmra.mxu0 %v994
  %v1094 = vpop.f32.mrf.mxu0
  %v1095 = vadd.f32 0.0, %v1094
  %v1096 = vpop.f32.mrf.mxu0
  %v1097 = vpop.f32.mrf.mxu0
  %v1098 = vadd.f32 0.0, %v1097
  %v1099 = vpop.f32.mrf.mxu0
  %1100 = vmatprep.mubr.bf16.mxu0 0
  %1101 = vmatmul.mubr.bf16.gmra.mxu0 %v997
  %v1102 = vpop.f32.mrf.mxu0
  %v1103 = vadd.f32 0.0, %v1102
  %v1104 = vpop.f32.mrf.mxu0
  %v1105 = vpop.f32.mrf.mxu0
  %v1106 = vadd.f32 0.0, %v1105
  %v1107 = vpop.f32.mrf.mxu0
  %1108 = vmatprep.mubr.bf16.mxu0 0
  %1109 = vmatmul.mubr.bf16.gmra.mxu0 %v1000
  %v1110 = vpop.f32.mrf.mxu0
  %v1111 = vadd.f32 0.0, %v1110
  %v1112 = vpop.f32.mrf.mxu0
  %v1113 = vpop.f32.mrf.mxu0
  %v1114 = vadd.f32 0.0, %v1113
  %v1115 = vpop.f32.mrf.mxu0
  %1116 = vmatprep.mubr.bf16.mxu0 0
  %1117 = vmatmul.mubr.bf16.gmra.mxu0 %v1003
  %v1118 = vpop.f32.mrf.mxu0
  %v1119 = vadd.f32 0.0, %v1118
  %v1120 = vpop.f32.mrf.mxu0
  %v1121 = vpop.f32.mrf.mxu0
  %v1122 = vadd.f32 0.0, %v1121
  %v1123 = vpop.f32.mrf.mxu0
  %1124 = vmatprep.mubr.bf16.mxu0 0
  %1125 = vmatmul.mubr.bf16.gmra.mxu0 %v1006
  %v1126 = vpop.f32.mrf.mxu0
  %v1127 = vadd.f32 0.0, %v1126
  %v1128 = vpop.f32.mrf.mxu0
  %v1129 = vpop.f32.mrf.mxu0
  %v1130 = vadd.f32 0.0, %v1129
  %v1131 = vpop.f32.mrf.mxu0
  %1132 = vmatprep.mubr.bf16.mxu0 0
  %1133 = vmatmul.mubr.bf16.gmra.mxu0 %v1009
  %v1134 = vpop.f32.mrf.mxu0
  %v1135 = vadd.f32 0.0, %v1134
  %v1136 = vpop.f32.mrf.mxu0
  %v1137 = vpop.f32.mrf.mxu0
  %v1138 = vadd.f32 0.0, %v1137
  %v1139 = vpop.f32.mrf.mxu0
  %1140 = vmatprep.mubr.bf16.mxu0 0
  %1141 = vmatmul.mubr.bf16.gmra.mxu0 %v1012
  %v1142 = vpop.f32.mrf.mxu0
  %v1143 = vadd.f32 0.0, %v1142
  %v1144 = vpop.f32.mrf.mxu0
  %v1145 = vpop.f32.mrf.mxu0
  %v1146 = vadd.f32 0.0, %v1145
  %v1147 = vpop.f32.mrf.mxu0
  %1148 = vmatprep.mubr.bf16.mxu0 0
  %1149 = vmatmul.mubr.bf16.gmra.mxu0 %v1015
  %v1150 = vpop.f32.mrf.mxu0
  %v1151 = vadd.f32 0.0, %v1150
  %v1152 = vpop.f32.mrf.mxu0
  %v1153 = vpop.f32.mrf.mxu0
  %v1154 = vpop.f32.mrf.mxu0
  %1155 = vdwg.mxu0
  %v1156 = vadd.f32 %v913, %v1055
  %v1157 = vadd.f32 %v914, %v1058
  %v1158 = vadd.f32 %v915, %v1063
  %v1159 = vadd.f32 %v916, %v1066
  %v1160 = vadd.f32 %v917, %v1071
  %v1161 = vadd.f32 %v918, %v1074
  %v1162 = vadd.f32 %v919, %v1079
  %v1163 = vadd.f32 %v920, %v1082
  %v1164 = vadd.f32 %v921, %v1087
  %v1165 = vadd.f32 %v922, %v1090
  %v1166 = vadd.f32 %v923, %v1095
  %v1167 = vadd.f32 %v924, %v1098
  %v1168 = vadd.f32 %v925, %v1103
  %v1169 = vadd.f32 %v926, %v1106
  %v1170 = vadd.f32 %v927, %v1111
  %v1171 = vadd.f32 %v928, %v1114
  %v1172 = vadd.f32 %v929, %v1119
  %v1173 = vadd.f32 %v930, %v1122
  %v1174 = vadd.f32 %v931, %v1127
  %v1175 = vadd.f32 %v932, %v1130
  %v1176 = vadd.f32 %v933, %v1135
  %v1177 = vadd.f32 %v934, %v1138
  %v1178 = vadd.f32 %v935, %v1143
  %v1179 = vadd.f32 %v936, %v1146
  %v1180 = vadd.f32 %v937, %v1151
  %v1181 = vld [vmem:[%s0 + $0xc] sm:$0xff]
  %v1182 = vld [vmem:[%s0 + $0x14] sm:$0xff]
  %v1183 = vld [vmem:[%s0 + $0x1c] sm:$0xff]
  %v1184 = vld [vmem:[%s0 + $0x24] sm:$0xff]
  %v1185 = vld [vmem:[%s0 + $0x2c] sm:$0xff]
  %v1186 = vld [vmem:[%s0 + $0x34] sm:$0xff]
  %v1187 = vld [vmem:[%s0 + $0x3c] sm:$0xff]
  %v1188 = vld [vmem:[%s0 + $0x44] sm:$0xff]
  %v1189 = vld [vmem:[%s0 + $0x4c] sm:$0xff]
  %v1190 = vld [vmem:[%s0 + $0x54] sm:$0xff]
  %v1191 = vld [vmem:[%s0 + $0x5c] sm:$0xff]
  %v1192 = vld [vmem:[%s0 + $0x64] sm:$0xff]
  %v1193 = vld [vmem:[%s0 + $0x6c] sm:$0xff]
  %v1194 = vld [vmem:[%s0 + $0x74] sm:$0xff]
  %v1195 = vld [vmem:[%s0 + $0x7c] sm:$0xff]
  %v1196 = vld [vmem:[%s0 + $0x84] sm:$0xff]
  %v1197 = vld [vmem:[%s0 + $0x8c] sm:$0xff]
  %v1198 = vld [vmem:[%s0 + $0x94] sm:$0xff]
  %v1199 = vld [vmem:[%s0 + $0x9c] sm:$0xff]
  %v1200 = vld [vmem:[%s0 + $0xa4] sm:$0xff]
  %v1201 = vld [vmem:[%s0 + $0xac] sm:$0xff]
  %v1202 = vld [vmem:[%s0 + $0xb4] sm:$0xff]
  %v1203 = vld [vmem:[%s0 + $0xbc] sm:$0xff]
  %v1204 = vld [vmem:[%s0 + $0xc4] sm:$0xff]
  %v1205 = vld [vmem:[%s0 + $0xcc] sm:$0xff]
  %v1206 = vpack.c.bf16 %v1182, %v1181
  %v1207 = vpack.c.bf16 %v1184, %v1183
  %v1208 = vpack.c.bf16 %v1186, %v1185
  %v1209 = vpack.c.bf16 %v1188, %v1187
  %v1210 = vpack.c.bf16 %v1190, %v1189
  %v1211 = vpack.c.bf16 %v1192, %v1191
  %v1212 = vpack.c.bf16 %v1194, %v1193
  %v1213 = vpack.c.bf16 %v1196, %v1195
  %v1214 = vpack.c.bf16 %v1198, %v1197
  %v1215 = vpack.c.bf16 %v1200, %v1199
  %v1216 = vpack.c.bf16 %v1202, %v1201
  %v1217 = vpack.c.bf16 %v1204, %v1203
  %v1218 = vpack.c.bf16 %v1205, %v1205
  %s1219 = scalar_lea.vmem %s1, 20
  %v1220 = vld [vmem:[%s1219] sm:$0xf]
  %v1222 = vsel %vm94, %v1206, 0
  %v1225 = vsel %vm94, %v1207, 0
  %v1228 = vsel %vm94, %v1208, 0
  %v1231 = vsel %vm94, %v1209, 0
  %v1234 = vsel %vm94, %v1210, 0
  %v1237 = vsel %vm94, %v1211, 0
  %v1240 = vsel %vm94, %v1212, 0
  %v1243 = vsel %vm94, %v1213, 0
  %v1246 = vsel %vm94, %v1214, 0
  %v1249 = vsel %vm94, %v1215, 0
  %v1252 = vsel %vm94, %v1216, 0
  %v1255 = vsel %vm94, %v1217, 0
  %v1258 = vsel %vm94, %v1218, 0
  %v1261 = vsel %vm134, %v1220, 0
  %1263 = vmatprep.subr.bf16.mxu0 0
  %1264 = vmatpush1.bf16.msra.mxu0 0
  %1265 = vmatprep.subr.bf16.mxu0 0
  %1266 = vmatpush1.bf16.msra.mxu0 0
  %1267 = vmatprep.subr.bf16.mxu0 0
  %1268 = vmatpush1.bf16.msra.mxu0 0
  %1269 = vmatprep.subr.bf16.mxu0 0
  %1270 = vmatpush1.bf16.msra.mxu0 0
  %1271 = vmatprep.subr.bf16.mxu0 0
  %1272 = vmatpush1.bf16.msra.mxu0 0
  %1273 = vmatprep.subr.bf16.mxu0 0
  %1274 = vmatpush1.bf16.msra.mxu0 0
  %1275 = vmatprep.subr.bf16.mxu0 0
  %1276 = vmatpush1.bf16.msra.mxu0 0
  %1277 = vmatprep.subr.bf16.mxu0 0
  %1278 = vmatpush1.bf16.msra.mxu0 %v1261
  %1279 = vmatprep.subr.bf16.mxu0 0
  %1280 = vmatpush2.bf16.msra.mxu0 0
  %1281 = vmatprep.subr.bf16.mxu0 0
  %1282 = vmatpush2.bf16.msra.mxu0 0
  %1283 = vmatprep.subr.bf16.mxu0 0
  %1284 = vmatpush2.bf16.msra.mxu0 0
  %1285 = vmatprep.subr.bf16.mxu0 0
  %1286 = vmatpush2.bf16.msra.mxu0 0
  %1287 = vmatprep.subr.bf16.mxu0 0
  %1288 = vmatpush2.bf16.msra.mxu0 0
  %1289 = vmatprep.subr.bf16.mxu0 0
  %1290 = vmatpush2.bf16.msra.mxu0 0
  %1291 = vmatprep.subr.bf16.mxu0 0
  %1292 = vmatpush2.bf16.msra.mxu0 0
  %1293 = vmatprep.subr.bf16.mxu0 0
  %1294 = vmatpush2.bf16.msra.mxu0 0
  %1295 = vmatprep.mubr.bf16.mxu0 0
  %1296 = vmatmul.mubr.bf16.gmra.mxu0 %v1222
  %v1297 = vpop.f32.mrf.mxu0
  %v1298 = vadd.f32 0.0, %v1297
  %v1299 = vpop.f32.mrf.mxu0
  %v1300 = vpop.f32.mrf.mxu0
  %v1301 = vadd.f32 0.0, %v1300
  %v1302 = vpop.f32.mrf.mxu0
  %1303 = vmatprep.mubr.bf16.mxu0 0
  %1304 = vmatmul.mubr.bf16.gmra.mxu0 %v1225
  %v1305 = vpop.f32.mrf.mxu0
  %v1306 = vadd.f32 0.0, %v1305
  %v1307 = vpop.f32.mrf.mxu0
  %v1308 = vpop.f32.mrf.mxu0
  %v1309 = vadd.f32 0.0, %v1308
  %v1310 = vpop.f32.mrf.mxu0
  %1311 = vmatprep.mubr.bf16.mxu0 0
  %1312 = vmatmul.mubr.bf16.gmra.mxu0 %v1228
  %v1313 = vpop.f32.mrf.mxu0
  %v1314 = vadd.f32 0.0, %v1313
  %v1315 = vpop.f32.mrf.mxu0
  %v1316 = vpop.f32.mrf.mxu0
  %v1317 = vadd.f32 0.0, %v1316
  %v1318 = vpop.f32.mrf.mxu0
  %1319 = vmatprep.mubr.bf16.mxu0 0
  %1320 = vmatmul.mubr.bf16.gmra.mxu0 %v1231
  %v1321 = vpop.f32.mrf.mxu0
  %v1322 = vadd.f32 0.0, %v1321
  %v1323 = vpop.f32.mrf.mxu0
  %v1324 = vpop.f32.mrf.mxu0
  %v1325 = vadd.f32 0.0, %v1324
  %v1326 = vpop.f32.mrf.mxu0
  %1327 = vmatprep.mubr.bf16.mxu0 0
  %1328 = vmatmul.mubr.bf16.gmra.mxu0 %v1234
  %v1329 = vpop.f32.mrf.mxu0
  %v1330 = vadd.f32 0.0, %v1329
  %v1331 = vpop.f32.mrf.mxu0
  %v1332 = vpop.f32.mrf.mxu0
  %v1333 = vadd.f32 0.0, %v1332
  %v1334 = vpop.f32.mrf.mxu0
  %1335 = vmatprep.mubr.bf16.mxu0 0
  %1336 = vmatmul.mubr.bf16.gmra.mxu0 %v1237
  %v1337 = vpop.f32.mrf.mxu0
  %v1338 = vadd.f32 0.0, %v1337
  %v1339 = vpop.f32.mrf.mxu0
  %v1340 = vpop.f32.mrf.mxu0
  %v1341 = vadd.f32 0.0, %v1340
  %v1342 = vpop.f32.mrf.mxu0
  %1343 = vmatprep.mubr.bf16.mxu0 0
  %1344 = vmatmul.mubr.bf16.gmra.mxu0 %v1240
  %v1345 = vpop.f32.mrf.mxu0
  %v1346 = vadd.f32 0.0, %v1345
  %v1347 = vpop.f32.mrf.mxu0
  %v1348 = vpop.f32.mrf.mxu0
  %v1349 = vadd.f32 0.0, %v1348
  %v1350 = vpop.f32.mrf.mxu0
  %1351 = vmatprep.mubr.bf16.mxu0 0
  %1352 = vmatmul.mubr.bf16.gmra.mxu0 %v1243
  %v1353 = vpop.f32.mrf.mxu0
  %v1354 = vadd.f32 0.0, %v1353
  %v1355 = vpop.f32.mrf.mxu0
  %v1356 = vpop.f32.mrf.mxu0
  %v1357 = vadd.f32 0.0, %v1356
  %v1358 = vpop.f32.mrf.mxu0
  %1359 = vmatprep.mubr.bf16.mxu0 0
  %1360 = vmatmul.mubr.bf16.gmra.mxu0 %v1246
  %v1361 = vpop.f32.mrf.mxu0
  %v1362 = vadd.f32 0.0, %v1361
  %v1363 = vpop.f32.mrf.mxu0
  %v1364 = vpop.f32.mrf.mxu0
  %v1365 = vadd.f32 0.0, %v1364
  %v1366 = vpop.f32.mrf.mxu0
  %1367 = vmatprep.mubr.bf16.mxu0 0
  %1368 = vmatmul.mubr.bf16.gmra.mxu0 %v1249
  %v1369 = vpop.f32.mrf.mxu0
  %v1370 = vadd.f32 0.0, %v1369
  %v1371 = vpop.f32.mrf.mxu0
  %v1372 = vpop.f32.mrf.mxu0
  %v1373 = vadd.f32 0.0, %v1372
  %v1374 = vpop.f32.mrf.mxu0
  %1375 = vmatprep.mubr.bf16.mxu0 0
  %1376 = vmatmul.mubr.bf16.gmra.mxu0 %v1252
  %v1377 = vpop.f32.mrf.mxu0
  %v1378 = vadd.f32 0.0, %v1377
  %v1379 = vpop.f32.mrf.mxu0
  %v1380 = vpop.f32.mrf.mxu0
  %v1381 = vadd.f32 0.0, %v1380
  %v1382 = vpop.f32.mrf.mxu0
  %1383 = vmatprep.mubr.bf16.mxu0 0
  %1384 = vmatmul.mubr.bf16.gmra.mxu0 %v1255
  %v1385 = vpop.f32.mrf.mxu0
  %v1386 = vadd.f32 0.0, %v1385
  %v1387 = vpop.f32.mrf.mxu0
  %v1388 = vpop.f32.mrf.mxu0
  %v1389 = vadd.f32 0.0, %v1388
  %v1390 = vpop.f32.mrf.mxu0
  %1391 = vmatprep.mubr.bf16.mxu0 0
  %1392 = vmatmul.mubr.bf16.gmra.mxu0 %v1258
  %v1393 = vpop.f32.mrf.mxu0
  %v1394 = vadd.f32 0.0, %v1393
  %v1395 = vpop.f32.mrf.mxu0
  %v1396 = vpop.f32.mrf.mxu0
  %v1397 = vpop.f32.mrf.mxu0
  %1398 = vdwg.mxu0
  %v1399 = vadd.f32 %v1156, %v1298
  %v1400 = vadd.f32 %v1157, %v1301
  %v1401 = vadd.f32 %v1158, %v1306
  %v1402 = vadd.f32 %v1159, %v1309
  %v1403 = vadd.f32 %v1160, %v1314
  %v1404 = vadd.f32 %v1161, %v1317
  %v1405 = vadd.f32 %v1162, %v1322
  %v1406 = vadd.f32 %v1163, %v1325
  %v1407 = vadd.f32 %v1164, %v1330
  %v1408 = vadd.f32 %v1165, %v1333
  %v1409 = vadd.f32 %v1166, %v1338
  %v1410 = vadd.f32 %v1167, %v1341
  %v1411 = vadd.f32 %v1168, %v1346
  %v1412 = vadd.f32 %v1169, %v1349
  %v1413 = vadd.f32 %v1170, %v1354
  %v1414 = vadd.f32 %v1171, %v1357
  %v1415 = vadd.f32 %v1172, %v1362
  %v1416 = vadd.f32 %v1173, %v1365
  %v1417 = vadd.f32 %v1174, %v1370
  %v1418 = vadd.f32 %v1175, %v1373
  %v1419 = vadd.f32 %v1176, %v1378
  %v1420 = vadd.f32 %v1177, %v1381
  %v1421 = vadd.f32 %v1178, %v1386
  %v1422 = vadd.f32 %v1179, %v1389
  %v1423 = vadd.f32 %v1180, %v1394
  %v1424 = vld [vmem:[%s0 + $0x14] sm:$0xff]
  %v1425 = vld [vmem:[%s0 + $0x1c] sm:$0xff]
  %v1426 = vld [vmem:[%s0 + $0x24] sm:$0xff]
  %v1427 = vld [vmem:[%s0 + $0x2c] sm:$0xff]
  %v1428 = vld [vmem:[%s0 + $0x34] sm:$0xff]
  %v1429 = vld [vmem:[%s0 + $0x3c] sm:$0xff]
  %v1430 = vld [vmem:[%s0 + $0x44] sm:$0xff]
  %v1431 = vld [vmem:[%s0 + $0x4c] sm:$0xff]
  %v1432 = vld [vmem:[%s0 + $0x54] sm:$0xff]
  %v1433 = vld [vmem:[%s0 + $0x5c] sm:$0xff]
  %v1434 = vld [vmem:[%s0 + $0x64] sm:$0xff]
  %v1435 = vld [vmem:[%s0 + $0x6c] sm:$0xff]
  %v1436 = vld [vmem:[%s0 + $0x74] sm:$0xff]
  %v1437 = vld [vmem:[%s0 + $0x7c] sm:$0xff]
  %v1438 = vld [vmem:[%s0 + $0x84] sm:$0xff]
  %v1439 = vld [vmem:[%s0 + $0x8c] sm:$0xff]
  %v1440 = vld [vmem:[%s0 + $0x94] sm:$0xff]
  %v1441 = vld [vmem:[%s0 + $0x9c] sm:$0xff]
  %v1442 = vld [vmem:[%s0 + $0xa4] sm:$0xff]
  %v1443 = vld [vmem:[%s0 + $0xac] sm:$0xff]
  %v1444 = vld [vmem:[%s0 + $0xb4] sm:$0xff]
  %v1445 = vld [vmem:[%s0 + $0xbc] sm:$0xff]
  %v1446 = vld [vmem:[%s0 + $0xc4] sm:$0xff]
  %v1447 = vld [vmem:[%s0 + $0xcc] sm:$0xff]
  %v1448 = vld [vmem:[%s0 + $0xd4] sm:$0xff]
  %v1449 = vpack.c.bf16 %v1425, %v1424
  %v1450 = vpack.c.bf16 %v1427, %v1426
  %v1451 = vpack.c.bf16 %v1429, %v1428
  %v1452 = vpack.c.bf16 %v1431, %v1430
  %v1453 = vpack.c.bf16 %v1433, %v1432
  %v1454 = vpack.c.bf16 %v1435, %v1434
  %v1455 = vpack.c.bf16 %v1437, %v1436
  %v1456 = vpack.c.bf16 %v1439, %v1438
  %v1457 = vpack.c.bf16 %v1441, %v1440
  %v1458 = vpack.c.bf16 %v1443, %v1442
  %v1459 = vpack.c.bf16 %v1445, %v1444
  %v1460 = vpack.c.bf16 %v1447, %v1446
  %v1461 = vpack.c.bf16 %v1448, %v1448
  %s1462 = scalar_lea.vmem %s1, 24
  %v1463 = vld [vmem:[%s1462] sm:$0xf]
  %v1465 = vsel %vm94, %v1449, 0
  %v1468 = vsel %vm94, %v1450, 0
  %v1471 = vsel %vm94, %v1451, 0
  %v1474 = vsel %vm94, %v1452, 0
  %v1477 = vsel %vm94, %v1453, 0
  %v1480 = vsel %vm94, %v1454, 0
  %v1483 = vsel %vm94, %v1455, 0
  %v1486 = vsel %vm94, %v1456, 0
  %v1489 = vsel %vm94, %v1457, 0
  %v1492 = vsel %vm94, %v1458, 0
  %v1495 = vsel %vm94, %v1459, 0
  %v1498 = vsel %vm94, %v1460, 0
  %v1501 = vsel %vm94, %v1461, 0
  %v1504 = vsel %vm134, %v1463, 0
  %1506 = vmatprep.subr.bf16.mxu0 0
  %1507 = vmatpush1.bf16.msra.mxu0 0
  %1508 = vmatprep.subr.bf16.mxu0 0
  %1509 = vmatpush1.bf16.msra.mxu0 0
  %1510 = vmatprep.subr.bf16.mxu0 0
  %1511 = vmatpush1.bf16.msra.mxu0 0
  %1512 = vmatprep.subr.bf16.mxu0 0
  %1513 = vmatpush1.bf16.msra.mxu0 0
  %1514 = vmatprep.subr.bf16.mxu0 0
  %1515 = vmatpush1.bf16.msra.mxu0 0
  %1516 = vmatprep.subr.bf16.mxu0 0
  %1517 = vmatpush1.bf16.msra.mxu0 0
  %1518 = vmatprep.subr.bf16.mxu0 0
  %1519 = vmatpush1.bf16.msra.mxu0 0
  %1520 = vmatprep.subr.bf16.mxu0 0
  %1521 = vmatpush1.bf16.msra.mxu0 %v1504
  %1522 = vmatprep.subr.bf16.mxu0 0
  %1523 = vmatpush2.bf16.msra.mxu0 0
  %1524 = vmatprep.subr.bf16.mxu0 0
  %1525 = vmatpush2.bf16.msra.mxu0 0
  %1526 = vmatprep.subr.bf16.mxu0 0
  %1527 = vmatpush2.bf16.msra.mxu0 0
  %1528 = vmatprep.subr.bf16.mxu0 0
  %1529 = vmatpush2.bf16.msra.mxu0 0
  %1530 = vmatprep.subr.bf16.mxu0 0
  %1531 = vmatpush2.bf16.msra.mxu0 0
  %1532 = vmatprep.subr.bf16.mxu0 0
  %1533 = vmatpush2.bf16.msra.mxu0 0
  %1534 = vmatprep.subr.bf16.mxu0 0
  %1535 = vmatpush2.bf16.msra.mxu0 0
  %1536 = vmatprep.subr.bf16.mxu0 0
  %1537 = vmatpush2.bf16.msra.mxu0 0
  %1538 = vmatprep.mubr.bf16.mxu0 0
  %1539 = vmatmul.mubr.bf16.gmra.mxu0 %v1465
  %v1540 = vpop.f32.mrf.mxu0
  %v1541 = vadd.f32 0.0, %v1540
  %v1542 = vpop.f32.mrf.mxu0
  %v1543 = vpop.f32.mrf.mxu0
  %v1544 = vadd.f32 0.0, %v1543
  %v1545 = vpop.f32.mrf.mxu0
  %1546 = vmatprep.mubr.bf16.mxu0 0
  %1547 = vmatmul.mubr.bf16.gmra.mxu0 %v1468
  %v1548 = vpop.f32.mrf.mxu0
  %v1549 = vadd.f32 0.0, %v1548
  %v1550 = vpop.f32.mrf.mxu0
  %v1551 = vpop.f32.mrf.mxu0
  %v1552 = vadd.f32 0.0, %v1551
  %v1553 = vpop.f32.mrf.mxu0
  %1554 = vmatprep.mubr.bf16.mxu0 0
  %1555 = vmatmul.mubr.bf16.gmra.mxu0 %v1471
  %v1556 = vpop.f32.mrf.mxu0
  %v1557 = vadd.f32 0.0, %v1556
  %v1558 = vpop.f32.mrf.mxu0
  %v1559 = vpop.f32.mrf.mxu0
  %v1560 = vadd.f32 0.0, %v1559
  %v1561 = vpop.f32.mrf.mxu0
  %1562 = vmatprep.mubr.bf16.mxu0 0
  %1563 = vmatmul.mubr.bf16.gmra.mxu0 %v1474
  %v1564 = vpop.f32.mrf.mxu0
  %v1565 = vadd.f32 0.0, %v1564
  %v1566 = vpop.f32.mrf.mxu0
  %v1567 = vpop.f32.mrf.mxu0
  %v1568 = vadd.f32 0.0, %v1567
  %v1569 = vpop.f32.mrf.mxu0
  %1570 = vmatprep.mubr.bf16.mxu0 0
  %1571 = vmatmul.mubr.bf16.gmra.mxu0 %v1477
  %v1572 = vpop.f32.mrf.mxu0
  %v1573 = vadd.f32 0.0, %v1572
  %v1574 = vpop.f32.mrf.mxu0
  %v1575 = vpop.f32.mrf.mxu0
  %v1576 = vadd.f32 0.0, %v1575
  %v1577 = vpop.f32.mrf.mxu0
  %1578 = vmatprep.mubr.bf16.mxu0 0
  %1579 = vmatmul.mubr.bf16.gmra.mxu0 %v1480
  %v1580 = vpop.f32.mrf.mxu0
  %v1581 = vadd.f32 0.0, %v1580
  %v1582 = vpop.f32.mrf.mxu0
  %v1583 = vpop.f32.mrf.mxu0
  %v1584 = vadd.f32 0.0, %v1583
  %v1585 = vpop.f32.mrf.mxu0
  %1586 = vmatprep.mubr.bf16.mxu0 0
  %1587 = vmatmul.mubr.bf16.gmra.mxu0 %v1483
  %v1588 = vpop.f32.mrf.mxu0
  %v1589 = vadd.f32 0.0, %v1588
  %v1590 = vpop.f32.mrf.mxu0
  %v1591 = vpop.f32.mrf.mxu0
  %v1592 = vadd.f32 0.0, %v1591
  %v1593 = vpop.f32.mrf.mxu0
  %1594 = vmatprep.mubr.bf16.mxu0 0
  %1595 = vmatmul.mubr.bf16.gmra.mxu0 %v1486
  %v1596 = vpop.f32.mrf.mxu0
  %v1597 = vadd.f32 0.0, %v1596
  %v1598 = vpop.f32.mrf.mxu0
  %v1599 = vpop.f32.mrf.mxu0
  %v1600 = vadd.f32 0.0, %v1599
  %v1601 = vpop.f32.mrf.mxu0
  %1602 = vmatprep.mubr.bf16.mxu0 0
  %1603 = vmatmul.mubr.bf16.gmra.mxu0 %v1489
  %v1604 = vpop.f32.mrf.mxu0
  %v1605 = vadd.f32 0.0, %v1604
  %v1606 = vpop.f32.mrf.mxu0
  %v1607 = vpop.f32.mrf.mxu0
  %v1608 = vadd.f32 0.0, %v1607
  %v1609 = vpop.f32.mrf.mxu0
  %1610 = vmatprep.mubr.bf16.mxu0 0
  %1611 = vmatmul.mubr.bf16.gmra.mxu0 %v1492
  %v1612 = vpop.f32.mrf.mxu0
  %v1613 = vadd.f32 0.0, %v1612
  %v1614 = vpop.f32.mrf.mxu0
  %v1615 = vpop.f32.mrf.mxu0
  %v1616 = vadd.f32 0.0, %v1615
  %v1617 = vpop.f32.mrf.mxu0
  %1618 = vmatprep.mubr.bf16.mxu0 0
  %1619 = vmatmul.mubr.bf16.gmra.mxu0 %v1495
  %v1620 = vpop.f32.mrf.mxu0
  %v1621 = vadd.f32 0.0, %v1620
  %v1622 = vpop.f32.mrf.mxu0
  %v1623 = vpop.f32.mrf.mxu0
  %v1624 = vadd.f32 0.0, %v1623
  %v1625 = vpop.f32.mrf.mxu0
  %1626 = vmatprep.mubr.bf16.mxu0 0
  %1627 = vmatmul.mubr.bf16.gmra.mxu0 %v1498
  %v1628 = vpop.f32.mrf.mxu0
  %v1629 = vadd.f32 0.0, %v1628
  %v1630 = vpop.f32.mrf.mxu0
  %v1631 = vpop.f32.mrf.mxu0
  %v1632 = vadd.f32 0.0, %v1631
  %v1633 = vpop.f32.mrf.mxu0
  %1634 = vmatprep.mubr.bf16.mxu0 0
  %1635 = vmatmul.mubr.bf16.gmra.mxu0 %v1501
  %v1636 = vpop.f32.mrf.mxu0
  %v1637 = vadd.f32 0.0, %v1636
  %v1638 = vpop.f32.mrf.mxu0
  %v1639 = vpop.f32.mrf.mxu0
  %v1640 = vpop.f32.mrf.mxu0
  %1641 = vdwg.mxu0
  %v1642 = vadd.f32 %v1399, %v1541
  %v1643 = vadd.f32 %v1400, %v1544
  %v1644 = vadd.f32 %v1401, %v1549
  %v1645 = vadd.f32 %v1402, %v1552
  %v1646 = vadd.f32 %v1403, %v1557
  %v1647 = vadd.f32 %v1404, %v1560
  %v1648 = vadd.f32 %v1405, %v1565
  %v1649 = vadd.f32 %v1406, %v1568
  %v1650 = vadd.f32 %v1407, %v1573
  %v1651 = vadd.f32 %v1408, %v1576
  %v1652 = vadd.f32 %v1409, %v1581
  %v1653 = vadd.f32 %v1410, %v1584
  %v1654 = vadd.f32 %v1411, %v1589
  %v1655 = vadd.f32 %v1412, %v1592
  %v1656 = vadd.f32 %v1413, %v1597
  %v1657 = vadd.f32 %v1414, %v1600
  %v1658 = vadd.f32 %v1415, %v1605
  %v1659 = vadd.f32 %v1416, %v1608
  %v1660 = vadd.f32 %v1417, %v1613
  %v1661 = vadd.f32 %v1418, %v1616
  %v1662 = vadd.f32 %v1419, %v1621
  %v1663 = vadd.f32 %v1420, %v1624
  %v1664 = vadd.f32 %v1421, %v1629
  %v1665 = vadd.f32 %v1422, %v1632
  %v1666 = vadd.f32 %v1423, %v1637
  %v1667 = vld [vmem:[%s0 + $0x15] sm:$0xff]
  %v1668 = vld [vmem:[%s0 + $0x1d] sm:$0xff]
  %v1669 = vld [vmem:[%s0 + $0x25] sm:$0xff]
  %v1670 = vld [vmem:[%s0 + $0x2d] sm:$0xff]
  %v1671 = vld [vmem:[%s0 + $0x35] sm:$0xff]
  %v1672 = vld [vmem:[%s0 + $0x3d] sm:$0xff]
  %v1673 = vld [vmem:[%s0 + $0x45] sm:$0xff]
  %v1674 = vld [vmem:[%s0 + $0x4d] sm:$0xff]
  %v1675 = vld [vmem:[%s0 + $0x55] sm:$0xff]
  %v1676 = vld [vmem:[%s0 + $0x5d] sm:$0xff]
  %v1677 = vld [vmem:[%s0 + $0x65] sm:$0xff]
  %v1678 = vld [vmem:[%s0 + $0x6d] sm:$0xff]
  %v1679 = vld [vmem:[%s0 + $0x75] sm:$0xff]
  %v1680 = vld [vmem:[%s0 + $0x7d] sm:$0xff]
  %v1681 = vld [vmem:[%s0 + $0x85] sm:$0xff]
  %v1682 = vld [vmem:[%s0 + $0x8d] sm:$0xff]
  %v1683 = vld [vmem:[%s0 + $0x95] sm:$0xff]
  %v1684 = vld [vmem:[%s0 + $0x9d] sm:$0xff]
  %v1685 = vld [vmem:[%s0 + $0xa5] sm:$0xff]
  %v1686 = vld [vmem:[%s0 + $0xad] sm:$0xff]
  %v1687 = vld [vmem:[%s0 + $0xb5] sm:$0xff]
  %v1688 = vld [vmem:[%s0 + $0xbd] sm:$0xff]
  %v1689 = vld [vmem:[%s0 + $0xc5] sm:$0xff]
  %v1690 = vld [vmem:[%s0 + $0xcd] sm:$0xff]
  %v1691 = vld [vmem:[%s0 + $0xd5] sm:$0xff]
  %v1692 = vpack.c.bf16 %v1668, %v1667
  %v1693 = vpack.c.bf16 %v1670, %v1669
  %v1694 = vpack.c.bf16 %v1672, %v1671
  %v1695 = vpack.c.bf16 %v1674, %v1673
  %v1696 = vpack.c.bf16 %v1676, %v1675
  %v1697 = vpack.c.bf16 %v1678, %v1677
  %v1698 = vpack.c.bf16 %v1680, %v1679
  %v1699 = vpack.c.bf16 %v1682, %v1681
  %v1700 = vpack.c.bf16 %v1684, %v1683
  %v1701 = vpack.c.bf16 %v1686, %v1685
  %v1702 = vpack.c.bf16 %v1688, %v1687
  %v1703 = vpack.c.bf16 %v1690, %v1689
  %v1704 = vpack.c.bf16 %v1691, %v1691
  %s1705 = scalar_lea.vmem %s1, 28
  %v1706 = vld [vmem:[%s1705] sm:$0xf]
  %v1708 = vsel %vm94, %v1692, 0
  %v1711 = vsel %vm94, %v1693, 0
  %v1714 = vsel %vm94, %v1694, 0
  %v1717 = vsel %vm94, %v1695, 0
  %v1720 = vsel %vm94, %v1696, 0
  %v1723 = vsel %vm94, %v1697, 0
  %v1726 = vsel %vm94, %v1698, 0
  %v1729 = vsel %vm94, %v1699, 0
  %v1732 = vsel %vm94, %v1700, 0
  %v1735 = vsel %vm94, %v1701, 0
  %v1738 = vsel %vm94, %v1702, 0
  %v1741 = vsel %vm94, %v1703, 0
  %v1744 = vsel %vm94, %v1704, 0
  %v1747 = vsel %vm134, %v1706, 0
  %1749 = vmatprep.subr.bf16.mxu0 0
  %1750 = vmatpush1.bf16.msra.mxu0 0
  %1751 = vmatprep.subr.bf16.mxu0 0
  %1752 = vmatpush1.bf16.msra.mxu0 0
  %1753 = vmatprep.subr.bf16.mxu0 0
  %1754 = vmatpush1.bf16.msra.mxu0 0
  %1755 = vmatprep.subr.bf16.mxu0 0
  %1756 = vmatpush1.bf16.msra.mxu0 0
  %1757 = vmatprep.subr.bf16.mxu0 0
  %1758 = vmatpush1.bf16.msra.mxu0 0
  %1759 = vmatprep.subr.bf16.mxu0 0
  %1760 = vmatpush1.bf16.msra.mxu0 0
  %1761 = vmatprep.subr.bf16.mxu0 0
  %1762 = vmatpush1.bf16.msra.mxu0 0
  %1763 = vmatprep.subr.bf16.mxu0 0
  %1764 = vmatpush1.bf16.msra.mxu0 %v1747
  %1765 = vmatprep.subr.bf16.mxu0 0
  %1766 = vmatpush2.bf16.msra.mxu0 0
  %1767 = vmatprep.subr.bf16.mxu0 0
  %1768 = vmatpush2.bf16.msra.mxu0 0
  %1769 = vmatprep.subr.bf16.mxu0 0
  %1770 = vmatpush2.bf16.msra.mxu0 0
  %1771 = vmatprep.subr.bf16.mxu0 0
  %1772 = vmatpush2.bf16.msra.mxu0 0
  %1773 = vmatprep.subr.bf16.mxu0 0
  %1774 = vmatpush2.bf16.msra.mxu0 0
  %1775 = vmatprep.subr.bf16.mxu0 0
  %1776 = vmatpush2.bf16.msra.mxu0 0
  %1777 = vmatprep.subr.bf16.mxu0 0
  %1778 = vmatpush2.bf16.msra.mxu0 0
  %1779 = vmatprep.subr.bf16.mxu0 0
  %1780 = vmatpush2.bf16.msra.mxu0 0
  %1781 = vmatprep.mubr.bf16.mxu0 0
  %1782 = vmatmul.mubr.bf16.gmra.mxu0 %v1708
  %v1783 = vpop.f32.mrf.mxu0
  %v1784 = vadd.f32 0.0, %v1783
  %v1785 = vpop.f32.mrf.mxu0
  %v1786 = vpop.f32.mrf.mxu0
  %v1787 = vadd.f32 0.0, %v1786
  %v1788 = vpop.f32.mrf.mxu0
  %1789 = vmatprep.mubr.bf16.mxu0 0
  %1790 = vmatmul.mubr.bf16.gmra.mxu0 %v1711
  %v1791 = vpop.f32.mrf.mxu0
  %v1792 = vadd.f32 0.0, %v1791
  %v1793 = vpop.f32.mrf.mxu0
  %v1794 = vpop.f32.mrf.mxu0
  %v1795 = vadd.f32 0.0, %v1794
  %v1796 = vpop.f32.mrf.mxu0
  %1797 = vmatprep.mubr.bf16.mxu0 0
  %1798 = vmatmul.mubr.bf16.gmra.mxu0 %v1714
  %v1799 = vpop.f32.mrf.mxu0
  %v1800 = vadd.f32 0.0, %v1799
  %v1801 = vpop.f32.mrf.mxu0
  %v1802 = vpop.f32.mrf.mxu0
  %v1803 = vadd.f32 0.0, %v1802
  %v1804 = vpop.f32.mrf.mxu0
  %1805 = vmatprep.mubr.bf16.mxu0 0
  %1806 = vmatmul.mubr.bf16.gmra.mxu0 %v1717
  %v1807 = vpop.f32.mrf.mxu0
  %v1808 = vadd.f32 0.0, %v1807
  %v1809 = vpop.f32.mrf.mxu0
  %v1810 = vpop.f32.mrf.mxu0
  %v1811 = vadd.f32 0.0, %v1810
  %v1812 = vpop.f32.mrf.mxu0
  %1813 = vmatprep.mubr.bf16.mxu0 0
  %1814 = vmatmul.mubr.bf16.gmra.mxu0 %v1720
  %v1815 = vpop.f32.mrf.mxu0
  %v1816 = vadd.f32 0.0, %v1815
  %v1817 = vpop.f32.mrf.mxu0
  %v1818 = vpop.f32.mrf.mxu0
  %v1819 = vadd.f32 0.0, %v1818
  %v1820 = vpop.f32.mrf.mxu0
  %1821 = vmatprep.mubr.bf16.mxu0 0
  %1822 = vmatmul.mubr.bf16.gmra.mxu0 %v1723
  %v1823 = vpop.f32.mrf.mxu0
  %v1824 = vadd.f32 0.0, %v1823
  %v1825 = vpop.f32.mrf.mxu0
  %v1826 = vpop.f32.mrf.mxu0
  %v1827 = vadd.f32 0.0, %v1826
  %v1828 = vpop.f32.mrf.mxu0
  %1829 = vmatprep.mubr.bf16.mxu0 0
  %1830 = vmatmul.mubr.bf16.gmra.mxu0 %v1726
  %v1831 = vpop.f32.mrf.mxu0
  %v1832 = vadd.f32 0.0, %v1831
  %v1833 = vpop.f32.mrf.mxu0
  %v1834 = vpop.f32.mrf.mxu0
  %v1835 = vadd.f32 0.0, %v1834
  %v1836 = vpop.f32.mrf.mxu0
  %1837 = vmatprep.mubr.bf16.mxu0 0
  %1838 = vmatmul.mubr.bf16.gmra.mxu0 %v1729
  %v1839 = vpop.f32.mrf.mxu0
  %v1840 = vadd.f32 0.0, %v1839
  %v1841 = vpop.f32.mrf.mxu0
  %v1842 = vpop.f32.mrf.mxu0
  %v1843 = vadd.f32 0.0, %v1842
  %v1844 = vpop.f32.mrf.mxu0
  %1845 = vmatprep.mubr.bf16.mxu0 0
  %1846 = vmatmul.mubr.bf16.gmra.mxu0 %v1732
  %v1847 = vpop.f32.mrf.mxu0
  %v1848 = vadd.f32 0.0, %v1847
  %v1849 = vpop.f32.mrf.mxu0
  %v1850 = vpop.f32.mrf.mxu0
  %v1851 = vadd.f32 0.0, %v1850
  %v1852 = vpop.f32.mrf.mxu0
  %1853 = vmatprep.mubr.bf16.mxu0 0
  %1854 = vmatmul.mubr.bf16.gmra.mxu0 %v1735
  %v1855 = vpop.f32.mrf.mxu0
  %v1856 = vadd.f32 0.0, %v1855
  %v1857 = vpop.f32.mrf.mxu0
  %v1858 = vpop.f32.mrf.mxu0
  %v1859 = vadd.f32 0.0, %v1858
  %v1860 = vpop.f32.mrf.mxu0
  %1861 = vmatprep.mubr.bf16.mxu0 0
  %1862 = vmatmul.mubr.bf16.gmra.mxu0 %v1738
  %v1863 = vpop.f32.mrf.mxu0
  %v1864 = vadd.f32 0.0, %v1863
  %v1865 = vpop.f32.mrf.mxu0
  %v1866 = vpop.f32.mrf.mxu0
  %v1867 = vadd.f32 0.0, %v1866
  %v1868 = vpop.f32.mrf.mxu0
  %1869 = vmatprep.mubr.bf16.mxu0 0
  %1870 = vmatmul.mubr.bf16.gmra.mxu0 %v1741
  %v1871 = vpop.f32.mrf.mxu0
  %v1872 = vadd.f32 0.0, %v1871
  %v1873 = vpop.f32.mrf.mxu0
  %v1874 = vpop.f32.mrf.mxu0
  %v1875 = vadd.f32 0.0, %v1874
  %v1876 = vpop.f32.mrf.mxu0
  %1877 = vmatprep.mubr.bf16.mxu0 0
  %1878 = vmatmul.mubr.bf16.gmra.mxu0 %v1744
  %v1879 = vpop.f32.mrf.mxu0
  %v1880 = vadd.f32 0.0, %v1879
  %v1881 = vpop.f32.mrf.mxu0
  %v1882 = vpop.f32.mrf.mxu0
  %v1883 = vpop.f32.mrf.mxu0
  %1884 = vdwg.mxu0
  %v1885 = vadd.f32 %v1642, %v1784
  %v1886 = vadd.f32 %v1643, %v1787
  %v1887 = vadd.f32 %v1644, %v1792
  %v1888 = vadd.f32 %v1645, %v1795
  %v1889 = vadd.f32 %v1646, %v1800
  %v1890 = vadd.f32 %v1647, %v1803
  %v1891 = vadd.f32 %v1648, %v1808
  %v1892 = vadd.f32 %v1649, %v1811
  %v1893 = vadd.f32 %v1650, %v1816
  %v1894 = vadd.f32 %v1651, %v1819
  %v1895 = vadd.f32 %v1652, %v1824
  %v1896 = vadd.f32 %v1653, %v1827
  %v1897 = vadd.f32 %v1654, %v1832
  %v1898 = vadd.f32 %v1655, %v1835
  %v1899 = vadd.f32 %v1656, %v1840
  %v1900 = vadd.f32 %v1657, %v1843
  %v1901 = vadd.f32 %v1658, %v1848
  %v1902 = vadd.f32 %v1659, %v1851
  %v1903 = vadd.f32 %v1660, %v1856
  %v1904 = vadd.f32 %v1661, %v1859
  %v1905 = vadd.f32 %v1662, %v1864
  %v1906 = vadd.f32 %v1663, %v1867
  %v1907 = vadd.f32 %v1664, %v1872
  %v1908 = vadd.f32 %v1665, %v1875
  %v1909 = vadd.f32 %v1666, %v1880
  %v1910 = vld [vmem:[%s0 + $0x16] sm:$0xff]
  %v1911 = vld [vmem:[%s0 + $0x1e] sm:$0xff]
  %v1912 = vld [vmem:[%s0 + $0x26] sm:$0xff]
  %v1913 = vld [vmem:[%s0 + $0x2e] sm:$0xff]
  %v1914 = vld [vmem:[%s0 + $0x36] sm:$0xff]
  %v1915 = vld [vmem:[%s0 + $0x3e] sm:$0xff]
  %v1916 = vld [vmem:[%s0 + $0x46] sm:$0xff]
  %v1917 = vld [vmem:[%s0 + $0x4e] sm:$0xff]
  %v1918 = vld [vmem:[%s0 + $0x56] sm:$0xff]
  %v1919 = vld [vmem:[%s0 + $0x5e] sm:$0xff]
  %v1920 = vld [vmem:[%s0 + $0x66] sm:$0xff]
  %v1921 = vld [vmem:[%s0 + $0x6e] sm:$0xff]
  %v1922 = vld [vmem:[%s0 + $0x76] sm:$0xff]
  %v1923 = vld [vmem:[%s0 + $0x7e] sm:$0xff]
  %v1924 = vld [vmem:[%s0 + $0x86] sm:$0xff]
  %v1925 = vld [vmem:[%s0 + $0x8e] sm:$0xff]
  %v1926 = vld [vmem:[%s0 + $0x96] sm:$0xff]
  %v1927 = vld [vmem:[%s0 + $0x9e] sm:$0xff]
  %v1928 = vld [vmem:[%s0 + $0xa6] sm:$0xff]
  %v1929 = vld [vmem:[%s0 + $0xae] sm:$0xff]
  %v1930 = vld [vmem:[%s0 + $0xb6] sm:$0xff]
  %v1931 = vld [vmem:[%s0 + $0xbe] sm:$0xff]
  %v1932 = vld [vmem:[%s0 + $0xc6] sm:$0xff]
  %v1933 = vld [vmem:[%s0 + $0xce] sm:$0xff]
  %v1934 = vld [vmem:[%s0 + $0xd6] sm:$0xff]
  %v1935 = vpack.c.bf16 %v1911, %v1910
  %v1936 = vpack.c.bf16 %v1913, %v1912
  %v1937 = vpack.c.bf16 %v1915, %v1914
  %v1938 = vpack.c.bf16 %v1917, %v1916
  %v1939 = vpack.c.bf16 %v1919, %v1918
  %v1940 = vpack.c.bf16 %v1921, %v1920
  %v1941 = vpack.c.bf16 %v1923, %v1922
  %v1942 = vpack.c.bf16 %v1925, %v1924
  %v1943 = vpack.c.bf16 %v1927, %v1926
  %v1944 = vpack.c.bf16 %v1929, %v1928
  %v1945 = vpack.c.bf16 %v1931, %v1930
  %v1946 = vpack.c.bf16 %v1933, %v1932
  %v1947 = vpack.c.bf16 %v1934, %v1934
  %s1948 = scalar_lea.vmem %s1, 32
  %v1949 = vld [vmem:[%s1948] sm:$0xf]
  %v1951 = vsel %vm94, %v1935, 0
  %v1954 = vsel %vm94, %v1936, 0
  %v1957 = vsel %vm94, %v1937, 0
  %v1960 = vsel %vm94, %v1938, 0
  %v1963 = vsel %vm94, %v1939, 0
  %v1966 = vsel %vm94, %v1940, 0
  %v1969 = vsel %vm94, %v1941, 0
  %v1972 = vsel %vm94, %v1942, 0
  %v1975 = vsel %vm94, %v1943, 0
  %v1978 = vsel %vm94, %v1944, 0
  %v1981 = vsel %vm94, %v1945, 0
  %v1984 = vsel %vm94, %v1946, 0
  %v1987 = vsel %vm94, %v1947, 0
  %v1990 = vsel %vm134, %v1949, 0
  %1992 = vmatprep.subr.bf16.mxu0 0
  %1993 = vmatpush1.bf16.msra.mxu0 0
  %1994 = vmatprep.subr.bf16.mxu0 0
  %1995 = vmatpush1.bf16.msra.mxu0 0
  %1996 = vmatprep.subr.bf16.mxu0 0
  %1997 = vmatpush1.bf16.msra.mxu0 0
  %1998 = vmatprep.subr.bf16.mxu0 0
  %1999 = vmatpush1.bf16.msra.mxu0 0
  %2000 = vmatprep.subr.bf16.mxu0 0
  %2001 = vmatpush1.bf16.msra.mxu0 0
  %2002 = vmatprep.subr.bf16.mxu0 0
  %2003 = vmatpush1.bf16.msra.mxu0 0
  %2004 = vmatprep.subr.bf16.mxu0 0
  %2005 = vmatpush1.bf16.msra.mxu0 0
  %2006 = vmatprep.subr.bf16.mxu0 0
  %2007 = vmatpush1.bf16.msra.mxu0 %v1990
  %2008 = vmatprep.subr.bf16.mxu0 0
  %2009 = vmatpush2.bf16.msra.mxu0 0
  %2010 = vmatprep.subr.bf16.mxu0 0
  %2011 = vmatpush2.bf16.msra.mxu0 0
  %2012 = vmatprep.subr.bf16.mxu0 0
  %2013 = vmatpush2.bf16.msra.mxu0 0
  %2014 = vmatprep.subr.bf16.mxu0 0
  %2015 = vmatpush2.bf16.msra.mxu0 0
  %2016 = vmatprep.subr.bf16.mxu0 0
  %2017 = vmatpush2.bf16.msra.mxu0 0
  %2018 = vmatprep.subr.bf16.mxu0 0
  %2019 = vmatpush2.bf16.msra.mxu0 0
  %2020 = vmatprep.subr.bf16.mxu0 0
  %2021 = vmatpush2.bf16.msra.mxu0 0
  %2022 = vmatprep.subr.bf16.mxu0 0
  %2023 = vmatpush2.bf16.msra.mxu0 0
  %2024 = vmatprep.mubr.bf16.mxu0 0
  %2025 = vmatmul.mubr.bf16.gmra.mxu0 %v1951
  %v2026 = vpop.f32.mrf.mxu0
  %v2027 = vadd.f32 0.0, %v2026
  %v2028 = vpop.f32.mrf.mxu0
  %v2029 = vpop.f32.mrf.mxu0
  %v2030 = vadd.f32 0.0, %v2029
  %v2031 = vpop.f32.mrf.mxu0
  %2032 = vmatprep.mubr.bf16.mxu0 0
  %2033 = vmatmul.mubr.bf16.gmra.mxu0 %v1954
  %v2034 = vpop.f32.mrf.mxu0
  %v2035 = vadd.f32 0.0, %v2034
  %v2036 = vpop.f32.mrf.mxu0
  %v2037 = vpop.f32.mrf.mxu0
  %v2038 = vadd.f32 0.0, %v2037
  %v2039 = vpop.f32.mrf.mxu0
  %2040 = vmatprep.mubr.bf16.mxu0 0
  %2041 = vmatmul.mubr.bf16.gmra.mxu0 %v1957
  %v2042 = vpop.f32.mrf.mxu0
  %v2043 = vadd.f32 0.0, %v2042
  %v2044 = vpop.f32.mrf.mxu0
  %v2045 = vpop.f32.mrf.mxu0
  %v2046 = vadd.f32 0.0, %v2045
  %v2047 = vpop.f32.mrf.mxu0
  %2048 = vmatprep.mubr.bf16.mxu0 0
  %2049 = vmatmul.mubr.bf16.gmra.mxu0 %v1960
  %v2050 = vpop.f32.mrf.mxu0
  %v2051 = vadd.f32 0.0, %v2050
  %v2052 = vpop.f32.mrf.mxu0
  %v2053 = vpop.f32.mrf.mxu0
  %v2054 = vadd.f32 0.0, %v2053
  %v2055 = vpop.f32.mrf.mxu0
  %2056 = vmatprep.mubr.bf16.mxu0 0
  %2057 = vmatmul.mubr.bf16.gmra.mxu0 %v1963
  %v2058 = vpop.f32.mrf.mxu0
  %v2059 = vadd.f32 0.0, %v2058
  %v2060 = vpop.f32.mrf.mxu0
  %v2061 = vpop.f32.mrf.mxu0
  %v2062 = vadd.f32 0.0, %v2061
  %v2063 = vpop.f32.mrf.mxu0
  %2064 = vmatprep.mubr.bf16.mxu0 0
  %2065 = vmatmul.mubr.bf16.gmra.mxu0 %v1966
  %v2066 = vpop.f32.mrf.mxu0
  %v2067 = vadd.f32 0.0, %v2066
  %v2068 = vpop.f32.mrf.mxu0
  %v2069 = vpop.f32.mrf.mxu0
  %v2070 = vadd.f32 0.0, %v2069
  %v2071 = vpop.f32.mrf.mxu0
  %2072 = vmatprep.mubr.bf16.mxu0 0
  %2073 = vmatmul.mubr.bf16.gmra.mxu0 %v1969
  %v2074 = vpop.f32.mrf.mxu0
  %v2075 = vadd.f32 0.0, %v2074
  %v2076 = vpop.f32.mrf.mxu0
  %v2077 = vpop.f32.mrf.mxu0
  %v2078 = vadd.f32 0.0, %v2077
  %v2079 = vpop.f32.mrf.mxu0
  %2080 = vmatprep.mubr.bf16.mxu0 0
  %2081 = vmatmul.mubr.bf16.gmra.mxu0 %v1972
  %v2082 = vpop.f32.mrf.mxu0
  %v2083 = vadd.f32 0.0, %v2082
  %v2084 = vpop.f32.mrf.mxu0
  %v2085 = vpop.f32.mrf.mxu0
  %v2086 = vadd.f32 0.0, %v2085
  %v2087 = vpop.f32.mrf.mxu0
  %2088 = vmatprep.mubr.bf16.mxu0 0
  %2089 = vmatmul.mubr.bf16.gmra.mxu0 %v1975
  %v2090 = vpop.f32.mrf.mxu0
  %v2091 = vadd.f32 0.0, %v2090
  %v2092 = vpop.f32.mrf.mxu0
  %v2093 = vpop.f32.mrf.mxu0
  %v2094 = vadd.f32 0.0, %v2093
  %v2095 = vpop.f32.mrf.mxu0
  %2096 = vmatprep.mubr.bf16.mxu0 0
  %2097 = vmatmul.mubr.bf16.gmra.mxu0 %v1978
  %v2098 = vpop.f32.mrf.mxu0
  %v2099 = vadd.f32 0.0, %v2098
  %v2100 = vpop.f32.mrf.mxu0
  %v2101 = vpop.f32.mrf.mxu0
  %v2102 = vadd.f32 0.0, %v2101
  %v2103 = vpop.f32.mrf.mxu0
  %2104 = vmatprep.mubr.bf16.mxu0 0
  %2105 = vmatmul.mubr.bf16.gmra.mxu0 %v1981
  %v2106 = vpop.f32.mrf.mxu0
  %v2107 = vadd.f32 0.0, %v2106
  %v2108 = vpop.f32.mrf.mxu0
  %v2109 = vpop.f32.mrf.mxu0
  %v2110 = vadd.f32 0.0, %v2109
  %v2111 = vpop.f32.mrf.mxu0
  %2112 = vmatprep.mubr.bf16.mxu0 0
  %2113 = vmatmul.mubr.bf16.gmra.mxu0 %v1984
  %v2114 = vpop.f32.mrf.mxu0
  %v2115 = vadd.f32 0.0, %v2114
  %v2116 = vpop.f32.mrf.mxu0
  %v2117 = vpop.f32.mrf.mxu0
  %v2118 = vadd.f32 0.0, %v2117
  %v2119 = vpop.f32.mrf.mxu0
  %2120 = vmatprep.mubr.bf16.mxu0 0
  %2121 = vmatmul.mubr.bf16.gmra.mxu0 %v1987
  %v2122 = vpop.f32.mrf.mxu0
  %v2123 = vadd.f32 0.0, %v2122
  %v2124 = vpop.f32.mrf.mxu0
  %v2125 = vpop.f32.mrf.mxu0
  %v2126 = vpop.f32.mrf.mxu0
  %2127 = vdwg.mxu0
  %v2128 = vadd.f32 %v1885, %v2027
  %v2129 = vadd.f32 %v1886, %v2030
  %v2130 = vadd.f32 %v1887, %v2035
  %v2131 = vadd.f32 %v1888, %v2038
  %v2132 = vadd.f32 %v1889, %v2043
  %v2133 = vadd.f32 %v1890, %v2046
  %v2134 = vadd.f32 %v1891, %v2051
  %v2135 = vadd.f32 %v1892, %v2054
  %v2136 = vadd.f32 %v1893, %v2059
  %v2137 = vadd.f32 %v1894, %v2062
  %v2138 = vadd.f32 %v1895, %v2067
  %v2139 = vadd.f32 %v1896, %v2070
  %v2140 = vadd.f32 %v1897, %v2075
  %v2141 = vadd.f32 %v1898, %v2078
  %v2142 = vadd.f32 %v1899, %v2083
  %v2143 = vadd.f32 %v1900, %v2086
  %v2144 = vadd.f32 %v1901, %v2091
  %v2145 = vadd.f32 %v1902, %v2094
  %v2146 = vadd.f32 %v1903, %v2099
  %v2147 = vadd.f32 %v1904, %v2102
  %v2148 = vadd.f32 %v1905, %v2107
  %v2149 = vadd.f32 %v1906, %v2110
  %v2150 = vadd.f32 %v1907, %v2115
  %v2151 = vadd.f32 %v1908, %v2118
  %v2152 = vadd.f32 %v1909, %v2123
  %v2153 = vld [vmem:[%s2] sm:$0x1]
  %v2155 = vlaneseq
  %v2156 = vshrl.u32 %v2155, 7
  %v2157 = vsub.s32 0, %v2156
  %v2158 = vrot.slane %v2153, %v2157
  %v2160 = vadd.f32 %v2128, %v2158
  %v2161 = vadd.f32 %v2129, %v2158
  %v2162 = vadd.f32 %v2130, %v2158
  %v2163 = vadd.f32 %v2131, %v2158
  %v2164 = vadd.f32 %v2132, %v2158
  %v2165 = vadd.f32 %v2133, %v2158
  %v2166 = vadd.f32 %v2134, %v2158
  %v2167 = vadd.f32 %v2135, %v2158
  %v2168 = vadd.f32 %v2136, %v2158
  %v2169 = vadd.f32 %v2137, %v2158
  %v2170 = vadd.f32 %v2138, %v2158
  %v2171 = vadd.f32 %v2139, %v2158
  %v2172 = vadd.f32 %v2140, %v2158
  %v2173 = vadd.f32 %v2141, %v2158
  %v2174 = vadd.f32 %v2142, %v2158
  %v2175 = vadd.f32 %v2143, %v2158
  %v2176 = vadd.f32 %v2144, %v2158
  %v2177 = vadd.f32 %v2145, %v2158
  %v2178 = vadd.f32 %v2146, %v2158
  %v2179 = vadd.f32 %v2147, %v2158
  %v2180 = vadd.f32 %v2148, %v2158
  %v2181 = vadd.f32 %v2149, %v2158
  %v2182 = vadd.f32 %v2150, %v2158
  %v2183 = vadd.f32 %v2151, %v2158
  %v2184 = vadd.f32 %v2152, %v2158
  %v2185 = vmax.f32 %v2160, 0.0
  %v2186 = vmax.f32 %v2161, 0.0
  %v2187 = vmax.f32 %v2162, 0.0
  %v2188 = vmax.f32 %v2163, 0.0
  %v2189 = vmax.f32 %v2164, 0.0
  %v2190 = vmax.f32 %v2165, 0.0
  %v2191 = vmax.f32 %v2166, 0.0
  %v2192 = vmax.f32 %v2167, 0.0
  %v2193 = vmax.f32 %v2168, 0.0
  %v2194 = vmax.f32 %v2169, 0.0
  %v2195 = vmax.f32 %v2170, 0.0
  %v2196 = vmax.f32 %v2171, 0.0
  %v2197 = vmax.f32 %v2172, 0.0
  %v2198 = vmax.f32 %v2173, 0.0
  %v2199 = vmax.f32 %v2174, 0.0
  %v2200 = vmax.f32 %v2175, 0.0
  %v2201 = vmax.f32 %v2176, 0.0
  %v2202 = vmax.f32 %v2177, 0.0
  %v2203 = vmax.f32 %v2178, 0.0
  %v2204 = vmax.f32 %v2179, 0.0
  %v2205 = vmax.f32 %v2180, 0.0
  %v2206 = vmax.f32 %v2181, 0.0
  %v2207 = vmax.f32 %v2182, 0.0
  %v2208 = vmax.f32 %v2183, 0.0
  %v2209 = vmax.f32 %v2184, 0.0
  %vm2210 = vcmask 130048
  %2211 = vst.msk [vmem:[%s3] sm:$0xff] %vm2210, %v2185
  %2212 = vst.msk [vmem:[%s3 + $0x8] sm:$0xff] %vm2210, %v2186
  %2213 = vst.msk [vmem:[%s3 + $0x10] sm:$0xff] %vm2210, %v2187
  %2214 = vst.msk [vmem:[%s3 + $0x18] sm:$0xff] %vm2210, %v2188
  %2215 = vst.msk [vmem:[%s3 + $0x20] sm:$0xff] %vm2210, %v2189
  %2216 = vst.msk [vmem:[%s3 + $0x28] sm:$0xff] %vm2210, %v2190
  %2217 = vst.msk [vmem:[%s3 + $0x30] sm:$0xff] %vm2210, %v2191
  %2218 = vst.msk [vmem:[%s3 + $0x38] sm:$0xff] %vm2210, %v2192
  %2219 = vst.msk [vmem:[%s3 + $0x40] sm:$0xff] %vm2210, %v2193
  %2220 = vst.msk [vmem:[%s3 + $0x48] sm:$0xff] %vm2210, %v2194
  %2221 = vst.msk [vmem:[%s3 + $0x50] sm:$0xff] %vm2210, %v2195
  %2222 = vst.msk [vmem:[%s3 + $0x58] sm:$0xff] %vm2210, %v2196
  %2223 = vst.msk [vmem:[%s3 + $0x60] sm:$0xff] %vm2210, %v2197
  %2224 = vst.msk [vmem:[%s3 + $0x68] sm:$0xff] %vm2210, %v2198
  %2225 = vst.msk [vmem:[%s3 + $0x70] sm:$0xff] %vm2210, %v2199
  %2226 = vst.msk [vmem:[%s3 + $0x78] sm:$0xff] %vm2210, %v2200
  %2227 = vst.msk [vmem:[%s3 + $0x80] sm:$0xff] %vm2210, %v2201
  %2228 = vst.msk [vmem:[%s3 + $0x88] sm:$0xff] %vm2210, %v2202
  %2229 = vst.msk [vmem:[%s3 + $0x90] sm:$0xff] %vm2210, %v2203
  %2230 = vst.msk [vmem:[%s3 + $0x98] sm:$0xff] %vm2210, %v2204
  %2231 = vst.msk [vmem:[%s3 + $0xa0] sm:$0xff] %vm2210, %v2205
  %2232 = vst.msk [vmem:[%s3 + $0xa8] sm:$0xff] %vm2210, %v2206
  %2233 = vst.msk [vmem:[%s3 + $0xb0] sm:$0xff] %vm2210, %v2207
  %2234 = vst.msk [vmem:[%s3 + $0xb8] sm:$0xff] %vm2210, %v2208
  %2235 = vst.msk [vmem:[%s3 + $0xc0] sm:$0xff] %vm2210, %v2209
  // Predicated region
  $region14: #{vqa_forward.4} parent=0 // pred_check
    _
  $region15: #{vqa_forward.4} parent=0 // pred_check_branch
    %2237 = sbr.rel (0) target = $region17
  $region16: #{vqa_forward.4} parent=0 // pred_region
    _
  $region17: #{vqa_forward.4} parent=0 // pred_fallthru
    _
  // Predicated region
  $region18: #{vqa_forward.4} parent=0 // pred_check
    _
  $region19: #{vqa_forward.4} parent=0 // pred_check_branch
    %2239 = sbr.rel (0) target = $region21
  $region20: #{vqa_forward.4} parent=0 // pred_region
    _
  $region21: #{vqa_forward.4} parent=0 // pred_fallthru
    _

// kernel: vqa_forward.5
$region0: #{vqa_forward.5}
  #allocation0 [shape = 'u32[]', space=smem, size = 0x4, offset = 0x4, fixed_abs, tag = 'smem constant byte address 0x4 - core index']
  #allocation1 [shape = 'u32[144,128]{1,0:T(1,128)}', space=vmem, size = 0x12000, scoped, tag = 'internal scratch']
  #allocation2 [shape = 'f32[64,128]{1,0:T(8,128)}', space=vmem, size = 0x8000, scoped, tag = 'scratch operand']
  %s0 = inlined_call_operand.vmem [shape: f32[8,256], index: 0, kind: input, shape index: {}]
  %s1 = inlined_call_operand.vmem [shape: f32[64,32], index: 1, kind: input, shape index: {}]
  %s2 = inlined_call_operand.vmem [shape: bf16[256,64], index: 2, kind: input, shape index: {}]
  %s3 = inlined_call_operand.vmem [shape: f32[1,64], index: 3, kind: input, shape index: {}]
  %s4 = inlined_call_operand.vmem [shape: bf16[64,64], index: 4, kind: input, shape index: {}]
  %s5 = inlined_call_operand.vmem [shape: f32[1,64], index: 5, kind: input, shape index: {}]
  %s6 = inlined_call_operand.vmem [shape: bf16[64,32], index: 6, kind: input, shape index: {}]
  %s7 = inlined_call_operand.vmem [shape: f32[1,32], index: 7, kind: input, shape index: {}]
  %s8 = inlined_call_operand.vmem [shape: bf16[64,32], index: 8, kind: input, shape index: {}]
  %s9 = inlined_call_operand.vmem [shape: f32[1,32], index: 9, kind: input, shape index: {}]
  %s10 = inlined_call_operand.vmem [shape: bf16[32,32], index: 10, kind: input, shape index: {}]
  %s11 = inlined_call_operand.vmem [shape: f32[1,32], index: 11, kind: input, shape index: {}]
  %s12 = inlined_call_operand.vmem [shape: bf16[32,32], index: 12, kind: input, shape index: {}]
  %s13 = inlined_call_operand.vmem [shape: f32[1,32], index: 13, kind: input, shape index: {}]
  %s14 = inlined_call_operand.vmem [shape: bf16[32,128], index: 14, kind: input, shape index: {}]
  %s15 = inlined_call_operand.vmem [shape: bf16[32,128], index: 15, kind: input, shape index: {}]
  %s16 = inlined_call_operand.vmem [shape: f32[1,128], index: 16, kind: input, shape index: {}]
  %s17 = inlined_call_operand.vmem [shape: f32[8,32], index: 17, kind: output, shape index: {}]
  %s18 = sld [smem:[#allocation0]]
  $region78: #{vqa_forward.5} parent=0
    _
  %s20 = ssub.s32 1, %s18
  %s21 = scalar_select 0, %s20, %s18
  // Predicated region
  $region2: #{vqa_forward.5} parent=0 // pred_check
    _
  $region3: #{vqa_forward.5} parent=0 // pred_check_branch
    %23 = sbr.rel (0) target = $region5
  $region4: #{vqa_forward.5} parent=0 // pred_region
    _
  $region5: #{vqa_forward.5} parent=0 // pred_fallthru
    _
  // Predicated region
  $region6: #{vqa_forward.5} parent=0 // pred_check
    _
  $region7: #{vqa_forward.5} parent=0 // pred_check_branch
    %25 = sbr.rel (0) target = $region9
  $region8: #{vqa_forward.5} parent=0 // pred_region
    _
  $region9: #{vqa_forward.5} parent=0 // pred_fallthru
    _
  // Predicated region
  $region10: #{vqa_forward.5} parent=0 // pred_check
    _
  $region11: #{vqa_forward.5} parent=0 // pred_check_branch
    %27 = sbr.rel (0) target = $region13
  $region12: #{vqa_forward.5} parent=0 // pred_region
    _
  $region13: #{vqa_forward.5} parent=0 // pred_fallthru
    _
  // Predicated region
  $region14: #{vqa_forward.5} parent=0 // pred_check
    _
  $region15: #{vqa_forward.5} parent=0 // pred_check_branch
    %29 = sbr.rel (0) target = $region17
  $region16: #{vqa_forward.5} parent=0 // pred_region
    _
  $region17: #{vqa_forward.5} parent=0 // pred_fallthru
    _
  // Predicated region
  $region18: #{vqa_forward.5} parent=0 // pred_check
    _
  $region19: #{vqa_forward.5} parent=0 // pred_check_branch
    %31 = sbr.rel (0) target = $region21
  $region20: #{vqa_forward.5} parent=0 // pred_region
    _
  $region21: #{vqa_forward.5} parent=0 // pred_fallthru
    _
  // Predicated region
  $region22: #{vqa_forward.5} parent=0 // pred_check
    _
  $region23: #{vqa_forward.5} parent=0 // pred_check_branch
    %33 = sbr.rel (0) target = $region25
  $region24: #{vqa_forward.5} parent=0 // pred_region
    _
  $region25: #{vqa_forward.5} parent=0 // pred_fallthru
    _
  // Predicated region
  $region26: #{vqa_forward.5} parent=0 // pred_check
    _
  $region27: #{vqa_forward.5} parent=0 // pred_check_branch
    %35 = sbr.rel (0) target = $region29
  $region28: #{vqa_forward.5} parent=0 // pred_region
    _
  $region29: #{vqa_forward.5} parent=0 // pred_fallthru
    _
  // Predicated region
  $region30: #{vqa_forward.5} parent=0 // pred_check
    _
  $region31: #{vqa_forward.5} parent=0 // pred_check_branch
    %37 = sbr.rel (0) target = $region33
  $region32: #{vqa_forward.5} parent=0 // pred_region
    _
  $region33: #{vqa_forward.5} parent=0 // pred_fallthru
    _
  // Predicated region
  $region34: #{vqa_forward.5} parent=0 // pred_check
    _
  $region35: #{vqa_forward.5} parent=0 // pred_check_branch
    %39 = sbr.rel (0) target = $region37
  $region36: #{vqa_forward.5} parent=0 // pred_region
    _
  $region37: #{vqa_forward.5} parent=0 // pred_fallthru
    _
  // Predicated region
  $region38: #{vqa_forward.5} parent=0 // pred_check
    _
  $region39: #{vqa_forward.5} parent=0 // pred_check_branch
    %41 = sbr.rel (0) target = $region41
  $region40: #{vqa_forward.5} parent=0 // pred_region
    _
  $region41: #{vqa_forward.5} parent=0 // pred_fallthru
    _
  // Predicated region
  $region42: #{vqa_forward.5} parent=0 // pred_check
    _
  $region43: #{vqa_forward.5} parent=0 // pred_check_branch
    %43 = sbr.rel (0) target = $region45
  $region44: #{vqa_forward.5} parent=0 // pred_region
    _
  $region45: #{vqa_forward.5} parent=0 // pred_fallthru
    _
  // Predicated region
  $region46: #{vqa_forward.5} parent=0 // pred_check
    _
  $region47: #{vqa_forward.5} parent=0 // pred_check_branch
    %45 = sbr.rel (0) target = $region49
  $region48: #{vqa_forward.5} parent=0 // pred_region
    _
  $region49: #{vqa_forward.5} parent=0 // pred_fallthru
    _
  // Predicated region
  $region50: #{vqa_forward.5} parent=0 // pred_check
    _
  $region51: #{vqa_forward.5} parent=0 // pred_check_branch
    %47 = sbr.rel (0) target = $region53
  $region52: #{vqa_forward.5} parent=0 // pred_region
    _
  $region53: #{vqa_forward.5} parent=0 // pred_fallthru
    _
  // Predicated region
  $region54: #{vqa_forward.5} parent=0 // pred_check
    _
  $region55: #{vqa_forward.5} parent=0 // pred_check_branch
    %49 = sbr.rel (0) target = $region57
  $region56: #{vqa_forward.5} parent=0 // pred_region
    _
  $region57: #{vqa_forward.5} parent=0 // pred_fallthru
    _
  // Predicated region
  $region58: #{vqa_forward.5} parent=0 // pred_check
    _
  $region59: #{vqa_forward.5} parent=0 // pred_check_branch
    %51 = sbr.rel (0) target = $region61
  $region60: #{vqa_forward.5} parent=0 // pred_region
    _
  $region61: #{vqa_forward.5} parent=0 // pred_fallthru
    _
  // Predicated region
  $region62: #{vqa_forward.5} parent=0 // pred_check
    _
  $region63: #{vqa_forward.5} parent=0 // pred_check_branch
    %53 = sbr.rel (0) target = $region65
  $region64: #{vqa_forward.5} parent=0 // pred_region
    _
  $region65: #{vqa_forward.5} parent=0 // pred_fallthru
    _
  // Predicated region
  $region66: #{vqa_forward.5} parent=0 // pred_check
    _
  $region67: #{vqa_forward.5} parent=0 // pred_check_branch
    %55 = sbr.rel (0) target = $region69
  $region68: #{vqa_forward.5} parent=0 // pred_region
    _
  $region69: #{vqa_forward.5} parent=0 // pred_fallthru
    _
  %v57 = vld [vmem:[%s0] sm:$0xff]
  %v58 = vld [vmem:[%s0 + $0x8] sm:$0xff]
  %v59 = vpack.c.bf16 %v57, %v57
  %v60 = vpack.c.bf16 %v58, %v58
  %v61 = vld [vmem:[%s2] sm:$0xf]
  %v62 = vld [vmem:[%s2 + $0x4] sm:$0xf]
  %v63 = vld [vmem:[%s2 + $0x8] sm:$0xf]
  %v64 = vld [vmem:[%s2 + $0xc] sm:$0xf]
  %v65 = vld [vmem:[%s2 + $0x10] sm:$0xf]
  %v66 = vld [vmem:[%s2 + $0x14] sm:$0xf]
  %v67 = vld [vmem:[%s2 + $0x18] sm:$0xf]
  %v68 = vld [vmem:[%s2 + $0x1c] sm:$0xf]
  %v69 = vld [vmem:[%s2 + $0x20] sm:$0xf]
  %v70 = vld [vmem:[%s2 + $0x24] sm:$0xf]
  %v71 = vld [vmem:[%s2 + $0x28] sm:$0xf]
  %v72 = vld [vmem:[%s2 + $0x2c] sm:$0xf]
  %v73 = vld [vmem:[%s2 + $0x30] sm:$0xf]
  %v74 = vld [vmem:[%s2 + $0x34] sm:$0xf]
  %v75 = vld [vmem:[%s2 + $0x38] sm:$0xf]
  %v76 = vld [vmem:[%s2 + $0x3c] sm:$0xf]
  %v77 = vld [vmem:[%s2 + $0x40] sm:$0xf]
  %v78 = vld [vmem:[%s2 + $0x44] sm:$0xf]
  %v79 = vld [vmem:[%s2 + $0x48] sm:$0xf]
  %v80 = vld [vmem:[%s2 + $0x4c] sm:$0xf]
  %v81 = vld [vmem:[%s2 + $0x50] sm:$0xf]
  %v82 = vld [vmem:[%s2 + $0x54] sm:$0xf]
  %v83 = vld [vmem:[%s2 + $0x58] sm:$0xf]
  %v84 = vld [vmem:[%s2 + $0x5c] sm:$0xf]
  %v85 = vld [vmem:[%s2 + $0x60] sm:$0xf]
  %v86 = vld [vmem:[%s2 + $0x64] sm:$0xf]
  %v87 = vld [vmem:[%s2 + $0x68] sm:$0xf]
  %v88 = vld [vmem:[%s2 + $0x6c] sm:$0xf]
  %v89 = vld [vmem:[%s2 + $0x70] sm:$0xf]
  %v90 = vld [vmem:[%s2 + $0x74] sm:$0xf]
  %v91 = vld [vmem:[%s2 + $0x78] sm:$0xf]
  %v92 = vld [vmem:[%s2 + $0x7c] sm:$0xf]
  %v93 = vld [vmem:[%s3] sm:$0x1]
  %v95 = vlaneseq
  %v96 = vshrl.u32 %v95, 7
  %v97 = vsub.s32 0, %v96
  %v98 = vrot.slane %v93, %v97
  %v132 = vunpack.c.l.b16 %v61
  %v133 = vunpack.c.l.b16 %v62
  %v134 = vunpack.c.l.b16 %v63
  %v135 = vunpack.c.l.b16 %v64
  %v136 = vunpack.c.l.b16 %v65
  %v137 = vunpack.c.l.b16 %v66
  %v138 = vunpack.c.l.b16 %v67
  %v139 = vunpack.c.l.b16 %v68
  %v140 = vunpack.c.l.b16 %v69
  %v141 = vunpack.c.l.b16 %v70
  %v142 = vunpack.c.l.b16 %v71
  %v143 = vunpack.c.l.b16 %v72
  %v144 = vunpack.c.l.b16 %v73
  %v145 = vunpack.c.l.b16 %v74
  %v146 = vunpack.c.l.b16 %v75
  %v147 = vunpack.c.l.b16 %v76
  %v148 = vunpack.c.l.b16 %v77
  %v149 = vunpack.c.l.b16 %v78
  %v150 = vunpack.c.l.b16 %v79
  %v151 = vunpack.c.l.b16 %v80
  %v152 = vunpack.c.l.b16 %v81
  %v153 = vunpack.c.l.b16 %v82
  %v154 = vunpack.c.l.b16 %v83
  %v155 = vunpack.c.l.b16 %v84
  %v156 = vunpack.c.l.b16 %v85
  %v157 = vunpack.c.l.b16 %v86
  %v158 = vunpack.c.l.b16 %v87
  %v159 = vunpack.c.l.b16 %v88
  %v160 = vunpack.c.l.b16 %v89
  %v161 = vunpack.c.l.b16 %v90
  %v162 = vunpack.c.l.b16 %v91
  %v163 = vunpack.c.l.b16 %v92
  %v164 = vpack.c.b16 %v133, %v132
  %v165 = vpack.c.b16 %v135, %v134
  %v166 = vpack.c.b16 %v137, %v136
  %v167 = vpack.c.b16 %v139, %v138
  %v168 = vpack.c.b16 %v141, %v140
  %v169 = vpack.c.b16 %v143, %v142
  %v170 = vpack.c.b16 %v145, %v144
  %v171 = vpack.c.b16 %v147, %v146
  %v172 = vpack.c.b16 %v149, %v148
  %v173 = vpack.c.b16 %v151, %v150
  %v174 = vpack.c.b16 %v153, %v152
  %v175 = vpack.c.b16 %v155, %v154
  %v176 = vpack.c.b16 %v157, %v156
  %v177 = vpack.c.b16 %v159, %v158
  %v178 = vpack.c.b16 %v161, %v160
  %v179 = vpack.c.b16 %v163, %v162
  %196 = vmatprep.subr.bf16.mxu0 0
  %197 = vmatpush1.bf16.msra.mxu0 %v171
  %198 = vmatprep.subr.bf16.mxu0 0
  %199 = vmatpush1.bf16.msra.mxu0 %v170
  %200 = vmatprep.subr.bf16.mxu0 0
  %201 = vmatpush1.bf16.msra.mxu0 %v169
  %202 = vmatprep.subr.bf16.mxu0 0
  %203 = vmatpush1.bf16.msra.mxu0 %v168
  %204 = vmatprep.subr.bf16.mxu0 0
  %205 = vmatpush1.bf16.msra.mxu0 %v167
  %206 = vmatprep.subr.bf16.mxu0 0
  %207 = vmatpush1.bf16.msra.mxu0 %v166
  %208 = vmatprep.subr.bf16.mxu0 0
  %209 = vmatpush1.bf16.msra.mxu0 %v165
  %210 = vmatprep.subr.bf16.mxu0 0
  %211 = vmatpush1.bf16.msra.mxu0 %v164
  %212 = vmatprep.subr.bf16.mxu0 0
  %213 = vmatpush2.bf16.msra.mxu0 %v179
  %214 = vmatprep.subr.bf16.mxu0 0
  %215 = vmatpush2.bf16.msra.mxu0 %v178
  %216 = vmatprep.subr.bf16.mxu0 0
  %217 = vmatpush2.bf16.msra.mxu0 %v177
  %218 = vmatprep.subr.bf16.mxu0 0
  %219 = vmatpush2.bf16.msra.mxu0 %v176
  %220 = vmatprep.subr.bf16.mxu0 0
  %221 = vmatpush2.bf16.msra.mxu0 %v175
  %222 = vmatprep.subr.bf16.mxu0 0
  %223 = vmatpush2.bf16.msra.mxu0 %v174
  %224 = vmatprep.subr.bf16.mxu0 0
  %225 = vmatpush2.bf16.msra.mxu0 %v173
  %226 = vmatprep.subr.bf16.mxu0 0
  %227 = vmatpush2.bf16.msra.mxu0 %v172
  %228 = vmatprep.mubr.bf16.mxu0 %v60
  %229 = vmatmul.mubr.bf16.gmra.mxu0 %v59
  %v230 = vpop.f32.mrf.mxu0
  %v231 = vadd.f32 %v98, %v230
  %v232 = vpop.f32.mrf.mxu0
  %v233 = vpop.f32.mrf.mxu0
  %v234 = vpop.f32.mrf.mxu0
  %235 = vdwg.mxu0
  %v236 = vmax.f32 %v231, 0.0
  %v237 = vpack.c.bf16 %v236, %v236
  %v238 = vld [vmem:[%s4] sm:$0xf]
  %v239 = vld [vmem:[%s4 + $0x4] sm:$0xf]
  %v240 = vld [vmem:[%s4 + $0x8] sm:$0xf]
  %v241 = vld [vmem:[%s4 + $0xc] sm:$0xf]
  %v242 = vld [vmem:[%s4 + $0x10] sm:$0xf]
  %v243 = vld [vmem:[%s4 + $0x14] sm:$0xf]
  %v244 = vld [vmem:[%s4 + $0x18] sm:$0xf]
  %v245 = vld [vmem:[%s4 + $0x1c] sm:$0xf]
  %v246 = vld [vmem:[%s5] sm:$0x1]
  %v248 = vlaneseq
  %v249 = vshrl.u32 %v248, 7
  %v250 = vsub.s32 0, %v249
  %v251 = vrot.slane %v246, %v250
  %v261 = vunpack.c.l.b16 %v238
  %v262 = vunpack.c.l.b16 %v239
  %v263 = vunpack.c.l.b16 %v240
  %v264 = vunpack.c.l.b16 %v241
  %v265 = vunpack.c.l.b16 %v242
  %v266 = vunpack.c.l.b16 %v243
  %v267 = vunpack.c.l.b16 %v244
  %v268 = vunpack.c.l.b16 %v245
  %v269 = vpack.c.b16 %v262, %v261
  %v270 = vpack.c.b16 %v264, %v263
  %v271 = vpack.c.b16 %v266, %v265
  %v272 = vpack.c.b16 %v268, %v267
  %vm277 = vcmask 523264
  %v279 = vsel %vm277, %v237, 0
  %281 = vmatprep.subr.bf16.mxu0 0
  %282 = vmatpush1.bf16.msra.mxu0 0
  %283 = vmatprep.subr.bf16.mxu0 0
  %284 = vmatpush1.bf16.msra.mxu0 0
  %285 = vmatprep.subr.bf16.mxu0 0
  %286 = vmatpush1.bf16.msra.mxu0 0
  %287 = vmatprep.subr.bf16.mxu0 0
  %288 = vmatpush1.bf16.msra.mxu0 0
  %289 = vmatprep.subr.bf16.mxu0 0
  %290 = vmatpush1.bf16.msra.mxu0 %v272
  %291 = vmatprep.subr.bf16.mxu0 0
  %292 = vmatpush1.bf16.msra.mxu0 %v271
  %293 = vmatprep.subr.bf16.mxu0 0
  %294 = vmatpush1.bf16.msra.mxu0 %v270
  %295 = vmatprep.subr.bf16.mxu0 0
  %296 = vmatpush1.bf16.msra.mxu0 %v269
  %297 = vmatprep.subr.bf16.mxu0 0
  %298 = vmatpush2.bf16.msra.mxu0 0
  %299 = vmatprep.subr.bf16.mxu0 0
  %300 = vmatpush2.bf16.msra.mxu0 0
  %301 = vmatprep.subr.bf16.mxu0 0
  %302 = vmatpush2.bf16.msra.mxu0 0
  %303 = vmatprep.subr.bf16.mxu0 0
  %304 = vmatpush2.bf16.msra.mxu0 0
  %305 = vmatprep.subr.bf16.mxu0 0
  %306 = vmatpush2.bf16.msra.mxu0 0
  %307 = vmatprep.subr.bf16.mxu0 0
  %308 = vmatpush2.bf16.msra.mxu0 0
  %309 = vmatprep.subr.bf16.mxu0 0
  %310 = vmatpush2.bf16.msra.mxu0 0
  %311 = vmatprep.subr.bf16.mxu0 0
  %312 = vmatpush2.bf16.msra.mxu0 0
  %313 = vmatprep.mubr.bf16.mxu0 0
  %314 = vmatmul.mubr.bf16.gmra.mxu0 %v279
  %v315 = vpop.f32.mrf.mxu0
  %v316 = vadd.f32 %v251, %v315
  %v317 = vpop.f32.mrf.mxu0
  %v318 = vpop.f32.mrf.mxu0
  %v319 = vpop.f32.mrf.mxu0
  %320 = vdwg.mxu0
  %v321 = vmax.f32 %v316, 0.0
  %v322 = vpack.c.bf16 %v321, %v321
  %v323 = vld [vmem:[%s6] sm:$0xf]
  %v324 = vld [vmem:[%s6 + $0x4] sm:$0xf]
  %v325 = vld [vmem:[%s6 + $0x8] sm:$0xf]
  %v326 = vld [vmem:[%s6 + $0xc] sm:$0xf]
  %v327 = vld [vmem:[%s6 + $0x10] sm:$0xf]
  %v328 = vld [vmem:[%s6 + $0x14] sm:$0xf]
  %v329 = vld [vmem:[%s6 + $0x18] sm:$0xf]
  %v330 = vld [vmem:[%s6 + $0x1c] sm:$0xf]
  %v331 = vld [vmem:[%s7] sm:$0x1]
  %v333 = vlaneseq
  %v334 = vshrl.u32 %v333, 7
  %v335 = vsub.s32 0, %v334
  %v336 = vrot.slane %v331, %v335
  %v346 = vunpack.c.l.b16 %v323
  %v347 = vunpack.c.l.b16 %v324
  %v348 = vunpack.c.l.b16 %v325
  %v349 = vunpack.c.l.b16 %v326
  %v350 = vunpack.c.l.b16 %v327
  %v351 = vunpack.c.l.b16 %v328
  %v352 = vunpack.c.l.b16 %v329
  %v353 = vunpack.c.l.b16 %v330
  %v354 = vpack.c.b16 %v347, %v346
  %v355 = vpack.c.b16 %v349, %v348
  %v356 = vpack.c.b16 %v351, %v350
  %v357 = vpack.c.b16 %v353, %v352
  %v363 = vsel %vm277, %v322, 0
  %365 = vmatprep.subr.bf16.mxu0 0
  %366 = vmatpush1.bf16.msra.mxu0 0
  %367 = vmatprep.subr.bf16.mxu0 0
  %368 = vmatpush1.bf16.msra.mxu0 0
  %369 = vmatprep.subr.bf16.mxu0 0
  %370 = vmatpush1.bf16.msra.mxu0 0
  %371 = vmatprep.subr.bf16.mxu0 0
  %372 = vmatpush1.bf16.msra.mxu0 0
  %373 = vmatprep.subr.bf16.mxu0 0
  %374 = vmatpush1.bf16.msra.mxu0 %v357
  %375 = vmatprep.subr.bf16.mxu0 0
  %376 = vmatpush1.bf16.msra.mxu0 %v356
  %377 = vmatprep.subr.bf16.mxu0 0
  %378 = vmatpush1.bf16.msra.mxu0 %v355
  %379 = vmatprep.subr.bf16.mxu0 0
  %380 = vmatpush1.bf16.msra.mxu0 %v354
  %381 = vmatprep.subr.bf16.mxu0 0
  %382 = vmatpush2.bf16.msra.mxu0 0
  %383 = vmatprep.subr.bf16.mxu0 0
  %384 = vmatpush2.bf16.msra.mxu0 0
  %385 = vmatprep.subr.bf16.mxu0 0
  %386 = vmatpush2.bf16.msra.mxu0 0
  %387 = vmatprep.subr.bf16.mxu0 0
  %388 = vmatpush2.bf16.msra.mxu0 0
  %389 = vmatprep.subr.bf16.mxu0 0
  %390 = vmatpush2.bf16.msra.mxu0 0
  %391 = vmatprep.subr.bf16.mxu0 0
  %392 = vmatpush2.bf16.msra.mxu0 0
  %393 = vmatprep.subr.bf16.mxu0 0
  %394 = vmatpush2.bf16.msra.mxu0 0
  %395 = vmatprep.subr.bf16.mxu0 0
  %396 = vmatpush2.bf16.msra.mxu0 0
  %397 = vmatprep.mubr.bf16.mxu0 0
  %398 = vmatmul.mubr.bf16.gmra.mxu0 %v363
  %v399 = vpop.f32.mrf.mxu0
  %v400 = vadd.f32 %v336, %v399
  %v401 = vpop.f32.mrf.mxu0
  %v402 = vpop.f32.mrf.mxu0
  %v403 = vpop.f32.mrf.mxu0
  %404 = vdwg.mxu0
  %v405 = vmul.f32 %v400, %v400
  %vm406 = vcmask 261120
  %v407 = vsel %vm406, %v405, 0.0
  %408 = vadd.xlane.f32.xlu0 %v407
  %v409 = vpop.xlane.xlu0 %408
  %v410 = vadd.f32 %v409, 1e-12
  %v411 = vrsqrt.pop %v410
  %v412 = vmul.f32 %v400, %v411
  %v413 = vld [vmem:[%s1] sm:$0xff]
  %v414 = vld [vmem:[%s1 + $0x8] sm:$0xff]
  %v415 = vld [vmem:[%s1 + $0x10] sm:$0xff]
  %v416 = vld [vmem:[%s1 + $0x18] sm:$0xff]
  %v417 = vld [vmem:[%s1 + $0x20] sm:$0xff]
  %v418 = vld [vmem:[%s1 + $0x28] sm:$0xff]
  %v419 = vld [vmem:[%s1 + $0x30] sm:$0xff]
  %v420 = vld [vmem:[%s1 + $0x38] sm:$0xff]
  %v421 = vtanh.pop %v413
  %v422 = vtanh.pop %v414
  %v423 = vtanh.pop %v415
  %v424 = vtanh.pop %v416
  %v425 = vtanh.pop %v417
  %v426 = vtanh.pop %v418
  %v427 = vtanh.pop %v419
  %v428 = vtanh.pop %v420
  %v429 = vpack.c.bf16 %v422, %v421
  %v430 = vpack.c.bf16 %v424, %v423
  %v431 = vpack.c.bf16 %v426, %v425
  %v432 = vpack.c.bf16 %v428, %v427
  %v433 = vld [vmem:[%s14] sm:$0xf]
  %v434 = vld [vmem:[%s14 + $0x4] sm:$0xf]
  %v435 = vld [vmem:[%s14 + $0x8] sm:$0xf]
  %v436 = vld [vmem:[%s14 + $0xc] sm:$0xf]
  %v437 = vld [vmem:[%s16] sm:$0x1]
  %v439 = vlaneseq
  %v440 = vshrl.u32 %v439, 7
  %v441 = vsub.s32 0, %v440
  %v442 = vrot.slane %v437, %v441
  %v448 = vunpack.c.l.b16 %v433
  %v449 = vunpack.c.l.b16 %v434
  %v450 = vunpack.c.l.b16 %v435
  %v451 = vunpack.c.l.b16 %v436
  %v452 = vpack.c.b16 %v449, %v448
  %v453 = vpack.c.b16 %v451, %v450
  %v457 = vsel %vm406, %v429, 0
  %v460 = vsel %vm406, %v430, 0
  %v463 = vsel %vm406, %v431, 0
  %v466 = vsel %vm406, %v432, 0
  %468 = vmatprep.subr.bf16.mxu0 0
  %469 = vmatpush1.bf16.msra.mxu0 0
  %470 = vmatprep.subr.bf16.mxu0 0
  %471 = vmatpush1.bf16.msra.mxu0 0
  %472 = vmatprep.subr.bf16.mxu0 0
  %473 = vmatpush1.bf16.msra.mxu0 0
  %474 = vmatprep.subr.bf16.mxu0 0
  %475 = vmatpush1.bf16.msra.mxu0 0
  %476 = vmatprep.subr.bf16.mxu0 0
  %477 = vmatpush1.bf16.msra.mxu0 0
  %478 = vmatprep.subr.bf16.mxu0 0
  %479 = vmatpush1.bf16.msra.mxu0 0
  %480 = vmatprep.subr.bf16.mxu0 0
  %481 = vmatpush1.bf16.msra.mxu0 %v453
  %482 = vmatprep.subr.bf16.mxu0 0
  %483 = vmatpush1.bf16.msra.mxu0 %v452
  %484 = vmatprep.subr.bf16.mxu0 0
  %485 = vmatpush2.bf16.msra.mxu0 0
  %486 = vmatprep.subr.bf16.mxu0 0
  %487 = vmatpush2.bf16.msra.mxu0 0
  %488 = vmatprep.subr.bf16.mxu0 0
  %489 = vmatpush2.bf16.msra.mxu0 0
  %490 = vmatprep.subr.bf16.mxu0 0
  %491 = vmatpush2.bf16.msra.mxu0 0
  %492 = vmatprep.subr.bf16.mxu0 0
  %493 = vmatpush2.bf16.msra.mxu0 0
  %494 = vmatprep.subr.bf16.mxu0 0
  %495 = vmatpush2.bf16.msra.mxu0 0
  %496 = vmatprep.subr.bf16.mxu0 0
  %497 = vmatpush2.bf16.msra.mxu0 0
  %498 = vmatprep.subr.bf16.mxu0 0
  %499 = vmatpush2.bf16.msra.mxu0 0
  %500 = vmatprep.mubr.bf16.mxu0 0
  %501 = vmatmul.mubr.bf16.gmra.mxu0 %v457
  %v502 = vpop.f32.mrf.mxu0
  %v503 = vadd.f32 %v442, %v502
  %v504 = vpop.f32.mrf.mxu0
  %v505 = vpop.f32.mrf.mxu0
  %v506 = vadd.f32 %v442, %v505
  %v507 = vpop.f32.mrf.mxu0
  %508 = vmatprep.mubr.bf16.mxu0 0
  %509 = vmatmul.mubr.bf16.gmra.mxu0 %v460
  %v510 = vpop.f32.mrf.mxu0
  %v511 = vadd.f32 %v442, %v510
  %v512 = vpop.f32.mrf.mxu0
  %v513 = vpop.f32.mrf.mxu0
  %v514 = vadd.f32 %v442, %v513
  %v515 = vpop.f32.mrf.mxu0
  %516 = vmatprep.mubr.bf16.mxu0 0
  %517 = vmatmul.mubr.bf16.gmra.mxu0 %v463
  %v518 = vpop.f32.mrf.mxu0
  %v519 = vadd.f32 %v442, %v518
  %v520 = vpop.f32.mrf.mxu0
  %v521 = vpop.f32.mrf.mxu0
  %v522 = vadd.f32 %v442, %v521
  %v523 = vpop.f32.mrf.mxu0
  %524 = vmatprep.mubr.bf16.mxu0 0
  %525 = vmatmul.mubr.bf16.gmra.mxu0 %v466
  %v526 = vpop.f32.mrf.mxu0
  %v527 = vadd.f32 %v442, %v526
  %v528 = vpop.f32.mrf.mxu0
  %v529 = vpop.f32.mrf.mxu0
  %v530 = vadd.f32 %v442, %v529
  %v531 = vpop.f32.mrf.mxu0
  %532 = vdwg.mxu0
  %533 = vst [vmem:[#allocation2] sm:$0xff] %v503
  %534 = vst [vmem:[#allocation2 + $0x8] sm:$0xff] %v506
  %535 = vst [vmem:[#allocation2 + $0x10] sm:$0xff] %v511
  %536 = vst [vmem:[#allocation2 + $0x18] sm:$0xff] %v514
  %537 = vst [vmem:[#allocation2 + $0x20] sm:$0xff] %v519
  %538 = vst [vmem:[#allocation2 + $0x28] sm:$0xff] %v522
  %539 = vst [vmem:[#allocation2 + $0x30] sm:$0xff] %v527
  %540 = vst [vmem:[#allocation2 + $0x38] sm:$0xff] %v530
  %v541 = vld [vmem:[%s15] sm:$0xf]
  %v542 = vld [vmem:[%s15 + $0x4] sm:$0xf]
  %v543 = vld [vmem:[%s15 + $0x8] sm:$0xf]
  %v544 = vld [vmem:[%s15 + $0xc] sm:$0xf]
  %v545 = vld [vmem:[#allocation2] sm:$0xff]
  %v550 = vunpack.c.l.b16 %v541
  %v551 = vunpack.c.l.b16 %v542
  %v552 = vunpack.c.l.b16 %v543
  %v553 = vunpack.c.l.b16 %v544
  %v554 = vpack.c.b16 %v551, %v550
  %v555 = vpack.c.b16 %v553, %v552
  %v559 = vsel %vm406, 0, 0
  %561 = vmatprep.subr.bf16.mxu0 0
  %562 = vmatpush1.bf16.msra.mxu0 0
  %563 = vmatprep.subr.bf16.mxu0 0
  %564 = vmatpush1.bf16.msra.mxu0 0
  %565 = vmatprep.subr.bf16.mxu0 0
  %566 = vmatpush1.bf16.msra.mxu0 0
  %567 = vmatprep.subr.bf16.mxu0 0
  %568 = vmatpush1.bf16.msra.mxu0 0
  %569 = vmatprep.subr.bf16.mxu0 0
  %570 = vmatpush1.bf16.msra.mxu0 0
  %571 = vmatprep.subr.bf16.mxu0 0
  %572 = vmatpush1.bf16.msra.mxu0 0
  %573 = vmatprep.subr.bf16.mxu0 0
  %574 = vmatpush1.bf16.msra.mxu0 %v555
  %575 = vmatprep.subr.bf16.mxu0 0
  %576 = vmatpush1.bf16.msra.mxu0 %v554
  %577 = vmatprep.subr.bf16.mxu0 0
  %578 = vmatpush2.bf16.msra.mxu0 0
  %579 = vmatprep.subr.bf16.mxu0 0
  %580 = vmatpush2.bf16.msra.mxu0 0
  %581 = vmatprep.subr.bf16.mxu0 0
  %582 = vmatpush2.bf16.msra.mxu0 0
  %583 = vmatprep.subr.bf16.mxu0 0
  %584 = vmatpush2.bf16.msra.mxu0 0
  %585 = vmatprep.subr.bf16.mxu0 0
  %586 = vmatpush2.bf16.msra.mxu0 0
  %587 = vmatprep.subr.bf16.mxu0 0
  %588 = vmatpush2.bf16.msra.mxu0 0
  %589 = vmatprep.subr.bf16.mxu0 0
  %590 = vmatpush2.bf16.msra.mxu0 0
  %591 = vmatprep.subr.bf16.mxu0 0
  %592 = vmatpush2.bf16.msra.mxu0 0
  %593 = vmatprep.mubr.bf16.mxu0 0
  %594 = vmatmul.mubr.bf16.gmra.mxu0 %v559
  %v595 = vpop.f32.mrf.mxu0
  %v596 = vadd.f32 0.0, %v595
  %v597 = vpop.f32.mrf.mxu0
  %v598 = vpop.f32.mrf.mxu0
  %v599 = vpop.f32.mrf.mxu0
  %600 = vdwg.mxu0
  %v601 = vadd.f32 %v545, %v596
  %v602 = vxor.u32 %v601, 2147483648
  %v603 = vmul.f32 %v602, 1.442695
  %v604 = vpow.pop %v603
  %v605 = vadd.f32 %v604, 1.0
  %v606 = vrcp.pop %v605
  %v607 = vmul.f32 1.0, %v606
  %v608 = vtanh.pop %v601
  %v609 = vmul.f32 %v607, 0.0
  %611 = vrot.lane.b32.xlu0 %v608, 64
  %v612 = vpop.permute.xlu0 %611
  %v614 = vmul.f32 %v607, %v612
  %616 = vrot.lane.b32.xlu0 %v614, 32
  %v617 = vpop.permute.xlu0 %616
  %v619 = vadd.f32 %v609, %v617
  %v620 = vtanh.pop %v619
  %622 = vrot.lane.b32.xlu0 %v620, 64
  %v623 = vpop.permute.xlu0 %622
  %v625 = vmul.f32 %v607, %v623
  %s626 = scalar_lea.vmem [#allocation2], 8
  %v627 = vld [vmem:[%s626] sm:$0xff]
  %v628 = vpack.c.bf16 %v625, %v625
  %630 = vrot.lane.b32.xlu0 %v628, 32
  %v631 = vpop.permute.xlu0 %630
  %v633 = vsel %vm406, %v631, 0
  %635 = vmatprep.subr.bf16.mxu0 0
  %636 = vmatpush1.bf16.msra.mxu0 0
  %637 = vmatprep.subr.bf16.mxu0 0
  %638 = vmatpush1.bf16.msra.mxu0 0
  %639 = vmatprep.subr.bf16.mxu0 0
  %640 = vmatpush1.bf16.msra.mxu0 0
  %641 = vmatprep.subr.bf16.mxu0 0
  %642 = vmatpush1.bf16.msra.mxu0 0
  %643 = vmatprep.subr.bf16.mxu0 0
  %644 = vmatpush1.bf16.msra.mxu0 0
  %645 = vmatprep.subr.bf16.mxu0 0
  %646 = vmatpush1.bf16.msra.mxu0 0
  %647 = vmatprep.subr.bf16.mxu0 0
  %648 = vmatpush1.bf16.msra.mxu0 %v555
  %649 = vmatprep.subr.bf16.mxu0 0
  %650 = vmatpush1.bf16.msra.mxu0 %v554
  %651 = vmatprep.subr.bf16.mxu0 0
  %652 = vmatpush2.bf16.msra.mxu0 0
  %653 = vmatprep.subr.bf16.mxu0 0
  %654 = vmatpush2.bf16.msra.mxu0 0
  %655 = vmatprep.subr.bf16.mxu0 0
  %656 = vmatpush2.bf16.msra.mxu0 0
  %657 = vmatprep.subr.bf16.mxu0 0
  %658 = vmatpush2.bf16.msra.mxu0 0
  %659 = vmatprep.subr.bf16.mxu0 0
  %660 = vmatpush2.bf16.msra.mxu0 0
  %661 = vmatprep.subr.bf16.mxu0 0
  %662 = vmatpush2.bf16.msra.mxu0 0
  %663 = vmatprep.subr.bf16.mxu0 0
  %664 = vmatpush2.bf16.msra.mxu0 0
  %665 = vmatprep.subr.bf16.mxu0 0
  %666 = vmatpush2.bf16.msra.mxu0 0
  %667 = vmatprep.mubr.bf16.mxu0 0
  %668 = vmatmul.mubr.bf16.gmra.mxu0 %v633
  %v669 = vpop.f32.mrf.mxu0
  %v670 = vadd.f32 0.0, %v669
  %v671 = vpop.f32.mrf.mxu0
  %v672 = vpop.f32.mrf.mxu0
  %v673 = vpop.f32.mrf.mxu0
  %674 = vdwg.mxu0
  %v675 = vadd.f32 %v627, %v670
  %v676 = vxor.u32 %v675, 2147483648
  %v677 = vmul.f32 %v676, 1.442695
  %v678 = vpow.pop %v677
  %v679 = vadd.f32 %v678, 1.0
  %v680 = vrcp.pop %v679
  %v681 = vmul.f32 1.0, %v680
  %v682 = vtanh.pop %v675
  %v683 = vmul.f32 %v681, %v619
  %685 = vrot.lane.b32.xlu0 %v682, 64
  %v686 = vpop.permute.xlu0 %685
  %v688 = vmul.f32 %v681, %v686
  %690 = vrot.lane.b32.xlu0 %v688, 32
  %v691 = vpop.permute.xlu0 %690
  %v693 = vadd.f32 %v683, %v691
  %v694 = vtanh.pop %v693
  %696 = vrot.lane.b32.xlu0 %v694, 64
  %v697 = vpop.permute.xlu0 %696
  %v699 = vmul.f32 %v681, %v697
  %s700 = scalar_lea.vmem [#allocation2], 16
  %v701 = vld [vmem:[%s700] sm:$0xff]
  %v702 = vpack.c.bf16 %v699, %v699
  %704 = vrot.lane.b32.xlu0 %v702, 32
  %v705 = vpop.permute.xlu0 %704
  %v707 = vsel %vm406, %v705, 0
  %709 = vmatprep.subr.bf16.mxu0 0
  %710 = vmatpush1.bf16.msra.mxu0 0
  %711 = vmatprep.subr.bf16.mxu0 0
  %712 = vmatpush1.bf16.msra.mxu0 0
  %713 = vmatprep.subr.bf16.mxu0 0
  %714 = vmatpush1.bf16.msra.mxu0 0
  %715 = vmatprep.subr.bf16.mxu0 0
  %716 = vmatpush1.bf16.msra.mxu0 0
  %717 = vmatprep.subr.bf16.mxu0 0
  %718 = vmatpush1.bf16.msra.mxu0 0
  %719 = vmatprep.subr.bf16.mxu0 0
  %720 = vmatpush1.bf16.msra.mxu0 0
  %721 = vmatprep.subr.bf16.mxu0 0
  %722 = vmatpush1.bf16.msra.mxu0 %v555
  %723 = vmatprep.subr.bf16.mxu0 0
  %724 = vmatpush1.bf16.msra.mxu0 %v554
  %725 = vmatprep.subr.bf16.mxu0 0
  %726 = vmatpush2.bf16.msra.mxu0 0
  %727 = vmatprep.subr.bf16.mxu0 0
  %728 = vmatpush2.bf16.msra.mxu0 0
  %729 = vmatprep.subr.bf16.mxu0 0
  %730 = vmatpush2.bf16.msra.mxu0 0
  %731 = vmatprep.subr.bf16.mxu0 0
  %732 = vmatpush2.bf16.msra.mxu0 0
  %733 = vmatprep.subr.bf16.mxu0 0
  %734 = vmatpush2.bf16.msra.mxu0 0
  %735 = vmatprep.subr.bf16.mxu0 0
  %736 = vmatpush2.bf16.msra.mxu0 0
  %737 = vmatprep.subr.bf16.mxu0 0
  %738 = vmatpush2.bf16.msra.mxu0 0
  %739 = vmatprep.subr.bf16.mxu0 0
  %740 = vmatpush2.bf16.msra.mxu0 0
  %741 = vmatprep.mubr.bf16.mxu0 0
  %742 = vmatmul.mubr.bf16.gmra.mxu0 %v707
  %v743 = vpop.f32.mrf.mxu0
  %v744 = vadd.f32 0.0, %v743
  %v745 = vpop.f32.mrf.mxu0
  %v746 = vpop.f32.mrf.mxu0
  %v747 = vpop.f32.mrf.mxu0
  %748 = vdwg.mxu0
  %v749 = vadd.f32 %v701, %v744
  %v750 = vxor.u32 %v749, 2147483648
  %v751 = vmul.f32 %v750, 1.442695
  %v752 = vpow.pop %v751
  %v753 = vadd.f32 %v752, 1.0
  %v754 = vrcp.pop %v753
  %v755 = vmul.f32 1.0, %v754
  %v756 = vtanh.pop %v749
  %v757 = vmul.f32 %v755, %v693
  %759 = vrot.lane.b32.xlu0 %v756, 64
  %v760 = vpop.permute.xlu0 %759
  %v762 = vmul.f32 %v755, %v760
  %764 = vrot.lane.b32.xlu0 %v762, 32
  %v765 = vpop.permute.xlu0 %764
  %v767 = vadd.f32 %v757, %v765
  %v768 = vtanh.pop %v767
  %770 = vrot.lane.b32.xlu0 %v768, 64
  %v771 = vpop.permute.xlu0 %770
  %v773 = vmul.f32 %v755, %v771
  %s774 = scalar_lea.vmem [#allocation2], 24
  %v775 = vld [vmem:[%s774] sm:$0xff]
  %v776 = vpack.c.bf16 %v773, %v773
  %778 = vrot.lane.b32.xlu0 %v776, 32
  %v779 = vpop.permute.xlu0 %778
  %v781 = vsel %vm406, %v779, 0
  %783 = vmatprep.subr.bf16.mxu0 0
  %784 = vmatpush1.bf16.msra.mxu0 0
  %785 = vmatprep.subr.bf16.mxu0 0
  %786 = vmatpush1.bf16.msra.mxu0 0
  %787 = vmatprep.subr.bf16.mxu0 0
  %788 = vmatpush1.bf16.msra.mxu0 0
  %789 = vmatprep.subr.bf16.mxu0 0
  %790 = vmatpush1.bf16.msra.mxu0 0
  %791 = vmatprep.subr.bf16.mxu0 0
  %792 = vmatpush1.bf16.msra.mxu0 0
  %793 = vmatprep.subr.bf16.mxu0 0
  %794 = vmatpush1.bf16.msra.mxu0 0
  %795 = vmatprep.subr.bf16.mxu0 0
  %796 = vmatpush1.bf16.msra.mxu0 %v555
  %797 = vmatprep.subr.bf16.mxu0 0
  %798 = vmatpush1.bf16.msra.mxu0 %v554
  %799 = vmatprep.subr.bf16.mxu0 0
  %800 = vmatpush2.bf16.msra.mxu0 0
  %801 = vmatprep.subr.bf16.mxu0 0
  %802 = vmatpush2.bf16.msra.mxu0 0
  %803 = vmatprep.subr.bf16.mxu0 0
  %804 = vmatpush2.bf16.msra.mxu0 0
  %805 = vmatprep.subr.bf16.mxu0 0
  %806 = vmatpush2.bf16.msra.mxu0 0
  %807 = vmatprep.subr.bf16.mxu0 0
  %808 = vmatpush2.bf16.msra.mxu0 0
  %809 = vmatprep.subr.bf16.mxu0 0
  %810 = vmatpush2.bf16.msra.mxu0 0
  %811 = vmatprep.subr.bf16.mxu0 0
  %812 = vmatpush2.bf16.msra.mxu0 0
  %813 = vmatprep.subr.bf16.mxu0 0
  %814 = vmatpush2.bf16.msra.mxu0 0
  %815 = vmatprep.mubr.bf16.mxu0 0
  %816 = vmatmul.mubr.bf16.gmra.mxu0 %v781
  %v817 = vpop.f32.mrf.mxu0
  %v818 = vadd.f32 0.0, %v817
  %v819 = vpop.f32.mrf.mxu0
  %v820 = vpop.f32.mrf.mxu0
  %v821 = vpop.f32.mrf.mxu0
  %822 = vdwg.mxu0
  %v823 = vadd.f32 %v775, %v818
  %v824 = vxor.u32 %v823, 2147483648
  %v825 = vmul.f32 %v824, 1.442695
  %v826 = vpow.pop %v825
  %v827 = vadd.f32 %v826, 1.0
  %v828 = vrcp.pop %v827
  %v829 = vmul.f32 1.0, %v828
  %v830 = vtanh.pop %v823
  %v831 = vmul.f32 %v829, %v767
  %833 = vrot.lane.b32.xlu0 %v830, 64
  %v834 = vpop.permute.xlu0 %833
  %v836 = vmul.f32 %v829, %v834
  %838 = vrot.lane.b32.xlu0 %v836, 32
  %v839 = vpop.permute.xlu0 %838
  %v841 = vadd.f32 %v831, %v839
  %v842 = vtanh.pop %v841
  %844 = vrot.lane.b32.xlu0 %v842, 64
  %v845 = vpop.permute.xlu0 %844
  %v847 = vmul.f32 %v829, %v845
  %s848 = scalar_lea.vmem [#allocation2], 32
  %v849 = vld [vmem:[%s848] sm:$0xff]
  %v850 = vpack.c.bf16 %v847, %v847
  %852 = vrot.lane.b32.xlu0 %v850, 32
  %v853 = vpop.permute.xlu0 %852
  %v855 = vsel %vm406, %v853, 0
  %857 = vmatprep.subr.bf16.mxu0 0
  %858 = vmatpush1.bf16.msra.mxu0 0
  %859 = vmatprep.subr.bf16.mxu0 0
  %860 = vmatpush1.bf16.msra.mxu0 0
  %861 = vmatprep.subr.bf16.mxu0 0
  %862 = vmatpush1.bf16.msra.mxu0 0
  %863 = vmatprep.subr.bf16.mxu0 0
  %864 = vmatpush1.bf16.msra.mxu0 0
  %865 = vmatprep.subr.bf16.mxu0 0
  %866 = vmatpush1.bf16.msra.mxu0 0
  %867 = vmatprep.subr.bf16.mxu0 0
  %868 = vmatpush1.bf16.msra.mxu0 0
  %869 = vmatprep.subr.bf16.mxu0 0
  %870 = vmatpush1.bf16.msra.mxu0 %v555
  %871 = vmatprep.subr.bf16.mxu0 0
  %872 = vmatpush1.bf16.msra.mxu0 %v554
  %873 = vmatprep.subr.bf16.mxu0 0
  %874 = vmatpush2.bf16.msra.mxu0 0
  %875 = vmatprep.subr.bf16.mxu0 0
  %876 = vmatpush2.bf16.msra.mxu0 0
  %877 = vmatprep.subr.bf16.mxu0 0
  %878 = vmatpush2.bf16.msra.mxu0 0
  %879 = vmatprep.subr.bf16.mxu0 0
  %880 = vmatpush2.bf16.msra.mxu0 0
  %881 = vmatprep.subr.bf16.mxu0 0
  %882 = vmatpush2.bf16.msra.mxu0 0
  %883 = vmatprep.subr.bf16.mxu0 0
  %884 = vmatpush2.bf16.msra.mxu0 0
  %885 = vmatprep.subr.bf16.mxu0 0
  %886 = vmatpush2.bf16.msra.mxu0 0
  %887 = vmatprep.subr.bf16.mxu0 0
  %888 = vmatpush2.bf16.msra.mxu0 0
  %889 = vmatprep.mubr.bf16.mxu0 0
  %890 = vmatmul.mubr.bf16.gmra.mxu0 %v855
  %v891 = vpop.f32.mrf.mxu0
  %v892 = vadd.f32 0.0, %v891
  %v893 = vpop.f32.mrf.mxu0
  %v894 = vpop.f32.mrf.mxu0
  %v895 = vpop.f32.mrf.mxu0
  %896 = vdwg.mxu0
  %v897 = vadd.f32 %v849, %v892
  %v898 = vxor.u32 %v897, 2147483648
  %v899 = vmul.f32 %v898, 1.442695
  %v900 = vpow.pop %v899
  %v901 = vadd.f32 %v900, 1.0
  %v902 = vrcp.pop %v901
  %v903 = vmul.f32 1.0, %v902
  %v904 = vtanh.pop %v897
  %v905 = vmul.f32 %v903, %v841
  %907 = vrot.lane.b32.xlu0 %v904, 64
  %v908 = vpop.permute.xlu0 %907
  %v910 = vmul.f32 %v903, %v908
  %912 = vrot.lane.b32.xlu0 %v910, 32
  %v913 = vpop.permute.xlu0 %912
  %v915 = vadd.f32 %v905, %v913
  %v916 = vtanh.pop %v915
  %918 = vrot.lane.b32.xlu0 %v916, 64
  %v919 = vpop.permute.xlu0 %918
  %v921 = vmul.f32 %v903, %v919
  %s922 = scalar_lea.vmem [#allocation2], 40
  %v923 = vld [vmem:[%s922] sm:$0xff]
  %v924 = vpack.c.bf16 %v921, %v921
  %926 = vrot.lane.b32.xlu0 %v924, 32
  %v927 = vpop.permute.xlu0 %926
  %v929 = vsel %vm406, %v927, 0
  %931 = vmatprep.subr.bf16.mxu0 0
  %932 = vmatpush1.bf16.msra.mxu0 0
  %933 = vmatprep.subr.bf16.mxu0 0
  %934 = vmatpush1.bf16.msra.mxu0 0
  %935 = vmatprep.subr.bf16.mxu0 0
  %936 = vmatpush1.bf16.msra.mxu0 0
  %937 = vmatprep.subr.bf16.mxu0 0
  %938 = vmatpush1.bf16.msra.mxu0 0
  %939 = vmatprep.subr.bf16.mxu0 0
  %940 = vmatpush1.bf16.msra.mxu0 0
  %941 = vmatprep.subr.bf16.mxu0 0
  %942 = vmatpush1.bf16.msra.mxu0 0
  %943 = vmatprep.subr.bf16.mxu0 0
  %944 = vmatpush1.bf16.msra.mxu0 %v555
  %945 = vmatprep.subr.bf16.mxu0 0
  %946 = vmatpush1.bf16.msra.mxu0 %v554
  %947 = vmatprep.subr.bf16.mxu0 0
  %948 = vmatpush2.bf16.msra.mxu0 0
  %949 = vmatprep.subr.bf16.mxu0 0
  %950 = vmatpush2.bf16.msra.mxu0 0
  %951 = vmatprep.subr.bf16.mxu0 0
  %952 = vmatpush2.bf16.msra.mxu0 0
  %953 = vmatprep.subr.bf16.mxu0 0
  %954 = vmatpush2.bf16.msra.mxu0 0
  %955 = vmatprep.subr.bf16.mxu0 0
  %956 = vmatpush2.bf16.msra.mxu0 0
  %957 = vmatprep.subr.bf16.mxu0 0
  %958 = vmatpush2.bf16.msra.mxu0 0
  %959 = vmatprep.subr.bf16.mxu0 0
  %960 = vmatpush2.bf16.msra.mxu0 0
  %961 = vmatprep.subr.bf16.mxu0 0
  %962 = vmatpush2.bf16.msra.mxu0 0
  %963 = vmatprep.mubr.bf16.mxu0 0
  %964 = vmatmul.mubr.bf16.gmra.mxu0 %v929
  %v965 = vpop.f32.mrf.mxu0
  %v966 = vadd.f32 0.0, %v965
  %v967 = vpop.f32.mrf.mxu0
  %v968 = vpop.f32.mrf.mxu0
  %v969 = vpop.f32.mrf.mxu0
  %970 = vdwg.mxu0
  %v971 = vadd.f32 %v923, %v966
  %v972 = vxor.u32 %v971, 2147483648
  %v973 = vmul.f32 %v972, 1.442695
  %v974 = vpow.pop %v973
  %v975 = vadd.f32 %v974, 1.0
  %v976 = vrcp.pop %v975
  %v977 = vmul.f32 1.0, %v976
  %v978 = vtanh.pop %v971
  %v979 = vmul.f32 %v977, %v915
  %981 = vrot.lane.b32.xlu0 %v978, 64
  %v982 = vpop.permute.xlu0 %981
  %v984 = vmul.f32 %v977, %v982
  %986 = vrot.lane.b32.xlu0 %v984, 32
  %v987 = vpop.permute.xlu0 %986
  %v989 = vadd.f32 %v979, %v987
  %v990 = vtanh.pop %v989
  %992 = vrot.lane.b32.xlu0 %v990, 64
  %v993 = vpop.permute.xlu0 %992
  %v995 = vmul.f32 %v977, %v993
  %s996 = scalar_lea.vmem [#allocation2], 48
  %v997 = vld [vmem:[%s996] sm:$0xff]
  %v998 = vpack.c.bf16 %v995, %v995
  %1000 = vrot.lane.b32.xlu0 %v998, 32
  %v1001 = vpop.permute.xlu0 %1000
  %v1003 = vsel %vm406, %v1001, 0
  %1005 = vmatprep.subr.bf16.mxu0 0
  %1006 = vmatpush1.bf16.msra.mxu0 0
  %1007 = vmatprep.subr.bf16.mxu0 0
  %1008 = vmatpush1.bf16.msra.mxu0 0
  %1009 = vmatprep.subr.bf16.mxu0 0
  %1010 = vmatpush1.bf16.msra.mxu0 0
  %1011 = vmatprep.subr.bf16.mxu0 0
  %1012 = vmatpush1.bf16.msra.mxu0 0
  %1013 = vmatprep.subr.bf16.mxu0 0
  %1014 = vmatpush1.bf16.msra.mxu0 0
  %1015 = vmatprep.subr.bf16.mxu0 0
  %1016 = vmatpush1.bf16.msra.mxu0 0
  %1017 = vmatprep.subr.bf16.mxu0 0
  %1018 = vmatpush1.bf16.msra.mxu0 %v555
  %1019 = vmatprep.subr.bf16.mxu0 0
  %1020 = vmatpush1.bf16.msra.mxu0 %v554
  %1021 = vmatprep.subr.bf16.mxu0 0
  %1022 = vmatpush2.bf16.msra.mxu0 0
  %1023 = vmatprep.subr.bf16.mxu0 0
  %1024 = vmatpush2.bf16.msra.mxu0 0
  %1025 = vmatprep.subr.bf16.mxu0 0
  %1026 = vmatpush2.bf16.msra.mxu0 0
  %1027 = vmatprep.subr.bf16.mxu0 0
  %1028 = vmatpush2.bf16.msra.mxu0 0
  %1029 = vmatprep.subr.bf16.mxu0 0
  %1030 = vmatpush2.bf16.msra.mxu0 0
  %1031 = vmatprep.subr.bf16.mxu0 0
  %1032 = vmatpush2.bf16.msra.mxu0 0
  %1033 = vmatprep.subr.bf16.mxu0 0
  %1034 = vmatpush2.bf16.msra.mxu0 0
  %1035 = vmatprep.subr.bf16.mxu0 0
  %1036 = vmatpush2.bf16.msra.mxu0 0
  %1037 = vmatprep.mubr.bf16.mxu0 0
  %1038 = vmatmul.mubr.bf16.gmra.mxu0 %v1003
  %v1039 = vpop.f32.mrf.mxu0
  %v1040 = vadd.f32 0.0, %v1039
  %v1041 = vpop.f32.mrf.mxu0
  %v1042 = vpop.f32.mrf.mxu0
  %v1043 = vpop.f32.mrf.mxu0
  %1044 = vdwg.mxu0
  %v1045 = vadd.f32 %v997, %v1040
  %v1046 = vxor.u32 %v1045, 2147483648
  %v1047 = vmul.f32 %v1046, 1.442695
  %v1048 = vpow.pop %v1047
  %v1049 = vadd.f32 %v1048, 1.0
  %v1050 = vrcp.pop %v1049
  %v1051 = vmul.f32 1.0, %v1050
  %v1052 = vtanh.pop %v1045
  %v1053 = vmul.f32 %v1051, %v989
  %1055 = vrot.lane.b32.xlu0 %v1052, 64
  %v1056 = vpop.permute.xlu0 %1055
  %v1058 = vmul.f32 %v1051, %v1056
  %1060 = vrot.lane.b32.xlu0 %v1058, 32
  %v1061 = vpop.permute.xlu0 %1060
  %v1063 = vadd.f32 %v1053, %v1061
  %v1064 = vtanh.pop %v1063
  %1066 = vrot.lane.b32.xlu0 %v1064, 64
  %v1067 = vpop.permute.xlu0 %1066
  %v1069 = vmul.f32 %v1051, %v1067
  %s1070 = scalar_lea.vmem [#allocation2], 56
  %v1071 = vld [vmem:[%s1070] sm:$0xff]
  %v1072 = vpack.c.bf16 %v1069, %v1069
  %1074 = vrot.lane.b32.xlu0 %v1072, 32
  %v1075 = vpop.permute.xlu0 %1074
  %v1077 = vsel %vm406, %v1075, 0
  %1079 = vmatprep.subr.bf16.mxu0 0
  %1080 = vmatpush1.bf16.msra.mxu0 0
  %1081 = vmatprep.subr.bf16.mxu0 0
  %1082 = vmatpush1.bf16.msra.mxu0 0
  %1083 = vmatprep.subr.bf16.mxu0 0
  %1084 = vmatpush1.bf16.msra.mxu0 0
  %1085 = vmatprep.subr.bf16.mxu0 0
  %1086 = vmatpush1.bf16.msra.mxu0 0
  %1087 = vmatprep.subr.bf16.mxu0 0
  %1088 = vmatpush1.bf16.msra.mxu0 0
  %1089 = vmatprep.subr.bf16.mxu0 0
  %1090 = vmatpush1.bf16.msra.mxu0 0
  %1091 = vmatprep.subr.bf16.mxu0 0
  %1092 = vmatpush1.bf16.msra.mxu0 %v555
  %1093 = vmatprep.subr.bf16.mxu0 0
  %1094 = vmatpush1.bf16.msra.mxu0 %v554
  %1095 = vmatprep.subr.bf16.mxu0 0
  %1096 = vmatpush2.bf16.msra.mxu0 0
  %1097 = vmatprep.subr.bf16.mxu0 0
  %1098 = vmatpush2.bf16.msra.mxu0 0
  %1099 = vmatprep.subr.bf16.mxu0 0
  %1100 = vmatpush2.bf16.msra.mxu0 0
  %1101 = vmatprep.subr.bf16.mxu0 0
  %1102 = vmatpush2.bf16.msra.mxu0 0
  %1103 = vmatprep.subr.bf16.mxu0 0
  %1104 = vmatpush2.bf16.msra.mxu0 0
  %1105 = vmatprep.subr.bf16.mxu0 0
  %1106 = vmatpush2.bf16.msra.mxu0 0
  %1107 = vmatprep.subr.bf16.mxu0 0
  %1108 = vmatpush2.bf16.msra.mxu0 0
  %1109 = vmatprep.subr.bf16.mxu0 0
  %1110 = vmatpush2.bf16.msra.mxu0 0
  %1111 = vmatprep.mubr.bf16.mxu0 0
  %1112 = vmatmul.mubr.bf16.gmra.mxu0 %v1077
  %v1113 = vpop.f32.mrf.mxu0
  %v1114 = vadd.f32 0.0, %v1113
  %v1115 = vpop.f32.mrf.mxu0
  %v1116 = vpop.f32.mrf.mxu0
  %v1117 = vpop.f32.mrf.mxu0
  %1118 = vdwg.mxu0
  %v1119 = vadd.f32 %v1071, %v1114
  %v1120 = vxor.u32 %v1119, 2147483648
  %v1121 = vmul.f32 %v1120, 1.442695
  %v1122 = vpow.pop %v1121
  %v1123 = vadd.f32 %v1122, 1.0
  %v1124 = vrcp.pop %v1123
  %v1125 = vmul.f32 1.0, %v1124
  %v1126 = vtanh.pop %v1119
  %v1127 = vmul.f32 %v1125, %v1063
  %1129 = vrot.lane.b32.xlu0 %v1126, 64
  %v1130 = vpop.permute.xlu0 %1129
  %v1132 = vmul.f32 %v1125, %v1130
  %1134 = vrot.lane.b32.xlu0 %v1132, 32
  %v1135 = vpop.permute.xlu0 %1134
  %v1137 = vadd.f32 %v1127, %v1135
  %v1138 = vtanh.pop %v1137
  %1140 = vrot.lane.b32.xlu0 %v1138, 64
  %v1141 = vpop.permute.xlu0 %1140
  %v1143 = vmul.f32 %v1125, %v1141
  %v1144 = vtanh.pop %v1143
  %v1145 = vpack.c.bf16 %v1144, %v1144
  %v1146 = vld [vmem:[%s8] sm:$0xf]
  %v1147 = vld [vmem:[%s8 + $0x4] sm:$0xf]
  %v1148 = vld [vmem:[%s8 + $0x8] sm:$0xf]
  %v1149 = vld [vmem:[%s8 + $0xc] sm:$0xf]
  %v1150 = vpack.c.bf16 %v1138, %v1138
  %v1151 = vld [vmem:[%s8 + $0x10] sm:$0xf]
  %v1152 = vld [vmem:[%s8 + $0x14] sm:$0xf]
  %v1153 = vld [vmem:[%s8 + $0x18] sm:$0xf]
  %v1154 = vld [vmem:[%s8 + $0x1c] sm:$0xf]
  %1156 = vrot.lane.b32.xlu0 %v1150, 96
  %v1157 = vpop.permute.xlu0 %1156
  %v1162 = vunpack.c.l.b16 %v1151
  %v1163 = vunpack.c.l.b16 %v1152
  %v1164 = vunpack.c.l.b16 %v1153
  %v1165 = vunpack.c.l.b16 %v1154
  %v1166 = vpack.c.b16 %v1163, %v1162
  %v1167 = vpack.c.b16 %v1165, %v1164
  %v1171 = vsel %vm406, %v1157, 0
  %1173 = vmatprep.subr.bf16.mxu0 0
  %1174 = vmatpush1.bf16.msra.mxu0 0
  %1175 = vmatprep.subr.bf16.mxu0 0
  %1176 = vmatpush1.bf16.msra.mxu0 0
  %1177 = vmatprep.subr.bf16.mxu0 0
  %1178 = vmatpush1.bf16.msra.mxu0 0
  %1179 = vmatprep.subr.bf16.mxu0 0
  %1180 = vmatpush1.bf16.msra.mxu0 0
  %1181 = vmatprep.subr.bf16.mxu0 0
  %1182 = vmatpush1.bf16.msra.mxu0 0
  %1183 = vmatprep.subr.bf16.mxu0 0
  %1184 = vmatpush1.bf16.msra.mxu0 0
  %1185 = vmatprep.subr.bf16.mxu0 0
  %1186 = vmatpush1.bf16.msra.mxu0 %v1167
  %1187 = vmatprep.subr.bf16.mxu0 0
  %1188 = vmatpush1.bf16.msra.mxu0 %v1166
  %1189 = vmatprep.subr.bf16.mxu0 0
  %1190 = vmatpush2.bf16.msra.mxu0 0
  %1191 = vmatprep.subr.bf16.mxu0 0
  %1192 = vmatpush2.bf16.msra.mxu0 0
  %1193 = vmatprep.subr.bf16.mxu0 0
  %1194 = vmatpush2.bf16.msra.mxu0 0
  %1195 = vmatprep.subr.bf16.mxu0 0
  %1196 = vmatpush2.bf16.msra.mxu0 0
  %1197 = vmatprep.subr.bf16.mxu0 0
  %1198 = vmatpush2.bf16.msra.mxu0 0
  %1199 = vmatprep.subr.bf16.mxu0 0
  %1200 = vmatpush2.bf16.msra.mxu0 0
  %1201 = vmatprep.subr.bf16.mxu0 0
  %1202 = vmatpush2.bf16.msra.mxu0 0
  %1203 = vmatprep.subr.bf16.mxu0 0
  %1204 = vmatpush2.bf16.msra.mxu0 0
  %1205 = vmatprep.mubr.bf16.mxu0 0
  %1206 = vmatmul.mubr.bf16.gmra.mxu0 %v1171
  %v1207 = vpop.f32.mrf.mxu0
  %v1208 = vadd.f32 0.0, %v1207
  %v1209 = vpop.f32.mrf.mxu0
  %v1210 = vpop.f32.mrf.mxu0
  %v1211 = vpop.f32.mrf.mxu0
  %1212 = vdwg.mxu0
  %1214 = vrot.lane.b32.xlu0 %v1145, 32
  %v1215 = vpop.permute.xlu0 %1214
  %v1220 = vunpack.c.l.b16 %v1146
  %v1221 = vunpack.c.l.b16 %v1147
  %v1222 = vunpack.c.l.b16 %v1148
  %v1223 = vunpack.c.l.b16 %v1149
  %v1224 = vpack.c.b16 %v1221, %v1220
  %v1225 = vpack.c.b16 %v1223, %v1222
  %v1229 = vsel %vm406, %v1215, 0
  %1231 = vmatprep.subr.bf16.mxu0 0
  %1232 = vmatpush1.bf16.msra.mxu0 0
  %1233 = vmatprep.subr.bf16.mxu0 0
  %1234 = vmatpush1.bf16.msra.mxu0 0
  %1235 = vmatprep.subr.bf16.mxu0 0
  %1236 = vmatpush1.bf16.msra.mxu0 0
  %1237 = vmatprep.subr.bf16.mxu0 0
  %1238 = vmatpush1.bf16.msra.mxu0 0
  %1239 = vmatprep.subr.bf16.mxu0 0
  %1240 = vmatpush1.bf16.msra.mxu0 0
  %1241 = vmatprep.subr.bf16.mxu0 0
  %1242 = vmatpush1.bf16.msra.mxu0 0
  %1243 = vmatprep.subr.bf16.mxu0 0
  %1244 = vmatpush1.bf16.msra.mxu0 %v1225
  %1245 = vmatprep.subr.bf16.mxu0 0
  %1246 = vmatpush1.bf16.msra.mxu0 %v1224
  %1247 = vmatprep.subr.bf16.mxu0 0
  %1248 = vmatpush2.bf16.msra.mxu0 0
  %1249 = vmatprep.subr.bf16.mxu0 0
  %1250 = vmatpush2.bf16.msra.mxu0 0
  %1251 = vmatprep.subr.bf16.mxu0 0
  %1252 = vmatpush2.bf16.msra.mxu0 0
  %1253 = vmatprep.subr.bf16.mxu0 0
  %1254 = vmatpush2.bf16.msra.mxu0 0
  %1255 = vmatprep.subr.bf16.mxu0 0
  %1256 = vmatpush2.bf16.msra.mxu0 0
  %1257 = vmatprep.subr.bf16.mxu0 0
  %1258 = vmatpush2.bf16.msra.mxu0 0
  %1259 = vmatprep.subr.bf16.mxu0 0
  %1260 = vmatpush2.bf16.msra.mxu0 0
  %1261 = vmatprep.subr.bf16.mxu0 0
  %1262 = vmatpush2.bf16.msra.mxu0 0
  %1263 = vmatprep.mubr.bf16.mxu0 0
  %1264 = vmatmul.mubr.bf16.gmra.mxu0 %v1229
  %v1265 = vpop.f32.mrf.mxu0
  %v1266 = vadd.f32 %v1208, %v1265
  %v1267 = vpop.f32.mrf.mxu0
  %v1268 = vpop.f32.mrf.mxu0
  %v1269 = vpop.f32.mrf.mxu0
  %1270 = vdwg.mxu0
  %v1271 = vld [vmem:[%s9] sm:$0x1]
  %v1273 = vlaneseq
  %v1274 = vshrl.u32 %v1273, 7
  %v1275 = vsub.s32 0, %v1274
  %v1276 = vrot.slane %v1271, %v1275
  %v1278 = vadd.f32 %v1266, %v1276
  %v1279 = vmul.f32 %v412, %v1278
  %v1280 = vtanh.pop %v1279
  %v1281 = vpack.c.bf16 %v1280, %v1280
  %v1282 = vld [vmem:[%s10] sm:$0xf]
  %v1283 = vld [vmem:[%s10 + $0x4] sm:$0xf]
  %v1284 = vld [vmem:[%s10 + $0x8] sm:$0xf]
  %v1285 = vld [vmem:[%s10 + $0xc] sm:$0xf]
  %v1286 = vld [vmem:[%s11] sm:$0x1]
  %v1288 = vlaneseq
  %v1289 = vshrl.u32 %v1288, 7
  %v1290 = vsub.s32 0, %v1289
  %v1291 = vrot.slane %v1286, %v1290
  %v1297 = vunpack.c.l.b16 %v1282
  %v1298 = vunpack.c.l.b16 %v1283
  %v1299 = vunpack.c.l.b16 %v1284
  %v1300 = vunpack.c.l.b16 %v1285
  %v1301 = vpack.c.b16 %v1298, %v1297
  %v1302 = vpack.c.b16 %v1300, %v1299
  %v1306 = vsel %vm406, %v1281, 0
  %1308 = vmatprep.subr.bf16.mxu0 0
  %1309 = vmatpush1.bf16.msra.mxu0 0
  %1310 = vmatprep.subr.bf16.mxu0 0
  %1311 = vmatpush1.bf16.msra.mxu0 0
  %1312 = vmatprep.subr.bf16.mxu0 0
  %1313 = vmatpush1.bf16.msra.mxu0 0
  %1314 = vmatprep.subr.bf16.mxu0 0
  %1315 = vmatpush1.bf16.msra.mxu0 0
  %1316 = vmatprep.subr.bf16.mxu0 0
  %1317 = vmatpush1.bf16.msra.mxu0 0
  %1318 = vmatprep.subr.bf16.mxu0 0
  %1319 = vmatpush1.bf16.msra.mxu0 0
  %1320 = vmatprep.subr.bf16.mxu0 0
  %1321 = vmatpush1.bf16.msra.mxu0 %v1302
  %1322 = vmatprep.subr.bf16.mxu0 0
  %1323 = vmatpush1.bf16.msra.mxu0 %v1301
  %1324 = vmatprep.subr.bf16.mxu0 0
  %1325 = vmatpush2.bf16.msra.mxu0 0
  %1326 = vmatprep.subr.bf16.mxu0 0
  %1327 = vmatpush2.bf16.msra.mxu0 0
  %1328 = vmatprep.subr.bf16.mxu0 0
  %1329 = vmatpush2.bf16.msra.mxu0 0
  %1330 = vmatprep.subr.bf16.mxu0 0
  %1331 = vmatpush2.bf16.msra.mxu0 0
  %1332 = vmatprep.subr.bf16.mxu0 0
  %1333 = vmatpush2.bf16.msra.mxu0 0
  %1334 = vmatprep.subr.bf16.mxu0 0
  %1335 = vmatpush2.bf16.msra.mxu0 0
  %1336 = vmatprep.subr.bf16.mxu0 0
  %1337 = vmatpush2.bf16.msra.mxu0 0
  %1338 = vmatprep.subr.bf16.mxu0 0
  %1339 = vmatpush2.bf16.msra.mxu0 0
  %1340 = vmatprep.mubr.bf16.mxu0 0
  %1341 = vmatmul.mubr.bf16.gmra.mxu0 %v1306
  %v1342 = vpop.f32.mrf.mxu0
  %v1343 = vadd.f32 %v1291, %v1342
  %v1344 = vpop.f32.mrf.mxu0
  %v1345 = vpop.f32.mrf.mxu0
  %v1346 = vpop.f32.mrf.mxu0
  %1347 = vdwg.mxu0
  %v1348 = vtanh.pop %v1343
  %v1349 = vpack.c.bf16 %v1348, %v1348
  %v1350 = vld [vmem:[%s12] sm:$0xf]
  %v1351 = vld [vmem:[%s12 + $0x4] sm:$0xf]
  %v1352 = vld [vmem:[%s12 + $0x8] sm:$0xf]
  %v1353 = vld [vmem:[%s12 + $0xc] sm:$0xf]
  %v1354 = vld [vmem:[%s13] sm:$0x1]
  %v1356 = vlaneseq
  %v1357 = vshrl.u32 %v1356, 7
  %v1358 = vsub.s32 0, %v1357
  %v1359 = vrot.slane %v1354, %v1358
  %v1365 = vunpack.c.l.b16 %v1350
  %v1366 = vunpack.c.l.b16 %v1351
  %v1367 = vunpack.c.l.b16 %v1352
  %v1368 = vunpack.c.l.b16 %v1353
  %v1369 = vpack.c.b16 %v1366, %v1365
  %v1370 = vpack.c.b16 %v1368, %v1367
  %v1374 = vsel %vm406, %v1349, 0
  %1376 = vmatprep.subr.bf16.mxu0 0
  %1377 = vmatpush1.bf16.msra.mxu0 0
  %1378 = vmatprep.subr.bf16.mxu0 0
  %1379 = vmatpush1.bf16.msra.mxu0 0
  %1380 = vmatprep.subr.bf16.mxu0 0
  %1381 = vmatpush1.bf16.msra.mxu0 0
  %1382 = vmatprep.subr.bf16.mxu0 0
  %1383 = vmatpush1.bf16.msra.mxu0 0
  %1384 = vmatprep.subr.bf16.mxu0 0
  %1385 = vmatpush1.bf16.msra.mxu0 0
  %1386 = vmatprep.subr.bf16.mxu0 0
  %1387 = vmatpush1.bf16.msra.mxu0 0
  %1388 = vmatprep.subr.bf16.mxu0 0
  %1389 = vmatpush1.bf16.msra.mxu0 %v1370
  %1390 = vmatprep.subr.bf16.mxu0 0
  %1391 = vmatpush1.bf16.msra.mxu0 %v1369
  %1392 = vmatprep.subr.bf16.mxu0 0
  %1393 = vmatpush2.bf16.msra.mxu0 0
  %1394 = vmatprep.subr.bf16.mxu0 0
  %1395 = vmatpush2.bf16.msra.mxu0 0
  %1396 = vmatprep.subr.bf16.mxu0 0
  %1397 = vmatpush2.bf16.msra.mxu0 0
  %1398 = vmatprep.subr.bf16.mxu0 0
  %1399 = vmatpush2.bf16.msra.mxu0 0
  %1400 = vmatprep.subr.bf16.mxu0 0
  %1401 = vmatpush2.bf16.msra.mxu0 0
  %1402 = vmatprep.subr.bf16.mxu0 0
  %1403 = vmatpush2.bf16.msra.mxu0 0
  %1404 = vmatprep.subr.bf16.mxu0 0
  %1405 = vmatpush2.bf16.msra.mxu0 0
  %1406 = vmatprep.subr.bf16.mxu0 0
  %1407 = vmatpush2.bf16.msra.mxu0 0
  %1408 = vmatprep.mubr.bf16.mxu0 0
  %1409 = vmatmul.mubr.bf16.gmra.mxu0 %v1374
  %v1410 = vpop.f32.mrf.mxu0
  %v1411 = vadd.f32 %v1359, %v1410
  %v1412 = vpop.f32.mrf.mxu0
  %v1413 = vpop.f32.mrf.mxu0
  %v1414 = vpop.f32.mrf.mxu0
  %1415 = vdwg.mxu0
  %1416 = vst.msk [vmem:[%s17] sm:$0xff] %vm406, %v1411
  // Predicated region
  $region70: #{vqa_forward.5} parent=0 // pred_check
    _
  $region71: #{vqa_forward.5} parent=0 // pred_check_branch
    %1418 = sbr.rel (0) target = $region73
  $region72: #{vqa_forward.5} parent=0 // pred_region
    _
  $region73: #{vqa_forward.5} parent=0 // pred_fallthru
    _
  // Predicated region
  $region74: #{vqa_forward.5} parent=0 // pred_check
    _
  $region75: #{vqa_forward.5} parent=0 // pred_check_branch
    %1420 = sbr.rel (0) target = $region77
  $region76: #{vqa_forward.5} parent=0 // pred_region
    _
  $region77: #{vqa_forward.5} parent=0 // pred_fallthru
    _

// kernel: vqa_forward.3
$region0: #{vqa_forward.3}
  #allocation0 [shape = 'u32[]', space=smem, size = 0x4, offset = 0x4, fixed_abs, tag = 'smem constant byte address 0x4 - core index']
  #allocation1 [shape = 'u32[144,128]{1,0:T(1,128)}', space=vmem, size = 0x12000, scoped, tag = 'internal scratch']
  %s0 = inlined_call_operand.vmem [shape: f32[686,3], index: 0, kind: input, shape index: {}]
  %s1 = inlined_call_operand.vmem [shape: bf16[9,3,8], index: 1, kind: input, shape index: {}]
  %s2 = inlined_call_operand.vmem [shape: f32[1,8], index: 2, kind: input, shape index: {}]
  %s3 = inlined_call_operand.vmem [shape: f32[648,8], index: 3, kind: output, shape index: {}]
  %s4 = sld [smem:[#allocation0]]
  $region22: #{vqa_forward.3} parent=0
    _
  %s6 = ssub.s32 1, %s4
  %s7 = scalar_select 0, %s6, %s4
  // Predicated region
  $region2: #{vqa_forward.3} parent=0 // pred_check
    _
  $region3: #{vqa_forward.3} parent=0 // pred_check_branch
    %9 = sbr.rel (0) target = $region5
  $region4: #{vqa_forward.3} parent=0 // pred_region
    _
  $region5: #{vqa_forward.3} parent=0 // pred_fallthru
    _
  // Predicated region
  $region6: #{vqa_forward.3} parent=0 // pred_check
    _
  $region7: #{vqa_forward.3} parent=0 // pred_check_branch
    %11 = sbr.rel (0) target = $region9
  $region8: #{vqa_forward.3} parent=0 // pred_region
    _
  $region9: #{vqa_forward.3} parent=0 // pred_fallthru
    _
  // Predicated region
  $region10: #{vqa_forward.3} parent=0 // pred_check
    _
  $region11: #{vqa_forward.3} parent=0 // pred_check_branch
    %13 = sbr.rel (0) target = $region13
  $region12: #{vqa_forward.3} parent=0 // pred_region
    _
  $region13: #{vqa_forward.3} parent=0 // pred_fallthru
    _
  %v15 = vld [vmem:[%s0] sm:$0xff]
  %v16 = vld [vmem:[%s0 + $0x8] sm:$0xff]
  %v17 = vld [vmem:[%s0 + $0x10] sm:$0xff]
  %v18 = vld [vmem:[%s0 + $0x18] sm:$0xff]
  %v19 = vld [vmem:[%s0 + $0x20] sm:$0xff]
  %v20 = vld [vmem:[%s0 + $0x28] sm:$0xff]
  %v21 = vld [vmem:[%s0 + $0x30] sm:$0xff]
  %v22 = vld [vmem:[%s0 + $0x38] sm:$0xff]
  %v23 = vld [vmem:[%s0 + $0x40] sm:$0xff]
  %v24 = vld [vmem:[%s0 + $0x48] sm:$0xff]
  %v25 = vld [vmem:[%s0 + $0x50] sm:$0xff]
  %v26 = vld [vmem:[%s0 + $0x58] sm:$0xff]
  %v27 = vld [vmem:[%s0 + $0x60] sm:$0xff]
  %v28 = vld [vmem:[%s0 + $0x68] sm:$0xff]
  %v29 = vld [vmem:[%s0 + $0x70] sm:$0xff]
  %v30 = vld [vmem:[%s0 + $0x78] sm:$0xff]
  %v31 = vld [vmem:[%s0 + $0x80] sm:$0xff]
  %v32 = vld [vmem:[%s0 + $0x88] sm:$0xff]
  %v33 = vld [vmem:[%s0 + $0x90] sm:$0xff]
  %v34 = vld [vmem:[%s0 + $0x98] sm:$0xff]
  %v35 = vld [vmem:[%s0 + $0xa0] sm:$0xff]
  %v36 = vld [vmem:[%s0 + $0xa8] sm:$0xff]
  %v37 = vld [vmem:[%s0 + $0xb0] sm:$0xff]
  %v38 = vld [vmem:[%s0 + $0xb8] sm:$0xff]
  %v39 = vld [vmem:[%s0 + $0xc0] sm:$0xff]
  %v40 = vld [vmem:[%s0 + $0xc8] sm:$0xff]
  %v41 = vld [vmem:[%s0 + $0xd0] sm:$0xff]
  %v42 = vld [vmem:[%s0 + $0xd8] sm:$0xff]
  %v43 = vld [vmem:[%s0 + $0xe0] sm:$0xff]
  %v44 = vld [vmem:[%s0 + $0xe8] sm:$0xff]
  %v45 = vld [vmem:[%s0 + $0xf0] sm:$0xff]
  %v46 = vld [vmem:[%s0 + $0xf8] sm:$0xff]
  %v47 = vld [vmem:[%s0 + $0x100] sm:$0xff]
  %v48 = vld [vmem:[%s0 + $0x108] sm:$0xff]
  %v49 = vld [vmem:[%s0 + $0x110] sm:$0xff]
  %v50 = vld [vmem:[%s0 + $0x118] sm:$0xff]
  %v51 = vld [vmem:[%s0 + $0x120] sm:$0xff]
  %v52 = vld [vmem:[%s0 + $0x128] sm:$0xff]
  %v53 = vld [vmem:[%s0 + $0x130] sm:$0xff]
  %v54 = vld [vmem:[%s0 + $0x138] sm:$0xff]
  %v55 = vld [vmem:[%s0 + $0x140] sm:$0xff]
  %v56 = vld [vmem:[%s0 + $0x148] sm:$0xff]
  %v57 = vld [vmem:[%s0 + $0x150] sm:$0xff]
  %v58 = vld [vmem:[%s0 + $0x158] sm:$0xff]
  %v59 = vld [vmem:[%s0 + $0x160] sm:$0xff]
  %v60 = vld [vmem:[%s0 + $0x168] sm:$0xff]
  %v61 = vld [vmem:[%s0 + $0x170] sm:$0xff]
  %v62 = vld [vmem:[%s0 + $0x178] sm:$0xff]
  %v63 = vld [vmem:[%s0 + $0x180] sm:$0xff]
  %v64 = vld [vmem:[%s0 + $0x188] sm:$0xff]
  %v65 = vld [vmem:[%s0 + $0x190] sm:$0xff]
  %v66 = vld [vmem:[%s0 + $0x198] sm:$0xff]
  %v67 = vld [vmem:[%s0 + $0x1a0] sm:$0xff]
  %v68 = vld [vmem:[%s0 + $0x1a8] sm:$0xff]
  %v69 = vld [vmem:[%s0 + $0x1b0] sm:$0xff]
  %v70 = vld [vmem:[%s0 + $0x1b8] sm:$0xff]
  %v71 = vld [vmem:[%s0 + $0x1c0] sm:$0xff]
  %v72 = vld [vmem:[%s0 + $0x1c8] sm:$0xff]
  %v73 = vld [vmem:[%s0 + $0x1d0] sm:$0xff]
  %v74 = vld [vmem:[%s0 + $0x1d8] sm:$0xff]
  %v75 = vld [vmem:[%s0 + $0x1e0] sm:$0xff]
  %v76 = vld [vmem:[%s0 + $0x1e8] sm:$0xff]
  %v77 = vld [vmem:[%s0 + $0x1f0] sm:$0xff]
  %v78 = vld [vmem:[%s0 + $0x1f8] sm:$0xff]
  %v79 = vld [vmem:[%s0 + $0x200] sm:$0xff]
  %v80 = vld [vmem:[%s0 + $0x208] sm:$0xff]
  %v81 = vld [vmem:[%s0 + $0x210] sm:$0xff]
  %v82 = vld [vmem:[%s0 + $0x218] sm:$0xff]
  %v83 = vld [vmem:[%s0 + $0x220] sm:$0xff]
  %v84 = vld [vmem:[%s0 + $0x228] sm:$0xff]
  %v85 = vld [vmem:[%s0 + $0x230] sm:$0xff]
  %v86 = vld [vmem:[%s0 + $0x238] sm:$0xff]
  %v87 = vld [vmem:[%s0 + $0x240] sm:$0xff]
  %v88 = vld [vmem:[%s0 + $0x248] sm:$0xff]
  %v89 = vld [vmem:[%s0 + $0x250] sm:$0xff]
  %v90 = vld [vmem:[%s0 + $0x258] sm:$0xff]
  %v91 = vld [vmem:[%s0 + $0x260] sm:$0xff]
  %v92 = vld [vmem:[%s0 + $0x268] sm:$0xff]
  %v93 = vld [vmem:[%s0 + $0x270] sm:$0xff]
  %v94 = vld [vmem:[%s0 + $0x278] sm:$0xff]
  %v95 = vld [vmem:[%s0 + $0x280] sm:$0xff]
  %v96 = vpack.c.bf16 %v16, %v15
  %v97 = vpack.c.bf16 %v18, %v17
  %v98 = vpack.c.bf16 %v20, %v19
  %v99 = vpack.c.bf16 %v22, %v21
  %v100 = vpack.c.bf16 %v24, %v23
  %v101 = vpack.c.bf16 %v26, %v25
  %v102 = vpack.c.bf16 %v28, %v27
  %v103 = vpack.c.bf16 %v30, %v29
  %v104 = vpack.c.bf16 %v32, %v31
  %v105 = vpack.c.bf16 %v34, %v33
  %v106 = vpack.c.bf16 %v36, %v35
  %v107 = vpack.c.bf16 %v38, %v37
  %v108 = vpack.c.bf16 %v40, %v39
  %v109 = vpack.c.bf16 %v42, %v41
  %v110 = vpack.c.bf16 %v44, %v43
  %v111 = vpack.c.bf16 %v46, %v45
  %v112 = vpack.c.bf16 %v48, %v47
  %v113 = vpack.c.bf16 %v50, %v49
  %v114 = vpack.c.bf16 %v52, %v51
  %v115 = vpack.c.bf16 %v54, %v53
  %v116 = vpack.c.bf16 %v56, %v55
  %v117 = vpack.c.bf16 %v58, %v57
  %v118 = vpack.c.bf16 %v60, %v59
  %v119 = vpack.c.bf16 %v62, %v61
  %v120 = vpack.c.bf16 %v64, %v63
  %v121 = vpack.c.bf16 %v66, %v65
  %v122 = vpack.c.bf16 %v68, %v67
  %v123 = vpack.c.bf16 %v70, %v69
  %v124 = vpack.c.bf16 %v72, %v71
  %v125 = vpack.c.bf16 %v74, %v73
  %v126 = vpack.c.bf16 %v76, %v75
  %v127 = vpack.c.bf16 %v78, %v77
  %v128 = vpack.c.bf16 %v80, %v79
  %v129 = vpack.c.bf16 %v82, %v81
  %v130 = vpack.c.bf16 %v84, %v83
  %v131 = vpack.c.bf16 %v86, %v85
  %v132 = vpack.c.bf16 %v88, %v87
  %v133 = vpack.c.bf16 %v90, %v89
  %v134 = vpack.c.bf16 %v92, %v91
  %v135 = vpack.c.bf16 %v94, %v93
  %v136 = vpack.c.bf16 %v95, %v95
  %v137 = vld [vmem:[%s1] sm:$0x3]
  %v138 = vld [vmem:[%s0 + $0x1] sm:$0xff]
  %v139 = vld [vmem:[%s0 + $0x9] sm:$0xff]
  %v140 = vld [vmem:[%s0 + $0x11] sm:$0xff]
  %v141 = vld [vmem:[%s0 + $0x19] sm:$0xff]
  %v142 = vld [vmem:[%s0 + $0x21] sm:$0xff]
  %v143 = vld [vmem:[%s0 + $0x29] sm:$0xff]
  %v144 = vld [vmem:[%s0 + $0x31] sm:$0xff]
  %v145 = vld [vmem:[%s0 + $0x39] sm:$0xff]
  %v146 = vld [vmem:[%s0 + $0x41] sm:$0xff]
  %v147 = vld [vmem:[%s0 + $0x49] sm:$0xff]
  %v148 = vld [vmem:[%s0 + $0x51] sm:$0xff]
  %v149 = vld [vmem:[%s0 + $0x59] sm:$0xff]
  %v150 = vld [vmem:[%s0 + $0x61] sm:$0xff]
  %v151 = vld [vmem:[%s0 + $0x69] sm:$0xff]
  %v152 = vld [vmem:[%s0 + $0x71] sm:$0xff]
  %v153 = vld [vmem:[%s0 + $0x79] sm:$0xff]
  %v154 = vld [vmem:[%s0 + $0x81] sm:$0xff]
  %v155 = vld [vmem:[%s0 + $0x89] sm:$0xff]
  %v156 = vld [vmem:[%s0 + $0x91] sm:$0xff]
  %v157 = vld [vmem:[%s0 + $0x99] sm:$0xff]
  %v158 = vld [vmem:[%s0 + $0xa1] sm:$0xff]
  %v159 = vld [vmem:[%s0 + $0xa9] sm:$0xff]
  %v160 = vld [vmem:[%s0 + $0xb1] sm:$0xff]
  %v161 = vld [vmem:[%s0 + $0xb9] sm:$0xff]
  %v162 = vld [vmem:[%s0 + $0xc1] sm:$0xff]
  %v163 = vld [vmem:[%s0 + $0xc9] sm:$0xff]
  %v164 = vld [vmem:[%s0 + $0xd1] sm:$0xff]
  %v165 = vld [vmem:[%s0 + $0xd9] sm:$0xff]
  %v166 = vld [vmem:[%s0 + $0xe1] sm:$0xff]
  %v167 = vld [vmem:[%s0 + $0xe9] sm:$0xff]
  %v168 = vld [vmem:[%s0 + $0xf1] sm:$0xff]
  %v169 = vld [vmem:[%s0 + $0xf9] sm:$0xff]
  %v170 = vld [vmem:[%s0 + $0x101] sm:$0xff]
  %v171 = vld [vmem:[%s0 + $0x109] sm:$0xff]
  %v172 = vld [vmem:[%s0 + $0x111] sm:$0xff]
  %v173 = vld [vmem:[%s0 + $0x119] sm:$0xff]
  %v174 = vld [vmem:[%s0 + $0x121] sm:$0xff]
  %v175 = vld [vmem:[%s0 + $0x129] sm:$0xff]
  %v176 = vld [vmem:[%s0 + $0x131] sm:$0xff]
  %v177 = vld [vmem:[%s0 + $0x139] sm:$0xff]
  %v178 = vld [vmem:[%s0 + $0x141] sm:$0xff]
  %v179 = vld [vmem:[%s0 + $0x149] sm:$0xff]
  %v180 = vld [vmem:[%s0 + $0x151] sm:$0xff]
  %v181 = vld [vmem:[%s0 + $0x159] sm:$0xff]
  %v182 = vld [vmem:[%s0 + $0x161] sm:$0xff]
  %v183 = vld [vmem:[%s0 + $0x169] sm:$0xff]
  %v184 = vld [vmem:[%s0 + $0x171] sm:$0xff]
  %v185 = vld [vmem:[%s0 + $0x179] sm:$0xff]
  %v186 = vld [vmem:[%s0 + $0x181] sm:$0xff]
  %v187 = vld [vmem:[%s0 + $0x189] sm:$0xff]
  %v188 = vld [vmem:[%s0 + $0x191] sm:$0xff]
  %v189 = vld [vmem:[%s0 + $0x199] sm:$0xff]
  %v190 = vld [vmem:[%s0 + $0x1a1] sm:$0xff]
  %v191 = vld [vmem:[%s0 + $0x1a9] sm:$0xff]
  %v192 = vld [vmem:[%s0 + $0x1b1] sm:$0xff]
  %v193 = vld [vmem:[%s0 + $0x1b9] sm:$0xff]
  %v194 = vld [vmem:[%s0 + $0x1c1] sm:$0xff]
  %v195 = vld [vmem:[%s0 + $0x1c9] sm:$0xff]
  %v196 = vld [vmem:[%s0 + $0x1d1] sm:$0xff]
  %v197 = vld [vmem:[%s0 + $0x1d9] sm:$0xff]
  %v198 = vld [vmem:[%s0 + $0x1e1] sm:$0xff]
  %v199 = vld [vmem:[%s0 + $0x1e9] sm:$0xff]
  %v200 = vld [vmem:[%s0 + $0x1f1] sm:$0xff]
  %v201 = vld [vmem:[%s0 + $0x1f9] sm:$0xff]
  %v202 = vld [vmem:[%s0 + $0x201] sm:$0xff]
  %v203 = vld [vmem:[%s0 + $0x209] sm:$0xff]
  %v204 = vld [vmem:[%s0 + $0x211] sm:$0xff]
  %v205 = vld [vmem:[%s0 + $0x219] sm:$0xff]
  %v206 = vld [vmem:[%s0 + $0x221] sm:$0xff]
  %v207 = vld [vmem:[%s0 + $0x229] sm:$0xff]
  %v208 = vld [vmem:[%s0 + $0x231] sm:$0xff]
  %v209 = vld [vmem:[%s0 + $0x239] sm:$0xff]
  %v210 = vld [vmem:[%s0 + $0x241] sm:$0xff]
  %v211 = vld [vmem:[%s0 + $0x249] sm:$0xff]
  %v212 = vld [vmem:[%s0 + $0x251] sm:$0xff]
  %v213 = vld [vmem:[%s0 + $0x259] sm:$0xff]
  %v214 = vld [vmem:[%s0 + $0x261] sm:$0xff]
  %v215 = vld [vmem:[%s0 + $0x269] sm:$0xff]
  %v216 = vld [vmem:[%s0 + $0x271] sm:$0xff]
  %v217 = vld [vmem:[%s0 + $0x279] sm:$0xff]
  %v218 = vld [vmem:[%s0 + $0x281] sm:$0xff]
  %v219 = vpack.c.bf16 %v139, %v138
  %v220 = vpack.c.bf16 %v141, %v140
  %v221 = vpack.c.bf16 %v143, %v142
  %v222 = vpack.c.bf16 %v145, %v144
  %v223 = vpack.c.bf16 %v147, %v146
  %v224 = vpack.c.bf16 %v149, %v148
  %v225 = vpack.c.bf16 %v151, %v150
  %v226 = vpack.c.bf16 %v153, %v152
  %v227 = vpack.c.bf16 %v155, %v154
  %v228 = vpack.c.bf16 %v157, %v156
  %v229 = vpack.c.bf16 %v159, %v158
  %v230 = vpack.c.bf16 %v161, %v160
  %v231 = vpack.c.bf16 %v163, %v162
  %v232 = vpack.c.bf16 %v165, %v164
  %v233 = vpack.c.bf16 %v167, %v166
  %v234 = vpack.c.bf16 %v169, %v168
  %v235 = vpack.c.bf16 %v171, %v170
  %v236 = vpack.c.bf16 %v173, %v172
  %v237 = vpack.c.bf16 %v175, %v174
  %v238 = vpack.c.bf16 %v177, %v176
  %v239 = vpack.c.bf16 %v179, %v178
  %v240 = vpack.c.bf16 %v181, %v180
  %v241 = vpack.c.bf16 %v183, %v182
  %v242 = vpack.c.bf16 %v185, %v184
  %v243 = vpack.c.bf16 %v187, %v186
  %v244 = vpack.c.bf16 %v189, %v188
  %v245 = vpack.c.bf16 %v191, %v190
  %v246 = vpack.c.bf16 %v193, %v192
  %v247 = vpack.c.bf16 %v195, %v194
  %v248 = vpack.c.bf16 %v197, %v196
  %v249 = vpack.c.bf16 %v199, %v198
  %v250 = vpack.c.bf16 %v201, %v200
  %v251 = vpack.c.bf16 %v203, %v202
  %v252 = vpack.c.bf16 %v205, %v204
  %v253 = vpack.c.bf16 %v207, %v206
  %v254 = vpack.c.bf16 %v209, %v208
  %v255 = vpack.c.bf16 %v211, %v210
  %v256 = vpack.c.bf16 %v213, %v212
  %v257 = vpack.c.bf16 %v215, %v214
  %v258 = vpack.c.bf16 %v217, %v216
  %v259 = vpack.c.bf16 %v218, %v218
  %s260 = scalar_lea.vmem %s1, 2
  %v261 = vld [vmem:[%s260] sm:$0x3]
  %vm262 = vcmask 23552
  %v264 = vsel %vm262, %v219, 0
  %v267 = vsel %vm262, %v220, 0
  %v270 = vsel %vm262, %v221, 0
  %v273 = vsel %vm262, %v222, 0
  %v276 = vsel %vm262, %v223, 0
  %v279 = vsel %vm262, %v224, 0
  %v282 = vsel %vm262, %v225, 0
  %v285 = vsel %vm262, %v226, 0
  %v288 = vsel %vm262, %v227, 0
  %v291 = vsel %vm262, %v228, 0
  %v294 = vsel %vm262, %v229, 0
  %v297 = vsel %vm262, %v230, 0
  %v300 = vsel %vm262, %v231, 0
  %v303 = vsel %vm262, %v232, 0
  %v306 = vsel %vm262, %v233, 0
  %v309 = vsel %vm262, %v234, 0
  %v312 = vsel %vm262, %v235, 0
  %v315 = vsel %vm262, %v236, 0
  %v318 = vsel %vm262, %v237, 0
  %v321 = vsel %vm262, %v238, 0
  %v324 = vsel %vm262, %v239, 0
  %v327 = vsel %vm262, %v240, 0
  %v330 = vsel %vm262, %v241, 0
  %v333 = vsel %vm262, %v242, 0
  %v336 = vsel %vm262, %v243, 0
  %v339 = vsel %vm262, %v244, 0
  %v342 = vsel %vm262, %v245, 0
  %v345 = vsel %vm262, %v246, 0
  %v348 = vsel %vm262, %v247, 0
  %v351 = vsel %vm262, %v248, 0
  %v354 = vsel %vm262, %v249, 0
  %v357 = vsel %vm262, %v250, 0
  %v360 = vsel %vm262, %v251, 0
  %v363 = vsel %vm262, %v252, 0
  %v366 = vsel %vm262, %v253, 0
  %v369 = vsel %vm262, %v254, 0
  %v372 = vsel %vm262, %v255, 0
  %v375 = vsel %vm262, %v256, 0
  %v378 = vsel %vm262, %v257, 0
  %v381 = vsel %vm262, %v258, 0
  %v384 = vsel %vm262, %v259, 0
  %vm386 = vcmask 1040384
  %vm387 = vcmask 1041408
  %v388 = vsel %vm386, 4294967295, 65535
  %v389 = vsel %vm387, %v388, 0
  %v391 = vand.u32 %v261, %v389
  %393 = vmatprep.subr.bf16.mxu0 0
  %394 = vmatpush1.bf16.msra.mxu0 0
  %395 = vmatprep.subr.bf16.mxu0 0
  %396 = vmatpush1.bf16.msra.mxu0 0
  %397 = vmatprep.subr.bf16.mxu0 0
  %398 = vmatpush1.bf16.msra.mxu0 0
  %399 = vmatprep.subr.bf16.mxu0 0
  %400 = vmatpush1.bf16.msra.mxu0 0
  %401 = vmatprep.subr.bf16.mxu0 0
  %402 = vmatpush1.bf16.msra.mxu0 0
  %403 = vmatprep.subr.bf16.mxu0 0
  %404 = vmatpush1.bf16.msra.mxu0 0
  %405 = vmatprep.subr.bf16.mxu0 0
  %406 = vmatpush1.bf16.msra.mxu0 0
  %407 = vmatprep.subr.bf16.mxu0 0
  %408 = vmatpush1.bf16.msra.mxu0 %v391
  %409 = vmatprep.subr.bf16.mxu0 0
  %410 = vmatpush2.bf16.msra.mxu0 0
  %411 = vmatprep.subr.bf16.mxu0 0
  %412 = vmatpush2.bf16.msra.mxu0 0
  %413 = vmatprep.subr.bf16.mxu0 0
  %414 = vmatpush2.bf16.msra.mxu0 0
  %415 = vmatprep.subr.bf16.mxu0 0
  %416 = vmatpush2.bf16.msra.mxu0 0
  %417 = vmatprep.subr.bf16.mxu0 0
  %418 = vmatpush2.bf16.msra.mxu0 0
  %419 = vmatprep.subr.bf16.mxu0 0
  %420 = vmatpush2.bf16.msra.mxu0 0
  %421 = vmatprep.subr.bf16.mxu0 0
  %422 = vmatpush2.bf16.msra.mxu0 0
  %423 = vmatprep.subr.bf16.mxu0 0
  %424 = vmatpush2.bf16.msra.mxu0 0
  %425 = vmatprep.mubr.bf16.mxu0 0
  %426 = vmatmul.mubr.bf16.gmra.mxu0 %v264
  %v427 = vpop.f32.mrf.mxu0
  %v428 = vadd.f32 0.0, %v427
  %v429 = vpop.f32.mrf.mxu0
  %v430 = vpop.f32.mrf.mxu0
  %v431 = vadd.f32 0.0, %v430
  %v432 = vpop.f32.mrf.mxu0
  %433 = vmatprep.mubr.bf16.mxu0 0
  %434 = vmatmul.mubr.bf16.gmra.mxu0 %v267
  %v435 = vpop.f32.mrf.mxu0
  %v436 = vadd.f32 0.0, %v435
  %v437 = vpop.f32.mrf.mxu0
  %v438 = vpop.f32.mrf.mxu0
  %v439 = vadd.f32 0.0, %v438
  %v440 = vpop.f32.mrf.mxu0
  %441 = vmatprep.mubr.bf16.mxu0 0
  %442 = vmatmul.mubr.bf16.gmra.mxu0 %v270
  %v443 = vpop.f32.mrf.mxu0
  %v444 = vadd.f32 0.0, %v443
  %v445 = vpop.f32.mrf.mxu0
  %v446 = vpop.f32.mrf.mxu0
  %v447 = vadd.f32 0.0, %v446
  %v448 = vpop.f32.mrf.mxu0
  %449 = vmatprep.mubr.bf16.mxu0 0
  %450 = vmatmul.mubr.bf16.gmra.mxu0 %v273
  %v451 = vpop.f32.mrf.mxu0
  %v452 = vadd.f32 0.0, %v451
  %v453 = vpop.f32.mrf.mxu0
  %v454 = vpop.f32.mrf.mxu0
  %v455 = vadd.f32 0.0, %v454
  %v456 = vpop.f32.mrf.mxu0
  %457 = vmatprep.mubr.bf16.mxu0 0
  %458 = vmatmul.mubr.bf16.gmra.mxu0 %v276
  %v459 = vpop.f32.mrf.mxu0
  %v460 = vadd.f32 0.0, %v459
  %v461 = vpop.f32.mrf.mxu0
  %v462 = vpop.f32.mrf.mxu0
  %v463 = vadd.f32 0.0, %v462
  %v464 = vpop.f32.mrf.mxu0
  %465 = vmatprep.mubr.bf16.mxu0 0
  %466 = vmatmul.mubr.bf16.gmra.mxu0 %v279
  %v467 = vpop.f32.mrf.mxu0
  %v468 = vadd.f32 0.0, %v467
  %v469 = vpop.f32.mrf.mxu0
  %v470 = vpop.f32.mrf.mxu0
  %v471 = vadd.f32 0.0, %v470
  %v472 = vpop.f32.mrf.mxu0
  %473 = vmatprep.mubr.bf16.mxu0 0
  %474 = vmatmul.mubr.bf16.gmra.mxu0 %v282
  %v475 = vpop.f32.mrf.mxu0
  %v476 = vadd.f32 0.0, %v475
  %v477 = vpop.f32.mrf.mxu0
  %v478 = vpop.f32.mrf.mxu0
  %v479 = vadd.f32 0.0, %v478
  %v480 = vpop.f32.mrf.mxu0
  %481 = vmatprep.mubr.bf16.mxu0 0
  %482 = vmatmul.mubr.bf16.gmra.mxu0 %v285
  %v483 = vpop.f32.mrf.mxu0
  %v484 = vadd.f32 0.0, %v483
  %v485 = vpop.f32.mrf.mxu0
  %v486 = vpop.f32.mrf.mxu0
  %v487 = vadd.f32 0.0, %v486
  %v488 = vpop.f32.mrf.mxu0
  %489 = vmatprep.mubr.bf16.mxu0 0
  %490 = vmatmul.mubr.bf16.gmra.mxu0 %v288
  %v491 = vpop.f32.mrf.mxu0
  %v492 = vadd.f32 0.0, %v491
  %v493 = vpop.f32.mrf.mxu0
  %v494 = vpop.f32.mrf.mxu0
  %v495 = vadd.f32 0.0, %v494
  %v496 = vpop.f32.mrf.mxu0
  %497 = vmatprep.mubr.bf16.mxu0 0
  %498 = vmatmul.mubr.bf16.gmra.mxu0 %v291
  %v499 = vpop.f32.mrf.mxu0
  %v500 = vadd.f32 0.0, %v499
  %v501 = vpop.f32.mrf.mxu0
  %v502 = vpop.f32.mrf.mxu0
  %v503 = vadd.f32 0.0, %v502
  %v504 = vpop.f32.mrf.mxu0
  %505 = vmatprep.mubr.bf16.mxu0 0
  %506 = vmatmul.mubr.bf16.gmra.mxu0 %v294
  %v507 = vpop.f32.mrf.mxu0
  %v508 = vadd.f32 0.0, %v507
  %v509 = vpop.f32.mrf.mxu0
  %v510 = vpop.f32.mrf.mxu0
  %v511 = vadd.f32 0.0, %v510
  %v512 = vpop.f32.mrf.mxu0
  %513 = vmatprep.mubr.bf16.mxu0 0
  %514 = vmatmul.mubr.bf16.gmra.mxu0 %v297
  %v515 = vpop.f32.mrf.mxu0
  %v516 = vadd.f32 0.0, %v515
  %v517 = vpop.f32.mrf.mxu0
  %v518 = vpop.f32.mrf.mxu0
  %v519 = vadd.f32 0.0, %v518
  %v520 = vpop.f32.mrf.mxu0
  %521 = vmatprep.mubr.bf16.mxu0 0
  %522 = vmatmul.mubr.bf16.gmra.mxu0 %v300
  %v523 = vpop.f32.mrf.mxu0
  %v524 = vadd.f32 0.0, %v523
  %v525 = vpop.f32.mrf.mxu0
  %v526 = vpop.f32.mrf.mxu0
  %v527 = vadd.f32 0.0, %v526
  %v528 = vpop.f32.mrf.mxu0
  %529 = vmatprep.mubr.bf16.mxu0 0
  %530 = vmatmul.mubr.bf16.gmra.mxu0 %v303
  %v531 = vpop.f32.mrf.mxu0
  %v532 = vadd.f32 0.0, %v531
  %v533 = vpop.f32.mrf.mxu0
  %v534 = vpop.f32.mrf.mxu0
  %v535 = vadd.f32 0.0, %v534
  %v536 = vpop.f32.mrf.mxu0
  %537 = vmatprep.mubr.bf16.mxu0 0
  %538 = vmatmul.mubr.bf16.gmra.mxu0 %v306
  %v539 = vpop.f32.mrf.mxu0
  %v540 = vadd.f32 0.0, %v539
  %v541 = vpop.f32.mrf.mxu0
  %v542 = vpop.f32.mrf.mxu0
  %v543 = vadd.f32 0.0, %v542
  %v544 = vpop.f32.mrf.mxu0
  %545 = vmatprep.mubr.bf16.mxu0 0
  %546 = vmatmul.mubr.bf16.gmra.mxu0 %v309
  %v547 = vpop.f32.mrf.mxu0
  %v548 = vadd.f32 0.0, %v547
  %v549 = vpop.f32.mrf.mxu0
  %v550 = vpop.f32.mrf.mxu0
  %v551 = vadd.f32 0.0, %v550
  %v552 = vpop.f32.mrf.mxu0
  %553 = vmatprep.mubr.bf16.mxu0 0
  %554 = vmatmul.mubr.bf16.gmra.mxu0 %v312
  %v555 = vpop.f32.mrf.mxu0
  %v556 = vadd.f32 0.0, %v555
  %v557 = vpop.f32.mrf.mxu0
  %v558 = vpop.f32.mrf.mxu0
  %v559 = vadd.f32 0.0, %v558
  %v560 = vpop.f32.mrf.mxu0
  %561 = vmatprep.mubr.bf16.mxu0 0
  %562 = vmatmul.mubr.bf16.gmra.mxu0 %v315
  %v563 = vpop.f32.mrf.mxu0
  %v564 = vadd.f32 0.0, %v563
  %v565 = vpop.f32.mrf.mxu0
  %v566 = vpop.f32.mrf.mxu0
  %v567 = vadd.f32 0.0, %v566
  %v568 = vpop.f32.mrf.mxu0
  %569 = vmatprep.mubr.bf16.mxu0 0
  %570 = vmatmul.mubr.bf16.gmra.mxu0 %v318
  %v571 = vpop.f32.mrf.mxu0
  %v572 = vadd.f32 0.0, %v571
  %v573 = vpop.f32.mrf.mxu0
  %v574 = vpop.f32.mrf.mxu0
  %v575 = vadd.f32 0.0, %v574
  %v576 = vpop.f32.mrf.mxu0
  %577 = vmatprep.mubr.bf16.mxu0 0
  %578 = vmatmul.mubr.bf16.gmra.mxu0 %v321
  %v579 = vpop.f32.mrf.mxu0
  %v580 = vadd.f32 0.0, %v579
  %v581 = vpop.f32.mrf.mxu0
  %v582 = vpop.f32.mrf.mxu0
  %v583 = vadd.f32 0.0, %v582
  %v584 = vpop.f32.mrf.mxu0
  %585 = vmatprep.mubr.bf16.mxu0 0
  %586 = vmatmul.mubr.bf16.gmra.mxu0 %v324
  %v587 = vpop.f32.mrf.mxu0
  %v588 = vadd.f32 0.0, %v587
  %v589 = vpop.f32.mrf.mxu0
  %v590 = vpop.f32.mrf.mxu0
  %v591 = vadd.f32 0.0, %v590
  %v592 = vpop.f32.mrf.mxu0
  %593 = vmatprep.mubr.bf16.mxu0 0
  %594 = vmatmul.mubr.bf16.gmra.mxu0 %v327
  %v595 = vpop.f32.mrf.mxu0
  %v596 = vadd.f32 0.0, %v595
  %v597 = vpop.f32.mrf.mxu0
  %v598 = vpop.f32.mrf.mxu0
  %v599 = vadd.f32 0.0, %v598
  %v600 = vpop.f32.mrf.mxu0
  %601 = vmatprep.mubr.bf16.mxu0 0
  %602 = vmatmul.mubr.bf16.gmra.mxu0 %v330
  %v603 = vpop.f32.mrf.mxu0
  %v604 = vadd.f32 0.0, %v603
  %v605 = vpop.f32.mrf.mxu0
  %v606 = vpop.f32.mrf.mxu0
  %v607 = vadd.f32 0.0, %v606
  %v608 = vpop.f32.mrf.mxu0
  %609 = vmatprep.mubr.bf16.mxu0 0
  %610 = vmatmul.mubr.bf16.gmra.mxu0 %v333
  %v611 = vpop.f32.mrf.mxu0
  %v612 = vadd.f32 0.0, %v611
  %v613 = vpop.f32.mrf.mxu0
  %v614 = vpop.f32.mrf.mxu0
  %v615 = vadd.f32 0.0, %v614
  %v616 = vpop.f32.mrf.mxu0
  %617 = vmatprep.mubr.bf16.mxu0 0
  %618 = vmatmul.mubr.bf16.gmra.mxu0 %v336
  %v619 = vpop.f32.mrf.mxu0
  %v620 = vadd.f32 0.0, %v619
  %v621 = vpop.f32.mrf.mxu0
  %v622 = vpop.f32.mrf.mxu0
  %v623 = vadd.f32 0.0, %v622
  %v624 = vpop.f32.mrf.mxu0
  %625 = vmatprep.mubr.bf16.mxu0 0
  %626 = vmatmul.mubr.bf16.gmra.mxu0 %v339
  %v627 = vpop.f32.mrf.mxu0
  %v628 = vadd.f32 0.0, %v627
  %v629 = vpop.f32.mrf.mxu0
  %v630 = vpop.f32.mrf.mxu0
  %v631 = vadd.f32 0.0, %v630
  %v632 = vpop.f32.mrf.mxu0
  %633 = vmatprep.mubr.bf16.mxu0 0
  %634 = vmatmul.mubr.bf16.gmra.mxu0 %v342
  %v635 = vpop.f32.mrf.mxu0
  %v636 = vadd.f32 0.0, %v635
  %v637 = vpop.f32.mrf.mxu0
  %v638 = vpop.f32.mrf.mxu0
  %v639 = vadd.f32 0.0, %v638
  %v640 = vpop.f32.mrf.mxu0
  %641 = vmatprep.mubr.bf16.mxu0 0
  %642 = vmatmul.mubr.bf16.gmra.mxu0 %v345
  %v643 = vpop.f32.mrf.mxu0
  %v644 = vadd.f32 0.0, %v643
  %v645 = vpop.f32.mrf.mxu0
  %v646 = vpop.f32.mrf.mxu0
  %v647 = vadd.f32 0.0, %v646
  %v648 = vpop.f32.mrf.mxu0
  %649 = vmatprep.mubr.bf16.mxu0 0
  %650 = vmatmul.mubr.bf16.gmra.mxu0 %v348
  %v651 = vpop.f32.mrf.mxu0
  %v652 = vadd.f32 0.0, %v651
  %v653 = vpop.f32.mrf.mxu0
  %v654 = vpop.f32.mrf.mxu0
  %v655 = vadd.f32 0.0, %v654
  %v656 = vpop.f32.mrf.mxu0
  %657 = vmatprep.mubr.bf16.mxu0 0
  %658 = vmatmul.mubr.bf16.gmra.mxu0 %v351
  %v659 = vpop.f32.mrf.mxu0
  %v660 = vadd.f32 0.0, %v659
  %v661 = vpop.f32.mrf.mxu0
  %v662 = vpop.f32.mrf.mxu0
  %v663 = vadd.f32 0.0, %v662
  %v664 = vpop.f32.mrf.mxu0
  %665 = vmatprep.mubr.bf16.mxu0 0
  %666 = vmatmul.mubr.bf16.gmra.mxu0 %v354
  %v667 = vpop.f32.mrf.mxu0
  %v668 = vadd.f32 0.0, %v667
  %v669 = vpop.f32.mrf.mxu0
  %v670 = vpop.f32.mrf.mxu0
  %v671 = vadd.f32 0.0, %v670
  %v672 = vpop.f32.mrf.mxu0
  %673 = vmatprep.mubr.bf16.mxu0 0
  %674 = vmatmul.mubr.bf16.gmra.mxu0 %v357
  %v675 = vpop.f32.mrf.mxu0
  %v676 = vadd.f32 0.0, %v675
  %v677 = vpop.f32.mrf.mxu0
  %v678 = vpop.f32.mrf.mxu0
  %v679 = vadd.f32 0.0, %v678
  %v680 = vpop.f32.mrf.mxu0
  %681 = vmatprep.mubr.bf16.mxu0 0
  %682 = vmatmul.mubr.bf16.gmra.mxu0 %v360
  %v683 = vpop.f32.mrf.mxu0
  %v684 = vadd.f32 0.0, %v683
  %v685 = vpop.f32.mrf.mxu0
  %v686 = vpop.f32.mrf.mxu0
  %v687 = vadd.f32 0.0, %v686
  %v688 = vpop.f32.mrf.mxu0
  %689 = vmatprep.mubr.bf16.mxu0 0
  %690 = vmatmul.mubr.bf16.gmra.mxu0 %v363
  %v691 = vpop.f32.mrf.mxu0
  %v692 = vadd.f32 0.0, %v691
  %v693 = vpop.f32.mrf.mxu0
  %v694 = vpop.f32.mrf.mxu0
  %v695 = vadd.f32 0.0, %v694
  %v696 = vpop.f32.mrf.mxu0
  %697 = vmatprep.mubr.bf16.mxu0 0
  %698 = vmatmul.mubr.bf16.gmra.mxu0 %v366
  %v699 = vpop.f32.mrf.mxu0
  %v700 = vadd.f32 0.0, %v699
  %v701 = vpop.f32.mrf.mxu0
  %v702 = vpop.f32.mrf.mxu0
  %v703 = vadd.f32 0.0, %v702
  %v704 = vpop.f32.mrf.mxu0
  %705 = vmatprep.mubr.bf16.mxu0 0
  %706 = vmatmul.mubr.bf16.gmra.mxu0 %v369
  %v707 = vpop.f32.mrf.mxu0
  %v708 = vadd.f32 0.0, %v707
  %v709 = vpop.f32.mrf.mxu0
  %v710 = vpop.f32.mrf.mxu0
  %v711 = vadd.f32 0.0, %v710
  %v712 = vpop.f32.mrf.mxu0
  %713 = vmatprep.mubr.bf16.mxu0 0
  %714 = vmatmul.mubr.bf16.gmra.mxu0 %v372
  %v715 = vpop.f32.mrf.mxu0
  %v716 = vadd.f32 0.0, %v715
  %v717 = vpop.f32.mrf.mxu0
  %v718 = vpop.f32.mrf.mxu0
  %v719 = vadd.f32 0.0, %v718
  %v720 = vpop.f32.mrf.mxu0
  %721 = vmatprep.mubr.bf16.mxu0 0
  %722 = vmatmul.mubr.bf16.gmra.mxu0 %v375
  %v723 = vpop.f32.mrf.mxu0
  %v724 = vadd.f32 0.0, %v723
  %v725 = vpop.f32.mrf.mxu0
  %v726 = vpop.f32.mrf.mxu0
  %v727 = vadd.f32 0.0, %v726
  %v728 = vpop.f32.mrf.mxu0
  %729 = vmatprep.mubr.bf16.mxu0 0
  %730 = vmatmul.mubr.bf16.gmra.mxu0 %v378
  %v731 = vpop.f32.mrf.mxu0
  %v732 = vadd.f32 0.0, %v731
  %v733 = vpop.f32.mrf.mxu0
  %v734 = vpop.f32.mrf.mxu0
  %v735 = vadd.f32 0.0, %v734
  %v736 = vpop.f32.mrf.mxu0
  %737 = vmatprep.mubr.bf16.mxu0 0
  %738 = vmatmul.mubr.bf16.gmra.mxu0 %v381
  %v739 = vpop.f32.mrf.mxu0
  %v740 = vadd.f32 0.0, %v739
  %v741 = vpop.f32.mrf.mxu0
  %v742 = vpop.f32.mrf.mxu0
  %v743 = vadd.f32 0.0, %v742
  %v744 = vpop.f32.mrf.mxu0
  %745 = vmatprep.mubr.bf16.mxu0 0
  %746 = vmatmul.mubr.bf16.gmra.mxu0 %v384
  %v747 = vpop.f32.mrf.mxu0
  %v748 = vadd.f32 0.0, %v747
  %v749 = vpop.f32.mrf.mxu0
  %v750 = vpop.f32.mrf.mxu0
  %v751 = vpop.f32.mrf.mxu0
  %752 = vdwg.mxu0
  %v754 = vsel %vm262, %v96, 0
  %v757 = vsel %vm262, %v97, 0
  %v760 = vsel %vm262, %v98, 0
  %v763 = vsel %vm262, %v99, 0
  %v766 = vsel %vm262, %v100, 0
  %v769 = vsel %vm262, %v101, 0
  %v772 = vsel %vm262, %v102, 0
  %v775 = vsel %vm262, %v103, 0
  %v778 = vsel %vm262, %v104, 0
  %v781 = vsel %vm262, %v105, 0
  %v784 = vsel %vm262, %v106, 0
  %v787 = vsel %vm262, %v107, 0
  %v790 = vsel %vm262, %v108, 0
  %v793 = vsel %vm262, %v109, 0
  %v796 = vsel %vm262, %v110, 0
  %v799 = vsel %vm262, %v111, 0
  %v802 = vsel %vm262, %v112, 0
  %v805 = vsel %vm262, %v113, 0
  %v808 = vsel %vm262, %v114, 0
  %v811 = vsel %vm262, %v115, 0
  %v814 = vsel %vm262, %v116, 0
  %v817 = vsel %vm262, %v117, 0
  %v820 = vsel %vm262, %v118, 0
  %v823 = vsel %vm262, %v119, 0
  %v826 = vsel %vm262, %v120, 0
  %v829 = vsel %vm262, %v121, 0
  %v832 = vsel %vm262, %v122, 0
  %v835 = vsel %vm262, %v123, 0
  %v838 = vsel %vm262, %v124, 0
  %v841 = vsel %vm262, %v125, 0
  %v844 = vsel %vm262, %v126, 0
  %v847 = vsel %vm262, %v127, 0
  %v850 = vsel %vm262, %v128, 0
  %v853 = vsel %vm262, %v129, 0
  %v856 = vsel %vm262, %v130, 0
  %v859 = vsel %vm262, %v131, 0
  %v862 = vsel %vm262, %v132, 0
  %v865 = vsel %vm262, %v133, 0
  %v868 = vsel %vm262, %v134, 0
  %v871 = vsel %vm262, %v135, 0
  %v874 = vsel %vm262, %v136, 0
  %v877 = vand.u32 %v137, %v389
  %879 = vmatprep.subr.bf16.mxu0 0
  %880 = vmatpush1.bf16.msra.mxu0 0
  %881 = vmatprep.subr.bf16.mxu0 0
  %882 = vmatpush1.bf16.msra.mxu0 0
  %883 = vmatprep.subr.bf16.mxu0 0
  %884 = vmatpush1.bf16.msra.mxu0 0
  %885 = vmatprep.subr.bf16.mxu0 0
  %886 = vmatpush1.bf16.msra.mxu0 0
  %887 = vmatprep.subr.bf16.mxu0 0
  %888 = vmatpush1.bf16.msra.mxu0 0
  %889 = vmatprep.subr.bf16.mxu0 0
  %890 = vmatpush1.bf16.msra.mxu0 0
  %891 = vmatprep.subr.bf16.mxu0 0
  %892 = vmatpush1.bf16.msra.mxu0 0
  %893 = vmatprep.subr.bf16.mxu0 0
  %894 = vmatpush1.bf16.msra.mxu0 %v877
  %895 = vmatprep.subr.bf16.mxu0 0
  %896 = vmatpush2.bf16.msra.mxu0 0
  %897 = vmatprep.subr.bf16.mxu0 0
  %898 = vmatpush2.bf16.msra.mxu0 0
  %899 = vmatprep.subr.bf16.mxu0 0
  %900 = vmatpush2.bf16.msra.mxu0 0
  %901 = vmatprep.subr.bf16.mxu0 0
  %902 = vmatpush2.bf16.msra.mxu0 0
  %903 = vmatprep.subr.bf16.mxu0 0
  %904 = vmatpush2.bf16.msra.mxu0 0
  %905 = vmatprep.subr.bf16.mxu0 0
  %906 = vmatpush2.bf16.msra.mxu0 0
  %907 = vmatprep.subr.bf16.mxu0 0
  %908 = vmatpush2.bf16.msra.mxu0 0
  %909 = vmatprep.subr.bf16.mxu0 0
  %910 = vmatpush2.bf16.msra.mxu0 0
  %911 = vmatprep.mubr.bf16.mxu0 0
  %912 = vmatmul.mubr.bf16.gmra.mxu0 %v754
  %v913 = vpop.f32.mrf.mxu0
  %v914 = vadd.f32 %v428, %v913
  %v915 = vpop.f32.mrf.mxu0
  %v916 = vpop.f32.mrf.mxu0
  %v917 = vadd.f32 %v431, %v916
  %v918 = vpop.f32.mrf.mxu0
  %919 = vmatprep.mubr.bf16.mxu0 0
  %920 = vmatmul.mubr.bf16.gmra.mxu0 %v757
  %v921 = vpop.f32.mrf.mxu0
  %v922 = vadd.f32 %v436, %v921
  %v923 = vpop.f32.mrf.mxu0
  %v924 = vpop.f32.mrf.mxu0
  %v925 = vadd.f32 %v439, %v924
  %v926 = vpop.f32.mrf.mxu0
  %927 = vmatprep.mubr.bf16.mxu0 0
  %928 = vmatmul.mubr.bf16.gmra.mxu0 %v760
  %v929 = vpop.f32.mrf.mxu0
  %v930 = vadd.f32 %v444, %v929
  %v931 = vpop.f32.mrf.mxu0
  %v932 = vpop.f32.mrf.mxu0
  %v933 = vadd.f32 %v447, %v932
  %v934 = vpop.f32.mrf.mxu0
  %935 = vmatprep.mubr.bf16.mxu0 0
  %936 = vmatmul.mubr.bf16.gmra.mxu0 %v763
  %v937 = vpop.f32.mrf.mxu0
  %v938 = vadd.f32 %v452, %v937
  %v939 = vpop.f32.mrf.mxu0
  %v940 = vpop.f32.mrf.mxu0
  %v941 = vadd.f32 %v455, %v940
  %v942 = vpop.f32.mrf.mxu0
  %943 = vmatprep.mubr.bf16.mxu0 0
  %944 = vmatmul.mubr.bf16.gmra.mxu0 %v766
  %v945 = vpop.f32.mrf.mxu0
  %v946 = vadd.f32 %v460, %v945
  %v947 = vpop.f32.mrf.mxu0
  %v948 = vpop.f32.mrf.mxu0
  %v949 = vadd.f32 %v463, %v948
  %v950 = vpop.f32.mrf.mxu0
  %951 = vmatprep.mubr.bf16.mxu0 0
  %952 = vmatmul.mubr.bf16.gmra.mxu0 %v769
  %v953 = vpop.f32.mrf.mxu0
  %v954 = vadd.f32 %v468, %v953
  %v955 = vpop.f32.mrf.mxu0
  %v956 = vpop.f32.mrf.mxu0
  %v957 = vadd.f32 %v471, %v956
  %v958 = vpop.f32.mrf.mxu0
  %959 = vmatprep.mubr.bf16.mxu0 0
  %960 = vmatmul.mubr.bf16.gmra.mxu0 %v772
  %v961 = vpop.f32.mrf.mxu0
  %v962 = vadd.f32 %v476, %v961
  %v963 = vpop.f32.mrf.mxu0
  %v964 = vpop.f32.mrf.mxu0
  %v965 = vadd.f32 %v479, %v964
  %v966 = vpop.f32.mrf.mxu0
  %967 = vmatprep.mubr.bf16.mxu0 0
  %968 = vmatmul.mubr.bf16.gmra.mxu0 %v775
  %v969 = vpop.f32.mrf.mxu0
  %v970 = vadd.f32 %v484, %v969
  %v971 = vpop.f32.mrf.mxu0
  %v972 = vpop.f32.mrf.mxu0
  %v973 = vadd.f32 %v487, %v972
  %v974 = vpop.f32.mrf.mxu0
  %975 = vmatprep.mubr.bf16.mxu0 0
  %976 = vmatmul.mubr.bf16.gmra.mxu0 %v778
  %v977 = vpop.f32.mrf.mxu0
  %v978 = vadd.f32 %v492, %v977
  %v979 = vpop.f32.mrf.mxu0
  %v980 = vpop.f32.mrf.mxu0
  %v981 = vadd.f32 %v495, %v980
  %v982 = vpop.f32.mrf.mxu0
  %983 = vmatprep.mubr.bf16.mxu0 0
  %984 = vmatmul.mubr.bf16.gmra.mxu0 %v781
  %v985 = vpop.f32.mrf.mxu0
  %v986 = vadd.f32 %v500, %v985
  %v987 = vpop.f32.mrf.mxu0
  %v988 = vpop.f32.mrf.mxu0
  %v989 = vadd.f32 %v503, %v988
  %v990 = vpop.f32.mrf.mxu0
  %991 = vmatprep.mubr.bf16.mxu0 0
  %992 = vmatmul.mubr.bf16.gmra.mxu0 %v784
  %v993 = vpop.f32.mrf.mxu0
  %v994 = vadd.f32 %v508, %v993
  %v995 = vpop.f32.mrf.mxu0
  %v996 = vpop.f32.mrf.mxu0
  %v997 = vadd.f32 %v511, %v996
  %v998 = vpop.f32.mrf.mxu0
  %999 = vmatprep.mubr.bf16.mxu0 0
  %1000 = vmatmul.mubr.bf16.gmra.mxu0 %v787
  %v1001 = vpop.f32.mrf.mxu0
  %v1002 = vadd.f32 %v516, %v1001
  %v1003 = vpop.f32.mrf.mxu0
  %v1004 = vpop.f32.mrf.mxu0
  %v1005 = vadd.f32 %v519, %v1004
  %v1006 = vpop.f32.mrf.mxu0
  %1007 = vmatprep.mubr.bf16.mxu0 0
  %1008 = vmatmul.mubr.bf16.gmra.mxu0 %v790
  %v1009 = vpop.f32.mrf.mxu0
  %v1010 = vadd.f32 %v524, %v1009
  %v1011 = vpop.f32.mrf.mxu0
  %v1012 = vpop.f32.mrf.mxu0
  %v1013 = vadd.f32 %v527, %v1012
  %v1014 = vpop.f32.mrf.mxu0
  %1015 = vmatprep.mubr.bf16.mxu0 0
  %1016 = vmatmul.mubr.bf16.gmra.mxu0 %v793
  %v1017 = vpop.f32.mrf.mxu0
  %v1018 = vadd.f32 %v532, %v1017
  %v1019 = vpop.f32.mrf.mxu0
  %v1020 = vpop.f32.mrf.mxu0
  %v1021 = vadd.f32 %v535, %v1020
  %v1022 = vpop.f32.mrf.mxu0
  %1023 = vmatprep.mubr.bf16.mxu0 0
  %1024 = vmatmul.mubr.bf16.gmra.mxu0 %v796
  %v1025 = vpop.f32.mrf.mxu0
  %v1026 = vadd.f32 %v540, %v1025
  %v1027 = vpop.f32.mrf.mxu0
  %v1028 = vpop.f32.mrf.mxu0
  %v1029 = vadd.f32 %v543, %v1028
  %v1030 = vpop.f32.mrf.mxu0
  %1031 = vmatprep.mubr.bf16.mxu0 0
  %1032 = vmatmul.mubr.bf16.gmra.mxu0 %v799
  %v1033 = vpop.f32.mrf.mxu0
  %v1034 = vadd.f32 %v548, %v1033
  %v1035 = vpop.f32.mrf.mxu0
  %v1036 = vpop.f32.mrf.mxu0
  %v1037 = vadd.f32 %v551, %v1036
  %v1038 = vpop.f32.mrf.mxu0
  %1039 = vmatprep.mubr.bf16.mxu0 0
  %1040 = vmatmul.mubr.bf16.gmra.mxu0 %v802
  %v1041 = vpop.f32.mrf.mxu0
  %v1042 = vadd.f32 %v556, %v1041
  %v1043 = vpop.f32.mrf.mxu0
  %v1044 = vpop.f32.mrf.mxu0
  %v1045 = vadd.f32 %v559, %v1044
  %v1046 = vpop.f32.mrf.mxu0
  %1047 = vmatprep.mubr.bf16.mxu0 0
  %1048 = vmatmul.mubr.bf16.gmra.mxu0 %v805
  %v1049 = vpop.f32.mrf.mxu0
  %v1050 = vadd.f32 %v564, %v1049
  %v1051 = vpop.f32.mrf.mxu0
  %v1052 = vpop.f32.mrf.mxu0
  %v1053 = vadd.f32 %v567, %v1052
  %v1054 = vpop.f32.mrf.mxu0
  %1055 = vmatprep.mubr.bf16.mxu0 0
  %1056 = vmatmul.mubr.bf16.gmra.mxu0 %v808
  %v1057 = vpop.f32.mrf.mxu0
  %v1058 = vadd.f32 %v572, %v1057
  %v1059 = vpop.f32.mrf.mxu0
  %v1060 = vpop.f32.mrf.mxu0
  %v1061 = vadd.f32 %v575, %v1060
  %v1062 = vpop.f32.mrf.mxu0
  %1063 = vmatprep.mubr.bf16.mxu0 0
  %1064 = vmatmul.mubr.bf16.gmra.mxu0 %v811
  %v1065 = vpop.f32.mrf.mxu0
  %v1066 = vadd.f32 %v580, %v1065
  %v1067 = vpop.f32.mrf.mxu0
  %v1068 = vpop.f32.mrf.mxu0
  %v1069 = vadd.f32 %v583, %v1068
  %v1070 = vpop.f32.mrf.mxu0
  %1071 = vmatprep.mubr.bf16.mxu0 0
  %1072 = vmatmul.mubr.bf16.gmra.mxu0 %v814
  %v1073 = vpop.f32.mrf.mxu0
  %v1074 = vadd.f32 %v588, %v1073
  %v1075 = vpop.f32.mrf.mxu0
  %v1076 = vpop.f32.mrf.mxu0
  %v1077 = vadd.f32 %v591, %v1076
  %v1078 = vpop.f32.mrf.mxu0
  %1079 = vmatprep.mubr.bf16.mxu0 0
  %1080 = vmatmul.mubr.bf16.gmra.mxu0 %v817
  %v1081 = vpop.f32.mrf.mxu0
  %v1082 = vadd.f32 %v596, %v1081
  %v1083 = vpop.f32.mrf.mxu0
  %v1084 = vpop.f32.mrf.mxu0
  %v1085 = vadd.f32 %v599, %v1084
  %v1086 = vpop.f32.mrf.mxu0
  %1087 = vmatprep.mubr.bf16.mxu0 0
  %1088 = vmatmul.mubr.bf16.gmra.mxu0 %v820
  %v1089 = vpop.f32.mrf.mxu0
  %v1090 = vadd.f32 %v604, %v1089
  %v1091 = vpop.f32.mrf.mxu0
  %v1092 = vpop.f32.mrf.mxu0
  %v1093 = vadd.f32 %v607, %v1092
  %v1094 = vpop.f32.mrf.mxu0
  %1095 = vmatprep.mubr.bf16.mxu0 0
  %1096 = vmatmul.mubr.bf16.gmra.mxu0 %v823
  %v1097 = vpop.f32.mrf.mxu0
  %v1098 = vadd.f32 %v612, %v1097
  %v1099 = vpop.f32.mrf.mxu0
  %v1100 = vpop.f32.mrf.mxu0
  %v1101 = vadd.f32 %v615, %v1100
  %v1102 = vpop.f32.mrf.mxu0
  %1103 = vmatprep.mubr.bf16.mxu0 0
  %1104 = vmatmul.mubr.bf16.gmra.mxu0 %v826
  %v1105 = vpop.f32.mrf.mxu0
  %v1106 = vadd.f32 %v620, %v1105
  %v1107 = vpop.f32.mrf.mxu0
  %v1108 = vpop.f32.mrf.mxu0
  %v1109 = vadd.f32 %v623, %v1108
  %v1110 = vpop.f32.mrf.mxu0
  %1111 = vmatprep.mubr.bf16.mxu0 0
  %1112 = vmatmul.mubr.bf16.gmra.mxu0 %v829
  %v1113 = vpop.f32.mrf.mxu0
  %v1114 = vadd.f32 %v628, %v1113
  %v1115 = vpop.f32.mrf.mxu0
  %v1116 = vpop.f32.mrf.mxu0
  %v1117 = vadd.f32 %v631, %v1116
  %v1118 = vpop.f32.mrf.mxu0
  %1119 = vmatprep.mubr.bf16.mxu0 0
  %1120 = vmatmul.mubr.bf16.gmra.mxu0 %v832
  %v1121 = vpop.f32.mrf.mxu0
  %v1122 = vadd.f32 %v636, %v1121
  %v1123 = vpop.f32.mrf.mxu0
  %v1124 = vpop.f32.mrf.mxu0
  %v1125 = vadd.f32 %v639, %v1124
  %v1126 = vpop.f32.mrf.mxu0
  %1127 = vmatprep.mubr.bf16.mxu0 0
  %1128 = vmatmul.mubr.bf16.gmra.mxu0 %v835
  %v1129 = vpop.f32.mrf.mxu0
  %v1130 = vadd.f32 %v644, %v1129
  %v1131 = vpop.f32.mrf.mxu0
  %v1132 = vpop.f32.mrf.mxu0
  %v1133 = vadd.f32 %v647, %v1132
  %v1134 = vpop.f32.mrf.mxu0
  %1135 = vmatprep.mubr.bf16.mxu0 0
  %1136 = vmatmul.mubr.bf16.gmra.mxu0 %v838
  %v1137 = vpop.f32.mrf.mxu0
  %v1138 = vadd.f32 %v652, %v1137
  %v1139 = vpop.f32.mrf.mxu0
  %v1140 = vpop.f32.mrf.mxu0
  %v1141 = vadd.f32 %v655, %v1140
  %v1142 = vpop.f32.mrf.mxu0
  %1143 = vmatprep.mubr.bf16.mxu0 0
  %1144 = vmatmul.mubr.bf16.gmra.mxu0 %v841
  %v1145 = vpop.f32.mrf.mxu0
  %v1146 = vadd.f32 %v660, %v1145
  %v1147 = vpop.f32.mrf.mxu0
  %v1148 = vpop.f32.mrf.mxu0
  %v1149 = vadd.f32 %v663, %v1148
  %v1150 = vpop.f32.mrf.mxu0
  %1151 = vmatprep.mubr.bf16.mxu0 0
  %1152 = vmatmul.mubr.bf16.gmra.mxu0 %v844
  %v1153 = vpop.f32.mrf.mxu0
  %v1154 = vadd.f32 %v668, %v1153
  %v1155 = vpop.f32.mrf.mxu0
  %v1156 = vpop.f32.mrf.mxu0
  %v1157 = vadd.f32 %v671, %v1156
  %v1158 = vpop.f32.mrf.mxu0
  %1159 = vmatprep.mubr.bf16.mxu0 0
  %1160 = vmatmul.mubr.bf16.gmra.mxu0 %v847
  %v1161 = vpop.f32.mrf.mxu0
  %v1162 = vadd.f32 %v676, %v1161
  %v1163 = vpop.f32.mrf.mxu0
  %v1164 = vpop.f32.mrf.mxu0
  %v1165 = vadd.f32 %v679, %v1164
  %v1166 = vpop.f32.mrf.mxu0
  %1167 = vmatprep.mubr.bf16.mxu0 0
  %1168 = vmatmul.mubr.bf16.gmra.mxu0 %v850
  %v1169 = vpop.f32.mrf.mxu0
  %v1170 = vadd.f32 %v684, %v1169
  %v1171 = vpop.f32.mrf.mxu0
  %v1172 = vpop.f32.mrf.mxu0
  %v1173 = vadd.f32 %v687, %v1172
  %v1174 = vpop.f32.mrf.mxu0
  %1175 = vmatprep.mubr.bf16.mxu0 0
  %1176 = vmatmul.mubr.bf16.gmra.mxu0 %v853
  %v1177 = vpop.f32.mrf.mxu0
  %v1178 = vadd.f32 %v692, %v1177
  %v1179 = vpop.f32.mrf.mxu0
  %v1180 = vpop.f32.mrf.mxu0
  %v1181 = vadd.f32 %v695, %v1180
  %v1182 = vpop.f32.mrf.mxu0
  %1183 = vmatprep.mubr.bf16.mxu0 0
  %1184 = vmatmul.mubr.bf16.gmra.mxu0 %v856
  %v1185 = vpop.f32.mrf.mxu0
  %v1186 = vadd.f32 %v700, %v1185
  %v1187 = vpop.f32.mrf.mxu0
  %v1188 = vpop.f32.mrf.mxu0
  %v1189 = vadd.f32 %v703, %v1188
  %v1190 = vpop.f32.mrf.mxu0
  %1191 = vmatprep.mubr.bf16.mxu0 0
  %1192 = vmatmul.mubr.bf16.gmra.mxu0 %v859
  %v1193 = vpop.f32.mrf.mxu0
  %v1194 = vadd.f32 %v708, %v1193
  %v1195 = vpop.f32.mrf.mxu0
  %v1196 = vpop.f32.mrf.mxu0
  %v1197 = vadd.f32 %v711, %v1196
  %v1198 = vpop.f32.mrf.mxu0
  %1199 = vmatprep.mubr.bf16.mxu0 0
  %1200 = vmatmul.mubr.bf16.gmra.mxu0 %v862
  %v1201 = vpop.f32.mrf.mxu0
  %v1202 = vadd.f32 %v716, %v1201
  %v1203 = vpop.f32.mrf.mxu0
  %v1204 = vpop.f32.mrf.mxu0
  %v1205 = vadd.f32 %v719, %v1204
  %v1206 = vpop.f32.mrf.mxu0
  %1207 = vmatprep.mubr.bf16.mxu0 0
  %1208 = vmatmul.mubr.bf16.gmra.mxu0 %v865
  %v1209 = vpop.f32.mrf.mxu0
  %v1210 = vadd.f32 %v724, %v1209
  %v1211 = vpop.f32.mrf.mxu0
  %v1212 = vpop.f32.mrf.mxu0
  %v1213 = vadd.f32 %v727, %v1212
  %v1214 = vpop.f32.mrf.mxu0
  %1215 = vmatprep.mubr.bf16.mxu0 0
  %1216 = vmatmul.mubr.bf16.gmra.mxu0 %v868
  %v1217 = vpop.f32.mrf.mxu0
  %v1218 = vadd.f32 %v732, %v1217
  %v1219 = vpop.f32.mrf.mxu0
  %v1220 = vpop.f32.mrf.mxu0
  %v1221 = vadd.f32 %v735, %v1220
  %v1222 = vpop.f32.mrf.mxu0
  %1223 = vmatprep.mubr.bf16.mxu0 0
  %1224 = vmatmul.mubr.bf16.gmra.mxu0 %v871
  %v1225 = vpop.f32.mrf.mxu0
  %v1226 = vadd.f32 %v740, %v1225
  %v1227 = vpop.f32.mrf.mxu0
  %v1228 = vpop.f32.mrf.mxu0
  %v1229 = vadd.f32 %v743, %v1228
  %v1230 = vpop.f32.mrf.mxu0
  %1231 = vmatprep.mubr.bf16.mxu0 0
  %1232 = vmatmul.mubr.bf16.gmra.mxu0 %v874
  %v1233 = vpop.f32.mrf.mxu0
  %v1234 = vadd.f32 %v748, %v1233
  %v1235 = vpop.f32.mrf.mxu0
  %v1236 = vpop.f32.mrf.mxu0
  %v1237 = vpop.f32.mrf.mxu0
  %1238 = vdwg.mxu0
  %v1239 = vld [vmem:[%s0 + $0x2] sm:$0xff]
  %v1240 = vld [vmem:[%s0 + $0xa] sm:$0xff]
  %v1241 = vld [vmem:[%s0 + $0x12] sm:$0xff]
  %v1242 = vld [vmem:[%s0 + $0x1a] sm:$0xff]
  %v1243 = vld [vmem:[%s0 + $0x22] sm:$0xff]
  %v1244 = vld [vmem:[%s0 + $0x2a] sm:$0xff]
  %v1245 = vld [vmem:[%s0 + $0x32] sm:$0xff]
  %v1246 = vld [vmem:[%s0 + $0x3a] sm:$0xff]
  %v1247 = vld [vmem:[%s0 + $0x42] sm:$0xff]
  %v1248 = vld [vmem:[%s0 + $0x4a] sm:$0xff]
  %v1249 = vld [vmem:[%s0 + $0x52] sm:$0xff]
  %v1250 = vld [vmem:[%s0 + $0x5a] sm:$0xff]
  %v1251 = vld [vmem:[%s0 + $0x62] sm:$0xff]
  %v1252 = vld [vmem:[%s0 + $0x6a] sm:$0xff]
  %v1253 = vld [vmem:[%s0 + $0x72] sm:$0xff]
  %v1254 = vld [vmem:[%s0 + $0x7a] sm:$0xff]
  %v1255 = vld [vmem:[%s0 + $0x82] sm:$0xff]
  %v1256 = vld [vmem:[%s0 + $0x8a] sm:$0xff]
  %v1257 = vld [vmem:[%s0 + $0x92] sm:$0xff]
  %v1258 = vld [vmem:[%s0 + $0x9a] sm:$0xff]
  %v1259 = vld [vmem:[%s0 + $0xa2] sm:$0xff]
  %v1260 = vld [vmem:[%s0 + $0xaa] sm:$0xff]
  %v1261 = vld [vmem:[%s0 + $0xb2] sm:$0xff]
  %v1262 = vld [vmem:[%s0 + $0xba] sm:$0xff]
  %v1263 = vld [vmem:[%s0 + $0xc2] sm:$0xff]
  %v1264 = vld [vmem:[%s0 + $0xca] sm:$0xff]
  %v1265 = vld [vmem:[%s0 + $0xd2] sm:$0xff]
  %v1266 = vld [vmem:[%s0 + $0xda] sm:$0xff]
  %v1267 = vld [vmem:[%s0 + $0xe2] sm:$0xff]
  %v1268 = vld [vmem:[%s0 + $0xea] sm:$0xff]
  %v1269 = vld [vmem:[%s0 + $0xf2] sm:$0xff]
  %v1270 = vld [vmem:[%s0 + $0xfa] sm:$0xff]
  %v1271 = vld [vmem:[%s0 + $0x102] sm:$0xff]
  %v1272 = vld [vmem:[%s0 + $0x10a] sm:$0xff]
  %v1273 = vld [vmem:[%s0 + $0x112] sm:$0xff]
  %v1274 = vld [vmem:[%s0 + $0x11a] sm:$0xff]
  %v1275 = vld [vmem:[%s0 + $0x122] sm:$0xff]
  %v1276 = vld [vmem:[%s0 + $0x12a] sm:$0xff]
  %v1277 = vld [vmem:[%s0 + $0x132] sm:$0xff]
  %v1278 = vld [vmem:[%s0 + $0x13a] sm:$0xff]
  %v1279 = vld [vmem:[%s0 + $0x142] sm:$0xff]
  %v1280 = vld [vmem:[%s0 + $0x14a] sm:$0xff]
  %v1281 = vld [vmem:[%s0 + $0x152] sm:$0xff]
  %v1282 = vld [vmem:[%s0 + $0x15a] sm:$0xff]
  %v1283 = vld [vmem:[%s0 + $0x162] sm:$0xff]
  %v1284 = vld [vmem:[%s0 + $0x16a] sm:$0xff]
  %v1285 = vld [vmem:[%s0 + $0x172] sm:$0xff]
  %v1286 = vld [vmem:[%s0 + $0x17a] sm:$0xff]
  %v1287 = vld [vmem:[%s0 + $0x182] sm:$0xff]
  %v1288 = vld [vmem:[%s0 + $0x18a] sm:$0xff]
  %v1289 = vld [vmem:[%s0 + $0x192] sm:$0xff]
  %v1290 = vld [vmem:[%s0 + $0x19a] sm:$0xff]
  %v1291 = vld [vmem:[%s0 + $0x1a2] sm:$0xff]
  %v1292 = vld [vmem:[%s0 + $0x1aa] sm:$0xff]
  %v1293 = vld [vmem:[%s0 + $0x1b2] sm:$0xff]
  %v1294 = vld [vmem:[%s0 + $0x1ba] sm:$0xff]
  %v1295 = vld [vmem:[%s0 + $0x1c2] sm:$0xff]
  %v1296 = vld [vmem:[%s0 + $0x1ca] sm:$0xff]
  %v1297 = vld [vmem:[%s0 + $0x1d2] sm:$0xff]
  %v1298 = vld [vmem:[%s0 + $0x1da] sm:$0xff]
  %v1299 = vld [vmem:[%s0 + $0x1e2] sm:$0xff]
  %v1300 = vld [vmem:[%s0 + $0x1ea] sm:$0xff]
  %v1301 = vld [vmem:[%s0 + $0x1f2] sm:$0xff]
  %v1302 = vld [vmem:[%s0 + $0x1fa] sm:$0xff]
  %v1303 = vld [vmem:[%s0 + $0x202] sm:$0xff]
  %v1304 = vld [vmem:[%s0 + $0x20a] sm:$0xff]
  %v1305 = vld [vmem:[%s0 + $0x212] sm:$0xff]
  %v1306 = vld [vmem:[%s0 + $0x21a] sm:$0xff]
  %v1307 = vld [vmem:[%s0 + $0x222] sm:$0xff]
  %v1308 = vld [vmem:[%s0 + $0x22a] sm:$0xff]
  %v1309 = vld [vmem:[%s0 + $0x232] sm:$0xff]
  %v1310 = vld [vmem:[%s0 + $0x23a] sm:$0xff]
  %v1311 = vld [vmem:[%s0 + $0x242] sm:$0xff]
  %v1312 = vld [vmem:[%s0 + $0x24a] sm:$0xff]
  %v1313 = vld [vmem:[%s0 + $0x252] sm:$0xff]
  %v1314 = vld [vmem:[%s0 + $0x25a] sm:$0xff]
  %v1315 = vld [vmem:[%s0 + $0x262] sm:$0xff]
  %v1316 = vld [vmem:[%s0 + $0x26a] sm:$0xff]
  %v1317 = vld [vmem:[%s0 + $0x272] sm:$0xff]
  %v1318 = vld [vmem:[%s0 + $0x27a] sm:$0xff]
  %v1319 = vld [vmem:[%s0 + $0x282] sm:$0xff]
  %v1320 = vpack.c.bf16 %v1240, %v1239
  %v1321 = vpack.c.bf16 %v1242, %v1241
  %v1322 = vpack.c.bf16 %v1244, %v1243
  %v1323 = vpack.c.bf16 %v1246, %v1245
  %v1324 = vpack.c.bf16 %v1248, %v1247
  %v1325 = vpack.c.bf16 %v1250, %v1249
  %v1326 = vpack.c.bf16 %v1252, %v1251
  %v1327 = vpack.c.bf16 %v1254, %v1253
  %v1328 = vpack.c.bf16 %v1256, %v1255
  %v1329 = vpack.c.bf16 %v1258, %v1257
  %v1330 = vpack.c.bf16 %v1260, %v1259
  %v1331 = vpack.c.bf16 %v1262, %v1261
  %v1332 = vpack.c.bf16 %v1264, %v1263
  %v1333 = vpack.c.bf16 %v1266, %v1265
  %v1334 = vpack.c.bf16 %v1268, %v1267
  %v1335 = vpack.c.bf16 %v1270, %v1269
  %v1336 = vpack.c.bf16 %v1272, %v1271
  %v1337 = vpack.c.bf16 %v1274, %v1273
  %v1338 = vpack.c.bf16 %v1276, %v1275
  %v1339 = vpack.c.bf16 %v1278, %v1277
  %v1340 = vpack.c.bf16 %v1280, %v1279
  %v1341 = vpack.c.bf16 %v1282, %v1281
  %v1342 = vpack.c.bf16 %v1284, %v1283
  %v1343 = vpack.c.bf16 %v1286, %v1285
  %v1344 = vpack.c.bf16 %v1288, %v1287
  %v1345 = vpack.c.bf16 %v1290, %v1289
  %v1346 = vpack.c.bf16 %v1292, %v1291
  %v1347 = vpack.c.bf16 %v1294, %v1293
  %v1348 = vpack.c.bf16 %v1296, %v1295
  %v1349 = vpack.c.bf16 %v1298, %v1297
  %v1350 = vpack.c.bf16 %v1300, %v1299
  %v1351 = vpack.c.bf16 %v1302, %v1301
  %v1352 = vpack.c.bf16 %v1304, %v1303
  %v1353 = vpack.c.bf16 %v1306, %v1305
  %v1354 = vpack.c.bf16 %v1308, %v1307
  %v1355 = vpack.c.bf16 %v1310, %v1309
  %v1356 = vpack.c.bf16 %v1312, %v1311
  %v1357 = vpack.c.bf16 %v1314, %v1313
  %v1358 = vpack.c.bf16 %v1316, %v1315
  %v1359 = vpack.c.bf16 %v1318, %v1317
  %v1360 = vpack.c.bf16 %v1319, %v1319
  %s1361 = scalar_lea.vmem %s1, 4
  %v1362 = vld [vmem:[%s1361] sm:$0x3]
  %v1364 = vsel %vm262, %v1320, 0
  %v1367 = vsel %vm262, %v1321, 0
  %v1370 = vsel %vm262, %v1322, 0
  %v1373 = vsel %vm262, %v1323, 0
  %v1376 = vsel %vm262, %v1324, 0
  %v1379 = vsel %vm262, %v1325, 0
  %v1382 = vsel %vm262, %v1326, 0
  %v1385 = vsel %vm262, %v1327, 0
  %v1388 = vsel %vm262, %v1328, 0
  %v1391 = vsel %vm262, %v1329, 0
  %v1394 = vsel %vm262, %v1330, 0
  %v1397 = vsel %vm262, %v1331, 0
  %v1400 = vsel %vm262, %v1332, 0
  %v1403 = vsel %vm262, %v1333, 0
  %v1406 = vsel %vm262, %v1334, 0
  %v1409 = vsel %vm262, %v1335, 0
  %v1412 = vsel %vm262, %v1336, 0
  %v1415 = vsel %vm262, %v1337, 0
  %v1418 = vsel %vm262, %v1338, 0
  %v1421 = vsel %vm262, %v1339, 0
  %v1424 = vsel %vm262, %v1340, 0
  %v1427 = vsel %vm262, %v1341, 0
  %v1430 = vsel %vm262, %v1342, 0
  %v1433 = vsel %vm262, %v1343, 0
  %v1436 = vsel %vm262, %v1344, 0
  %v1439 = vsel %vm262, %v1345, 0
  %v1442 = vsel %vm262, %v1346, 0
  %v1445 = vsel %vm262, %v1347, 0
  %v1448 = vsel %vm262, %v1348, 0
  %v1451 = vsel %vm262, %v1349, 0
  %v1454 = vsel %vm262, %v1350, 0
  %v1457 = vsel %vm262, %v1351, 0
  %v1460 = vsel %vm262, %v1352, 0
  %v1463 = vsel %vm262, %v1353, 0
  %v1466 = vsel %vm262, %v1354, 0
  %v1469 = vsel %vm262, %v1355, 0
  %v1472 = vsel %vm262, %v1356, 0
  %v1475 = vsel %vm262, %v1357, 0
  %v1478 = vsel %vm262, %v1358, 0
  %v1481 = vsel %vm262, %v1359, 0
  %v1484 = vsel %vm262, %v1360, 0
  %v1487 = vand.u32 %v1362, %v389
  %1489 = vmatprep.subr.bf16.mxu0 0
  %1490 = vmatpush1.bf16.msra.mxu0 0
  %1491 = vmatprep.subr.bf16.mxu0 0
  %1492 = vmatpush1.bf16.msra.mxu0 0
  %1493 = vmatprep.subr.bf16.mxu0 0
  %1494 = vmatpush1.bf16.msra.mxu0 0
  %1495 = vmatprep.subr.bf16.mxu0 0
  %1496 = vmatpush1.bf16.msra.mxu0 0
  %1497 = vmatprep.subr.bf16.mxu0 0
  %1498 = vmatpush1.bf16.msra.mxu0 0
  %1499 = vmatprep.subr.bf16.mxu0 0
  %1500 = vmatpush1.bf16.msra.mxu0 0
  %1501 = vmatprep.subr.bf16.mxu0 0
  %1502 = vmatpush1.bf16.msra.mxu0 0
  %1503 = vmatprep.subr.bf16.mxu0 0
  %1504 = vmatpush1.bf16.msra.mxu0 %v1487
  %1505 = vmatprep.subr.bf16.mxu0 0
  %1506 = vmatpush2.bf16.msra.mxu0 0
  %1507 = vmatprep.subr.bf16.mxu0 0
  %1508 = vmatpush2.bf16.msra.mxu0 0
  %1509 = vmatprep.subr.bf16.mxu0 0
  %1510 = vmatpush2.bf16.msra.mxu0 0
  %1511 = vmatprep.subr.bf16.mxu0 0
  %1512 = vmatpush2.bf16.msra.mxu0 0
  %1513 = vmatprep.subr.bf16.mxu0 0
  %1514 = vmatpush2.bf16.msra.mxu0 0
  %1515 = vmatprep.subr.bf16.mxu0 0
  %1516 = vmatpush2.bf16.msra.mxu0 0
  %1517 = vmatprep.subr.bf16.mxu0 0
  %1518 = vmatpush2.bf16.msra.mxu0 0
  %1519 = vmatprep.subr.bf16.mxu0 0
  %1520 = vmatpush2.bf16.msra.mxu0 0
  %1521 = vmatprep.mubr.bf16.mxu0 0
  %1522 = vmatmul.mubr.bf16.gmra.mxu0 %v1364
  %v1523 = vpop.f32.mrf.mxu0
  %v1524 = vadd.f32 0.0, %v1523
  %v1525 = vpop.f32.mrf.mxu0
  %v1526 = vpop.f32.mrf.mxu0
  %v1527 = vadd.f32 0.0, %v1526
  %v1528 = vpop.f32.mrf.mxu0
  %1529 = vmatprep.mubr.bf16.mxu0 0
  %1530 = vmatmul.mubr.bf16.gmra.mxu0 %v1367
  %v1531 = vpop.f32.mrf.mxu0
  %v1532 = vadd.f32 0.0, %v1531
  %v1533 = vpop.f32.mrf.mxu0
  %v1534 = vpop.f32.mrf.mxu0
  %v1535 = vadd.f32 0.0, %v1534
  %v1536 = vpop.f32.mrf.mxu0
  %1537 = vmatprep.mubr.bf16.mxu0 0
  %1538 = vmatmul.mubr.bf16.gmra.mxu0 %v1370
  %v1539 = vpop.f32.mrf.mxu0
  %v1540 = vadd.f32 0.0, %v1539
  %v1541 = vpop.f32.mrf.mxu0
  %v1542 = vpop.f32.mrf.mxu0
  %v1543 = vadd.f32 0.0, %v1542
  %v1544 = vpop.f32.mrf.mxu0
  %1545 = vmatprep.mubr.bf16.mxu0 0
  %1546 = vmatmul.mubr.bf16.gmra.mxu0 %v1373
  %v1547 = vpop.f32.mrf.mxu0
  %v1548 = vadd.f32 0.0, %v1547
  %v1549 = vpop.f32.mrf.mxu0
  %v1550 = vpop.f32.mrf.mxu0
  %v1551 = vadd.f32 0.0, %v1550
  %v1552 = vpop.f32.mrf.mxu0
  %1553 = vmatprep.mubr.bf16.mxu0 0
  %1554 = vmatmul.mubr.bf16.gmra.mxu0 %v1376
  %v1555 = vpop.f32.mrf.mxu0
  %v1556 = vadd.f32 0.0, %v1555
  %v1557 = vpop.f32.mrf.mxu0
  %v1558 = vpop.f32.mrf.mxu0
  %v1559 = vadd.f32 0.0, %v1558
  %v1560 = vpop.f32.mrf.mxu0
  %1561 = vmatprep.mubr.bf16.mxu0 0
  %1562 = vmatmul.mubr.bf16.gmra.mxu0 %v1379
  %v1563 = vpop.f32.mrf.mxu0
  %v1564 = vadd.f32 0.0, %v1563
  %v1565 = vpop.f32.mrf.mxu0
  %v1566 = vpop.f32.mrf.mxu0
  %v1567 = vadd.f32 0.0, %v1566
  %v1568 = vpop.f32.mrf.mxu0
  %1569 = vmatprep.mubr.bf16.mxu0 0
  %1570 = vmatmul.mubr.bf16.gmra.mxu0 %v1382
  %v1571 = vpop.f32.mrf.mxu0
  %v1572 = vadd.f32 0.0, %v1571
  %v1573 = vpop.f32.mrf.mxu0
  %v1574 = vpop.f32.mrf.mxu0
  %v1575 = vadd.f32 0.0, %v1574
  %v1576 = vpop.f32.mrf.mxu0
  %1577 = vmatprep.mubr.bf16.mxu0 0
  %1578 = vmatmul.mubr.bf16.gmra.mxu0 %v1385
  %v1579 = vpop.f32.mrf.mxu0
  %v1580 = vadd.f32 0.0, %v1579
  %v1581 = vpop.f32.mrf.mxu0
  %v1582 = vpop.f32.mrf.mxu0
  %v1583 = vadd.f32 0.0, %v1582
  %v1584 = vpop.f32.mrf.mxu0
  %1585 = vmatprep.mubr.bf16.mxu0 0
  %1586 = vmatmul.mubr.bf16.gmra.mxu0 %v1388
  %v1587 = vpop.f32.mrf.mxu0
  %v1588 = vadd.f32 0.0, %v1587
  %v1589 = vpop.f32.mrf.mxu0
  %v1590 = vpop.f32.mrf.mxu0
  %v1591 = vadd.f32 0.0, %v1590
  %v1592 = vpop.f32.mrf.mxu0
  %1593 = vmatprep.mubr.bf16.mxu0 0
  %1594 = vmatmul.mubr.bf16.gmra.mxu0 %v1391
  %v1595 = vpop.f32.mrf.mxu0
  %v1596 = vadd.f32 0.0, %v1595
  %v1597 = vpop.f32.mrf.mxu0
  %v1598 = vpop.f32.mrf.mxu0
  %v1599 = vadd.f32 0.0, %v1598
  %v1600 = vpop.f32.mrf.mxu0
  %1601 = vmatprep.mubr.bf16.mxu0 0
  %1602 = vmatmul.mubr.bf16.gmra.mxu0 %v1394
  %v1603 = vpop.f32.mrf.mxu0
  %v1604 = vadd.f32 0.0, %v1603
  %v1605 = vpop.f32.mrf.mxu0
  %v1606 = vpop.f32.mrf.mxu0
  %v1607 = vadd.f32 0.0, %v1606
  %v1608 = vpop.f32.mrf.mxu0
  %1609 = vmatprep.mubr.bf16.mxu0 0
  %1610 = vmatmul.mubr.bf16.gmra.mxu0 %v1397
  %v1611 = vpop.f32.mrf.mxu0
  %v1612 = vadd.f32 0.0, %v1611
  %v1613 = vpop.f32.mrf.mxu0
  %v1614 = vpop.f32.mrf.mxu0
  %v1615 = vadd.f32 0.0, %v1614
  %v1616 = vpop.f32.mrf.mxu0
  %1617 = vmatprep.mubr.bf16.mxu0 0
  %1618 = vmatmul.mubr.bf16.gmra.mxu0 %v1400
  %v1619 = vpop.f32.mrf.mxu0
  %v1620 = vadd.f32 0.0, %v1619
  %v1621 = vpop.f32.mrf.mxu0
  %v1622 = vpop.f32.mrf.mxu0
  %v1623 = vadd.f32 0.0, %v1622
  %v1624 = vpop.f32.mrf.mxu0
  %1625 = vmatprep.mubr.bf16.mxu0 0
  %1626 = vmatmul.mubr.bf16.gmra.mxu0 %v1403
  %v1627 = vpop.f32.mrf.mxu0
  %v1628 = vadd.f32 0.0, %v1627
  %v1629 = vpop.f32.mrf.mxu0
  %v1630 = vpop.f32.mrf.mxu0
  %v1631 = vadd.f32 0.0, %v1630
  %v1632 = vpop.f32.mrf.mxu0
  %1633 = vmatprep.mubr.bf16.mxu0 0
  %1634 = vmatmul.mubr.bf16.gmra.mxu0 %v1406
  %v1635 = vpop.f32.mrf.mxu0
  %v1636 = vadd.f32 0.0, %v1635
  %v1637 = vpop.f32.mrf.mxu0
  %v1638 = vpop.f32.mrf.mxu0
  %v1639 = vadd.f32 0.0, %v1638
  %v1640 = vpop.f32.mrf.mxu0
  %1641 = vmatprep.mubr.bf16.mxu0 0
  %1642 = vmatmul.mubr.bf16.gmra.mxu0 %v1409
  %v1643 = vpop.f32.mrf.mxu0
  %v1644 = vadd.f32 0.0, %v1643
  %v1645 = vpop.f32.mrf.mxu0
  %v1646 = vpop.f32.mrf.mxu0
  %v1647 = vadd.f32 0.0, %v1646
  %v1648 = vpop.f32.mrf.mxu0
  %1649 = vmatprep.mubr.bf16.mxu0 0
  %1650 = vmatmul.mubr.bf16.gmra.mxu0 %v1412
  %v1651 = vpop.f32.mrf.mxu0
  %v1652 = vadd.f32 0.0, %v1651
  %v1653 = vpop.f32.mrf.mxu0
  %v1654 = vpop.f32.mrf.mxu0
  %v1655 = vadd.f32 0.0, %v1654
  %v1656 = vpop.f32.mrf.mxu0
  %1657 = vmatprep.mubr.bf16.mxu0 0
  %1658 = vmatmul.mubr.bf16.gmra.mxu0 %v1415
  %v1659 = vpop.f32.mrf.mxu0
  %v1660 = vadd.f32 0.0, %v1659
  %v1661 = vpop.f32.mrf.mxu0
  %v1662 = vpop.f32.mrf.mxu0
  %v1663 = vadd.f32 0.0, %v1662
  %v1664 = vpop.f32.mrf.mxu0
  %1665 = vmatprep.mubr.bf16.mxu0 0
  %1666 = vmatmul.mubr.bf16.gmra.mxu0 %v1418
  %v1667 = vpop.f32.mrf.mxu0
  %v1668 = vadd.f32 0.0, %v1667
  %v1669 = vpop.f32.mrf.mxu0
  %v1670 = vpop.f32.mrf.mxu0
  %v1671 = vadd.f32 0.0, %v1670
  %v1672 = vpop.f32.mrf.mxu0
  %1673 = vmatprep.mubr.bf16.mxu0 0
  %1674 = vmatmul.mubr.bf16.gmra.mxu0 %v1421
  %v1675 = vpop.f32.mrf.mxu0
  %v1676 = vadd.f32 0.0, %v1675
  %v1677 = vpop.f32.mrf.mxu0
  %v1678 = vpop.f32.mrf.mxu0
  %v1679 = vadd.f32 0.0, %v1678
  %v1680 = vpop.f32.mrf.mxu0
  %1681 = vmatprep.mubr.bf16.mxu0 0
  %1682 = vmatmul.mubr.bf16.gmra.mxu0 %v1424
  %v1683 = vpop.f32.mrf.mxu0
  %v1684 = vadd.f32 0.0, %v1683
  %v1685 = vpop.f32.mrf.mxu0
  %v1686 = vpop.f32.mrf.mxu0
  %v1687 = vadd.f32 0.0, %v1686
  %v1688 = vpop.f32.mrf.mxu0
  %1689 = vmatprep.mubr.bf16.mxu0 0
  %1690 = vmatmul.mubr.bf16.gmra.mxu0 %v1427
  %v1691 = vpop.f32.mrf.mxu0
  %v1692 = vadd.f32 0.0, %v1691
  %v1693 = vpop.f32.mrf.mxu0
  %v1694 = vpop.f32.mrf.mxu0
  %v1695 = vadd.f32 0.0, %v1694
  %v1696 = vpop.f32.mrf.mxu0
  %1697 = vmatprep.mubr.bf16.mxu0 0
  %1698 = vmatmul.mubr.bf16.gmra.mxu0 %v1430
  %v1699 = vpop.f32.mrf.mxu0
  %v1700 = vadd.f32 0.0, %v1699
  %v1701 = vpop.f32.mrf.mxu0
  %v1702 = vpop.f32.mrf.mxu0
  %v1703 = vadd.f32 0.0, %v1702
  %v1704 = vpop.f32.mrf.mxu0
  %1705 = vmatprep.mubr.bf16.mxu0 0
  %1706 = vmatmul.mubr.bf16.gmra.mxu0 %v1433
  %v1707 = vpop.f32.mrf.mxu0
  %v1708 = vadd.f32 0.0, %v1707
  %v1709 = vpop.f32.mrf.mxu0
  %v1710 = vpop.f32.mrf.mxu0
  %v1711 = vadd.f32 0.0, %v1710
  %v1712 = vpop.f32.mrf.mxu0
  %1713 = vmatprep.mubr.bf16.mxu0 0
  %1714 = vmatmul.mubr.bf16.gmra.mxu0 %v1436
  %v1715 = vpop.f32.mrf.mxu0
  %v1716 = vadd.f32 0.0, %v1715
  %v1717 = vpop.f32.mrf.mxu0
  %v1718 = vpop.f32.mrf.mxu0
  %v1719 = vadd.f32 0.0, %v1718
  %v1720 = vpop.f32.mrf.mxu0
  %1721 = vmatprep.mubr.bf16.mxu0 0
  %1722 = vmatmul.mubr.bf16.gmra.mxu0 %v1439
  %v1723 = vpop.f32.mrf.mxu0
  %v1724 = vadd.f32 0.0, %v1723
  %v1725 = vpop.f32.mrf.mxu0
  %v1726 = vpop.f32.mrf.mxu0
  %v1727 = vadd.f32 0.0, %v1726
  %v1728 = vpop.f32.mrf.mxu0
  %1729 = vmatprep.mubr.bf16.mxu0 0
  %1730 = vmatmul.mubr.bf16.gmra.mxu0 %v1442
  %v1731 = vpop.f32.mrf.mxu0
  %v1732 = vadd.f32 0.0, %v1731
  %v1733 = vpop.f32.mrf.mxu0
  %v1734 = vpop.f32.mrf.mxu0
  %v1735 = vadd.f32 0.0, %v1734
  %v1736 = vpop.f32.mrf.mxu0
  %1737 = vmatprep.mubr.bf16.mxu0 0
  %1738 = vmatmul.mubr.bf16.gmra.mxu0 %v1445
  %v1739 = vpop.f32.mrf.mxu0
  %v1740 = vadd.f32 0.0, %v1739
  %v1741 = vpop.f32.mrf.mxu0
  %v1742 = vpop.f32.mrf.mxu0
  %v1743 = vadd.f32 0.0, %v1742
  %v1744 = vpop.f32.mrf.mxu0
  %1745 = vmatprep.mubr.bf16.mxu0 0
  %1746 = vmatmul.mubr.bf16.gmra.mxu0 %v1448
  %v1747 = vpop.f32.mrf.mxu0
  %v1748 = vadd.f32 0.0, %v1747
  %v1749 = vpop.f32.mrf.mxu0
  %v1750 = vpop.f32.mrf.mxu0
  %v1751 = vadd.f32 0.0, %v1750
  %v1752 = vpop.f32.mrf.mxu0
  %1753 = vmatprep.mubr.bf16.mxu0 0
  %1754 = vmatmul.mubr.bf16.gmra.mxu0 %v1451
  %v1755 = vpop.f32.mrf.mxu0
  %v1756 = vadd.f32 0.0, %v1755
  %v1757 = vpop.f32.mrf.mxu0
  %v1758 = vpop.f32.mrf.mxu0
  %v1759 = vadd.f32 0.0, %v1758
  %v1760 = vpop.f32.mrf.mxu0
  %1761 = vmatprep.mubr.bf16.mxu0 0
  %1762 = vmatmul.mubr.bf16.gmra.mxu0 %v1454
  %v1763 = vpop.f32.mrf.mxu0
  %v1764 = vadd.f32 0.0, %v1763
  %v1765 = vpop.f32.mrf.mxu0
  %v1766 = vpop.f32.mrf.mxu0
  %v1767 = vadd.f32 0.0, %v1766
  %v1768 = vpop.f32.mrf.mxu0
  %1769 = vmatprep.mubr.bf16.mxu0 0
  %1770 = vmatmul.mubr.bf16.gmra.mxu0 %v1457
  %v1771 = vpop.f32.mrf.mxu0
  %v1772 = vadd.f32 0.0, %v1771
  %v1773 = vpop.f32.mrf.mxu0
  %v1774 = vpop.f32.mrf.mxu0
  %v1775 = vadd.f32 0.0, %v1774
  %v1776 = vpop.f32.mrf.mxu0
  %1777 = vmatprep.mubr.bf16.mxu0 0
  %1778 = vmatmul.mubr.bf16.gmra.mxu0 %v1460
  %v1779 = vpop.f32.mrf.mxu0
  %v1780 = vadd.f32 0.0, %v1779
  %v1781 = vpop.f32.mrf.mxu0
  %v1782 = vpop.f32.mrf.mxu0
  %v1783 = vadd.f32 0.0, %v1782
  %v1784 = vpop.f32.mrf.mxu0
  %1785 = vmatprep.mubr.bf16.mxu0 0
  %1786 = vmatmul.mubr.bf16.gmra.mxu0 %v1463
  %v1787 = vpop.f32.mrf.mxu0
  %v1788 = vadd.f32 0.0, %v1787
  %v1789 = vpop.f32.mrf.mxu0
  %v1790 = vpop.f32.mrf.mxu0
  %v1791 = vadd.f32 0.0, %v1790
  %v1792 = vpop.f32.mrf.mxu0
  %1793 = vmatprep.mubr.bf16.mxu0 0
  %1794 = vmatmul.mubr.bf16.gmra.mxu0 %v1466
  %v1795 = vpop.f32.mrf.mxu0
  %v1796 = vadd.f32 0.0, %v1795
  %v1797 = vpop.f32.mrf.mxu0
  %v1798 = vpop.f32.mrf.mxu0
  %v1799 = vadd.f32 0.0, %v1798
  %v1800 = vpop.f32.mrf.mxu0
  %1801 = vmatprep.mubr.bf16.mxu0 0
  %1802 = vmatmul.mubr.bf16.gmra.mxu0 %v1469
  %v1803 = vpop.f32.mrf.mxu0
  %v1804 = vadd.f32 0.0, %v1803
  %v1805 = vpop.f32.mrf.mxu0
  %v1806 = vpop.f32.mrf.mxu0
  %v1807 = vadd.f32 0.0, %v1806
  %v1808 = vpop.f32.mrf.mxu0
  %1809 = vmatprep.mubr.bf16.mxu0 0
  %1810 = vmatmul.mubr.bf16.gmra.mxu0 %v1472
  %v1811 = vpop.f32.mrf.mxu0
  %v1812 = vadd.f32 0.0, %v1811
  %v1813 = vpop.f32.mrf.mxu0
  %v1814 = vpop.f32.mrf.mxu0
  %v1815 = vadd.f32 0.0, %v1814
  %v1816 = vpop.f32.mrf.mxu0
  %1817 = vmatprep.mubr.bf16.mxu0 0
  %1818 = vmatmul.mubr.bf16.gmra.mxu0 %v1475
  %v1819 = vpop.f32.mrf.mxu0
  %v1820 = vadd.f32 0.0, %v1819
  %v1821 = vpop.f32.mrf.mxu0
  %v1822 = vpop.f32.mrf.mxu0
  %v1823 = vadd.f32 0.0, %v1822
  %v1824 = vpop.f32.mrf.mxu0
  %1825 = vmatprep.mubr.bf16.mxu0 0
  %1826 = vmatmul.mubr.bf16.gmra.mxu0 %v1478
  %v1827 = vpop.f32.mrf.mxu0
  %v1828 = vadd.f32 0.0, %v1827
  %v1829 = vpop.f32.mrf.mxu0
  %v1830 = vpop.f32.mrf.mxu0
  %v1831 = vadd.f32 0.0, %v1830
  %v1832 = vpop.f32.mrf.mxu0
  %1833 = vmatprep.mubr.bf16.mxu0 0
  %1834 = vmatmul.mubr.bf16.gmra.mxu0 %v1481
  %v1835 = vpop.f32.mrf.mxu0
  %v1836 = vadd.f32 0.0, %v1835
  %v1837 = vpop.f32.mrf.mxu0
  %v1838 = vpop.f32.mrf.mxu0
  %v1839 = vadd.f32 0.0, %v1838
  %v1840 = vpop.f32.mrf.mxu0
  %1841 = vmatprep.mubr.bf16.mxu0 0
  %1842 = vmatmul.mubr.bf16.gmra.mxu0 %v1484
  %v1843 = vpop.f32.mrf.mxu0
  %v1844 = vadd.f32 0.0, %v1843
  %v1845 = vpop.f32.mrf.mxu0
  %v1846 = vpop.f32.mrf.mxu0
  %v1847 = vpop.f32.mrf.mxu0
  %1848 = vdwg.mxu0
  %v1849 = vadd.f32 %v914, %v1524
  %v1850 = vadd.f32 %v917, %v1527
  %v1851 = vadd.f32 %v922, %v1532
  %v1852 = vadd.f32 %v925, %v1535
  %v1853 = vadd.f32 %v930, %v1540
  %v1854 = vadd.f32 %v933, %v1543
  %v1855 = vadd.f32 %v938, %v1548
  %v1856 = vadd.f32 %v941, %v1551
  %v1857 = vadd.f32 %v946, %v1556
  %v1858 = vadd.f32 %v949, %v1559
  %v1859 = vadd.f32 %v954, %v1564
  %v1860 = vadd.f32 %v957, %v1567
  %v1861 = vadd.f32 %v962, %v1572
  %v1862 = vadd.f32 %v965, %v1575
  %v1863 = vadd.f32 %v970, %v1580
  %v1864 = vadd.f32 %v973, %v1583
  %v1865 = vadd.f32 %v978, %v1588
  %v1866 = vadd.f32 %v981, %v1591
  %v1867 = vadd.f32 %v986, %v1596
  %v1868 = vadd.f32 %v989, %v1599
  %v1869 = vadd.f32 %v994, %v1604
  %v1870 = vadd.f32 %v997, %v1607
  %v1871 = vadd.f32 %v1002, %v1612
  %v1872 = vadd.f32 %v1005, %v1615
  %v1873 = vadd.f32 %v1010, %v1620
  %v1874 = vadd.f32 %v1013, %v1623
  %v1875 = vadd.f32 %v1018, %v1628
  %v1876 = vadd.f32 %v1021, %v1631
  %v1877 = vadd.f32 %v1026, %v1636
  %v1878 = vadd.f32 %v1029, %v1639
  %v1879 = vadd.f32 %v1034, %v1644
  %v1880 = vadd.f32 %v1037, %v1647
  %v1881 = vadd.f32 %v1042, %v1652
  %v1882 = vadd.f32 %v1045, %v1655
  %v1883 = vadd.f32 %v1050, %v1660
  %v1884 = vadd.f32 %v1053, %v1663
  %v1885 = vadd.f32 %v1058, %v1668
  %v1886 = vadd.f32 %v1061, %v1671
  %v1887 = vadd.f32 %v1066, %v1676
  %v1888 = vadd.f32 %v1069, %v1679
  %v1889 = vadd.f32 %v1074, %v1684
  %v1890 = vadd.f32 %v1077, %v1687
  %v1891 = vadd.f32 %v1082, %v1692
  %v1892 = vadd.f32 %v1085, %v1695
  %v1893 = vadd.f32 %v1090, %v1700
  %v1894 = vadd.f32 %v1093, %v1703
  %v1895 = vadd.f32 %v1098, %v1708
  %v1896 = vadd.f32 %v1101, %v1711
  %v1897 = vadd.f32 %v1106, %v1716
  %v1898 = vadd.f32 %v1109, %v1719
  %v1899 = vadd.f32 %v1114, %v1724
  %v1900 = vadd.f32 %v1117, %v1727
  %v1901 = vadd.f32 %v1122, %v1732
  %v1902 = vadd.f32 %v1125, %v1735
  %v1903 = vadd.f32 %v1130, %v1740
  %v1904 = vadd.f32 %v1133, %v1743
  %v1905 = vadd.f32 %v1138, %v1748
  %v1906 = vadd.f32 %v1141, %v1751
  %v1907 = vadd.f32 %v1146, %v1756
  %v1908 = vadd.f32 %v1149, %v1759
  %v1909 = vadd.f32 %v1154, %v1764
  %v1910 = vadd.f32 %v1157, %v1767
  %v1911 = vadd.f32 %v1162, %v1772
  %v1912 = vadd.f32 %v1165, %v1775
  %v1913 = vadd.f32 %v1170, %v1780
  %v1914 = vadd.f32 %v1173, %v1783
  %v1915 = vadd.f32 %v1178, %v1788
  %v1916 = vadd.f32 %v1181, %v1791
  %v1917 = vadd.f32 %v1186, %v1796
  %v1918 = vadd.f32 %v1189, %v1799
  %v1919 = vadd.f32 %v1194, %v1804
  %v1920 = vadd.f32 %v1197, %v1807
  %v1921 = vadd.f32 %v1202, %v1812
  %v1922 = vadd.f32 %v1205, %v1815
  %v1923 = vadd.f32 %v1210, %v1820
  %v1924 = vadd.f32 %v1213, %v1823
  %v1925 = vadd.f32 %v1218, %v1828
  %v1926 = vadd.f32 %v1221, %v1831
  %v1927 = vadd.f32 %v1226, %v1836
  %v1928 = vadd.f32 %v1229, %v1839
  %v1929 = vadd.f32 %v1234, %v1844
  %v1930 = vld [vmem:[%s0 + $0x12] sm:$0xff]
  %v1931 = vld [vmem:[%s0 + $0x1a] sm:$0xff]
  %v1932 = vld [vmem:[%s0 + $0x22] sm:$0xff]
  %v1933 = vld [vmem:[%s0 + $0x2a] sm:$0xff]
  %v1934 = vld [vmem:[%s0 + $0x32] sm:$0xff]
  %v1935 = vld [vmem:[%s0 + $0x3a] sm:$0xff]
  %v1936 = vld [vmem:[%s0 + $0x42] sm:$0xff]
  %v1937 = vld [vmem:[%s0 + $0x4a] sm:$0xff]
  %v1938 = vld [vmem:[%s0 + $0x52] sm:$0xff]
  %v1939 = vld [vmem:[%s0 + $0x5a] sm:$0xff]
  %v1940 = vld [vmem:[%s0 + $0x62] sm:$0xff]
  %v1941 = vld [vmem:[%s0 + $0x6a] sm:$0xff]
  %v1942 = vld [vmem:[%s0 + $0x72] sm:$0xff]
  %v1943 = vld [vmem:[%s0 + $0x7a] sm:$0xff]
  %v1944 = vld [vmem:[%s0 + $0x82] sm:$0xff]
  %v1945 = vld [vmem:[%s0 + $0x8a] sm:$0xff]
  %v1946 = vld [vmem:[%s0 + $0x92] sm:$0xff]
  %v1947 = vld [vmem:[%s0 + $0x9a] sm:$0xff]
  %v1948 = vld [vmem:[%s0 + $0xa2] sm:$0xff]
  %v1949 = vld [vmem:[%s0 + $0xaa] sm:$0xff]
  %v1950 = vld [vmem:[%s0 + $0xb2] sm:$0xff]
  %v1951 = vld [vmem:[%s0 + $0xba] sm:$0xff]
  %v1952 = vld [vmem:[%s0 + $0xc2] sm:$0xff]
  %v1953 = vld [vmem:[%s0 + $0xca] sm:$0xff]
  %v1954 = vld [vmem:[%s0 + $0xd2] sm:$0xff]
  %v1955 = vld [vmem:[%s0 + $0xda] sm:$0xff]
  %v1956 = vld [vmem:[%s0 + $0xe2] sm:$0xff]
  %v1957 = vld [vmem:[%s0 + $0xea] sm:$0xff]
  %v1958 = vld [vmem:[%s0 + $0xf2] sm:$0xff]
  %v1959 = vld [vmem:[%s0 + $0xfa] sm:$0xff]
  %v1960 = vld [vmem:[%s0 + $0x102] sm:$0xff]
  %v1961 = vld [vmem:[%s0 + $0x10a] sm:$0xff]
  %v1962 = vld [vmem:[%s0 + $0x112] sm:$0xff]
  %v1963 = vld [vmem:[%s0 + $0x11a] sm:$0xff]
  %v1964 = vld [vmem:[%s0 + $0x122] sm:$0xff]
  %v1965 = vld [vmem:[%s0 + $0x12a] sm:$0xff]
  %v1966 = vld [vmem:[%s0 + $0x132] sm:$0xff]
  %v1967 = vld [vmem:[%s0 + $0x13a] sm:$0xff]
  %v1968 = vld [vmem:[%s0 + $0x142] sm:$0xff]
  %v1969 = vld [vmem:[%s0 + $0x14a] sm:$0xff]
  %v1970 = vld [vmem:[%s0 + $0x152] sm:$0xff]
  %v1971 = vld [vmem:[%s0 + $0x15a] sm:$0xff]
  %v1972 = vld [vmem:[%s0 + $0x162] sm:$0xff]
  %v1973 = vld [vmem:[%s0 + $0x16a] sm:$0xff]
  %v1974 = vld [vmem:[%s0 + $0x172] sm:$0xff]
  %v1975 = vld [vmem:[%s0 + $0x17a] sm:$0xff]
  %v1976 = vld [vmem:[%s0 + $0x182] sm:$0xff]
  %v1977 = vld [vmem:[%s0 + $0x18a] sm:$0xff]
  %v1978 = vld [vmem:[%s0 + $0x192] sm:$0xff]
  %v1979 = vld [vmem:[%s0 + $0x19a] sm:$0xff]
  %v1980 = vld [vmem:[%s0 + $0x1a2] sm:$0xff]
  %v1981 = vld [vmem:[%s0 + $0x1aa] sm:$0xff]
  %v1982 = vld [vmem:[%s0 + $0x1b2] sm:$0xff]
  %v1983 = vld [vmem:[%s0 + $0x1ba] sm:$0xff]
  %v1984 = vld [vmem:[%s0 + $0x1c2] sm:$0xff]
  %v1985 = vld [vmem:[%s0 + $0x1ca] sm:$0xff]
  %v1986 = vld [vmem:[%s0 + $0x1d2] sm:$0xff]
  %v1987 = vld [vmem:[%s0 + $0x1da] sm:$0xff]
  %v1988 = vld [vmem:[%s0 + $0x1e2] sm:$0xff]
  %v1989 = vld [vmem:[%s0 + $0x1ea] sm:$0xff]
  %v1990 = vld [vmem:[%s0 + $0x1f2] sm:$0xff]
  %v1991 = vld [vmem:[%s0 + $0x1fa] sm:$0xff]
  %v1992 = vld [vmem:[%s0 + $0x202] sm:$0xff]
  %v1993 = vld [vmem:[%s0 + $0x20a] sm:$0xff]
  %v1994 = vld [vmem:[%s0 + $0x212] sm:$0xff]
  %v1995 = vld [vmem:[%s0 + $0x21a] sm:$0xff]
  %v1996 = vld [vmem:[%s0 + $0x222] sm:$0xff]
  %v1997 = vld [vmem:[%s0 + $0x22a] sm:$0xff]
  %v1998 = vld [vmem:[%s0 + $0x232] sm:$0xff]
  %v1999 = vld [vmem:[%s0 + $0x23a] sm:$0xff]
  %v2000 = vld [vmem:[%s0 + $0x242] sm:$0xff]
  %v2001 = vld [vmem:[%s0 + $0x24a] sm:$0xff]
  %v2002 = vld [vmem:[%s0 + $0x252] sm:$0xff]
  %v2003 = vld [vmem:[%s0 + $0x25a] sm:$0xff]
  %v2004 = vld [vmem:[%s0 + $0x262] sm:$0xff]
  %v2005 = vld [vmem:[%s0 + $0x26a] sm:$0xff]
  %v2006 = vld [vmem:[%s0 + $0x272] sm:$0xff]
  %v2007 = vld [vmem:[%s0 + $0x27a] sm:$0xff]
  %v2008 = vld [vmem:[%s0 + $0x282] sm:$0xff]
  %v2009 = vld [vmem:[%s0 + $0x28a] sm:$0xff]
  %v2010 = vld [vmem:[%s0 + $0x292] sm:$0xff]
  %v2011 = vpack.c.bf16 %v1931, %v1930
  %v2012 = vpack.c.bf16 %v1933, %v1932
  %v2013 = vpack.c.bf16 %v1935, %v1934
  %v2014 = vpack.c.bf16 %v1937, %v1936
  %v2015 = vpack.c.bf16 %v1939, %v1938
  %v2016 = vpack.c.bf16 %v1941, %v1940
  %v2017 = vpack.c.bf16 %v1943, %v1942
  %v2018 = vpack.c.bf16 %v1945, %v1944
  %v2019 = vpack.c.bf16 %v1947, %v1946
  %v2020 = vpack.c.bf16 %v1949, %v1948
  %v2021 = vpack.c.bf16 %v1951, %v1950
  %v2022 = vpack.c.bf16 %v1953, %v1952
  %v2023 = vpack.c.bf16 %v1955, %v1954
  %v2024 = vpack.c.bf16 %v1957, %v1956
  %v2025 = vpack.c.bf16 %v1959, %v1958
  %v2026 = vpack.c.bf16 %v1961, %v1960
  %v2027 = vpack.c.bf16 %v1963, %v1962
  %v2028 = vpack.c.bf16 %v1965, %v1964
  %v2029 = vpack.c.bf16 %v1967, %v1966
  %v2030 = vpack.c.bf16 %v1969, %v1968
  %v2031 = vpack.c.bf16 %v1971, %v1970
  %v2032 = vpack.c.bf16 %v1973, %v1972
  %v2033 = vpack.c.bf16 %v1975, %v1974
  %v2034 = vpack.c.bf16 %v1977, %v1976
  %v2035 = vpack.c.bf16 %v1979, %v1978
  %v2036 = vpack.c.bf16 %v1981, %v1980
  %v2037 = vpack.c.bf16 %v1983, %v1982
  %v2038 = vpack.c.bf16 %v1985, %v1984
  %v2039 = vpack.c.bf16 %v1987, %v1986
  %v2040 = vpack.c.bf16 %v1989, %v1988
  %v2041 = vpack.c.bf16 %v1991, %v1990
  %v2042 = vpack.c.bf16 %v1993, %v1992
  %v2043 = vpack.c.bf16 %v1995, %v1994
  %v2044 = vpack.c.bf16 %v1997, %v1996
  %v2045 = vpack.c.bf16 %v1999, %v1998
  %v2046 = vpack.c.bf16 %v2001, %v2000
  %v2047 = vpack.c.bf16 %v2003, %v2002
  %v2048 = vpack.c.bf16 %v2005, %v2004
  %v2049 = vpack.c.bf16 %v2007, %v2006
  %v2050 = vpack.c.bf16 %v2009, %v2008
  %v2051 = vpack.c.bf16 %v2010, %v2010
  %s2052 = scalar_lea.vmem %s1, 6
  %v2053 = vld [vmem:[%s2052] sm:$0x3]
  %v2055 = vsel %vm262, %v2011, 0
  %v2058 = vsel %vm262, %v2012, 0
  %v2061 = vsel %vm262, %v2013, 0
  %v2064 = vsel %vm262, %v2014, 0
  %v2067 = vsel %vm262, %v2015, 0
  %v2070 = vsel %vm262, %v2016, 0
  %v2073 = vsel %vm262, %v2017, 0
  %v2076 = vsel %vm262, %v2018, 0
  %v2079 = vsel %vm262, %v2019, 0
  %v2082 = vsel %vm262, %v2020, 0
  %v2085 = vsel %vm262, %v2021, 0
  %v2088 = vsel %vm262, %v2022, 0
  %v2091 = vsel %vm262, %v2023, 0
  %v2094 = vsel %vm262, %v2024, 0
  %v2097 = vsel %vm262, %v2025, 0
  %v2100 = vsel %vm262, %v2026, 0
  %v2103 = vsel %vm262, %v2027, 0
  %v2106 = vsel %vm262, %v2028, 0
  %v2109 = vsel %vm262, %v2029, 0
  %v2112 = vsel %vm262, %v2030, 0
  %v2115 = vsel %vm262, %v2031, 0
  %v2118 = vsel %vm262, %v2032, 0
  %v2121 = vsel %vm262, %v2033, 0
  %v2124 = vsel %vm262, %v2034, 0
  %v2127 = vsel %vm262, %v2035, 0
  %v2130 = vsel %vm262, %v2036, 0
  %v2133 = vsel %vm262, %v2037, 0
  %v2136 = vsel %vm262, %v2038, 0
  %v2139 = vsel %vm262, %v2039, 0
  %v2142 = vsel %vm262, %v2040, 0
  %v2145 = vsel %vm262, %v2041, 0
  %v2148 = vsel %vm262, %v2042, 0
  %v2151 = vsel %vm262, %v2043, 0
  %v2154 = vsel %vm262, %v2044, 0
  %v2157 = vsel %vm262, %v2045, 0
  %v2160 = vsel %vm262, %v2046, 0
  %v2163 = vsel %vm262, %v2047, 0
  %v2166 = vsel %vm262, %v2048, 0
  %v2169 = vsel %vm262, %v2049, 0
  %v2172 = vsel %vm262, %v2050, 0
  %v2175 = vsel %vm262, %v2051, 0
  %v2178 = vand.u32 %v2053, %v389
  %2180 = vmatprep.subr.bf16.mxu0 0
  %2181 = vmatpush1.bf16.msra.mxu0 0
  %2182 = vmatprep.subr.bf16.mxu0 0
  %2183 = vmatpush1.bf16.msra.mxu0 0
  %2184 = vmatprep.subr.bf16.mxu0 0
  %2185 = vmatpush1.bf16.msra.mxu0 0
  %2186 = vmatprep.subr.bf16.mxu0 0
  %2187 = vmatpush1.bf16.msra.mxu0 0
  %2188 = vmatprep.subr.bf16.mxu0 0
  %2189 = vmatpush1.bf16.msra.mxu0 0
  %2190 = vmatprep.subr.bf16.mxu0 0
  %2191 = vmatpush1.bf16.msra.mxu0 0
  %2192 = vmatprep.subr.bf16.mxu0 0
  %2193 = vmatpush1.bf16.msra.mxu0 0
  %2194 = vmatprep.subr.bf16.mxu0 0
  %2195 = vmatpush1.bf16.msra.mxu0 %v2178
  %2196 = vmatprep.subr.bf16.mxu0 0
  %2197 = vmatpush2.bf16.msra.mxu0 0
  %2198 = vmatprep.subr.bf16.mxu0 0
  %2199 = vmatpush2.bf16.msra.mxu0 0
  %2200 = vmatprep.subr.bf16.mxu0 0
  %2201 = vmatpush2.bf16.msra.mxu0 0
  %2202 = vmatprep.subr.bf16.mxu0 0
  %2203 = vmatpush2.bf16.msra.mxu0 0
  %2204 = vmatprep.subr.bf16.mxu0 0
  %2205 = vmatpush2.bf16.msra.mxu0 0
  %2206 = vmatprep.subr.bf16.mxu0 0
  %2207 = vmatpush2.bf16.msra.mxu0 0
  %2208 = vmatprep.subr.bf16.mxu0 0
  %2209 = vmatpush2.bf16.msra.mxu0 0
  %2210 = vmatprep.subr.bf16.mxu0 0
  %2211 = vmatpush2.bf16.msra.mxu0 0
  %2212 = vmatprep.mubr.bf16.mxu0 0
  %2213 = vmatmul.mubr.bf16.gmra.mxu0 %v2055
  %v2214 = vpop.f32.mrf.mxu0
  %v2215 = vadd.f32 0.0, %v2214
  %v2216 = vpop.f32.mrf.mxu0
  %v2217 = vpop.f32.mrf.mxu0
  %v2218 = vadd.f32 0.0, %v2217
  %v2219 = vpop.f32.mrf.mxu0
  %2220 = vmatprep.mubr.bf16.mxu0 0
  %2221 = vmatmul.mubr.bf16.gmra.mxu0 %v2058
  %v2222 = vpop.f32.mrf.mxu0
  %v2223 = vadd.f32 0.0, %v2222
  %v2224 = vpop.f32.mrf.mxu0
  %v2225 = vpop.f32.mrf.mxu0
  %v2226 = vadd.f32 0.0, %v2225
  %v2227 = vpop.f32.mrf.mxu0
  %2228 = vmatprep.mubr.bf16.mxu0 0
  %2229 = vmatmul.mubr.bf16.gmra.mxu0 %v2061
  %v2230 = vpop.f32.mrf.mxu0
  %v2231 = vadd.f32 0.0, %v2230
  %v2232 = vpop.f32.mrf.mxu0
  %v2233 = vpop.f32.mrf.mxu0
  %v2234 = vadd.f32 0.0, %v2233
  %v2235 = vpop.f32.mrf.mxu0
  %2236 = vmatprep.mubr.bf16.mxu0 0
  %2237 = vmatmul.mubr.bf16.gmra.mxu0 %v2064
  %v2238 = vpop.f32.mrf.mxu0
  %v2239 = vadd.f32 0.0, %v2238
  %v2240 = vpop.f32.mrf.mxu0
  %v2241 = vpop.f32.mrf.mxu0
  %v2242 = vadd.f32 0.0, %v2241
  %v2243 = vpop.f32.mrf.mxu0
  %2244 = vmatprep.mubr.bf16.mxu0 0
  %2245 = vmatmul.mubr.bf16.gmra.mxu0 %v2067
  %v2246 = vpop.f32.mrf.mxu0
  %v2247 = vadd.f32 0.0, %v2246
  %v2248 = vpop.f32.mrf.mxu0
  %v2249 = vpop.f32.mrf.mxu0
  %v2250 = vadd.f32 0.0, %v2249
  %v2251 = vpop.f32.mrf.mxu0
  %2252 = vmatprep.mubr.bf16.mxu0 0
  %2253 = vmatmul.mubr.bf16.gmra.mxu0 %v2070
  %v2254 = vpop.f32.mrf.mxu0
  %v2255 = vadd.f32 0.0, %v2254
  %v2256 = vpop.f32.mrf.mxu0
  %v2257 = vpop.f32.mrf.mxu0
  %v2258 = vadd.f32 0.0, %v2257
  %v2259 = vpop.f32.mrf.mxu0
  %2260 = vmatprep.mubr.bf16.mxu0 0
  %2261 = vmatmul.mubr.bf16.gmra.mxu0 %v2073
  %v2262 = vpop.f32.mrf.mxu0
  %v2263 = vadd.f32 0.0, %v2262
  %v2264 = vpop.f32.mrf.mxu0
  %v2265 = vpop.f32.mrf.mxu0
  %v2266 = vadd.f32 0.0, %v2265
  %v2267 = vpop.f32.mrf.mxu0
  %2268 = vmatprep.mubr.bf16.mxu0 0
  %2269 = vmatmul.mubr.bf16.gmra.mxu0 %v2076
  %v2270 = vpop.f32.mrf.mxu0
  %v2271 = vadd.f32 0.0, %v2270
  %v2272 = vpop.f32.mrf.mxu0
  %v2273 = vpop.f32.mrf.mxu0
  %v2274 = vadd.f32 0.0, %v2273
  %v2275 = vpop.f32.mrf.mxu0
  %2276 = vmatprep.mubr.bf16.mxu0 0
  %2277 = vmatmul.mubr.bf16.gmra.mxu0 %v2079
  %v2278 = vpop.f32.mrf.mxu0
  %v2279 = vadd.f32 0.0, %v2278
  %v2280 = vpop.f32.mrf.mxu0
  %v2281 = vpop.f32.mrf.mxu0
  %v2282 = vadd.f32 0.0, %v2281
  %v2283 = vpop.f32.mrf.mxu0
  %2284 = vmatprep.mubr.bf16.mxu0 0
  %2285 = vmatmul.mubr.bf16.gmra.mxu0 %v2082
  %v2286 = vpop.f32.mrf.mxu0
  %v2287 = vadd.f32 0.0, %v2286
  %v2288 = vpop.f32.mrf.mxu0
  %v2289 = vpop.f32.mrf.mxu0
  %v2290 = vadd.f32 0.0, %v2289
  %v2291 = vpop.f32.mrf.mxu0
  %2292 = vmatprep.mubr.bf16.mxu0 0
  %2293 = vmatmul.mubr.bf16.gmra.mxu0 %v2085
  %v2294 = vpop.f32.mrf.mxu0
  %v2295 = vadd.f32 0.0, %v2294
  %v2296 = vpop.f32.mrf.mxu0
  %v2297 = vpop.f32.mrf.mxu0
  %v2298 = vadd.f32 0.0, %v2297
  %v2299 = vpop.f32.mrf.mxu0
  %2300 = vmatprep.mubr.bf16.mxu0 0
  %2301 = vmatmul.mubr.bf16.gmra.mxu0 %v2088
  %v2302 = vpop.f32.mrf.mxu0
  %v2303 = vadd.f32 0.0, %v2302
  %v2304 = vpop.f32.mrf.mxu0
  %v2305 = vpop.f32.mrf.mxu0
  %v2306 = vadd.f32 0.0, %v2305
  %v2307 = vpop.f32.mrf.mxu0
  %2308 = vmatprep.mubr.bf16.mxu0 0
  %2309 = vmatmul.mubr.bf16.gmra.mxu0 %v2091
  %v2310 = vpop.f32.mrf.mxu0
  %v2311 = vadd.f32 0.0, %v2310
  %v2312 = vpop.f32.mrf.mxu0
  %v2313 = vpop.f32.mrf.mxu0
  %v2314 = vadd.f32 0.0, %v2313
  %v2315 = vpop.f32.mrf.mxu0
  %2316 = vmatprep.mubr.bf16.mxu0 0
  %2317 = vmatmul.mubr.bf16.gmra.mxu0 %v2094
  %v2318 = vpop.f32.mrf.mxu0
  %v2319 = vadd.f32 0.0, %v2318
  %v2320 = vpop.f32.mrf.mxu0
  %v2321 = vpop.f32.mrf.mxu0
  %v2322 = vadd.f32 0.0, %v2321
  %v2323 = vpop.f32.mrf.mxu0
  %2324 = vmatprep.mubr.bf16.mxu0 0
  %2325 = vmatmul.mubr.bf16.gmra.mxu0 %v2097
  %v2326 = vpop.f32.mrf.mxu0
  %v2327 = vadd.f32 0.0, %v2326
  %v2328 = vpop.f32.mrf.mxu0
  %v2329 = vpop.f32.mrf.mxu0
  %v2330 = vadd.f32 0.0, %v2329
  %v2331 = vpop.f32.mrf.mxu0
  %2332 = vmatprep.mubr.bf16.mxu0 0
  %2333 = vmatmul.mubr.bf16.gmra.mxu0 %v2100
  %v2334 = vpop.f32.mrf.mxu0
  %v2335 = vadd.f32 0.0, %v2334
  %v2336 = vpop.f32.mrf.mxu0
  %v2337 = vpop.f32.mrf.mxu0
  %v2338 = vadd.f32 0.0, %v2337
  %v2339 = vpop.f32.mrf.mxu0
  %2340 = vmatprep.mubr.bf16.mxu0 0
  %2341 = vmatmul.mubr.bf16.gmra.mxu0 %v2103
  %v2342 = vpop.f32.mrf.mxu0
  %v2343 = vadd.f32 0.0, %v2342
  %v2344 = vpop.f32.mrf.mxu0
  %v2345 = vpop.f32.mrf.mxu0
  %v2346 = vadd.f32 0.0, %v2345
  %v2347 = vpop.f32.mrf.mxu0
  %2348 = vmatprep.mubr.bf16.mxu0 0
  %2349 = vmatmul.mubr.bf16.gmra.mxu0 %v2106
  %v2350 = vpop.f32.mrf.mxu0
  %v2351 = vadd.f32 0.0, %v2350
  %v2352 = vpop.f32.mrf.mxu0
  %v2353 = vpop.f32.mrf.mxu0
  %v2354 = vadd.f32 0.0, %v2353
  %v2355 = vpop.f32.mrf.mxu0
  %2356 = vmatprep.mubr.bf16.mxu0 0
  %2357 = vmatmul.mubr.bf16.gmra.mxu0 %v2109
  %v2358 = vpop.f32.mrf.mxu0
  %v2359 = vadd.f32 0.0, %v2358
  %v2360 = vpop.f32.mrf.mxu0
  %v2361 = vpop.f32.mrf.mxu0
  %v2362 = vadd.f32 0.0, %v2361
  %v2363 = vpop.f32.mrf.mxu0
  %2364 = vmatprep.mubr.bf16.mxu0 0
  %2365 = vmatmul.mubr.bf16.gmra.mxu0 %v2112
  %v2366 = vpop.f32.mrf.mxu0
  %v2367 = vadd.f32 0.0, %v2366
  %v2368 = vpop.f32.mrf.mxu0
  %v2369 = vpop.f32.mrf.mxu0
  %v2370 = vadd.f32 0.0, %v2369
  %v2371 = vpop.f32.mrf.mxu0
  %2372 = vmatprep.mubr.bf16.mxu0 0
  %2373 = vmatmul.mubr.bf16.gmra.mxu0 %v2115
  %v2374 = vpop.f32.mrf.mxu0
  %v2375 = vadd.f32 0.0, %v2374
  %v2376 = vpop.f32.mrf.mxu0
  %v2377 = vpop.f32.mrf.mxu0
  %v2378 = vadd.f32 0.0, %v2377
  %v2379 = vpop.f32.mrf.mxu0
  %2380 = vmatprep.mubr.bf16.mxu0 0
  %2381 = vmatmul.mubr.bf16.gmra.mxu0 %v2118
  %v2382 = vpop.f32.mrf.mxu0
  %v2383 = vadd.f32 0.0, %v2382
  %v2384 = vpop.f32.mrf.mxu0
  %v2385 = vpop.f32.mrf.mxu0
  %v2386 = vadd.f32 0.0, %v2385
  %v2387 = vpop.f32.mrf.mxu0
  %2388 = vmatprep.mubr.bf16.mxu0 0
  %2389 = vmatmul.mubr.bf16.gmra.mxu0 %v2121
  %v2390 = vpop.f32.mrf.mxu0
  %v2391 = vadd.f32 0.0, %v2390
  %v2392 = vpop.f32.mrf.mxu0
  %v2393 = vpop.f32.mrf.mxu0
  %v2394 = vadd.f32 0.0, %v2393
  %v2395 = vpop.f32.mrf.mxu0
  %2396 = vmatprep.mubr.bf16.mxu0 0
  %2397 = vmatmul.mubr.bf16.gmra.mxu0 %v2124
  %v2398 = vpop.f32.mrf.mxu0
  %v2399 = vadd.f32 0.0, %v2398
  %v2400 = vpop.f32.mrf.mxu0
  %v2401 = vpop.f32.mrf.mxu0
  %v2402 = vadd.f32 0.0, %v2401
  %v2403 = vpop.f32.mrf.mxu0
  %2404 = vmatprep.mubr.bf16.mxu0 0
  %2405 = vmatmul.mubr.bf16.gmra.mxu0 %v2127
  %v2406 = vpop.f32.mrf.mxu0
  %v2407 = vadd.f32 0.0, %v2406
  %v2408 = vpop.f32.mrf.mxu0
  %v2409 = vpop.f32.mrf.mxu0
  %v2410 = vadd.f32 0.0, %v2409
  %v2411 = vpop.f32.mrf.mxu0
  %2412 = vmatprep.mubr.bf16.mxu0 0
  %2413 = vmatmul.mubr.bf16.gmra.mxu0 %v2130
  %v2414 = vpop.f32.mrf.mxu0
  %v2415 = vadd.f32 0.0, %v2414
  %v2416 = vpop.f32.mrf.mxu0
  %v2417 = vpop.f32.mrf.mxu0
  %v2418 = vadd.f32 0.0, %v2417
  %v2419 = vpop.f32.mrf.mxu0
  %2420 = vmatprep.mubr.bf16.mxu0 0
  %2421 = vmatmul.mubr.bf16.gmra.mxu0 %v2133
  %v2422 = vpop.f32.mrf.mxu0
  %v2423 = vadd.f32 0.0, %v2422
  %v2424 = vpop.f32.mrf.mxu0
  %v2425 = vpop.f32.mrf.mxu0
  %v2426 = vadd.f32 0.0, %v2425
  %v2427 = vpop.f32.mrf.mxu0
  %2428 = vmatprep.mubr.bf16.mxu0 0
  %2429 = vmatmul.mubr.bf16.gmra.mxu0 %v2136
  %v2430 = vpop.f32.mrf.mxu0
  %v2431 = vadd.f32 0.0, %v2430
  %v2432 = vpop.f32.mrf.mxu0
  %v2433 = vpop.f32.mrf.mxu0
  %v2434 = vadd.f32 0.0, %v2433
  %v2435 = vpop.f32.mrf.mxu0
  %2436 = vmatprep.mubr.bf16.mxu0 0
  %2437 = vmatmul.mubr.bf16.gmra.mxu0 %v2139
  %v2438 = vpop.f32.mrf.mxu0
  %v2439 = vadd.f32 0.0, %v2438
  %v2440 = vpop.f32.mrf.mxu0
  %v2441 = vpop.f32.mrf.mxu0
  %v2442 = vadd.f32 0.0, %v2441
  %v2443 = vpop.f32.mrf.mxu0
  %2444 = vmatprep.mubr.bf16.mxu0 0
  %2445 = vmatmul.mubr.bf16.gmra.mxu0 %v2142
  %v2446 = vpop.f32.mrf.mxu0
  %v2447 = vadd.f32 0.0, %v2446
  %v2448 = vpop.f32.mrf.mxu0
  %v2449 = vpop.f32.mrf.mxu0
  %v2450 = vadd.f32 0.0, %v2449
  %v2451 = vpop.f32.mrf.mxu0
  %2452 = vmatprep.mubr.bf16.mxu0 0
  %2453 = vmatmul.mubr.bf16.gmra.mxu0 %v2145
  %v2454 = vpop.f32.mrf.mxu0
  %v2455 = vadd.f32 0.0, %v2454
  %v2456 = vpop.f32.mrf.mxu0
  %v2457 = vpop.f32.mrf.mxu0
  %v2458 = vadd.f32 0.0, %v2457
  %v2459 = vpop.f32.mrf.mxu0
  %2460 = vmatprep.mubr.bf16.mxu0 0
  %2461 = vmatmul.mubr.bf16.gmra.mxu0 %v2148
  %v2462 = vpop.f32.mrf.mxu0
  %v2463 = vadd.f32 0.0, %v2462
  %v2464 = vpop.f32.mrf.mxu0
  %v2465 = vpop.f32.mrf.mxu0
  %v2466 = vadd.f32 0.0, %v2465
  %v2467 = vpop.f32.mrf.mxu0
  %2468 = vmatprep.mubr.bf16.mxu0 0
  %2469 = vmatmul.mubr.bf16.gmra.mxu0 %v2151
  %v2470 = vpop.f32.mrf.mxu0
  %v2471 = vadd.f32 0.0, %v2470
  %v2472 = vpop.f32.mrf.mxu0
  %v2473 = vpop.f32.mrf.mxu0
  %v2474 = vadd.f32 0.0, %v2473
  %v2475 = vpop.f32.mrf.mxu0
  %2476 = vmatprep.mubr.bf16.mxu0 0
  %2477 = vmatmul.mubr.bf16.gmra.mxu0 %v2154
  %v2478 = vpop.f32.mrf.mxu0
  %v2479 = vadd.f32 0.0, %v2478
  %v2480 = vpop.f32.mrf.mxu0
  %v2481 = vpop.f32.mrf.mxu0
  %v2482 = vadd.f32 0.0, %v2481
  %v2483 = vpop.f32.mrf.mxu0
  %2484 = vmatprep.mubr.bf16.mxu0 0
  %2485 = vmatmul.mubr.bf16.gmra.mxu0 %v2157
  %v2486 = vpop.f32.mrf.mxu0
  %v2487 = vadd.f32 0.0, %v2486
  %v2488 = vpop.f32.mrf.mxu0
  %v2489 = vpop.f32.mrf.mxu0
  %v2490 = vadd.f32 0.0, %v2489
  %v2491 = vpop.f32.mrf.mxu0
  %2492 = vmatprep.mubr.bf16.mxu0 0
  %2493 = vmatmul.mubr.bf16.gmra.mxu0 %v2160
  %v2494 = vpop.f32.mrf.mxu0
  %v2495 = vadd.f32 0.0, %v2494
  %v2496 = vpop.f32.mrf.mxu0
  %v2497 = vpop.f32.mrf.mxu0
  %v2498 = vadd.f32 0.0, %v2497
  %v2499 = vpop.f32.mrf.mxu0
  %2500 = vmatprep.mubr.bf16.mxu0 0
  %2501 = vmatmul.mubr.bf16.gmra.mxu0 %v2163
  %v2502 = vpop.f32.mrf.mxu0
  %v2503 = vadd.f32 0.0, %v2502
  %v2504 = vpop.f32.mrf.mxu0
  %v2505 = vpop.f32.mrf.mxu0
  %v2506 = vadd.f32 0.0, %v2505
  %v2507 = vpop.f32.mrf.mxu0
  %2508 = vmatprep.mubr.bf16.mxu0 0
  %2509 = vmatmul.mubr.bf16.gmra.mxu0 %v2166
  %v2510 = vpop.f32.mrf.mxu0
  %v2511 = vadd.f32 0.0, %v2510
  %v2512 = vpop.f32.mrf.mxu0
  %v2513 = vpop.f32.mrf.mxu0
  %v2514 = vadd.f32 0.0, %v2513
  %v2515 = vpop.f32.mrf.mxu0
  %2516 = vmatprep.mubr.bf16.mxu0 0
  %2517 = vmatmul.mubr.bf16.gmra.mxu0 %v2169
  %v2518 = vpop.f32.mrf.mxu0
  %v2519 = vadd.f32 0.0, %v2518
  %v2520 = vpop.f32.mrf.mxu0
  %v2521 = vpop.f32.mrf.mxu0
  %v2522 = vadd.f32 0.0, %v2521
  %v2523 = vpop.f32.mrf.mxu0
  %2524 = vmatprep.mubr.bf16.mxu0 0
  %2525 = vmatmul.mubr.bf16.gmra.mxu0 %v2172
  %v2526 = vpop.f32.mrf.mxu0
  %v2527 = vadd.f32 0.0, %v2526
  %v2528 = vpop.f32.mrf.mxu0
  %v2529 = vpop.f32.mrf.mxu0
  %v2530 = vadd.f32 0.0, %v2529
  %v2531 = vpop.f32.mrf.mxu0
  %2532 = vmatprep.mubr.bf16.mxu0 0
  %2533 = vmatmul.mubr.bf16.gmra.mxu0 %v2175
  %v2534 = vpop.f32.mrf.mxu0
  %v2535 = vadd.f32 0.0, %v2534
  %v2536 = vpop.f32.mrf.mxu0
  %v2537 = vpop.f32.mrf.mxu0
  %v2538 = vpop.f32.mrf.mxu0
  %2539 = vdwg.mxu0
  %v2540 = vadd.f32 %v1849, %v2215
  %v2541 = vadd.f32 %v1850, %v2218
  %v2542 = vadd.f32 %v1851, %v2223
  %v2543 = vadd.f32 %v1852, %v2226
  %v2544 = vadd.f32 %v1853, %v2231
  %v2545 = vadd.f32 %v1854, %v2234
  %v2546 = vadd.f32 %v1855, %v2239
  %v2547 = vadd.f32 %v1856, %v2242
  %v2548 = vadd.f32 %v1857, %v2247
  %v2549 = vadd.f32 %v1858, %v2250
  %v2550 = vadd.f32 %v1859, %v2255
  %v2551 = vadd.f32 %v1860, %v2258
  %v2552 = vadd.f32 %v1861, %v2263
  %v2553 = vadd.f32 %v1862, %v2266
  %v2554 = vadd.f32 %v1863, %v2271
  %v2555 = vadd.f32 %v1864, %v2274
  %v2556 = vadd.f32 %v1865, %v2279
  %v2557 = vadd.f32 %v1866, %v2282
  %v2558 = vadd.f32 %v1867, %v2287
  %v2559 = vadd.f32 %v1868, %v2290
  %v2560 = vadd.f32 %v1869, %v2295
  %v2561 = vadd.f32 %v1870, %v2298
  %v2562 = vadd.f32 %v1871, %v2303
  %v2563 = vadd.f32 %v1872, %v2306
  %v2564 = vadd.f32 %v1873, %v2311
  %v2565 = vadd.f32 %v1874, %v2314
  %v2566 = vadd.f32 %v1875, %v2319
  %v2567 = vadd.f32 %v1876, %v2322
  %v2568 = vadd.f32 %v1877, %v2327
  %v2569 = vadd.f32 %v1878, %v2330
  %v2570 = vadd.f32 %v1879, %v2335
  %v2571 = vadd.f32 %v1880, %v2338
  %v2572 = vadd.f32 %v1881, %v2343
  %v2573 = vadd.f32 %v1882, %v2346
  %v2574 = vadd.f32 %v1883, %v2351
  %v2575 = vadd.f32 %v1884, %v2354
  %v2576 = vadd.f32 %v1885, %v2359
  %v2577 = vadd.f32 %v1886, %v2362
  %v2578 = vadd.f32 %v1887, %v2367
  %v2579 = vadd.f32 %v1888, %v2370
  %v2580 = vadd.f32 %v1889, %v2375
  %v2581 = vadd.f32 %v1890, %v2378
  %v2582 = vadd.f32 %v1891, %v2383
  %v2583 = vadd.f32 %v1892, %v2386
  %v2584 = vadd.f32 %v1893, %v2391
  %v2585 = vadd.f32 %v1894, %v2394
  %v2586 = vadd.f32 %v1895, %v2399
  %v2587 = vadd.f32 %v1896, %v2402
  %v2588 = vadd.f32 %v1897, %v2407
  %v2589 = vadd.f32 %v1898, %v2410
  %v2590 = vadd.f32 %v1899, %v2415
  %v2591 = vadd.f32 %v1900, %v2418
  %v2592 = vadd.f32 %v1901, %v2423
  %v2593 = vadd.f32 %v1902, %v2426
  %v2594 = vadd.f32 %v1903, %v2431
  %v2595 = vadd.f32 %v1904, %v2434
  %v2596 = vadd.f32 %v1905, %v2439
  %v2597 = vadd.f32 %v1906, %v2442
  %v2598 = vadd.f32 %v1907, %v2447
  %v2599 = vadd.f32 %v1908, %v2450
  %v2600 = vadd.f32 %v1909, %v2455
  %v2601 = vadd.f32 %v1910, %v2458
  %v2602 = vadd.f32 %v1911, %v2463
  %v2603 = vadd.f32 %v1912, %v2466
  %v2604 = vadd.f32 %v1913, %v2471
  %v2605 = vadd.f32 %v1914, %v2474
  %v2606 = vadd.f32 %v1915, %v2479
  %v2607 = vadd.f32 %v1916, %v2482
  %v2608 = vadd.f32 %v1917, %v2487
  %v2609 = vadd.f32 %v1918, %v2490
  %v2610 = vadd.f32 %v1919, %v2495
  %v2611 = vadd.f32 %v1920, %v2498
  %v2612 = vadd.f32 %v1921, %v2503
  %v2613 = vadd.f32 %v1922, %v2506
  %v2614 = vadd.f32 %v1923, %v2511
  %v2615 = vadd.f32 %v1924, %v2514
  %v2616 = vadd.f32 %v1925, %v2519
  %v2617 = vadd.f32 %v1926, %v2522
  %v2618 = vadd.f32 %v1927, %v2527
  %v2619 = vadd.f32 %v1928, %v2530
  %v2620 = vadd.f32 %v1929, %v2535
  %v2621 = vld [vmem:[%s0 + $0x13] sm:$0xff]
  %v2622 = vld [vmem:[%s0 + $0x1b] sm:$0xff]
  %v2623 = vld [vmem:[%s0 + $0x23] sm:$0xff]
  %v2624 = vld [vmem:[%s0 + $0x2b] sm:$0xff]
  %v2625 = vld [vmem:[%s0 + $0x33] sm:$0xff]
  %v2626 = vld [vmem:[%s0 + $0x3b] sm:$0xff]
  %v2627 = vld [vmem:[%s0 + $0x43] sm:$0xff]
  %v2628 = vld [vmem:[%s0 + $0x4b] sm:$0xff]
  %v2629 = vld [vmem:[%s0 + $0x53] sm:$0xff]
  %v2630 = vld [vmem:[%s0 + $0x5b] sm:$0xff]
  %v2631 = vld [vmem:[%s0 + $0x63] sm:$0xff]
  %v2632 = vld [vmem:[%s0 + $0x6b] sm:$0xff]
  %v2633 = vld [vmem:[%s0 + $0x73] sm:$0xff]
  %v2634 = vld [vmem:[%s0 + $0x7b] sm:$0xff]
  %v2635 = vld [vmem:[%s0 + $0x83] sm:$0xff]
  %v2636 = vld [vmem:[%s0 + $0x8b] sm:$0xff]
  %v2637 = vld [vmem:[%s0 + $0x93] sm:$0xff]
  %v2638 = vld [vmem:[%s0 + $0x9b] sm:$0xff]
  %v2639 = vld [vmem:[%s0 + $0xa3] sm:$0xff]
  %v2640 = vld [vmem:[%s0 + $0xab] sm:$0xff]
  %v2641 = vld [vmem:[%s0 + $0xb3] sm:$0xff]
  %v2642 = vld [vmem:[%s0 + $0xbb] sm:$0xff]
  %v2643 = vld [vmem:[%s0 + $0xc3] sm:$0xff]
  %v2644 = vld [vmem:[%s0 + $0xcb] sm:$0xff]
  %v2645 = vld [vmem:[%s0 + $0xd3] sm:$0xff]
  %v2646 = vld [vmem:[%s0 + $0xdb] sm:$0xff]
  %v2647 = vld [vmem:[%s0 + $0xe3] sm:$0xff]
  %v2648 = vld [vmem:[%s0 + $0xeb] sm:$0xff]
  %v2649 = vld [vmem:[%s0 + $0xf3] sm:$0xff]
  %v2650 = vld [vmem:[%s0 + $0xfb] sm:$0xff]
  %v2651 = vld [vmem:[%s0 + $0x103] sm:$0xff]
  %v2652 = vld [vmem:[%s0 + $0x10b] sm:$0xff]
  %v2653 = vld [vmem:[%s0 + $0x113] sm:$0xff]
  %v2654 = vld [vmem:[%s0 + $0x11b] sm:$0xff]
  %v2655 = vld [vmem:[%s0 + $0x123] sm:$0xff]
  %v2656 = vld [vmem:[%s0 + $0x12b] sm:$0xff]
  %v2657 = vld [vmem:[%s0 + $0x133] sm:$0xff]
  %v2658 = vld [vmem:[%s0 + $0x13b] sm:$0xff]
  %v2659 = vld [vmem:[%s0 + $0x143] sm:$0xff]
  %v2660 = vld [vmem:[%s0 + $0x14b] sm:$0xff]
  %v2661 = vld [vmem:[%s0 + $0x153] sm:$0xff]
  %v2662 = vld [vmem:[%s0 + $0x15b] sm:$0xff]
  %v2663 = vld [vmem:[%s0 + $0x163] sm:$0xff]
  %v2664 = vld [vmem:[%s0 + $0x16b] sm:$0xff]
  %v2665 = vld [vmem:[%s0 + $0x173] sm:$0xff]
  %v2666 = vld [vmem:[%s0 + $0x17b] sm:$0xff]
  %v2667 = vld [vmem:[%s0 + $0x183] sm:$0xff]
  %v2668 = vld [vmem:[%s0 + $0x18b] sm:$0xff]
  %v2669 = vld [vmem:[%s0 + $0x193] sm:$0xff]
  %v2670 = vld [vmem:[%s0 + $0x19b] sm:$0xff]
  %v2671 = vld [vmem:[%s0 + $0x1a3] sm:$0xff]
  %v2672 = vld [vmem:[%s0 + $0x1ab] sm:$0xff]
  %v2673 = vld [vmem:[%s0 + $0x1b3] sm:$0xff]
  %v2674 = vld [vmem:[%s0 + $0x1bb] sm:$0xff]
  %v2675 = vld [vmem:[%s0 + $0x1c3] sm:$0xff]
  %v2676 = vld [vmem:[%s0 + $0x1cb] sm:$0xff]
  %v2677 = vld [vmem:[%s0 + $0x1d3] sm:$0xff]
  %v2678 = vld [vmem:[%s0 + $0x1db] sm:$0xff]
  %v2679 = vld [vmem:[%s0 + $0x1e3] sm:$0xff]
  %v2680 = vld [vmem:[%s0 + $0x1eb] sm:$0xff]
  %v2681 = vld [vmem:[%s0 + $0x1f3] sm:$0xff]
  %v2682 = vld [vmem:[%s0 + $0x1fb] sm:$0xff]
  %v2683 = vld [vmem:[%s0 + $0x203] sm:$0xff]
  %v2684 = vld [vmem:[%s0 + $0x20b] sm:$0xff]
  %v2685 = vld [vmem:[%s0 + $0x213] sm:$0xff]
  %v2686 = vld [vmem:[%s0 + $0x21b] sm:$0xff]
  %v2687 = vld [vmem:[%s0 + $0x223] sm:$0xff]
  %v2688 = vld [vmem:[%s0 + $0x22b] sm:$0xff]
  %v2689 = vld [vmem:[%s0 + $0x233] sm:$0xff]
  %v2690 = vld [vmem:[%s0 + $0x23b] sm:$0xff]
  %v2691 = vld [vmem:[%s0 + $0x243] sm:$0xff]
  %v2692 = vld [vmem:[%s0 + $0x24b] sm:$0xff]
  %v2693 = vld [vmem:[%s0 + $0x253] sm:$0xff]
  %v2694 = vld [vmem:[%s0 + $0x25b] sm:$0xff]
  %v2695 = vld [vmem:[%s0 + $0x263] sm:$0xff]
  %v2696 = vld [vmem:[%s0 + $0x26b] sm:$0xff]
  %v2697 = vld [vmem:[%s0 + $0x273] sm:$0xff]
  %v2698 = vld [vmem:[%s0 + $0x27b] sm:$0xff]
  %v2699 = vld [vmem:[%s0 + $0x283] sm:$0xff]
  %v2700 = vld [vmem:[%s0 + $0x28b] sm:$0xff]
  %v2701 = vld [vmem:[%s0 + $0x293] sm:$0xff]
  %v2702 = vpack.c.bf16 %v2622, %v2621
  %v2703 = vpack.c.bf16 %v2624, %v2623
  %v2704 = vpack.c.bf16 %v2626, %v2625
  %v2705 = vpack.c.bf16 %v2628, %v2627
  %v2706 = vpack.c.bf16 %v2630, %v2629
  %v2707 = vpack.c.bf16 %v2632, %v2631
  %v2708 = vpack.c.bf16 %v2634, %v2633
  %v2709 = vpack.c.bf16 %v2636, %v2635
  %v2710 = vpack.c.bf16 %v2638, %v2637
  %v2711 = vpack.c.bf16 %v2640, %v2639
  %v2712 = vpack.c.bf16 %v2642, %v2641
  %v2713 = vpack.c.bf16 %v2644, %v2643
  %v2714 = vpack.c.bf16 %v2646, %v2645
  %v2715 = vpack.c.bf16 %v2648, %v2647
  %v2716 = vpack.c.bf16 %v2650, %v2649
  %v2717 = vpack.c.bf16 %v2652, %v2651
  %v2718 = vpack.c.bf16 %v2654, %v2653
  %v2719 = vpack.c.bf16 %v2656, %v2655
  %v2720 = vpack.c.bf16 %v2658, %v2657
  %v2721 = vpack.c.bf16 %v2660, %v2659
  %v2722 = vpack.c.bf16 %v2662, %v2661
  %v2723 = vpack.c.bf16 %v2664, %v2663
  %v2724 = vpack.c.bf16 %v2666, %v2665
  %v2725 = vpack.c.bf16 %v2668, %v2667
  %v2726 = vpack.c.bf16 %v2670, %v2669
  %v2727 = vpack.c.bf16 %v2672, %v2671
  %v2728 = vpack.c.bf16 %v2674, %v2673
  %v2729 = vpack.c.bf16 %v2676, %v2675
  %v2730 = vpack.c.bf16 %v2678, %v2677
  %v2731 = vpack.c.bf16 %v2680, %v2679
  %v2732 = vpack.c.bf16 %v2682, %v2681
  %v2733 = vpack.c.bf16 %v2684, %v2683
  %v2734 = vpack.c.bf16 %v2686, %v2685
  %v2735 = vpack.c.bf16 %v2688, %v2687
  %v2736 = vpack.c.bf16 %v2690, %v2689
  %v2737 = vpack.c.bf16 %v2692, %v2691
  %v2738 = vpack.c.bf16 %v2694, %v2693
  %v2739 = vpack.c.bf16 %v2696, %v2695
  %v2740 = vpack.c.bf16 %v2698, %v2697
  %v2741 = vpack.c.bf16 %v2700, %v2699
  %v2742 = vpack.c.bf16 %v2701, %v2701
  %s2743 = scalar_lea.vmem %s1, 8
  %v2744 = vld [vmem:[%s2743] sm:$0x3]
  %v2746 = vsel %vm262, %v2702, 0
  %v2749 = vsel %vm262, %v2703, 0
  %v2752 = vsel %vm262, %v2704, 0
  %v2755 = vsel %vm262, %v2705, 0
  %v2758 = vsel %vm262, %v2706, 0
  %v2761 = vsel %vm262, %v2707, 0
  %v2764 = vsel %vm262, %v2708, 0
  %v2767 = vsel %vm262, %v2709, 0
  %v2770 = vsel %vm262, %v2710, 0
  %v2773 = vsel %vm262, %v2711, 0
  %v2776 = vsel %vm262, %v2712, 0
  %v2779 = vsel %vm262, %v2713, 0
  %v2782 = vsel %vm262, %v2714, 0
  %v2785 = vsel %vm262, %v2715, 0
  %v2788 = vsel %vm262, %v2716, 0
  %v2791 = vsel %vm262, %v2717, 0
  %v2794 = vsel %vm262, %v2718, 0
  %v2797 = vsel %vm262, %v2719, 0
  %v2800 = vsel %vm262, %v2720, 0
  %v2803 = vsel %vm262, %v2721, 0
  %v2806 = vsel %vm262, %v2722, 0
  %v2809 = vsel %vm262, %v2723, 0
  %v2812 = vsel %vm262, %v2724, 0
  %v2815 = vsel %vm262, %v2725, 0
  %v2818 = vsel %vm262, %v2726, 0
  %v2821 = vsel %vm262, %v2727, 0
  %v2824 = vsel %vm262, %v2728, 0
  %v2827 = vsel %vm262, %v2729, 0
  %v2830 = vsel %vm262, %v2730, 0
  %v2833 = vsel %vm262, %v2731, 0
  %v2836 = vsel %vm262, %v2732, 0
  %v2839 = vsel %vm262, %v2733, 0
  %v2842 = vsel %vm262, %v2734, 0
  %v2845 = vsel %vm262, %v2735, 0
  %v2848 = vsel %vm262, %v2736, 0
  %v2851 = vsel %vm262, %v2737, 0
  %v2854 = vsel %vm262, %v2738, 0
  %v2857 = vsel %vm262, %v2739, 0
  %v2860 = vsel %vm262, %v2740, 0
  %v2863 = vsel %vm262, %v2741, 0
  %v2866 = vsel %vm262, %v2742, 0
  %v2869 = vand.u32 %v2744, %v389
  %2871 = vmatprep.subr.bf16.mxu0 0
  %2872 = vmatpush1.bf16.msra.mxu0 0
  %2873 = vmatprep.subr.bf16.mxu0 0
  %2874 = vmatpush1.bf16.msra.mxu0 0
  %2875 = vmatprep.subr.bf16.mxu0 0
  %2876 = vmatpush1.bf16.msra.mxu0 0
  %2877 = vmatprep.subr.bf16.mxu0 0
  %2878 = vmatpush1.bf16.msra.mxu0 0
  %2879 = vmatprep.subr.bf16.mxu0 0
  %2880 = vmatpush1.bf16.msra.mxu0 0
  %2881 = vmatprep.subr.bf16.mxu0 0
  %2882 = vmatpush1.bf16.msra.mxu0 0
  %2883 = vmatprep.subr.bf16.mxu0 0
  %2884 = vmatpush1.bf16.msra.mxu0 0
  %2885 = vmatprep.subr.bf16.mxu0 0
  %2886 = vmatpush1.bf16.msra.mxu0 %v2869
  %2887 = vmatprep.subr.bf16.mxu0 0
  %2888 = vmatpush2.bf16.msra.mxu0 0
  %2889 = vmatprep.subr.bf16.mxu0 0
  %2890 = vmatpush2.bf16.msra.mxu0 0
  %2891 = vmatprep.subr.bf16.mxu0 0
  %2892 = vmatpush2.bf16.msra.mxu0 0
  %2893 = vmatprep.subr.bf16.mxu0 0
  %2894 = vmatpush2.bf16.msra.mxu0 0
  %2895 = vmatprep.subr.bf16.mxu0 0
  %2896 = vmatpush2.bf16.msra.mxu0 0
  %2897 = vmatprep.subr.bf16.mxu0 0
  %2898 = vmatpush2.bf16.msra.mxu0 0
  %2899 = vmatprep.subr.bf16.mxu0 0
  %2900 = vmatpush2.bf16.msra.mxu0 0
  %2901 = vmatprep.subr.bf16.mxu0 0
  %2902 = vmatpush2.bf16.msra.mxu0 0
  %2903 = vmatprep.mubr.bf16.mxu0 0
  %2904 = vmatmul.mubr.bf16.gmra.mxu0 %v2746
  %v2905 = vpop.f32.mrf.mxu0
  %v2906 = vadd.f32 0.0, %v2905
  %v2907 = vpop.f32.mrf.mxu0
  %v2908 = vpop.f32.mrf.mxu0
  %v2909 = vadd.f32 0.0, %v2908
  %v2910 = vpop.f32.mrf.mxu0
  %2911 = vmatprep.mubr.bf16.mxu0 0
  %2912 = vmatmul.mubr.bf16.gmra.mxu0 %v2749
  %v2913 = vpop.f32.mrf.mxu0
  %v2914 = vadd.f32 0.0, %v2913
  %v2915 = vpop.f32.mrf.mxu0
  %v2916 = vpop.f32.mrf.mxu0
  %v2917 = vadd.f32 0.0, %v2916
  %v2918 = vpop.f32.mrf.mxu0
  %2919 = vmatprep.mubr.bf16.mxu0 0
  %2920 = vmatmul.mubr.bf16.gmra.mxu0 %v2752
  %v2921 = vpop.f32.mrf.mxu0
  %v2922 = vadd.f32 0.0, %v2921
  %v2923 = vpop.f32.mrf.mxu0
  %v2924 = vpop.f32.mrf.mxu0
  %v2925 = vadd.f32 0.0, %v2924
  %v2926 = vpop.f32.mrf.mxu0
  %2927 = vmatprep.mubr.bf16.mxu0 0
  %2928 = vmatmul.mubr.bf16.gmra.mxu0 %v2755
  %v2929 = vpop.f32.mrf.mxu0
  %v2930 = vadd.f32 0.0, %v2929
  %v2931 = vpop.f32.mrf.mxu0
  %v2932 = vpop.f32.mrf.mxu0
  %v2933 = vadd.f32 0.0, %v2932
  %v2934 = vpop.f32.mrf.mxu0
  %2935 = vmatprep.mubr.bf16.mxu0 0
  %2936 = vmatmul.mubr.bf16.gmra.mxu0 %v2758
  %v2937 = vpop.f32.mrf.mxu0
  %v2938 = vadd.f32 0.0, %v2937
  %v2939 = vpop.f32.mrf.mxu0
  %v2940 = vpop.f32.mrf.mxu0
  %v2941 = vadd.f32 0.0, %v2940
  %v2942 = vpop.f32.mrf.mxu0
  %2943 = vmatprep.mubr.bf16.mxu0 0
  %2944 = vmatmul.mubr.bf16.gmra.mxu0 %v2761
  %v2945 = vpop.f32.mrf.mxu0
  %v2946 = vadd.f32 0.0, %v2945
  %v2947 = vpop.f32.mrf.mxu0
  %v2948 = vpop.f32.mrf.mxu0
  %v2949 = vadd.f32 0.0, %v2948
  %v2950 = vpop.f32.mrf.mxu0
  %2951 = vmatprep.mubr.bf16.mxu0 0
  %2952 = vmatmul.mubr.bf16.gmra.mxu0 %v2764
  %v2953 = vpop.f32.mrf.mxu0
  %v2954 = vadd.f32 0.0, %v2953
  %v2955 = vpop.f32.mrf.mxu0
  %v2956 = vpop.f32.mrf.mxu0
  %v2957 = vadd.f32 0.0, %v2956
  %v2958 = vpop.f32.mrf.mxu0
  %2959 = vmatprep.mubr.bf16.mxu0 0
  %2960 = vmatmul.mubr.bf16.gmra.mxu0 %v2767
  %v2961 = vpop.f32.mrf.mxu0
  %v2962 = vadd.f32 0.0, %v2961
  %v2963 = vpop.f32.mrf.mxu0
  %v2964 = vpop.f32.mrf.mxu0
  %v2965 = vadd.f32 0.0, %v2964
  %v2966 = vpop.f32.mrf.mxu0
  %2967 = vmatprep.mubr.bf16.mxu0 0
  %2968 = vmatmul.mubr.bf16.gmra.mxu0 %v2770
  %v2969 = vpop.f32.mrf.mxu0
  %v2970 = vadd.f32 0.0, %v2969
  %v2971 = vpop.f32.mrf.mxu0
  %v2972 = vpop.f32.mrf.mxu0
  %v2973 = vadd.f32 0.0, %v2972
  %v2974 = vpop.f32.mrf.mxu0
  %2975 = vmatprep.mubr.bf16.mxu0 0
  %2976 = vmatmul.mubr.bf16.gmra.mxu0 %v2773
  %v2977 = vpop.f32.mrf.mxu0
  %v2978 = vadd.f32 0.0, %v2977
  %v2979 = vpop.f32.mrf.mxu0
  %v2980 = vpop.f32.mrf.mxu0
  %v2981 = vadd.f32 0.0, %v2980
  %v2982 = vpop.f32.mrf.mxu0
  %2983 = vmatprep.mubr.bf16.mxu0 0
  %2984 = vmatmul.mubr.bf16.gmra.mxu0 %v2776
  %v2985 = vpop.f32.mrf.mxu0
  %v2986 = vadd.f32 0.0, %v2985
  %v2987 = vpop.f32.mrf.mxu0
  %v2988 = vpop.f32.mrf.mxu0
  %v2989 = vadd.f32 0.0, %v2988
  %v2990 = vpop.f32.mrf.mxu0
  %2991 = vmatprep.mubr.bf16.mxu0 0
  %2992 = vmatmul.mubr.bf16.gmra.mxu0 %v2779
  %v2993 = vpop.f32.mrf.mxu0
  %v2994 = vadd.f32 0.0, %v2993
  %v2995 = vpop.f32.mrf.mxu0
  %v2996 = vpop.f32.mrf.mxu0
  %v2997 = vadd.f32 0.0, %v2996
  %v2998 = vpop.f32.mrf.mxu0
  %2999 = vmatprep.mubr.bf16.mxu0 0
  %3000 = vmatmul.mubr.bf16.gmra.mxu0 %v2782
  %v3001 = vpop.f32.mrf.mxu0
  %v3002 = vadd.f32 0.0, %v3001
  %v3003 = vpop.f32.mrf.mxu0
  %v3004 = vpop.f32.mrf.mxu0
  %v3005 = vadd.f32 0.0, %v3004
  %v3006 = vpop.f32.mrf.mxu0
  %3007 = vmatprep.mubr.bf16.mxu0 0
  %3008 = vmatmul.mubr.bf16.gmra.mxu0 %v2785
  %v3009 = vpop.f32.mrf.mxu0
  %v3010 = vadd.f32 0.0, %v3009
  %v3011 = vpop.f32.mrf.mxu0
  %v3012 = vpop.f32.mrf.mxu0
  %v3013 = vadd.f32 0.0, %v3012
  %v3014 = vpop.f32.mrf.mxu0
  %3015 = vmatprep.mubr.bf16.mxu0 0
  %3016 = vmatmul.mubr.bf16.gmra.mxu0 %v2788
  %v3017 = vpop.f32.mrf.mxu0
  %v3018 = vadd.f32 0.0, %v3017
  %v3019 = vpop.f32.mrf.mxu0
  %v3020 = vpop.f32.mrf.mxu0
  %v3021 = vadd.f32 0.0, %v3020
  %v3022 = vpop.f32.mrf.mxu0
  %3023 = vmatprep.mubr.bf16.mxu0 0
  %3024 = vmatmul.mubr.bf16.gmra.mxu0 %v2791
  %v3025 = vpop.f32.mrf.mxu0
  %v3026 = vadd.f32 0.0, %v3025
  %v3027 = vpop.f32.mrf.mxu0
  %v3028 = vpop.f32.mrf.mxu0
  %v3029 = vadd.f32 0.0, %v3028
  %v3030 = vpop.f32.mrf.mxu0
  %3031 = vmatprep.mubr.bf16.mxu0 0
  %3032 = vmatmul.mubr.bf16.gmra.mxu0 %v2794
  %v3033 = vpop.f32.mrf.mxu0
  %v3034 = vadd.f32 0.0, %v3033
  %v3035 = vpop.f32.mrf.mxu0
  %v3036 = vpop.f32.mrf.mxu0
  %v3037 = vadd.f32 0.0, %v3036
  %v3038 = vpop.f32.mrf.mxu0
  %3039 = vmatprep.mubr.bf16.mxu0 0
  %3040 = vmatmul.mubr.bf16.gmra.mxu0 %v2797
  %v3041 = vpop.f32.mrf.mxu0
  %v3042 = vadd.f32 0.0, %v3041
  %v3043 = vpop.f32.mrf.mxu0
  %v3044 = vpop.f32.mrf.mxu0
  %v3045 = vadd.f32 0.0, %v3044
  %v3046 = vpop.f32.mrf.mxu0
  %3047 = vmatprep.mubr.bf16.mxu0 0
  %3048 = vmatmul.mubr.bf16.gmra.mxu0 %v2800
  %v3049 = vpop.f32.mrf.mxu0
  %v3050 = vadd.f32 0.0, %v3049
  %v3051 = vpop.f32.mrf.mxu0
  %v3052 = vpop.f32.mrf.mxu0
  %v3053 = vadd.f32 0.0, %v3052
  %v3054 = vpop.f32.mrf.mxu0
  %3055 = vmatprep.mubr.bf16.mxu0 0
  %3056 = vmatmul.mubr.bf16.gmra.mxu0 %v2803
  %v3057 = vpop.f32.mrf.mxu0
  %v3058 = vadd.f32 0.0, %v3057
  %v3059 = vpop.f32.mrf.mxu0
  %v3060 = vpop.f32.mrf.mxu0
  %v3061 = vadd.f32 0.0, %v3060
  %v3062 = vpop.f32.mrf.mxu0
  %3063 = vmatprep.mubr.bf16.mxu0 0
  %3064 = vmatmul.mubr.bf16.gmra.mxu0 %v2806
  %v3065 = vpop.f32.mrf.mxu0
  %v3066 = vadd.f32 0.0, %v3065
  %v3067 = vpop.f32.mrf.mxu0
  %v3068 = vpop.f32.mrf.mxu0
  %v3069 = vadd.f32 0.0, %v3068
  %v3070 = vpop.f32.mrf.mxu0
  %3071 = vmatprep.mubr.bf16.mxu0 0
  %3072 = vmatmul.mubr.bf16.gmra.mxu0 %v2809
  %v3073 = vpop.f32.mrf.mxu0
  %v3074 = vadd.f32 0.0, %v3073
  %v3075 = vpop.f32.mrf.mxu0
  %v3076 = vpop.f32.mrf.mxu0
  %v3077 = vadd.f32 0.0, %v3076
  %v3078 = vpop.f32.mrf.mxu0
  %3079 = vmatprep.mubr.bf16.mxu0 0
  %3080 = vmatmul.mubr.bf16.gmra.mxu0 %v2812
  %v3081 = vpop.f32.mrf.mxu0
  %v3082 = vadd.f32 0.0, %v3081
  %v3083 = vpop.f32.mrf.mxu0
  %v3084 = vpop.f32.mrf.mxu0
  %v3085 = vadd.f32 0.0, %v3084
  %v3086 = vpop.f32.mrf.mxu0
  %3087 = vmatprep.mubr.bf16.mxu0 0
  %3088 = vmatmul.mubr.bf16.gmra.mxu0 %v2815
  %v3089 = vpop.f32.mrf.mxu0
  %v3090 = vadd.f32 0.0, %v3089
  %v3091 = vpop.f32.mrf.mxu0
  %v3092 = vpop.f32.mrf.mxu0
  %v3093 = vadd.f32 0.0, %v3092
  %v3094 = vpop.f32.mrf.mxu0
  %3095 = vmatprep.mubr.bf16.mxu0 0
  %3096 = vmatmul.mubr.bf16.gmra.mxu0 %v2818
  %v3097 = vpop.f32.mrf.mxu0
  %v3098 = vadd.f32 0.0, %v3097
  %v3099 = vpop.f32.mrf.mxu0
  %v3100 = vpop.f32.mrf.mxu0
  %v3101 = vadd.f32 0.0, %v3100
  %v3102 = vpop.f32.mrf.mxu0
  %3103 = vmatprep.mubr.bf16.mxu0 0
  %3104 = vmatmul.mubr.bf16.gmra.mxu0 %v2821
  %v3105 = vpop.f32.mrf.mxu0
  %v3106 = vadd.f32 0.0, %v3105
  %v3107 = vpop.f32.mrf.mxu0
  %v3108 = vpop.f32.mrf.mxu0
  %v3109 = vadd.f32 0.0, %v3108
  %v3110 = vpop.f32.mrf.mxu0
  %3111 = vmatprep.mubr.bf16.mxu0 0
  %3112 = vmatmul.mubr.bf16.gmra.mxu0 %v2824
  %v3113 = vpop.f32.mrf.mxu0
  %v3114 = vadd.f32 0.0, %v3113
  %v3115 = vpop.f32.mrf.mxu0
  %v3116 = vpop.f32.mrf.mxu0
  %v3117 = vadd.f32 0.0, %v3116
  %v3118 = vpop.f32.mrf.mxu0
  %3119 = vmatprep.mubr.bf16.mxu0 0
  %3120 = vmatmul.mubr.bf16.gmra.mxu0 %v2827
  %v3121 = vpop.f32.mrf.mxu0
  %v3122 = vadd.f32 0.0, %v3121
  %v3123 = vpop.f32.mrf.mxu0
  %v3124 = vpop.f32.mrf.mxu0
  %v3125 = vadd.f32 0.0, %v3124
  %v3126 = vpop.f32.mrf.mxu0
  %3127 = vmatprep.mubr.bf16.mxu0 0
  %3128 = vmatmul.mubr.bf16.gmra.mxu0 %v2830
  %v3129 = vpop.f32.mrf.mxu0
  %v3130 = vadd.f32 0.0, %v3129
  %v3131 = vpop.f32.mrf.mxu0
  %v3132 = vpop.f32.mrf.mxu0
  %v3133 = vadd.f32 0.0, %v3132
  %v3134 = vpop.f32.mrf.mxu0
  %3135 = vmatprep.mubr.bf16.mxu0 0
  %3136 = vmatmul.mubr.bf16.gmra.mxu0 %v2833
  %v3137 = vpop.f32.mrf.mxu0
  %v3138 = vadd.f32 0.0, %v3137
  %v3139 = vpop.f32.mrf.mxu0
  %v3140 = vpop.f32.mrf.mxu0
  %v3141 = vadd.f32 0.0, %v3140
  %v3142 = vpop.f32.mrf.mxu0
  %3143 = vmatprep.mubr.bf16.mxu0 0
  %3144 = vmatmul.mubr.bf16.gmra.mxu0 %v2836
  %v3145 = vpop.f32.mrf.mxu0
  %v3146 = vadd.f32 0.0, %v3145
  %v3147 = vpop.f32.mrf.mxu0
  %v3148 = vpop.f32.mrf.mxu0
  %v3149 = vadd.f32 0.0, %v3148
  %v3150 = vpop.f32.mrf.mxu0
  %3151 = vmatprep.mubr.bf16.mxu0 0
  %3152 = vmatmul.mubr.bf16.gmra.mxu0 %v2839
  %v3153 = vpop.f32.mrf.mxu0
  %v3154 = vadd.f32 0.0, %v3153
  %v3155 = vpop.f32.mrf.mxu0
  %v3156 = vpop.f32.mrf.mxu0
  %v3157 = vadd.f32 0.0, %v3156
  %v3158 = vpop.f32.mrf.mxu0
  %3159 = vmatprep.mubr.bf16.mxu0 0
  %3160 = vmatmul.mubr.bf16.gmra.mxu0 %v2842
  %v3161 = vpop.f32.mrf.mxu0
  %v3162 = vadd.f32 0.0, %v3161
  %v3163 = vpop.f32.mrf.mxu0
  %v3164 = vpop.f32.mrf.mxu0
  %v3165 = vadd.f32 0.0, %v3164
  %v3166 = vpop.f32.mrf.mxu0
  %3167 = vmatprep.mubr.bf16.mxu0 0
  %3168 = vmatmul.mubr.bf16.gmra.mxu0 %v2845
  %v3169 = vpop.f32.mrf.mxu0
  %v3170 = vadd.f32 0.0, %v3169
  %v3171 = vpop.f32.mrf.mxu0
  %v3172 = vpop.f32.mrf.mxu0
  %v3173 = vadd.f32 0.0, %v3172
  %v3174 = vpop.f32.mrf.mxu0
  %3175 = vmatprep.mubr.bf16.mxu0 0
  %3176 = vmatmul.mubr.bf16.gmra.mxu0 %v2848
  %v3177 = vpop.f32.mrf.mxu0
  %v3178 = vadd.f32 0.0, %v3177
  %v3179 = vpop.f32.mrf.mxu0
  %v3180 = vpop.f32.mrf.mxu0
  %v3181 = vadd.f32 0.0, %v3180
  %v3182 = vpop.f32.mrf.mxu0
  %3183 = vmatprep.mubr.bf16.mxu0 0
  %3184 = vmatmul.mubr.bf16.gmra.mxu0 %v2851
  %v3185 = vpop.f32.mrf.mxu0
  %v3186 = vadd.f32 0.0, %v3185
  %v3187 = vpop.f32.mrf.mxu0
  %v3188 = vpop.f32.mrf.mxu0
  %v3189 = vadd.f32 0.0, %v3188
  %v3190 = vpop.f32.mrf.mxu0
  %3191 = vmatprep.mubr.bf16.mxu0 0
  %3192 = vmatmul.mubr.bf16.gmra.mxu0 %v2854
  %v3193 = vpop.f32.mrf.mxu0
  %v3194 = vadd.f32 0.0, %v3193
  %v3195 = vpop.f32.mrf.mxu0
  %v3196 = vpop.f32.mrf.mxu0
  %v3197 = vadd.f32 0.0, %v3196
  %v3198 = vpop.f32.mrf.mxu0
  %3199 = vmatprep.mubr.bf16.mxu0 0
  %3200 = vmatmul.mubr.bf16.gmra.mxu0 %v2857
  %v3201 = vpop.f32.mrf.mxu0
  %v3202 = vadd.f32 0.0, %v3201
  %v3203 = vpop.f32.mrf.mxu0
  %v3204 = vpop.f32.mrf.mxu0
  %v3205 = vadd.f32 0.0, %v3204
  %v3206 = vpop.f32.mrf.mxu0
  %3207 = vmatprep.mubr.bf16.mxu0 0
  %3208 = vmatmul.mubr.bf16.gmra.mxu0 %v2860
  %v3209 = vpop.f32.mrf.mxu0
  %v3210 = vadd.f32 0.0, %v3209
  %v3211 = vpop.f32.mrf.mxu0
  %v3212 = vpop.f32.mrf.mxu0
  %v3213 = vadd.f32 0.0, %v3212
  %v3214 = vpop.f32.mrf.mxu0
  %3215 = vmatprep.mubr.bf16.mxu0 0
  %3216 = vmatmul.mubr.bf16.gmra.mxu0 %v2863
  %v3217 = vpop.f32.mrf.mxu0
  %v3218 = vadd.f32 0.0, %v3217
  %v3219 = vpop.f32.mrf.mxu0
  %v3220 = vpop.f32.mrf.mxu0
  %v3221 = vadd.f32 0.0, %v3220
  %v3222 = vpop.f32.mrf.mxu0
  %3223 = vmatprep.mubr.bf16.mxu0 0
  %3224 = vmatmul.mubr.bf16.gmra.mxu0 %v2866
  %v3225 = vpop.f32.mrf.mxu0
  %v3226 = vadd.f32 0.0, %v3225
  %v3227 = vpop.f32.mrf.mxu0
  %v3228 = vpop.f32.mrf.mxu0
  %v3229 = vpop.f32.mrf.mxu0
  %3230 = vdwg.mxu0
  %v3231 = vadd.f32 %v2540, %v2906
  %v3232 = vadd.f32 %v2541, %v2909
  %v3233 = vadd.f32 %v2542, %v2914
  %v3234 = vadd.f32 %v2543, %v2917
  %v3235 = vadd.f32 %v2544, %v2922
  %v3236 = vadd.f32 %v2545, %v2925
  %v3237 = vadd.f32 %v2546, %v2930
  %v3238 = vadd.f32 %v2547, %v2933
  %v3239 = vadd.f32 %v2548, %v2938
  %v3240 = vadd.f32 %v2549, %v2941
  %v3241 = vadd.f32 %v2550, %v2946
  %v3242 = vadd.f32 %v2551, %v2949
  %v3243 = vadd.f32 %v2552, %v2954
  %v3244 = vadd.f32 %v2553, %v2957
  %v3245 = vadd.f32 %v2554, %v2962
  %v3246 = vadd.f32 %v2555, %v2965
  %v3247 = vadd.f32 %v2556, %v2970
  %v3248 = vadd.f32 %v2557, %v2973
  %v3249 = vadd.f32 %v2558, %v2978
  %v3250 = vadd.f32 %v2559, %v2981
  %v3251 = vadd.f32 %v2560, %v2986
  %v3252 = vadd.f32 %v2561, %v2989
  %v3253 = vadd.f32 %v2562, %v2994
  %v3254 = vadd.f32 %v2563, %v2997
  %v3255 = vadd.f32 %v2564, %v3002
  %v3256 = vadd.f32 %v2565, %v3005
  %v3257 = vadd.f32 %v2566, %v3010
  %v3258 = vadd.f32 %v2567, %v3013
  %v3259 = vadd.f32 %v2568, %v3018
  %v3260 = vadd.f32 %v2569, %v3021
  %v3261 = vadd.f32 %v2570, %v3026
  %v3262 = vadd.f32 %v2571, %v3029
  %v3263 = vadd.f32 %v2572, %v3034
  %v3264 = vadd.f32 %v2573, %v3037
  %v3265 = vadd.f32 %v2574, %v3042
  %v3266 = vadd.f32 %v2575, %v3045
  %v3267 = vadd.f32 %v2576, %v3050
  %v3268 = vadd.f32 %v2577, %v3053
  %v3269 = vadd.f32 %v2578, %v3058
  %v3270 = vadd.f32 %v2579, %v3061
  %v3271 = vadd.f32 %v2580, %v3066
  %v3272 = vadd.f32 %v2581, %v3069
  %v3273 = vadd.f32 %v2582, %v3074
  %v3274 = vadd.f32 %v2583, %v3077
  %v3275 = vadd.f32 %v2584, %v3082
  %v3276 = vadd.f32 %v2585, %v3085
  %v3277 = vadd.f32 %v2586, %v3090
  %v3278 = vadd.f32 %v2587, %v3093
  %v3279 = vadd.f32 %v2588, %v3098
  %v3280 = vadd.f32 %v2589, %v3101
  %v3281 = vadd.f32 %v2590, %v3106
  %v3282 = vadd.f32 %v2591, %v3109
  %v3283 = vadd.f32 %v2592, %v3114
  %v3284 = vadd.f32 %v2593, %v3117
  %v3285 = vadd.f32 %v2594, %v3122
  %v3286 = vadd.f32 %v2595, %v3125
  %v3287 = vadd.f32 %v2596, %v3130
  %v3288 = vadd.f32 %v2597, %v3133
  %v3289 = vadd.f32 %v2598, %v3138
  %v3290 = vadd.f32 %v2599, %v3141
  %v3291 = vadd.f32 %v2600, %v3146
  %v3292 = vadd.f32 %v2601, %v3149
  %v3293 = vadd.f32 %v2602, %v3154
  %v3294 = vadd.f32 %v2603, %v3157
  %v3295 = vadd.f32 %v2604, %v3162
  %v3296 = vadd.f32 %v2605, %v3165
  %v3297 = vadd.f32 %v2606, %v3170
  %v3298 = vadd.f32 %v2607, %v3173
  %v3299 = vadd.f32 %v2608, %v3178
  %v3300 = vadd.f32 %v2609, %v3181
  %v3301 = vadd.f32 %v2610, %v3186
  %v3302 = vadd.f32 %v2611, %v3189
  %v3303 = vadd.f32 %v2612, %v3194
  %v3304 = vadd.f32 %v2613, %v3197
  %v3305 = vadd.f32 %v2614, %v3202
  %v3306 = vadd.f32 %v2615, %v3205
  %v3307 = vadd.f32 %v2616, %v3210
  %v3308 = vadd.f32 %v2617, %v3213
  %v3309 = vadd.f32 %v2618, %v3218
  %v3310 = vadd.f32 %v2619, %v3221
  %v3311 = vadd.f32 %v2620, %v3226
  %v3312 = vld [vmem:[%s0 + $0x14] sm:$0xff]
  %v3313 = vld [vmem:[%s0 + $0x1c] sm:$0xff]
  %v3314 = vld [vmem:[%s0 + $0x24] sm:$0xff]
  %v3315 = vld [vmem:[%s0 + $0x2c] sm:$0xff]
  %v3316 = vld [vmem:[%s0 + $0x34] sm:$0xff]
  %v3317 = vld [vmem:[%s0 + $0x3c] sm:$0xff]
  %v3318 = vld [vmem:[%s0 + $0x44] sm:$0xff]
  %v3319 = vld [vmem:[%s0 + $0x4c] sm:$0xff]
  %v3320 = vld [vmem:[%s0 + $0x54] sm:$0xff]
  %v3321 = vld [vmem:[%s0 + $0x5c] sm:$0xff]
  %v3322 = vld [vmem:[%s0 + $0x64] sm:$0xff]
  %v3323 = vld [vmem:[%s0 + $0x6c] sm:$0xff]
  %v3324 = vld [vmem:[%s0 + $0x74] sm:$0xff]
  %v3325 = vld [vmem:[%s0 + $0x7c] sm:$0xff]
  %v3326 = vld [vmem:[%s0 + $0x84] sm:$0xff]
  %v3327 = vld [vmem:[%s0 + $0x8c] sm:$0xff]
  %v3328 = vld [vmem:[%s0 + $0x94] sm:$0xff]
  %v3329 = vld [vmem:[%s0 + $0x9c] sm:$0xff]
  %v3330 = vld [vmem:[%s0 + $0xa4] sm:$0xff]
  %v3331 = vld [vmem:[%s0 + $0xac] sm:$0xff]
  %v3332 = vld [vmem:[%s0 + $0xb4] sm:$0xff]
  %v3333 = vld [vmem:[%s0 + $0xbc] sm:$0xff]
  %v3334 = vld [vmem:[%s0 + $0xc4] sm:$0xff]
  %v3335 = vld [vmem:[%s0 + $0xcc] sm:$0xff]
  %v3336 = vld [vmem:[%s0 + $0xd4] sm:$0xff]
  %v3337 = vld [vmem:[%s0 + $0xdc] sm:$0xff]
  %v3338 = vld [vmem:[%s0 + $0xe4] sm:$0xff]
  %v3339 = vld [vmem:[%s0 + $0xec] sm:$0xff]
  %v3340 = vld [vmem:[%s0 + $0xf4] sm:$0xff]
  %v3341 = vld [vmem:[%s0 + $0xfc] sm:$0xff]
  %v3342 = vld [vmem:[%s0 + $0x104] sm:$0xff]
  %v3343 = vld [vmem:[%s0 + $0x10c] sm:$0xff]
  %v3344 = vld [vmem:[%s0 + $0x114] sm:$0xff]
  %v3345 = vld [vmem:[%s0 + $0x11c] sm:$0xff]
  %v3346 = vld [vmem:[%s0 + $0x124] sm:$0xff]
  %v3347 = vld [vmem:[%s0 + $0x12c] sm:$0xff]
  %v3348 = vld [vmem:[%s0 + $0x134] sm:$0xff]
  %v3349 = vld [vmem:[%s0 + $0x13c] sm:$0xff]
  %v3350 = vld [vmem:[%s0 + $0x144] sm:$0xff]
  %v3351 = vld [vmem:[%s0 + $0x14c] sm:$0xff]
  %v3352 = vld [vmem:[%s0 + $0x154] sm:$0xff]
  %v3353 = vld [vmem:[%s0 + $0x15c] sm:$0xff]
  %v3354 = vld [vmem:[%s0 + $0x164] sm:$0xff]
  %v3355 = vld [vmem:[%s0 + $0x16c] sm:$0xff]
  %v3356 = vld [vmem:[%s0 + $0x174] sm:$0xff]
  %v3357 = vld [vmem:[%s0 + $0x17c] sm:$0xff]
  %v3358 = vld [vmem:[%s0 + $0x184] sm:$0xff]
  %v3359 = vld [vmem:[%s0 + $0x18c] sm:$0xff]
  %v3360 = vld [vmem:[%s0 + $0x194] sm:$0xff]
  %v3361 = vld [vmem:[%s0 + $0x19c] sm:$0xff]
  %v3362 = vld [vmem:[%s0 + $0x1a4] sm:$0xff]
  %v3363 = vld [vmem:[%s0 + $0x1ac] sm:$0xff]
  %v3364 = vld [vmem:[%s0 + $0x1b4] sm:$0xff]
  %v3365 = vld [vmem:[%s0 + $0x1bc] sm:$0xff]
  %v3366 = vld [vmem:[%s0 + $0x1c4] sm:$0xff]
  %v3367 = vld [vmem:[%s0 + $0x1cc] sm:$0xff]
  %v3368 = vld [vmem:[%s0 + $0x1d4] sm:$0xff]
  %v3369 = vld [vmem:[%s0 + $0x1dc] sm:$0xff]
  %v3370 = vld [vmem:[%s0 + $0x1e4] sm:$0xff]
  %v3371 = vld [vmem:[%s0 + $0x1ec] sm:$0xff]
  %v3372 = vld [vmem:[%s0 + $0x1f4] sm:$0xff]
  %v3373 = vld [vmem:[%s0 + $0x1fc] sm:$0xff]
  %v3374 = vld [vmem:[%s0 + $0x204] sm:$0xff]
  %v3375 = vld [vmem:[%s0 + $0x20c] sm:$0xff]
  %v3376 = vld [vmem:[%s0 + $0x214] sm:$0xff]
  %v3377 = vld [vmem:[%s0 + $0x21c] sm:$0xff]
  %v3378 = vld [vmem:[%s0 + $0x224] sm:$0xff]
  %v3379 = vld [vmem:[%s0 + $0x22c] sm:$0xff]
  %v3380 = vld [vmem:[%s0 + $0x234] sm:$0xff]
  %v3381 = vld [vmem:[%s0 + $0x23c] sm:$0xff]
  %v3382 = vld [vmem:[%s0 + $0x244] sm:$0xff]
  %v3383 = vld [vmem:[%s0 + $0x24c] sm:$0xff]
  %v3384 = vld [vmem:[%s0 + $0x254] sm:$0xff]
  %v3385 = vld [vmem:[%s0 + $0x25c] sm:$0xff]
  %v3386 = vld [vmem:[%s0 + $0x264] sm:$0xff]
  %v3387 = vld [vmem:[%s0 + $0x26c] sm:$0xff]
  %v3388 = vld [vmem:[%s0 + $0x274] sm:$0xff]
  %v3389 = vld [vmem:[%s0 + $0x27c] sm:$0xff]
  %v3390 = vld [vmem:[%s0 + $0x284] sm:$0xff]
  %v3391 = vld [vmem:[%s0 + $0x28c] sm:$0xff]
  %v3392 = vld [vmem:[%s0 + $0x294] sm:$0xff]
  %v3393 = vpack.c.bf16 %v3313, %v3312
  %v3394 = vpack.c.bf16 %v3315, %v3314
  %v3395 = vpack.c.bf16 %v3317, %v3316
  %v3396 = vpack.c.bf16 %v3319, %v3318
  %v3397 = vpack.c.bf16 %v3321, %v3320
  %v3398 = vpack.c.bf16 %v3323, %v3322
  %v3399 = vpack.c.bf16 %v3325, %v3324
  %v3400 = vpack.c.bf16 %v3327, %v3326
  %v3401 = vpack.c.bf16 %v3329, %v3328
  %v3402 = vpack.c.bf16 %v3331, %v3330
  %v3403 = vpack.c.bf16 %v3333, %v3332
  %v3404 = vpack.c.bf16 %v3335, %v3334
  %v3405 = vpack.c.bf16 %v3337, %v3336
  %v3406 = vpack.c.bf16 %v3339, %v3338
  %v3407 = vpack.c.bf16 %v3341, %v3340
  %v3408 = vpack.c.bf16 %v3343, %v3342
  %v3409 = vpack.c.bf16 %v3345, %v3344
  %v3410 = vpack.c.bf16 %v3347, %v3346
  %v3411 = vpack.c.bf16 %v3349, %v3348
  %v3412 = vpack.c.bf16 %v3351, %v3350
  %v3413 = vpack.c.bf16 %v3353, %v3352
  %v3414 = vpack.c.bf16 %v3355, %v3354
  %v3415 = vpack.c.bf16 %v3357, %v3356
  %v3416 = vpack.c.bf16 %v3359, %v3358
  %v3417 = vpack.c.bf16 %v3361, %v3360
  %v3418 = vpack.c.bf16 %v3363, %v3362
  %v3419 = vpack.c.bf16 %v3365, %v3364
  %v3420 = vpack.c.bf16 %v3367, %v3366
  %v3421 = vpack.c.bf16 %v3369, %v3368
  %v3422 = vpack.c.bf16 %v3371, %v3370
  %v3423 = vpack.c.bf16 %v3373, %v3372
  %v3424 = vpack.c.bf16 %v3375, %v3374
  %v3425 = vpack.c.bf16 %v3377, %v3376
  %v3426 = vpack.c.bf16 %v3379, %v3378
  %v3427 = vpack.c.bf16 %v3381, %v3380
  %v3428 = vpack.c.bf16 %v3383, %v3382
  %v3429 = vpack.c.bf16 %v3385, %v3384
  %v3430 = vpack.c.bf16 %v3387, %v3386
  %v3431 = vpack.c.bf16 %v3389, %v3388
  %v3432 = vpack.c.bf16 %v3391, %v3390
  %v3433 = vpack.c.bf16 %v3392, %v3392
  %s3434 = scalar_lea.vmem %s1, 10
  %v3435 = vld [vmem:[%s3434] sm:$0x3]
  %v3437 = vsel %vm262, %v3393, 0
  %v3440 = vsel %vm262, %v3394, 0
  %v3443 = vsel %vm262, %v3395, 0
  %v3446 = vsel %vm262, %v3396, 0
  %v3449 = vsel %vm262, %v3397, 0
  %v3452 = vsel %vm262, %v3398, 0
  %v3455 = vsel %vm262, %v3399, 0
  %v3458 = vsel %vm262, %v3400, 0
  %v3461 = vsel %vm262, %v3401, 0
  %v3464 = vsel %vm262, %v3402, 0
  %v3467 = vsel %vm262, %v3403, 0
  %v3470 = vsel %vm262, %v3404, 0
  %v3473 = vsel %vm262, %v3405, 0
  %v3476 = vsel %vm262, %v3406, 0
  %v3479 = vsel %vm262, %v3407, 0
  %v3482 = vsel %vm262, %v3408, 0
  %v3485 = vsel %vm262, %v3409, 0
  %v3488 = vsel %vm262, %v3410, 0
  %v3491 = vsel %vm262, %v3411, 0
  %v3494 = vsel %vm262, %v3412, 0
  %v3497 = vsel %vm262, %v3413, 0
  %v3500 = vsel %vm262, %v3414, 0
  %v3503 = vsel %vm262, %v3415, 0
  %v3506 = vsel %vm262, %v3416, 0
  %v3509 = vsel %vm262, %v3417, 0
  %v3512 = vsel %vm262, %v3418, 0
  %v3515 = vsel %vm262, %v3419, 0
  %v3518 = vsel %vm262, %v3420, 0
  %v3521 = vsel %vm262, %v3421, 0
  %v3524 = vsel %vm262, %v3422, 0
  %v3527 = vsel %vm262, %v3423, 0
  %v3530 = vsel %vm262, %v3424, 0
  %v3533 = vsel %vm262, %v3425, 0
  %v3536 = vsel %vm262, %v3426, 0
  %v3539 = vsel %vm262, %v3427, 0
  %v3542 = vsel %vm262, %v3428, 0
  %v3545 = vsel %vm262, %v3429, 0
  %v3548 = vsel %vm262, %v3430, 0
  %v3551 = vsel %vm262, %v3431, 0
  %v3554 = vsel %vm262, %v3432, 0
  %v3557 = vsel %vm262, %v3433, 0
  %v3560 = vand.u32 %v3435, %v389
  %3562 = vmatprep.subr.bf16.mxu0 0
  %3563 = vmatpush1.bf16.msra.mxu0 0
  %3564 = vmatprep.subr.bf16.mxu0 0
  %3565 = vmatpush1.bf16.msra.mxu0 0
  %3566 = vmatprep.subr.bf16.mxu0 0
  %3567 = vmatpush1.bf16.msra.mxu0 0
  %3568 = vmatprep.subr.bf16.mxu0 0
  %3569 = vmatpush1.bf16.msra.mxu0 0
  %3570 = vmatprep.subr.bf16.mxu0 0
  %3571 = vmatpush1.bf16.msra.mxu0 0
  %3572 = vmatprep.subr.bf16.mxu0 0
  %3573 = vmatpush1.bf16.msra.mxu0 0
  %3574 = vmatprep.subr.bf16.mxu0 0
  %3575 = vmatpush1.bf16.msra.mxu0 0
  %3576 = vmatprep.subr.bf16.mxu0 0
  %3577 = vmatpush1.bf16.msra.mxu0 %v3560
  %3578 = vmatprep.subr.bf16.mxu0 0
  %3579 = vmatpush2.bf16.msra.mxu0 0
  %3580 = vmatprep.subr.bf16.mxu0 0
  %3581 = vmatpush2.bf16.msra.mxu0 0
  %3582 = vmatprep.subr.bf16.mxu0 0
  %3583 = vmatpush2.bf16.msra.mxu0 0
  %3584 = vmatprep.subr.bf16.mxu0 0
  %3585 = vmatpush2.bf16.msra.mxu0 0
  %3586 = vmatprep.subr.bf16.mxu0 0
  %3587 = vmatpush2.bf16.msra.mxu0 0
  %3588 = vmatprep.subr.bf16.mxu0 0
  %3589 = vmatpush2.bf16.msra.mxu0 0
  %3590 = vmatprep.subr.bf16.mxu0 0
  %3591 = vmatpush2.bf16.msra.mxu0 0
  %3592 = vmatprep.subr.bf16.mxu0 0
  %3593 = vmatpush2.bf16.msra.mxu0 0
  %3594 = vmatprep.mubr.bf16.mxu0 0
  %3595 = vmatmul.mubr.bf16.gmra.mxu0 %v3437
  %v3596 = vpop.f32.mrf.mxu0
  %v3597 = vadd.f32 0.0, %v3596
  %v3598 = vpop.f32.mrf.mxu0
  %v3599 = vpop.f32.mrf.mxu0
  %v3600 = vadd.f32 0.0, %v3599
  %v3601 = vpop.f32.mrf.mxu0
  %3602 = vmatprep.mubr.bf16.mxu0 0
  %3603 = vmatmul.mubr.bf16.gmra.mxu0 %v3440
  %v3604 = vpop.f32.mrf.mxu0
  %v3605 = vadd.f32 0.0, %v3604
  %v3606 = vpop.f32.mrf.mxu0
  %v3607 = vpop.f32.mrf.mxu0
  %v3608 = vadd.f32 0.0, %v3607
  %v3609 = vpop.f32.mrf.mxu0
  %3610 = vmatprep.mubr.bf16.mxu0 0
  %3611 = vmatmul.mubr.bf16.gmra.mxu0 %v3443
  %v3612 = vpop.f32.mrf.mxu0
  %v3613 = vadd.f32 0.0, %v3612
  %v3614 = vpop.f32.mrf.mxu0
  %v3615 = vpop.f32.mrf.mxu0
  %v3616 = vadd.f32 0.0, %v3615
  %v3617 = vpop.f32.mrf.mxu0
  %3618 = vmatprep.mubr.bf16.mxu0 0
  %3619 = vmatmul.mubr.bf16.gmra.mxu0 %v3446
  %v3620 = vpop.f32.mrf.mxu0
  %v3621 = vadd.f32 0.0, %v3620
  %v3622 = vpop.f32.mrf.mxu0
  %v3623 = vpop.f32.mrf.mxu0
  %v3624 = vadd.f32 0.0, %v3623
  %v3625 = vpop.f32.mrf.mxu0
  %3626 = vmatprep.mubr.bf16.mxu0 0
  %3627 = vmatmul.mubr.bf16.gmra.mxu0 %v3449
  %v3628 = vpop.f32.mrf.mxu0
  %v3629 = vadd.f32 0.0, %v3628
  %v3630 = vpop.f32.mrf.mxu0
  %v3631 = vpop.f32.mrf.mxu0
  %v3632 = vadd.f32 0.0, %v3631
  %v3633 = vpop.f32.mrf.mxu0
  %3634 = vmatprep.mubr.bf16.mxu0 0
  %3635 = vmatmul.mubr.bf16.gmra.mxu0 %v3452
  %v3636 = vpop.f32.mrf.mxu0
  %v3637 = vadd.f32 0.0, %v3636
  %v3638 = vpop.f32.mrf.mxu0
  %v3639 = vpop.f32.mrf.mxu0
  %v3640 = vadd.f32 0.0, %v3639
  %v3641 = vpop.f32.mrf.mxu0
  %3642 = vmatprep.mubr.bf16.mxu0 0
  %3643 = vmatmul.mubr.bf16.gmra.mxu0 %v3455
  %v3644 = vpop.f32.mrf.mxu0
  %v3645 = vadd.f32 0.0, %v3644
  %v3646 = vpop.f32.mrf.mxu0
  %v3647 = vpop.f32.mrf.mxu0
  %v3648 = vadd.f32 0.0, %v3647
  %v3649 = vpop.f32.mrf.mxu0
  %3650 = vmatprep.mubr.bf16.mxu0 0
  %3651 = vmatmul.mubr.bf16.gmra.mxu0 %v3458
  %v3652 = vpop.f32.mrf.mxu0
  %v3653 = vadd.f32 0.0, %v3652
  %v3654 = vpop.f32.mrf.mxu0
  %v3655 = vpop.f32.mrf.mxu0
  %v3656 = vadd.f32 0.0, %v3655
  %v3657 = vpop.f32.mrf.mxu0
  %3658 = vmatprep.mubr.bf16.mxu0 0
  %3659 = vmatmul.mubr.bf16.gmra.mxu0 %v3461
  %v3660 = vpop.f32.mrf.mxu0
  %v3661 = vadd.f32 0.0, %v3660
  %v3662 = vpop.f32.mrf.mxu0
  %v3663 = vpop.f32.mrf.mxu0
  %v3664 = vadd.f32 0.0, %v3663
  %v3665 = vpop.f32.mrf.mxu0
  %3666 = vmatprep.mubr.bf16.mxu0 0
  %3667 = vmatmul.mubr.bf16.gmra.mxu0 %v3464
  %v3668 = vpop.f32.mrf.mxu0
  %v3669 = vadd.f32 0.0, %v3668
  %v3670 = vpop.f32.mrf.mxu0
  %v3671 = vpop.f32.mrf.mxu0
  %v3672 = vadd.f32 0.0, %v3671
  %v3673 = vpop.f32.mrf.mxu0
  %3674 = vmatprep.mubr.bf16.mxu0 0
  %3675 = vmatmul.mubr.bf16.gmra.mxu0 %v3467
  %v3676 = vpop.f32.mrf.mxu0
  %v3677 = vadd.f32 0.0, %v3676
  %v3678 = vpop.f32.mrf.mxu0
  %v3679 = vpop.f32.mrf.mxu0
  %v3680 = vadd.f32 0.0, %v3679
  %v3681 = vpop.f32.mrf.mxu0
  %3682 = vmatprep.mubr.bf16.mxu0 0
  %3683 = vmatmul.mubr.bf16.gmra.mxu0 %v3470
  %v3684 = vpop.f32.mrf.mxu0
  %v3685 = vadd.f32 0.0, %v3684
  %v3686 = vpop.f32.mrf.mxu0
  %v3687 = vpop.f32.mrf.mxu0
  %v3688 = vadd.f32 0.0, %v3687
  %v3689 = vpop.f32.mrf.mxu0
  %3690 = vmatprep.mubr.bf16.mxu0 0
  %3691 = vmatmul.mubr.bf16.gmra.mxu0 %v3473
  %v3692 = vpop.f32.mrf.mxu0
  %v3693 = vadd.f32 0.0, %v3692
  %v3694 = vpop.f32.mrf.mxu0
  %v3695 = vpop.f32.mrf.mxu0
  %v3696 = vadd.f32 0.0, %v3695
  %v3697 = vpop.f32.mrf.mxu0
  %3698 = vmatprep.mubr.bf16.mxu0 0
  %3699 = vmatmul.mubr.bf16.gmra.mxu0 %v3476
  %v3700 = vpop.f32.mrf.mxu0
  %v3701 = vadd.f32 0.0, %v3700
  %v3702 = vpop.f32.mrf.mxu0
  %v3703 = vpop.f32.mrf.mxu0
  %v3704 = vadd.f32 0.0, %v3703
  %v3705 = vpop.f32.mrf.mxu0
  %3706 = vmatprep.mubr.bf16.mxu0 0
  %3707 = vmatmul.mubr.bf16.gmra.mxu0 %v3479
  %v3708 = vpop.f32.mrf.mxu0
  %v3709 = vadd.f32 0.0, %v3708
  %v3710 = vpop.f32.mrf.mxu0
  %v3711 = vpop.f32.mrf.mxu0
  %v3712 = vadd.f32 0.0, %v3711
  %v3713 = vpop.f32.mrf.mxu0
  %3714 = vmatprep.mubr.bf16.mxu0 0
  %3715 = vmatmul.mubr.bf16.gmra.mxu0 %v3482
  %v3716 = vpop.f32.mrf.mxu0
  %v3717 = vadd.f32 0.0, %v3716
  %v3718 = vpop.f32.mrf.mxu0
  %v3719 = vpop.f32.mrf.mxu0
  %v3720 = vadd.f32 0.0, %v3719
  %v3721 = vpop.f32.mrf.mxu0
  %3722 = vmatprep.mubr.bf16.mxu0 0
  %3723 = vmatmul.mubr.bf16.gmra.mxu0 %v3485
  %v3724 = vpop.f32.mrf.mxu0
  %v3725 = vadd.f32 0.0, %v3724
  %v3726 = vpop.f32.mrf.mxu0
  %v3727 = vpop.f32.mrf.mxu0
  %v3728 = vadd.f32 0.0, %v3727
  %v3729 = vpop.f32.mrf.mxu0
  %3730 = vmatprep.mubr.bf16.mxu0 0
  %3731 = vmatmul.mubr.bf16.gmra.mxu0 %v3488
  %v3732 = vpop.f32.mrf.mxu0
  %v3733 = vadd.f32 0.0, %v3732
  %v3734 = vpop.f32.mrf.mxu0
  %v3735 = vpop.f32.mrf.mxu0
  %v3736 = vadd.f32 0.0, %v3735
  %v3737 = vpop.f32.mrf.mxu0
  %3738 = vmatprep.mubr.bf16.mxu0 0
  %3739 = vmatmul.mubr.bf16.gmra.mxu0 %v3491
  %v3740 = vpop.f32.mrf.mxu0
  %v3741 = vadd.f32 0.0, %v3740
  %v3742 = vpop.f32.mrf.mxu0
  %v3743 = vpop.f32.mrf.mxu0
  %v3744 = vadd.f32 0.0, %v3743
  %v3745 = vpop.f32.mrf.mxu0
  %3746 = vmatprep.mubr.bf16.mxu0 0
  %3747 = vmatmul.mubr.bf16.gmra.mxu0 %v3494
  %v3748 = vpop.f32.mrf.mxu0
  %v3749 = vadd.f32 0.0, %v3748
  %v3750 = vpop.f32.mrf.mxu0
  %v3751 = vpop.f32.mrf.mxu0
  %v3752 = vadd.f32 0.0, %v3751
  %v3753 = vpop.f32.mrf.mxu0
  %3754 = vmatprep.mubr.bf16.mxu0 0
  %3755 = vmatmul.mubr.bf16.gmra.mxu0 %v3497
  %v3756 = vpop.f32.mrf.mxu0
  %v3757 = vadd.f32 0.0, %v3756
  %v3758 = vpop.f32.mrf.mxu0
  %v3759 = vpop.f32.mrf.mxu0
  %v3760 = vadd.f32 0.0, %v3759
  %v3761 = vpop.f32.mrf.mxu0
  %3762 = vmatprep.mubr.bf16.mxu0 0
  %3763 = vmatmul.mubr.bf16.gmra.mxu0 %v3500
  %v3764 = vpop.f32.mrf.mxu0
  %v3765 = vadd.f32 0.0, %v3764
  %v3766 = vpop.f32.mrf.mxu0
  %v3767 = vpop.f32.mrf.mxu0
  %v3768 = vadd.f32 0.0, %v3767
  %v3769 = vpop.f32.mrf.mxu0
  %3770 = vmatprep.mubr.bf16.mxu0 0
  %3771 = vmatmul.mubr.bf16.gmra.mxu0 %v3503
  %v3772 = vpop.f32.mrf.mxu0
  %v3773 = vadd.f32 0.0, %v3772
  %v3774 = vpop.f32.mrf.mxu0
  %v3775 = vpop.f32.mrf.mxu0
  %v3776 = vadd.f32 0.0, %v3775
  %v3777 = vpop.f32.mrf.mxu0
  %3778 = vmatprep.mubr.bf16.mxu0 0
  %3779 = vmatmul.mubr.bf16.gmra.mxu0 %v3506
  %v3780 = vpop.f32.mrf.mxu0
  %v3781 = vadd.f32 0.0, %v3780
  %v3782 = vpop.f32.mrf.mxu0
  %v3783 = vpop.f32.mrf.mxu0
  %v3784 = vadd.f32 0.0, %v3783
  %v3785 = vpop.f32.mrf.mxu0
  %3786 = vmatprep.mubr.bf16.mxu0 0
  %3787 = vmatmul.mubr.bf16.gmra.mxu0 %v3509
  %v3788 = vpop.f32.mrf.mxu0
  %v3789 = vadd.f32 0.0, %v3788
  %v3790 = vpop.f32.mrf.mxu0
  %v3791 = vpop.f32.mrf.mxu0
  %v3792 = vadd.f32 0.0, %v3791
  %v3793 = vpop.f32.mrf.mxu0
  %3794 = vmatprep.mubr.bf16.mxu0 0
  %3795 = vmatmul.mubr.bf16.gmra.mxu0 %v3512
  %v3796 = vpop.f32.mrf.mxu0
  %v3797 = vadd.f32 0.0, %v3796
  %v3798 = vpop.f32.mrf.mxu0
  %v3799 = vpop.f32.mrf.mxu0
  %v3800 = vadd.f32 0.0, %v3799
  %v3801 = vpop.f32.mrf.mxu0
  %3802 = vmatprep.mubr.bf16.mxu0 0
  %3803 = vmatmul.mubr.bf16.gmra.mxu0 %v3515
  %v3804 = vpop.f32.mrf.mxu0
  %v3805 = vadd.f32 0.0, %v3804
  %v3806 = vpop.f32.mrf.mxu0
  %v3807 = vpop.f32.mrf.mxu0
  %v3808 = vadd.f32 0.0, %v3807
  %v3809 = vpop.f32.mrf.mxu0
  %3810 = vmatprep.mubr.bf16.mxu0 0
  %3811 = vmatmul.mubr.bf16.gmra.mxu0 %v3518
  %v3812 = vpop.f32.mrf.mxu0
  %v3813 = vadd.f32 0.0, %v3812
  %v3814 = vpop.f32.mrf.mxu0
  %v3815 = vpop.f32.mrf.mxu0
  %v3816 = vadd.f32 0.0, %v3815
  %v3817 = vpop.f32.mrf.mxu0
  %3818 = vmatprep.mubr.bf16.mxu0 0
  %3819 = vmatmul.mubr.bf16.gmra.mxu0 %v3521
  %v3820 = vpop.f32.mrf.mxu0
  %v3821 = vadd.f32 0.0, %v3820
  %v3822 = vpop.f32.mrf.mxu0
  %v3823 = vpop.f32.mrf.mxu0
  %v3824 = vadd.f32 0.0, %v3823
  %v3825 = vpop.f32.mrf.mxu0
  %3826 = vmatprep.mubr.bf16.mxu0 0
  %3827 = vmatmul.mubr.bf16.gmra.mxu0 %v3524
  %v3828 = vpop.f32.mrf.mxu0
  %v3829 = vadd.f32 0.0, %v3828
  %v3830 = vpop.f32.mrf.mxu0
  %v3831 = vpop.f32.mrf.mxu0
  %v3832 = vadd.f32 0.0, %v3831
  %v3833 = vpop.f32.mrf.mxu0
  %3834 = vmatprep.mubr.bf16.mxu0 0
  %3835 = vmatmul.mubr.bf16.gmra.mxu0 %v3527
  %v3836 = vpop.f32.mrf.mxu0
  %v3837 = vadd.f32 0.0, %v3836
  %v3838 = vpop.f32.mrf.mxu0
  %v3839 = vpop.f32.mrf.mxu0
  %v3840 = vadd.f32 0.0, %v3839
  %v3841 = vpop.f32.mrf.mxu0
  %3842 = vmatprep.mubr.bf16.mxu0 0
  %3843 = vmatmul.mubr.bf16.gmra.mxu0 %v3530
  %v3844 = vpop.f32.mrf.mxu0
  %v3845 = vadd.f32 0.0, %v3844
  %v3846 = vpop.f32.mrf.mxu0
  %v3847 = vpop.f32.mrf.mxu0
  %v3848 = vadd.f32 0.0, %v3847
  %v3849 = vpop.f32.mrf.mxu0
  %3850 = vmatprep.mubr.bf16.mxu0 0
  %3851 = vmatmul.mubr.bf16.gmra.mxu0 %v3533
  %v3852 = vpop.f32.mrf.mxu0
  %v3853 = vadd.f32 0.0, %v3852
  %v3854 = vpop.f32.mrf.mxu0
  %v3855 = vpop.f32.mrf.mxu0
  %v3856 = vadd.f32 0.0, %v3855
  %v3857 = vpop.f32.mrf.mxu0
  %3858 = vmatprep.mubr.bf16.mxu0 0
  %3859 = vmatmul.mubr.bf16.gmra.mxu0 %v3536
  %v3860 = vpop.f32.mrf.mxu0
  %v3861 = vadd.f32 0.0, %v3860
  %v3862 = vpop.f32.mrf.mxu0
  %v3863 = vpop.f32.mrf.mxu0
  %v3864 = vadd.f32 0.0, %v3863
  %v3865 = vpop.f32.mrf.mxu0
  %3866 = vmatprep.mubr.bf16.mxu0 0
  %3867 = vmatmul.mubr.bf16.gmra.mxu0 %v3539
  %v3868 = vpop.f32.mrf.mxu0
  %v3869 = vadd.f32 0.0, %v3868
  %v3870 = vpop.f32.mrf.mxu0
  %v3871 = vpop.f32.mrf.mxu0
  %v3872 = vadd.f32 0.0, %v3871
  %v3873 = vpop.f32.mrf.mxu0
  %3874 = vmatprep.mubr.bf16.mxu0 0
  %3875 = vmatmul.mubr.bf16.gmra.mxu0 %v3542
  %v3876 = vpop.f32.mrf.mxu0
  %v3877 = vadd.f32 0.0, %v3876
  %v3878 = vpop.f32.mrf.mxu0
  %v3879 = vpop.f32.mrf.mxu0
  %v3880 = vadd.f32 0.0, %v3879
  %v3881 = vpop.f32.mrf.mxu0
  %3882 = vmatprep.mubr.bf16.mxu0 0
  %3883 = vmatmul.mubr.bf16.gmra.mxu0 %v3545
  %v3884 = vpop.f32.mrf.mxu0
  %v3885 = vadd.f32 0.0, %v3884
  %v3886 = vpop.f32.mrf.mxu0
  %v3887 = vpop.f32.mrf.mxu0
  %v3888 = vadd.f32 0.0, %v3887
  %v3889 = vpop.f32.mrf.mxu0
  %3890 = vmatprep.mubr.bf16.mxu0 0
  %3891 = vmatmul.mubr.bf16.gmra.mxu0 %v3548
  %v3892 = vpop.f32.mrf.mxu0
  %v3893 = vadd.f32 0.0, %v3892
  %v3894 = vpop.f32.mrf.mxu0
  %v3895 = vpop.f32.mrf.mxu0
  %v3896 = vadd.f32 0.0, %v3895
  %v3897 = vpop.f32.mrf.mxu0
  %3898 = vmatprep.mubr.bf16.mxu0 0
  %3899 = vmatmul.mubr.bf16.gmra.mxu0 %v3551
  %v3900 = vpop.f32.mrf.mxu0
  %v3901 = vadd.f32 0.0, %v3900
  %v3902 = vpop.f32.mrf.mxu0
  %v3903 = vpop.f32.mrf.mxu0
  %v3904 = vadd.f32 0.0, %v3903
  %v3905 = vpop.f32.mrf.mxu0
  %3906 = vmatprep.mubr.bf16.mxu0 0
  %3907 = vmatmul.mubr.bf16.gmra.mxu0 %v3554
  %v3908 = vpop.f32.mrf.mxu0
  %v3909 = vadd.f32 0.0, %v3908
  %v3910 = vpop.f32.mrf.mxu0
  %v3911 = vpop.f32.mrf.mxu0
  %v3912 = vadd.f32 0.0, %v3911
  %v3913 = vpop.f32.mrf.mxu0
  %3914 = vmatprep.mubr.bf16.mxu0 0
  %3915 = vmatmul.mubr.bf16.gmra.mxu0 %v3557
  %v3916 = vpop.f32.mrf.mxu0
  %v3917 = vadd.f32 0.0, %v3916
  %v3918 = vpop.f32.mrf.mxu0
  %v3919 = vpop.f32.mrf.mxu0
  %v3920 = vpop.f32.mrf.mxu0
  %3921 = vdwg.mxu0
  %v3922 = vadd.f32 %v3231, %v3597
  %v3923 = vadd.f32 %v3232, %v3600
  %v3924 = vadd.f32 %v3233, %v3605
  %v3925 = vadd.f32 %v3234, %v3608
  %v3926 = vadd.f32 %v3235, %v3613
  %v3927 = vadd.f32 %v3236, %v3616
  %v3928 = vadd.f32 %v3237, %v3621
  %v3929 = vadd.f32 %v3238, %v3624
  %v3930 = vadd.f32 %v3239, %v3629
  %v3931 = vadd.f32 %v3240, %v3632
  %v3932 = vadd.f32 %v3241, %v3637
  %v3933 = vadd.f32 %v3242, %v3640
  %v3934 = vadd.f32 %v3243, %v3645
  %v3935 = vadd.f32 %v3244, %v3648
  %v3936 = vadd.f32 %v3245, %v3653
  %v3937 = vadd.f32 %v3246, %v3656
  %v3938 = vadd.f32 %v3247, %v3661
  %v3939 = vadd.f32 %v3248, %v3664
  %v3940 = vadd.f32 %v3249, %v3669
  %v3941 = vadd.f32 %v3250, %v3672
  %v3942 = vadd.f32 %v3251, %v3677
  %v3943 = vadd.f32 %v3252, %v3680
  %v3944 = vadd.f32 %v3253, %v3685
  %v3945 = vadd.f32 %v3254, %v3688
  %v3946 = vadd.f32 %v3255, %v3693
  %v3947 = vadd.f32 %v3256, %v3696
  %v3948 = vadd.f32 %v3257, %v3701
  %v3949 = vadd.f32 %v3258, %v3704
  %v3950 = vadd.f32 %v3259, %v3709
  %v3951 = vadd.f32 %v3260, %v3712
  %v3952 = vadd.f32 %v3261, %v3717
  %v3953 = vadd.f32 %v3262, %v3720
  %v3954 = vadd.f32 %v3263, %v3725
  %v3955 = vadd.f32 %v3264, %v3728
  %v3956 = vadd.f32 %v3265, %v3733
  %v3957 = vadd.f32 %v3266, %v3736
  %v3958 = vadd.f32 %v3267, %v3741
  %v3959 = vadd.f32 %v3268, %v3744
  %v3960 = vadd.f32 %v3269, %v3749
  %v3961 = vadd.f32 %v3270, %v3752
  %v3962 = vadd.f32 %v3271, %v3757
  %v3963 = vadd.f32 %v3272, %v3760
  %v3964 = vadd.f32 %v3273, %v3765
  %v3965 = vadd.f32 %v3274, %v3768
  %v3966 = vadd.f32 %v3275, %v3773
  %v3967 = vadd.f32 %v3276, %v3776
  %v3968 = vadd.f32 %v3277, %v3781
  %v3969 = vadd.f32 %v3278, %v3784
  %v3970 = vadd.f32 %v3279, %v3789
  %v3971 = vadd.f32 %v3280, %v3792
  %v3972 = vadd.f32 %v3281, %v3797
  %v3973 = vadd.f32 %v3282, %v3800
  %v3974 = vadd.f32 %v3283, %v3805
  %v3975 = vadd.f32 %v3284, %v3808
  %v3976 = vadd.f32 %v3285, %v3813
  %v3977 = vadd.f32 %v3286, %v3816
  %v3978 = vadd.f32 %v3287, %v3821
  %v3979 = vadd.f32 %v3288, %v3824
  %v3980 = vadd.f32 %v3289, %v3829
  %v3981 = vadd.f32 %v3290, %v3832
  %v3982 = vadd.f32 %v3291, %v3837
  %v3983 = vadd.f32 %v3292, %v3840
  %v3984 = vadd.f32 %v3293, %v3845
  %v3985 = vadd.f32 %v3294, %v3848
  %v3986 = vadd.f32 %v3295, %v3853
  %v3987 = vadd.f32 %v3296, %v3856
  %v3988 = vadd.f32 %v3297, %v3861
  %v3989 = vadd.f32 %v3298, %v3864
  %v3990 = vadd.f32 %v3299, %v3869
  %v3991 = vadd.f32 %v3300, %v3872
  %v3992 = vadd.f32 %v3301, %v3877
  %v3993 = vadd.f32 %v3302, %v3880
  %v3994 = vadd.f32 %v3303, %v3885
  %v3995 = vadd.f32 %v3304, %v3888
  %v3996 = vadd.f32 %v3305, %v3893
  %v3997 = vadd.f32 %v3306, %v3896
  %v3998 = vadd.f32 %v3307, %v3901
  %v3999 = vadd.f32 %v3308, %v3904
  %v4000 = vadd.f32 %v3309, %v3909
  %v4001 = vadd.f32 %v3310, %v3912
  %v4002 = vadd.f32 %v3311, %v3917
  %v4003 = vld [vmem:[%s0 + $0x24] sm:$0xff]
  %v4004 = vld [vmem:[%s0 + $0x2c] sm:$0xff]
  %v4005 = vld [vmem:[%s0 + $0x34] sm:$0xff]
  %v4006 = vld [vmem:[%s0 + $0x3c] sm:$0xff]
  %v4007 = vld [vmem:[%s0 + $0x44] sm:$0xff]
  %v4008 = vld [vmem:[%s0 + $0x4c] sm:$0xff]
  %v4009 = vld [vmem:[%s0 + $0x54] sm:$0xff]
  %v4010 = vld [vmem:[%s0 + $0x5c] sm:$0xff]
  %v4011 = vld [vmem:[%s0 + $0x64] sm:$0xff]
  %v4012 = vld [vmem:[%s0 + $0x6c] sm:$0xff]
  %v4013 = vld [vmem:[%s0 + $0x74] sm:$0xff]
  %v4014 = vld [vmem:[%s0 + $0x7c] sm:$0xff]
  %v4015 = vld [vmem:[%s0 + $0x84] sm:$0xff]
  %v4016 = vld [vmem:[%s0 + $0x8c] sm:$0xff]
  %v4017 = vld [vmem:[%s0 + $0x94] sm:$0xff]
  %v4018 = vld [vmem:[%s0 + $0x9c] sm:$0xff]
  %v4019 = vld [vmem:[%s0 + $0xa4] sm:$0xff]
  %v4020 = vld [vmem:[%s0 + $0xac] sm:$0xff]
  %v4021 = vld [vmem:[%s0 + $0xb4] sm:$0xff]
  %v4022 = vld [vmem:[%s0 + $0xbc] sm:$0xff]
  %v4023 = vld [vmem:[%s0 + $0xc4] sm:$0xff]
  %v4024 = vld [vmem:[%s0 + $0xcc] sm:$0xff]
  %v4025 = vld [vmem:[%s0 + $0xd4] sm:$0xff]
  %v4026 = vld [vmem:[%s0 + $0xdc] sm:$0xff]
  %v4027 = vld [vmem:[%s0 + $0xe4] sm:$0xff]
  %v4028 = vld [vmem:[%s0 + $0xec] sm:$0xff]
  %v4029 = vld [vmem:[%s0 + $0xf4] sm:$0xff]
  %v4030 = vld [vmem:[%s0 + $0xfc] sm:$0xff]
  %v4031 = vld [vmem:[%s0 + $0x104] sm:$0xff]
  %v4032 = vld [vmem:[%s0 + $0x10c] sm:$0xff]
  %v4033 = vld [vmem:[%s0 + $0x114] sm:$0xff]
  %v4034 = vld [vmem:[%s0 + $0x11c] sm:$0xff]
  %v4035 = vld [vmem:[%s0 + $0x124] sm:$0xff]
  %v4036 = vld [vmem:[%s0 + $0x12c] sm:$0xff]
  %v4037 = vld [vmem:[%s0 + $0x134] sm:$0xff]
  %v4038 = vld [vmem:[%s0 + $0x13c] sm:$0xff]
  %v4039 = vld [vmem:[%s0 + $0x144] sm:$0xff]
  %v4040 = vld [vmem:[%s0 + $0x14c] sm:$0xff]
  %v4041 = vld [vmem:[%s0 + $0x154] sm:$0xff]
  %v4042 = vld [vmem:[%s0 + $0x15c] sm:$0xff]
  %v4043 = vld [vmem:[%s0 + $0x164] sm:$0xff]
  %v4044 = vld [vmem:[%s0 + $0x16c] sm:$0xff]
  %v4045 = vld [vmem:[%s0 + $0x174] sm:$0xff]
  %v4046 = vld [vmem:[%s0 + $0x17c] sm:$0xff]
  %v4047 = vld [vmem:[%s0 + $0x184] sm:$0xff]
  %v4048 = vld [vmem:[%s0 + $0x18c] sm:$0xff]
  %v4049 = vld [vmem:[%s0 + $0x194] sm:$0xff]
  %v4050 = vld [vmem:[%s0 + $0x19c] sm:$0xff]
  %v4051 = vld [vmem:[%s0 + $0x1a4] sm:$0xff]
  %v4052 = vld [vmem:[%s0 + $0x1ac] sm:$0xff]
  %v4053 = vld [vmem:[%s0 + $0x1b4] sm:$0xff]
  %v4054 = vld [vmem:[%s0 + $0x1bc] sm:$0xff]
  %v4055 = vld [vmem:[%s0 + $0x1c4] sm:$0xff]
  %v4056 = vld [vmem:[%s0 + $0x1cc] sm:$0xff]
  %v4057 = vld [vmem:[%s0 + $0x1d4] sm:$0xff]
  %v4058 = vld [vmem:[%s0 + $0x1dc] sm:$0xff]
  %v4059 = vld [vmem:[%s0 + $0x1e4] sm:$0xff]
  %v4060 = vld [vmem:[%s0 + $0x1ec] sm:$0xff]
  %v4061 = vld [vmem:[%s0 + $0x1f4] sm:$0xff]
  %v4062 = vld [vmem:[%s0 + $0x1fc] sm:$0xff]
  %v4063 = vld [vmem:[%s0 + $0x204] sm:$0xff]
  %v4064 = vld [vmem:[%s0 + $0x20c] sm:$0xff]
  %v4065 = vld [vmem:[%s0 + $0x214] sm:$0xff]
  %v4066 = vld [vmem:[%s0 + $0x21c] sm:$0xff]
  %v4067 = vld [vmem:[%s0 + $0x224] sm:$0xff]
  %v4068 = vld [vmem:[%s0 + $0x22c] sm:$0xff]
  %v4069 = vld [vmem:[%s0 + $0x234] sm:$0xff]
  %v4070 = vld [vmem:[%s0 + $0x23c] sm:$0xff]
  %v4071 = vld [vmem:[%s0 + $0x244] sm:$0xff]
  %v4072 = vld [vmem:[%s0 + $0x24c] sm:$0xff]
  %v4073 = vld [vmem:[%s0 + $0x254] sm:$0xff]
  %v4074 = vld [vmem:[%s0 + $0x25c] sm:$0xff]
  %v4075 = vld [vmem:[%s0 + $0x264] sm:$0xff]
  %v4076 = vld [vmem:[%s0 + $0x26c] sm:$0xff]
  %v4077 = vld [vmem:[%s0 + $0x274] sm:$0xff]
  %v4078 = vld [vmem:[%s0 + $0x27c] sm:$0xff]
  %v4079 = vld [vmem:[%s0 + $0x284] sm:$0xff]
  %v4080 = vld [vmem:[%s0 + $0x28c] sm:$0xff]
  %v4081 = vld [vmem:[%s0 + $0x294] sm:$0xff]
  %v4082 = vld [vmem:[%s0 + $0x29c] sm:$0xff]
  %v4083 = vld [vmem:[%s0 + $0x2a4] sm:$0xff]
  %v4084 = vpack.c.bf16 %v4004, %v4003
  %v4085 = vpack.c.bf16 %v4006, %v4005
  %v4086 = vpack.c.bf16 %v4008, %v4007
  %v4087 = vpack.c.bf16 %v4010, %v4009
  %v4088 = vpack.c.bf16 %v4012, %v4011
  %v4089 = vpack.c.bf16 %v4014, %v4013
  %v4090 = vpack.c.bf16 %v4016, %v4015
  %v4091 = vpack.c.bf16 %v4018, %v4017
  %v4092 = vpack.c.bf16 %v4020, %v4019
  %v4093 = vpack.c.bf16 %v4022, %v4021
  %v4094 = vpack.c.bf16 %v4024, %v4023
  %v4095 = vpack.c.bf16 %v4026, %v4025
  %v4096 = vpack.c.bf16 %v4028, %v4027
  %v4097 = vpack.c.bf16 %v4030, %v4029
  %v4098 = vpack.c.bf16 %v4032, %v4031
  %v4099 = vpack.c.bf16 %v4034, %v4033
  %v4100 = vpack.c.bf16 %v4036, %v4035
  %v4101 = vpack.c.bf16 %v4038, %v4037
  %v4102 = vpack.c.bf16 %v4040, %v4039
  %v4103 = vpack.c.bf16 %v4042, %v4041
  %v4104 = vpack.c.bf16 %v4044, %v4043
  %v4105 = vpack.c.bf16 %v4046, %v4045
  %v4106 = vpack.c.bf16 %v4048, %v4047
  %v4107 = vpack.c.bf16 %v4050, %v4049
  %v4108 = vpack.c.bf16 %v4052, %v4051
  %v4109 = vpack.c.bf16 %v4054, %v4053
  %v4110 = vpack.c.bf16 %v4056, %v4055
  %v4111 = vpack.c.bf16 %v4058, %v4057
  %v4112 = vpack.c.bf16 %v4060, %v4059
  %v4113 = vpack.c.bf16 %v4062, %v4061
  %v4114 = vpack.c.bf16 %v4064, %v4063
  %v4115 = vpack.c.bf16 %v4066, %v4065
  %v4116 = vpack.c.bf16 %v4068, %v4067
  %v4117 = vpack.c.bf16 %v4070, %v4069
  %v4118 = vpack.c.bf16 %v4072, %v4071
  %v4119 = vpack.c.bf16 %v4074, %v4073
  %v4120 = vpack.c.bf16 %v4076, %v4075
  %v4121 = vpack.c.bf16 %v4078, %v4077
  %v4122 = vpack.c.bf16 %v4080, %v4079
  %v4123 = vpack.c.bf16 %v4082, %v4081
  %v4124 = vpack.c.bf16 %v4083, %v4083
  %s4125 = scalar_lea.vmem %s1, 12
  %v4126 = vld [vmem:[%s4125] sm:$0x3]
  %v4128 = vsel %vm262, %v4084, 0
  %v4131 = vsel %vm262, %v4085, 0
  %v4134 = vsel %vm262, %v4086, 0
  %v4137 = vsel %vm262, %v4087, 0
  %v4140 = vsel %vm262, %v4088, 0
  %v4143 = vsel %vm262, %v4089, 0
  %v4146 = vsel %vm262, %v4090, 0
  %v4149 = vsel %vm262, %v4091, 0
  %v4152 = vsel %vm262, %v4092, 0
  %v4155 = vsel %vm262, %v4093, 0
  %v4158 = vsel %vm262, %v4094, 0
  %v4161 = vsel %vm262, %v4095, 0
  %v4164 = vsel %vm262, %v4096, 0
  %v4167 = vsel %vm262, %v4097, 0
  %v4170 = vsel %vm262, %v4098, 0
  %v4173 = vsel %vm262, %v4099, 0
  %v4176 = vsel %vm262, %v4100, 0
  %v4179 = vsel %vm262, %v4101, 0
  %v4182 = vsel %vm262, %v4102, 0
  %v4185 = vsel %vm262, %v4103, 0
  %v4188 = vsel %vm262, %v4104, 0
  %v4191 = vsel %vm262, %v4105, 0
  %v4194 = vsel %vm262, %v4106, 0
  %v4197 = vsel %vm262, %v4107, 0
  %v4200 = vsel %vm262, %v4108, 0
  %v4203 = vsel %vm262, %v4109, 0
  %v4206 = vsel %vm262, %v4110, 0
  %v4209 = vsel %vm262, %v4111, 0
  %v4212 = vsel %vm262, %v4112, 0
  %v4215 = vsel %vm262, %v4113, 0
  %v4218 = vsel %vm262, %v4114, 0
  %v4221 = vsel %vm262, %v4115, 0
  %v4224 = vsel %vm262, %v4116, 0
  %v4227 = vsel %vm262, %v4117, 0
  %v4230 = vsel %vm262, %v4118, 0
  %v4233 = vsel %vm262, %v4119, 0
  %v4236 = vsel %vm262, %v4120, 0
  %v4239 = vsel %vm262, %v4121, 0
  %v4242 = vsel %vm262, %v4122, 0
  %v4245 = vsel %vm262, %v4123, 0
  %v4248 = vsel %vm262, %v4124, 0
  %v4251 = vand.u32 %v4126, %v389
  %4253 = vmatprep.subr.bf16.mxu0 0
  %4254 = vmatpush1.bf16.msra.mxu0 0
  %4255 = vmatprep.subr.bf16.mxu0 0
  %4256 = vmatpush1.bf16.msra.mxu0 0
  %4257 = vmatprep.subr.bf16.mxu0 0
  %4258 = vmatpush1.bf16.msra.mxu0 0
  %4259 = vmatprep.subr.bf16.mxu0 0
  %4260 = vmatpush1.bf16.msra.mxu0 0
  %4261 = vmatprep.subr.bf16.mxu0 0
  %4262 = vmatpush1.bf16.msra.mxu0 0
  %4263 = vmatprep.subr.bf16.mxu0 0
  %4264 = vmatpush1.bf16.msra.mxu0 0
  %4265 = vmatprep.subr.bf16.mxu0 0
  %4266 = vmatpush1.bf16.msra.mxu0 0
  %4267 = vmatprep.subr.bf16.mxu0 0
  %4268 = vmatpush1.bf16.msra.mxu0 %v4251
  %4269 = vmatprep.subr.bf16.mxu0 0
  %4270 = vmatpush2.bf16.msra.mxu0 0
  %4271 = vmatprep.subr.bf16.mxu0 0
  %4272 = vmatpush2.bf16.msra.mxu0 0
  %4273 = vmatprep.subr.bf16.mxu0 0
  %4274 = vmatpush2.bf16.msra.mxu0 0
  %4275 = vmatprep.subr.bf16.mxu0 0
  %4276 = vmatpush2.bf16.msra.mxu0 0
  %4277 = vmatprep.subr.bf16.mxu0 0
  %4278 = vmatpush2.bf16.msra.mxu0 0
  %4279 = vmatprep.subr.bf16.mxu0 0
  %4280 = vmatpush2.bf16.msra.mxu0 0
  %4281 = vmatprep.subr.bf16.mxu0 0
  %4282 = vmatpush2.bf16.msra.mxu0 0
  %4283 = vmatprep.subr.bf16.mxu0 0
  %4284 = vmatpush2.bf16.msra.mxu0 0
  %4285 = vmatprep.mubr.bf16.mxu0 0
  %4286 = vmatmul.mubr.bf16.gmra.mxu0 %v4128
  %v4287 = vpop.f32.mrf.mxu0
  %v4288 = vadd.f32 0.0, %v4287
  %v4289 = vpop.f32.mrf.mxu0
  %v4290 = vpop.f32.mrf.mxu0
  %v4291 = vadd.f32 0.0, %v4290
  %v4292 = vpop.f32.mrf.mxu0
  %4293 = vmatprep.mubr.bf16.mxu0 0
  %4294 = vmatmul.mubr.bf16.gmra.mxu0 %v4131
  %v4295 = vpop.f32.mrf.mxu0
  %v4296 = vadd.f32 0.0, %v4295
  %v4297 = vpop.f32.mrf.mxu0
  %v4298 = vpop.f32.mrf.mxu0
  %v4299 = vadd.f32 0.0, %v4298
  %v4300 = vpop.f32.mrf.mxu0
  %4301 = vmatprep.mubr.bf16.mxu0 0
  %4302 = vmatmul.mubr.bf16.gmra.mxu0 %v4134
  %v4303 = vpop.f32.mrf.mxu0
  %v4304 = vadd.f32 0.0, %v4303
  %v4305 = vpop.f32.mrf.mxu0
  %v4306 = vpop.f32.mrf.mxu0
  %v4307 = vadd.f32 0.0, %v4306
  %v4308 = vpop.f32.mrf.mxu0
  %4309 = vmatprep.mubr.bf16.mxu0 0
  %4310 = vmatmul.mubr.bf16.gmra.mxu0 %v4137
  %v4311 = vpop.f32.mrf.mxu0
  %v4312 = vadd.f32 0.0, %v4311
  %v4313 = vpop.f32.mrf.mxu0
  %v4314 = vpop.f32.mrf.mxu0
  %v4315 = vadd.f32 0.0, %v4314
  %v4316 = vpop.f32.mrf.mxu0
  %4317 = vmatprep.mubr.bf16.mxu0 0
  %4318 = vmatmul.mubr.bf16.gmra.mxu0 %v4140
  %v4319 = vpop.f32.mrf.mxu0
  %v4320 = vadd.f32 0.0, %v4319
  %v4321 = vpop.f32.mrf.mxu0
  %v4322 = vpop.f32.mrf.mxu0
  %v4323 = vadd.f32 0.0, %v4322
  %v4324 = vpop.f32.mrf.mxu0
  %4325 = vmatprep.mubr.bf16.mxu0 0
  %4326 = vmatmul.mubr.bf16.gmra.mxu0 %v4143
  %v4327 = vpop.f32.mrf.mxu0
  %v4328 = vadd.f32 0.0, %v4327
  %v4329 = vpop.f32.mrf.mxu0
  %v4330 = vpop.f32.mrf.mxu0
  %v4331 = vadd.f32 0.0, %v4330
  %v4332 = vpop.f32.mrf.mxu0
  %4333 = vmatprep.mubr.bf16.mxu0 0
  %4334 = vmatmul.mubr.bf16.gmra.mxu0 %v4146
  %v4335 = vpop.f32.mrf.mxu0
  %v4336 = vadd.f32 0.0, %v4335
  %v4337 = vpop.f32.mrf.mxu0
  %v4338 = vpop.f32.mrf.mxu0
  %v4339 = vadd.f32 0.0, %v4338
  %v4340 = vpop.f32.mrf.mxu0
  %4341 = vmatprep.mubr.bf16.mxu0 0
  %4342 = vmatmul.mubr.bf16.gmra.mxu0 %v4149
  %v4343 = vpop.f32.mrf.mxu0
  %v4344 = vadd.f32 0.0, %v4343
  %v4345 = vpop.f32.mrf.mxu0
  %v4346 = vpop.f32.mrf.mxu0
  %v4347 = vadd.f32 0.0, %v4346
  %v4348 = vpop.f32.mrf.mxu0
  %4349 = vmatprep.mubr.bf16.mxu0 0
  %4350 = vmatmul.mubr.bf16.gmra.mxu0 %v4152
  %v4351 = vpop.f32.mrf.mxu0
  %v4352 = vadd.f32 0.0, %v4351
  %v4353 = vpop.f32.mrf.mxu0
  %v4354 = vpop.f32.mrf.mxu0
  %v4355 = vadd.f32 0.0, %v4354
  %v4356 = vpop.f32.mrf.mxu0
  %4357 = vmatprep.mubr.bf16.mxu0 0
  %4358 = vmatmul.mubr.bf16.gmra.mxu0 %v4155
  %v4359 = vpop.f32.mrf.mxu0
  %v4360 = vadd.f32 0.0, %v4359
  %v4361 = vpop.f32.mrf.mxu0
  %v4362 = vpop.f32.mrf.mxu0
  %v4363 = vadd.f32 0.0, %v4362
  %v4364 = vpop.f32.mrf.mxu0
  %4365 = vmatprep.mubr.bf16.mxu0 0
  %4366 = vmatmul.mubr.bf16.gmra.mxu0 %v4158
  %v4367 = vpop.f32.mrf.mxu0
  %v4368 = vadd.f32 0.0, %v4367
  %v4369 = vpop.f32.mrf.mxu0
  %v4370 = vpop.f32.mrf.mxu0
  %v4371 = vadd.f32 0.0, %v4370
  %v4372 = vpop.f32.mrf.mxu0
  %4373 = vmatprep.mubr.bf16.mxu0 0
  %4374 = vmatmul.mubr.bf16.gmra.mxu0 %v4161
  %v4375 = vpop.f32.mrf.mxu0
  %v4376 = vadd.f32 0.0, %v4375
  %v4377 = vpop.f32.mrf.mxu0
  %v4378 = vpop.f32.mrf.mxu0
  %v4379 = vadd.f32 0.0, %v4378
  %v4380 = vpop.f32.mrf.mxu0
  %4381 = vmatprep.mubr.bf16.mxu0 0
  %4382 = vmatmul.mubr.bf16.gmra.mxu0 %v4164
  %v4383 = vpop.f32.mrf.mxu0
  %v4384 = vadd.f32 0.0, %v4383
  %v4385 = vpop.f32.mrf.mxu0
  %v4386 = vpop.f32.mrf.mxu0
  %v4387 = vadd.f32 0.0, %v4386
  %v4388 = vpop.f32.mrf.mxu0
  %4389 = vmatprep.mubr.bf16.mxu0 0
  %4390 = vmatmul.mubr.bf16.gmra.mxu0 %v4167
  %v4391 = vpop.f32.mrf.mxu0
  %v4392 = vadd.f32 0.0, %v4391
  %v4393 = vpop.f32.mrf.mxu0
  %v4394 = vpop.f32.mrf.mxu0
  %v4395 = vadd.f32 0.0, %v4394
  %v4396 = vpop.f32.mrf.mxu0
  %4397 = vmatprep.mubr.bf16.mxu0 0
  %4398 = vmatmul.mubr.bf16.gmra.mxu0 %v4170
  %v4399 = vpop.f32.mrf.mxu0
  %v4400 = vadd.f32 0.0, %v4399
  %v4401 = vpop.f32.mrf.mxu0
  %v4402 = vpop.f32.mrf.mxu0
  %v4403 = vadd.f32 0.0, %v4402
  %v4404 = vpop.f32.mrf.mxu0
  %4405 = vmatprep.mubr.bf16.mxu0 0
  %4406 = vmatmul.mubr.bf16.gmra.mxu0 %v4173
  %v4407 = vpop.f32.mrf.mxu0
  %v4408 = vadd.f32 0.0, %v4407
  %v4409 = vpop.f32.mrf.mxu0
  %v4410 = vpop.f32.mrf.mxu0
  %v4411 = vadd.f32 0.0, %v4410
  %v4412 = vpop.f32.mrf.mxu0
  %4413 = vmatprep.mubr.bf16.mxu0 0
  %4414 = vmatmul.mubr.bf16.gmra.mxu0 %v4176
  %v4415 = vpop.f32.mrf.mxu0
  %v4416 = vadd.f32 0.0, %v4415
  %v4417 = vpop.f32.mrf.mxu0
  %v4418 = vpop.f32.mrf.mxu0
  %v4419 = vadd.f32 0.0, %v4418
  %v4420 = vpop.f32.mrf.mxu0
  %4421 = vmatprep.mubr.bf16.mxu0 0
  %4422 = vmatmul.mubr.bf16.gmra.mxu0 %v4179
  %v4423 = vpop.f32.mrf.mxu0
  %v4424 = vadd.f32 0.0, %v4423
  %v4425 = vpop.f32.mrf.mxu0
  %v4426 = vpop.f32.mrf.mxu0
  %v4427 = vadd.f32 0.0, %v4426
  %v4428 = vpop.f32.mrf.mxu0
  %4429 = vmatprep.mubr.bf16.mxu0 0
  %4430 = vmatmul.mubr.bf16.gmra.mxu0 %v4182
  %v4431 = vpop.f32.mrf.mxu0
  %v4432 = vadd.f32 0.0, %v4431
  %v4433 = vpop.f32.mrf.mxu0
  %v4434 = vpop.f32.mrf.mxu0
  %v4435 = vadd.f32 0.0, %v4434
  %v4436 = vpop.f32.mrf.mxu0
  %4437 = vmatprep.mubr.bf16.mxu0 0
  %4438 = vmatmul.mubr.bf16.gmra.mxu0 %v4185
  %v4439 = vpop.f32.mrf.mxu0
  %v4440 = vadd.f32 0.0, %v4439
  %v4441 = vpop.f32.mrf.mxu0
  %v4442 = vpop.f32.mrf.mxu0
  %v4443 = vadd.f32 0.0, %v4442
  %v4444 = vpop.f32.mrf.mxu0
  %4445 = vmatprep.mubr.bf16.mxu0 0
  %4446 = vmatmul.mubr.bf16.gmra.mxu0 %v4188
  %v4447 = vpop.f32.mrf.mxu0
  %v4448 = vadd.f32 0.0, %v4447
  %v4449 = vpop.f32.mrf.mxu0
  %v4450 = vpop.f32.mrf.mxu0
  %v4451 = vadd.f32 0.0, %v4450
  %v4452 = vpop.f32.mrf.mxu0
  %4453 = vmatprep.mubr.bf16.mxu0 0
  %4454 = vmatmul.mubr.bf16.gmra.mxu0 %v4191
  %v4455 = vpop.f32.mrf.mxu0
  %v4456 = vadd.f32 0.0, %v4455
  %v4457 = vpop.f32.mrf.mxu0
  %v4458 = vpop.f32.mrf.mxu0
  %v4459 = vadd.f32 0.0, %v4458
  %v4460 = vpop.f32.mrf.mxu0
  %4461 = vmatprep.mubr.bf16.mxu0 0
  %4462 = vmatmul.mubr.bf16.gmra.mxu0 %v4194
  %v4463 = vpop.f32.mrf.mxu0
  %v4464 = vadd.f32 0.0, %v4463
  %v4465 = vpop.f32.mrf.mxu0
  %v4466 = vpop.f32.mrf.mxu0
  %v4467 = vadd.f32 0.0, %v4466
  %v4468 = vpop.f32.mrf.mxu0
  %4469 = vmatprep.mubr.bf16.mxu0 0
  %4470 = vmatmul.mubr.bf16.gmra.mxu0 %v4197
  %v4471 = vpop.f32.mrf.mxu0
  %v4472 = vadd.f32 0.0, %v4471
  %v4473 = vpop.f32.mrf.mxu0
  %v4474 = vpop.f32.mrf.mxu0
  %v4475 = vadd.f32 0.0, %v4474
  %v4476 = vpop.f32.mrf.mxu0
  %4477 = vmatprep.mubr.bf16.mxu0 0
  %4478 = vmatmul.mubr.bf16.gmra.mxu0 %v4200
  %v4479 = vpop.f32.mrf.mxu0
  %v4480 = vadd.f32 0.0, %v4479
  %v4481 = vpop.f32.mrf.mxu0
  %v4482 = vpop.f32.mrf.mxu0
  %v4483 = vadd.f32 0.0, %v4482
  %v4484 = vpop.f32.mrf.mxu0
  %4485 = vmatprep.mubr.bf16.mxu0 0
  %4486 = vmatmul.mubr.bf16.gmra.mxu0 %v4203
  %v4487 = vpop.f32.mrf.mxu0
  %v4488 = vadd.f32 0.0, %v4487
  %v4489 = vpop.f32.mrf.mxu0
  %v4490 = vpop.f32.mrf.mxu0
  %v4491 = vadd.f32 0.0, %v4490
  %v4492 = vpop.f32.mrf.mxu0
  %4493 = vmatprep.mubr.bf16.mxu0 0
  %4494 = vmatmul.mubr.bf16.gmra.mxu0 %v4206
  %v4495 = vpop.f32.mrf.mxu0
  %v4496 = vadd.f32 0.0, %v4495
  %v4497 = vpop.f32.mrf.mxu0
  %v4498 = vpop.f32.mrf.mxu0
  %v4499 = vadd.f32 0.0, %v4498
  %v4500 = vpop.f32.mrf.mxu0
  %4501 = vmatprep.mubr.bf16.mxu0 0
  %4502 = vmatmul.mubr.bf16.gmra.mxu0 %v4209
  %v4503 = vpop.f32.mrf.mxu0
  %v4504 = vadd.f32 0.0, %v4503
  %v4505 = vpop.f32.mrf.mxu0
  %v4506 = vpop.f32.mrf.mxu0
  %v4507 = vadd.f32 0.0, %v4506
  %v4508 = vpop.f32.mrf.mxu0
  %4509 = vmatprep.mubr.bf16.mxu0 0
  %4510 = vmatmul.mubr.bf16.gmra.mxu0 %v4212
  %v4511 = vpop.f32.mrf.mxu0
  %v4512 = vadd.f32 0.0, %v4511
  %v4513 = vpop.f32.mrf.mxu0
  %v4514 = vpop.f32.mrf.mxu0
  %v4515 = vadd.f32 0.0, %v4514
  %v4516 = vpop.f32.mrf.mxu0
  %4517 = vmatprep.mubr.bf16.mxu0 0
  %4518 = vmatmul.mubr.bf16.gmra.mxu0 %v4215
  %v4519 = vpop.f32.mrf.mxu0
  %v4520 = vadd.f32 0.0, %v4519
  %v4521 = vpop.f32.mrf.mxu0
  %v4522 = vpop.f32.mrf.mxu0
  %v4523 = vadd.f32 0.0, %v4522
  %v4524 = vpop.f32.mrf.mxu0
  %4525 = vmatprep.mubr.bf16.mxu0 0
  %4526 = vmatmul.mubr.bf16.gmra.mxu0 %v4218
  %v4527 = vpop.f32.mrf.mxu0
  %v4528 = vadd.f32 0.0, %v4527
  %v4529 = vpop.f32.mrf.mxu0
  %v4530 = vpop.f32.mrf.mxu0
  %v4531 = vadd.f32 0.0, %v4530
  %v4532 = vpop.f32.mrf.mxu0
  %4533 = vmatprep.mubr.bf16.mxu0 0
  %4534 = vmatmul.mubr.bf16.gmra.mxu0 %v4221
  %v4535 = vpop.f32.mrf.mxu0
  %v4536 = vadd.f32 0.0, %v4535
  %v4537 = vpop.f32.mrf.mxu0
  %v4538 = vpop.f32.mrf.mxu0
  %v4539 = vadd.f32 0.0, %v4538
  %v4540 = vpop.f32.mrf.mxu0
  %4541 = vmatprep.mubr.bf16.mxu0 0
  %4542 = vmatmul.mubr.bf16.gmra.mxu0 %v4224
  %v4543 = vpop.f32.mrf.mxu0
  %v4544 = vadd.f32 0.0, %v4543
  %v4545 = vpop.f32.mrf.mxu0
  %v4546 = vpop.f32.mrf.mxu0
  %v4547 = vadd.f32 0.0, %v4546
  %v4548 = vpop.f32.mrf.mxu0
  %4549 = vmatprep.mubr.bf16.mxu0 0
  %4550 = vmatmul.mubr.bf16.gmra.mxu0 %v4227
  %v4551 = vpop.f32.mrf.mxu0
  %v4552 = vadd.f32 0.0, %v4551
  %v4553 = vpop.f32.mrf.mxu0
  %v4554 = vpop.f32.mrf.mxu0
  %v4555 = vadd.f32 0.0, %v4554
  %v4556 = vpop.f32.mrf.mxu0
  %4557 = vmatprep.mubr.bf16.mxu0 0
  %4558 = vmatmul.mubr.bf16.gmra.mxu0 %v4230
  %v4559 = vpop.f32.mrf.mxu0
  %v4560 = vadd.f32 0.0, %v4559
  %v4561 = vpop.f32.mrf.mxu0
  %v4562 = vpop.f32.mrf.mxu0
  %v4563 = vadd.f32 0.0, %v4562
  %v4564 = vpop.f32.mrf.mxu0
  %4565 = vmatprep.mubr.bf16.mxu0 0
  %4566 = vmatmul.mubr.bf16.gmra.mxu0 %v4233
  %v4567 = vpop.f32.mrf.mxu0
  %v4568 = vadd.f32 0.0, %v4567
  %v4569 = vpop.f32.mrf.mxu0
  %v4570 = vpop.f32.mrf.mxu0
  %v4571 = vadd.f32 0.0, %v4570
  %v4572 = vpop.f32.mrf.mxu0
  %4573 = vmatprep.mubr.bf16.mxu0 0
  %4574 = vmatmul.mubr.bf16.gmra.mxu0 %v4236
  %v4575 = vpop.f32.mrf.mxu0
  %v4576 = vadd.f32 0.0, %v4575
  %v4577 = vpop.f32.mrf.mxu0
  %v4578 = vpop.f32.mrf.mxu0
  %v4579 = vadd.f32 0.0, %v4578
  %v4580 = vpop.f32.mrf.mxu0
  %4581 = vmatprep.mubr.bf16.mxu0 0
  %4582 = vmatmul.mubr.bf16.gmra.mxu0 %v4239
  %v4583 = vpop.f32.mrf.mxu0
  %v4584 = vadd.f32 0.0, %v4583
  %v4585 = vpop.f32.mrf.mxu0
  %v4586 = vpop.f32.mrf.mxu0
  %v4587 = vadd.f32 0.0, %v4586
  %v4588 = vpop.f32.mrf.mxu0
  %4589 = vmatprep.mubr.bf16.mxu0 0
  %4590 = vmatmul.mubr.bf16.gmra.mxu0 %v4242
  %v4591 = vpop.f32.mrf.mxu0
  %v4592 = vadd.f32 0.0, %v4591
  %v4593 = vpop.f32.mrf.mxu0
  %v4594 = vpop.f32.mrf.mxu0
  %v4595 = vadd.f32 0.0, %v4594
  %v4596 = vpop.f32.mrf.mxu0
  %4597 = vmatprep.mubr.bf16.mxu0 0
  %4598 = vmatmul.mubr.bf16.gmra.mxu0 %v4245
  %v4599 = vpop.f32.mrf.mxu0
  %v4600 = vadd.f32 0.0, %v4599
  %v4601 = vpop.f32.mrf.mxu0
  %v4602 = vpop.f32.mrf.mxu0
  %v4603 = vadd.f32 0.0, %v4602
  %v4604 = vpop.f32.mrf.mxu0
  %4605 = vmatprep.mubr.bf16.mxu0 0
  %4606 = vmatmul.mubr.bf16.gmra.mxu0 %v4248
  %v4607 = vpop.f32.mrf.mxu0
  %v4608 = vadd.f32 0.0, %v4607
  %v4609 = vpop.f32.mrf.mxu0
  %v4610 = vpop.f32.mrf.mxu0
  %v4611 = vpop.f32.mrf.mxu0
  %4612 = vdwg.mxu0
  %v4613 = vadd.f32 %v3922, %v4288
  %v4614 = vadd.f32 %v3923, %v4291
  %v4615 = vadd.f32 %v3924, %v4296
  %v4616 = vadd.f32 %v3925, %v4299
  %v4617 = vadd.f32 %v3926, %v4304
  %v4618 = vadd.f32 %v3927, %v4307
  %v4619 = vadd.f32 %v3928, %v4312
  %v4620 = vadd.f32 %v3929, %v4315
  %v4621 = vadd.f32 %v3930, %v4320
  %v4622 = vadd.f32 %v3931, %v4323
  %v4623 = vadd.f32 %v3932, %v4328
  %v4624 = vadd.f32 %v3933, %v4331
  %v4625 = vadd.f32 %v3934, %v4336
  %v4626 = vadd.f32 %v3935, %v4339
  %v4627 = vadd.f32 %v3936, %v4344
  %v4628 = vadd.f32 %v3937, %v4347
  %v4629 = vadd.f32 %v3938, %v4352
  %v4630 = vadd.f32 %v3939, %v4355
  %v4631 = vadd.f32 %v3940, %v4360
  %v4632 = vadd.f32 %v3941, %v4363
  %v4633 = vadd.f32 %v3942, %v4368
  %v4634 = vadd.f32 %v3943, %v4371
  %v4635 = vadd.f32 %v3944, %v4376
  %v4636 = vadd.f32 %v3945, %v4379
  %v4637 = vadd.f32 %v3946, %v4384
  %v4638 = vadd.f32 %v3947, %v4387
  %v4639 = vadd.f32 %v3948, %v4392
  %v4640 = vadd.f32 %v3949, %v4395
  %v4641 = vadd.f32 %v3950, %v4400
  %v4642 = vadd.f32 %v3951, %v4403
  %v4643 = vadd.f32 %v3952, %v4408
  %v4644 = vadd.f32 %v3953, %v4411
  %v4645 = vadd.f32 %v3954, %v4416
  %v4646 = vadd.f32 %v3955, %v4419
  %v4647 = vadd.f32 %v3956, %v4424
  %v4648 = vadd.f32 %v3957, %v4427
  %v4649 = vadd.f32 %v3958, %v4432
  %v4650 = vadd.f32 %v3959, %v4435
  %v4651 = vadd.f32 %v3960, %v4440
  %v4652 = vadd.f32 %v3961, %v4443
  %v4653 = vadd.f32 %v3962, %v4448
  %v4654 = vadd.f32 %v3963, %v4451
  %v4655 = vadd.f32 %v3964, %v4456
  %v4656 = vadd.f32 %v3965, %v4459
  %v4657 = vadd.f32 %v3966, %v4464
  %v4658 = vadd.f32 %v3967, %v4467
  %v4659 = vadd.f32 %v3968, %v4472
  %v4660 = vadd.f32 %v3969, %v4475
  %v4661 = vadd.f32 %v3970, %v4480
  %v4662 = vadd.f32 %v3971, %v4483
  %v4663 = vadd.f32 %v3972, %v4488
  %v4664 = vadd.f32 %v3973, %v4491
  %v4665 = vadd.f32 %v3974, %v4496
  %v4666 = vadd.f32 %v3975, %v4499
  %v4667 = vadd.f32 %v3976, %v4504
  %v4668 = vadd.f32 %v3977, %v4507
  %v4669 = vadd.f32 %v3978, %v4512
  %v4670 = vadd.f32 %v3979, %v4515
  %v4671 = vadd.f32 %v3980, %v4520
  %v4672 = vadd.f32 %v3981, %v4523
  %v4673 = vadd.f32 %v3982, %v4528
  %v4674 = vadd.f32 %v3983, %v4531
  %v4675 = vadd.f32 %v3984, %v4536
  %v4676 = vadd.f32 %v3985, %v4539
  %v4677 = vadd.f32 %v3986, %v4544
  %v4678 = vadd.f32 %v3987, %v4547
  %v4679 = vadd.f32 %v3988, %v4552
  %v4680 = vadd.f32 %v3989, %v4555
  %v4681 = vadd.f32 %v3990, %v4560
  %v4682 = vadd.f32 %v3991, %v4563
  %v4683 = vadd.f32 %v3992, %v4568
  %v4684 = vadd.f32 %v3993, %v4571
  %v4685 = vadd.f32 %v3994, %v4576
  %v4686 = vadd.f32 %v3995, %v4579
  %v4687 = vadd.f32 %v3996, %v4584
  %v4688 = vadd.f32 %v3997, %v4587
  %v4689 = vadd.f32 %v3998, %v4592
  %v4690 = vadd.f32 %v3999, %v4595
  %v4691 = vadd.f32 %v4000, %v4600
  %v4692 = vadd.f32 %v4001, %v4603
  %v4693 = vadd.f32 %v4002, %v4608
  %v4694 = vld [vmem:[%s0 + $0x25] sm:$0xff]
  %v4695 = vld [vmem:[%s0 + $0x2d] sm:$0xff]
  %v4696 = vld [vmem:[%s0 + $0x35] sm:$0xff]
  %v4697 = vld [vmem:[%s0 + $0x3d] sm:$0xff]
  %v4698 = vld [vmem:[%s0 + $0x45] sm:$0xff]
  %v4699 = vld [vmem:[%s0 + $0x4d] sm:$0xff]
  %v4700 = vld [vmem:[%s0 + $0x55] sm:$0xff]
  %v4701 = vld [vmem:[%s0 + $0x5d] sm:$0xff]
  %v4702 = vld [vmem:[%s0 + $0x65] sm:$0xff]
  %v4703 = vld [vmem:[%s0 + $0x6d] sm:$0xff]
  %v4704 = vld [vmem:[%s0 + $0x75] sm:$0xff]
  %v4705 = vld [vmem:[%s0 + $0x7d] sm:$0xff]
  %v4706 = vld [vmem:[%s0 + $0x85] sm:$0xff]
  %v4707 = vld [vmem:[%s0 + $0x8d] sm:$0xff]
  %v4708 = vld [vmem:[%s0 + $0x95] sm:$0xff]
  %v4709 = vld [vmem:[%s0 + $0x9d] sm:$0xff]
  %v4710 = vld [vmem:[%s0 + $0xa5] sm:$0xff]
  %v4711 = vld [vmem:[%s0 + $0xad] sm:$0xff]
  %v4712 = vld [vmem:[%s0 + $0xb5] sm:$0xff]
  %v4713 = vld [vmem:[%s0 + $0xbd] sm:$0xff]
  %v4714 = vld [vmem:[%s0 + $0xc5] sm:$0xff]
  %v4715 = vld [vmem:[%s0 + $0xcd] sm:$0xff]
  %v4716 = vld [vmem:[%s0 + $0xd5] sm:$0xff]
  %v4717 = vld [vmem:[%s0 + $0xdd] sm:$0xff]
  %v4718 = vld [vmem:[%s0 + $0xe5] sm:$0xff]
  %v4719 = vld [vmem:[%s0 + $0xed] sm:$0xff]
  %v4720 = vld [vmem:[%s0 + $0xf5] sm:$0xff]
  %v4721 = vld [vmem:[%s0 + $0xfd] sm:$0xff]
  %v4722 = vld [vmem:[%s0 + $0x105] sm:$0xff]
  %v4723 = vld [vmem:[%s0 + $0x10d] sm:$0xff]
  %v4724 = vld [vmem:[%s0 + $0x115] sm:$0xff]
  %v4725 = vld [vmem:[%s0 + $0x11d] sm:$0xff]
  %v4726 = vld [vmem:[%s0 + $0x125] sm:$0xff]
  %v4727 = vld [vmem:[%s0 + $0x12d] sm:$0xff]
  %v4728 = vld [vmem:[%s0 + $0x135] sm:$0xff]
  %v4729 = vld [vmem:[%s0 + $0x13d] sm:$0xff]
  %v4730 = vld [vmem:[%s0 + $0x145] sm:$0xff]
  %v4731 = vld [vmem:[%s0 + $0x14d] sm:$0xff]
  %v4732 = vld [vmem:[%s0 + $0x155] sm:$0xff]
  %v4733 = vld [vmem:[%s0 + $0x15d] sm:$0xff]
  %v4734 = vld [vmem:[%s0 + $0x165] sm:$0xff]
  %v4735 = vld [vmem:[%s0 + $0x16d] sm:$0xff]
  %v4736 = vld [vmem:[%s0 + $0x175] sm:$0xff]
  %v4737 = vld [vmem:[%s0 + $0x17d] sm:$0xff]
  %v4738 = vld [vmem:[%s0 + $0x185] sm:$0xff]
  %v4739 = vld [vmem:[%s0 + $0x18d] sm:$0xff]
  %v4740 = vld [vmem:[%s0 + $0x195] sm:$0xff]
  %v4741 = vld [vmem:[%s0 + $0x19d] sm:$0xff]
  %v4742 = vld [vmem:[%s0 + $0x1a5] sm:$0xff]
  %v4743 = vld [vmem:[%s0 + $0x1ad] sm:$0xff]
  %v4744 = vld [vmem:[%s0 + $0x1b5] sm:$0xff]
  %v4745 = vld [vmem:[%s0 + $0x1bd] sm:$0xff]
  %v4746 = vld [vmem:[%s0 + $0x1c5] sm:$0xff]
  %v4747 = vld [vmem:[%s0 + $0x1cd] sm:$0xff]
  %v4748 = vld [vmem:[%s0 + $0x1d5] sm:$0xff]
  %v4749 = vld [vmem:[%s0 + $0x1dd] sm:$0xff]
  %v4750 = vld [vmem:[%s0 + $0x1e5] sm:$0xff]
  %v4751 = vld [vmem:[%s0 + $0x1ed] sm:$0xff]
  %v4752 = vld [vmem:[%s0 + $0x1f5] sm:$0xff]
  %v4753 = vld [vmem:[%s0 + $0x1fd] sm:$0xff]
  %v4754 = vld [vmem:[%s0 + $0x205] sm:$0xff]
  %v4755 = vld [vmem:[%s0 + $0x20d] sm:$0xff]
  %v4756 = vld [vmem:[%s0 + $0x215] sm:$0xff]
  %v4757 = vld [vmem:[%s0 + $0x21d] sm:$0xff]
  %v4758 = vld [vmem:[%s0 + $0x225] sm:$0xff]
  %v4759 = vld [vmem:[%s0 + $0x22d] sm:$0xff]
  %v4760 = vld [vmem:[%s0 + $0x235] sm:$0xff]
  %v4761 = vld [vmem:[%s0 + $0x23d] sm:$0xff]
  %v4762 = vld [vmem:[%s0 + $0x245] sm:$0xff]
  %v4763 = vld [vmem:[%s0 + $0x24d] sm:$0xff]
  %v4764 = vld [vmem:[%s0 + $0x255] sm:$0xff]
  %v4765 = vld [vmem:[%s0 + $0x25d] sm:$0xff]
  %v4766 = vld [vmem:[%s0 + $0x265] sm:$0xff]
  %v4767 = vld [vmem:[%s0 + $0x26d] sm:$0xff]
  %v4768 = vld [vmem:[%s0 + $0x275] sm:$0xff]
  %v4769 = vld [vmem:[%s0 + $0x27d] sm:$0xff]
  %v4770 = vld [vmem:[%s0 + $0x285] sm:$0xff]
  %v4771 = vld [vmem:[%s0 + $0x28d] sm:$0xff]
  %v4772 = vld [vmem:[%s0 + $0x295] sm:$0xff]
  %v4773 = vld [vmem:[%s0 + $0x29d] sm:$0xff]
  %v4774 = vld [vmem:[%s0 + $0x2a5] sm:$0xff]
  %v4775 = vpack.c.bf16 %v4695, %v4694
  %v4776 = vpack.c.bf16 %v4697, %v4696
  %v4777 = vpack.c.bf16 %v4699, %v4698
  %v4778 = vpack.c.bf16 %v4701, %v4700
  %v4779 = vpack.c.bf16 %v4703, %v4702
  %v4780 = vpack.c.bf16 %v4705, %v4704
  %v4781 = vpack.c.bf16 %v4707, %v4706
  %v4782 = vpack.c.bf16 %v4709, %v4708
  %v4783 = vpack.c.bf16 %v4711, %v4710
  %v4784 = vpack.c.bf16 %v4713, %v4712
  %v4785 = vpack.c.bf16 %v4715, %v4714
  %v4786 = vpack.c.bf16 %v4717, %v4716
  %v4787 = vpack.c.bf16 %v4719, %v4718
  %v4788 = vpack.c.bf16 %v4721, %v4720
  %v4789 = vpack.c.bf16 %v4723, %v4722
  %v4790 = vpack.c.bf16 %v4725, %v4724
  %v4791 = vpack.c.bf16 %v4727, %v4726
  %v4792 = vpack.c.bf16 %v4729, %v4728
  %v4793 = vpack.c.bf16 %v4731, %v4730
  %v4794 = vpack.c.bf16 %v4733, %v4732
  %v4795 = vpack.c.bf16 %v4735, %v4734
  %v4796 = vpack.c.bf16 %v4737, %v4736
  %v4797 = vpack.c.bf16 %v4739, %v4738
  %v4798 = vpack.c.bf16 %v4741, %v4740
  %v4799 = vpack.c.bf16 %v4743, %v4742
  %v4800 = vpack.c.bf16 %v4745, %v4744
  %v4801 = vpack.c.bf16 %v4747, %v4746
  %v4802 = vpack.c.bf16 %v4749, %v4748
  %v4803 = vpack.c.bf16 %v4751, %v4750
  %v4804 = vpack.c.bf16 %v4753, %v4752
  %v4805 = vpack.c.bf16 %v4755, %v4754
  %v4806 = vpack.c.bf16 %v4757, %v4756
  %v4807 = vpack.c.bf16 %v4759, %v4758
  %v4808 = vpack.c.bf16 %v4761, %v4760
  %v4809 = vpack.c.bf16 %v4763, %v4762
  %v4810 = vpack.c.bf16 %v4765, %v4764
  %v4811 = vpack.c.bf16 %v4767, %v4766
  %v4812 = vpack.c.bf16 %v4769, %v4768
  %v4813 = vpack.c.bf16 %v4771, %v4770
  %v4814 = vpack.c.bf16 %v4773, %v4772
  %v4815 = vpack.c.bf16 %v4774, %v4774
  %s4816 = scalar_lea.vmem %s1, 14
  %v4817 = vld [vmem:[%s4816] sm:$0x3]
  %v4819 = vsel %vm262, %v4775, 0
  %v4822 = vsel %vm262, %v4776, 0
  %v4825 = vsel %vm262, %v4777, 0
  %v4828 = vsel %vm262, %v4778, 0
  %v4831 = vsel %vm262, %v4779, 0
  %v4834 = vsel %vm262, %v4780, 0
  %v4837 = vsel %vm262, %v4781, 0
  %v4840 = vsel %vm262, %v4782, 0
  %v4843 = vsel %vm262, %v4783, 0
  %v4846 = vsel %vm262, %v4784, 0
  %v4849 = vsel %vm262, %v4785, 0
  %v4852 = vsel %vm262, %v4786, 0
  %v4855 = vsel %vm262, %v4787, 0
  %v4858 = vsel %vm262, %v4788, 0
  %v4861 = vsel %vm262, %v4789, 0
  %v4864 = vsel %vm262, %v4790, 0
  %v4867 = vsel %vm262, %v4791, 0
  %v4870 = vsel %vm262, %v4792, 0
  %v4873 = vsel %vm262, %v4793, 0
  %v4876 = vsel %vm262, %v4794, 0
  %v4879 = vsel %vm262, %v4795, 0
  %v4882 = vsel %vm262, %v4796, 0
  %v4885 = vsel %vm262, %v4797, 0
  %v4888 = vsel %vm262, %v4798, 0
  %v4891 = vsel %vm262, %v4799, 0
  %v4894 = vsel %vm262, %v4800, 0
  %v4897 = vsel %vm262, %v4801, 0
  %v4900 = vsel %vm262, %v4802, 0
  %v4903 = vsel %vm262, %v4803, 0
  %v4906 = vsel %vm262, %v4804, 0
  %v4909 = vsel %vm262, %v4805, 0
  %v4912 = vsel %vm262, %v4806, 0
  %v4915 = vsel %vm262, %v4807, 0
  %v4918 = vsel %vm262, %v4808, 0
  %v4921 = vsel %vm262, %v4809, 0
  %v4924 = vsel %vm262, %v4810, 0
  %v4927 = vsel %vm262, %v4811, 0
  %v4930 = vsel %vm262, %v4812, 0
  %v4933 = vsel %vm262, %v4813, 0
  %v4936 = vsel %vm262, %v4814, 0
  %v4939 = vsel %vm262, %v4815, 0
  %v4942 = vand.u32 %v4817, %v389
  %4944 = vmatprep.subr.bf16.mxu0 0
  %4945 = vmatpush1.bf16.msra.mxu0 0
  %4946 = vmatprep.subr.bf16.mxu0 0
  %4947 = vmatpush1.bf16.msra.mxu0 0
  %4948 = vmatprep.subr.bf16.mxu0 0
  %4949 = vmatpush1.bf16.msra.mxu0 0
  %4950 = vmatprep.subr.bf16.mxu0 0
  %4951 = vmatpush1.bf16.msra.mxu0 0
  %4952 = vmatprep.subr.bf16.mxu0 0
  %4953 = vmatpush1.bf16.msra.mxu0 0
  %4954 = vmatprep.subr.bf16.mxu0 0
  %4955 = vmatpush1.bf16.msra.mxu0 0
  %4956 = vmatprep.subr.bf16.mxu0 0
  %4957 = vmatpush1.bf16.msra.mxu0 0
  %4958 = vmatprep.subr.bf16.mxu0 0
  %4959 = vmatpush1.bf16.msra.mxu0 %v4942
  %4960 = vmatprep.subr.bf16.mxu0 0
  %4961 = vmatpush2.bf16.msra.mxu0 0
  %4962 = vmatprep.subr.bf16.mxu0 0
  %4963 = vmatpush2.bf16.msra.mxu0 0
  %4964 = vmatprep.subr.bf16.mxu0 0
  %4965 = vmatpush2.bf16.msra.mxu0 0
  %4966 = vmatprep.subr.bf16.mxu0 0
  %4967 = vmatpush2.bf16.msra.mxu0 0
  %4968 = vmatprep.subr.bf16.mxu0 0
  %4969 = vmatpush2.bf16.msra.mxu0 0
  %4970 = vmatprep.subr.bf16.mxu0 0
  %4971 = vmatpush2.bf16.msra.mxu0 0
  %4972 = vmatprep.subr.bf16.mxu0 0
  %4973 = vmatpush2.bf16.msra.mxu0 0
  %4974 = vmatprep.subr.bf16.mxu0 0
  %4975 = vmatpush2.bf16.msra.mxu0 0
  %4976 = vmatprep.mubr.bf16.mxu0 0
  %4977 = vmatmul.mubr.bf16.gmra.mxu0 %v4819
  %v4978 = vpop.f32.mrf.mxu0
  %v4979 = vadd.f32 0.0, %v4978
  %v4980 = vpop.f32.mrf.mxu0
  %v4981 = vpop.f32.mrf.mxu0
  %v4982 = vadd.f32 0.0, %v4981
  %v4983 = vpop.f32.mrf.mxu0
  %4984 = vmatprep.mubr.bf16.mxu0 0
  %4985 = vmatmul.mubr.bf16.gmra.mxu0 %v4822
  %v4986 = vpop.f32.mrf.mxu0
  %v4987 = vadd.f32 0.0, %v4986
  %v4988 = vpop.f32.mrf.mxu0
  %v4989 = vpop.f32.mrf.mxu0
  %v4990 = vadd.f32 0.0, %v4989
  %v4991 = vpop.f32.mrf.mxu0
  %4992 = vmatprep.mubr.bf16.mxu0 0
  %4993 = vmatmul.mubr.bf16.gmra.mxu0 %v4825
  %v4994 = vpop.f32.mrf.mxu0
  %v4995 = vadd.f32 0.0, %v4994
  %v4996 = vpop.f32.mrf.mxu0
  %v4997 = vpop.f32.mrf.mxu0
  %v4998 = vadd.f32 0.0, %v4997
  %v4999 = vpop.f32.mrf.mxu0
  %5000 = vmatprep.mubr.bf16.mxu0 0
  %5001 = vmatmul.mubr.bf16.gmra.mxu0 %v4828
  %v5002 = vpop.f32.mrf.mxu0
  %v5003 = vadd.f32 0.0, %v5002
  %v5004 = vpop.f32.mrf.mxu0
  %v5005 = vpop.f32.mrf.mxu0
  %v5006 = vadd.f32 0.0, %v5005
  %v5007 = vpop.f32.mrf.mxu0
  %5008 = vmatprep.mubr.bf16.mxu0 0
  %5009 = vmatmul.mubr.bf16.gmra.mxu0 %v4831
  %v5010 = vpop.f32.mrf.mxu0
  %v5011 = vadd.f32 0.0, %v5010
  %v5012 = vpop.f32.mrf.mxu0
  %v5013 = vpop.f32.mrf.mxu0
  %v5014 = vadd.f32 0.0, %v5013
  %v5015 = vpop.f32.mrf.mxu0
  %5016 = vmatprep.mubr.bf16.mxu0 0
  %5017 = vmatmul.mubr.bf16.gmra.mxu0 %v4834
  %v5018 = vpop.f32.mrf.mxu0
  %v5019 = vadd.f32 0.0, %v5018
  %v5020 = vpop.f32.mrf.mxu0
  %v5021 = vpop.f32.mrf.mxu0
  %v5022 = vadd.f32 0.0, %v5021
  %v5023 = vpop.f32.mrf.mxu0
  %5024 = vmatprep.mubr.bf16.mxu0 0
  %5025 = vmatmul.mubr.bf16.gmra.mxu0 %v4837
  %v5026 = vpop.f32.mrf.mxu0
  %v5027 = vadd.f32 0.0, %v5026
  %v5028 = vpop.f32.mrf.mxu0
  %v5029 = vpop.f32.mrf.mxu0
  %v5030 = vadd.f32 0.0, %v5029
  %v5031 = vpop.f32.mrf.mxu0
  %5032 = vmatprep.mubr.bf16.mxu0 0
  %5033 = vmatmul.mubr.bf16.gmra.mxu0 %v4840
  %v5034 = vpop.f32.mrf.mxu0
  %v5035 = vadd.f32 0.0, %v5034
  %v5036 = vpop.f32.mrf.mxu0
  %v5037 = vpop.f32.mrf.mxu0
  %v5038 = vadd.f32 0.0, %v5037
  %v5039 = vpop.f32.mrf.mxu0
  %5040 = vmatprep.mubr.bf16.mxu0 0
  %5041 = vmatmul.mubr.bf16.gmra.mxu0 %v4843
  %v5042 = vpop.f32.mrf.mxu0
  %v5043 = vadd.f32 0.0, %v5042
  %v5044 = vpop.f32.mrf.mxu0
  %v5045 = vpop.f32.mrf.mxu0
  %v5046 = vadd.f32 0.0, %v5045
  %v5047 = vpop.f32.mrf.mxu0
  %5048 = vmatprep.mubr.bf16.mxu0 0
  %5049 = vmatmul.mubr.bf16.gmra.mxu0 %v4846
  %v5050 = vpop.f32.mrf.mxu0
  %v5051 = vadd.f32 0.0, %v5050
  %v5052 = vpop.f32.mrf.mxu0
  %v5053 = vpop.f32.mrf.mxu0
  %v5054 = vadd.f32 0.0, %v5053
  %v5055 = vpop.f32.mrf.mxu0
  %5056 = vmatprep.mubr.bf16.mxu0 0
  %5057 = vmatmul.mubr.bf16.gmra.mxu0 %v4849
  %v5058 = vpop.f32.mrf.mxu0
  %v5059 = vadd.f32 0.0, %v5058
  %v5060 = vpop.f32.mrf.mxu0
  %v5061 = vpop.f32.mrf.mxu0
  %v5062 = vadd.f32 0.0, %v5061
  %v5063 = vpop.f32.mrf.mxu0
  %5064 = vmatprep.mubr.bf16.mxu0 0
  %5065 = vmatmul.mubr.bf16.gmra.mxu0 %v4852
  %v5066 = vpop.f32.mrf.mxu0
  %v5067 = vadd.f32 0.0, %v5066
  %v5068 = vpop.f32.mrf.mxu0
  %v5069 = vpop.f32.mrf.mxu0
  %v5070 = vadd.f32 0.0, %v5069
  %v5071 = vpop.f32.mrf.mxu0
  %5072 = vmatprep.mubr.bf16.mxu0 0
  %5073 = vmatmul.mubr.bf16.gmra.mxu0 %v4855
  %v5074 = vpop.f32.mrf.mxu0
  %v5075 = vadd.f32 0.0, %v5074
  %v5076 = vpop.f32.mrf.mxu0
  %v5077 = vpop.f32.mrf.mxu0
  %v5078 = vadd.f32 0.0, %v5077
  %v5079 = vpop.f32.mrf.mxu0
  %5080 = vmatprep.mubr.bf16.mxu0 0
  %5081 = vmatmul.mubr.bf16.gmra.mxu0 %v4858
  %v5082 = vpop.f32.mrf.mxu0
  %v5083 = vadd.f32 0.0, %v5082
  %v5084 = vpop.f32.mrf.mxu0
  %v5085 = vpop.f32.mrf.mxu0
  %v5086 = vadd.f32 0.0, %v5085
  %v5087 = vpop.f32.mrf.mxu0
  %5088 = vmatprep.mubr.bf16.mxu0 0
  %5089 = vmatmul.mubr.bf16.gmra.mxu0 %v4861
  %v5090 = vpop.f32.mrf.mxu0
  %v5091 = vadd.f32 0.0, %v5090
  %v5092 = vpop.f32.mrf.mxu0
  %v5093 = vpop.f32.mrf.mxu0
  %v5094 = vadd.f32 0.0, %v5093
  %v5095 = vpop.f32.mrf.mxu0
  %5096 = vmatprep.mubr.bf16.mxu0 0
  %5097 = vmatmul.mubr.bf16.gmra.mxu0 %v4864
  %v5098 = vpop.f32.mrf.mxu0
  %v5099 = vadd.f32 0.0, %v5098
  %v5100 = vpop.f32.mrf.mxu0
  %v5101 = vpop.f32.mrf.mxu0
  %v5102 = vadd.f32 0.0, %v5101
  %v5103 = vpop.f32.mrf.mxu0
  %5104 = vmatprep.mubr.bf16.mxu0 0
  %5105 = vmatmul.mubr.bf16.gmra.mxu0 %v4867
  %v5106 = vpop.f32.mrf.mxu0
  %v5107 = vadd.f32 0.0, %v5106
  %v5108 = vpop.f32.mrf.mxu0
  %v5109 = vpop.f32.mrf.mxu0
  %v5110 = vadd.f32 0.0, %v5109
  %v5111 = vpop.f32.mrf.mxu0
  %5112 = vmatprep.mubr.bf16.mxu0 0
  %5113 = vmatmul.mubr.bf16.gmra.mxu0 %v4870
  %v5114 = vpop.f32.mrf.mxu0
  %v5115 = vadd.f32 0.0, %v5114
  %v5116 = vpop.f32.mrf.mxu0
  %v5117 = vpop.f32.mrf.mxu0
  %v5118 = vadd.f32 0.0, %v5117
  %v5119 = vpop.f32.mrf.mxu0
  %5120 = vmatprep.mubr.bf16.mxu0 0
  %5121 = vmatmul.mubr.bf16.gmra.mxu0 %v4873
  %v5122 = vpop.f32.mrf.mxu0
  %v5123 = vadd.f32 0.0, %v5122
  %v5124 = vpop.f32.mrf.mxu0
  %v5125 = vpop.f32.mrf.mxu0
  %v5126 = vadd.f32 0.0, %v5125
  %v5127 = vpop.f32.mrf.mxu0
  %5128 = vmatprep.mubr.bf16.mxu0 0
  %5129 = vmatmul.mubr.bf16.gmra.mxu0 %v4876
  %v5130 = vpop.f32.mrf.mxu0
  %v5131 = vadd.f32 0.0, %v5130
  %v5132 = vpop.f32.mrf.mxu0
  %v5133 = vpop.f32.mrf.mxu0
  %v5134 = vadd.f32 0.0, %v5133
  %v5135 = vpop.f32.mrf.mxu0
  %5136 = vmatprep.mubr.bf16.mxu0 0
  %5137 = vmatmul.mubr.bf16.gmra.mxu0 %v4879
  %v5138 = vpop.f32.mrf.mxu0
  %v5139 = vadd.f32 0.0, %v5138
  %v5140 = vpop.f32.mrf.mxu0
  %v5141 = vpop.f32.mrf.mxu0
  %v5142 = vadd.f32 0.0, %v5141
  %v5143 = vpop.f32.mrf.mxu0
  %5144 = vmatprep.mubr.bf16.mxu0 0
  %5145 = vmatmul.mubr.bf16.gmra.mxu0 %v4882
  %v5146 = vpop.f32.mrf.mxu0
  %v5147 = vadd.f32 0.0, %v5146
  %v5148 = vpop.f32.mrf.mxu0
  %v5149 = vpop.f32.mrf.mxu0
  %v5150 = vadd.f32 0.0, %v5149
  %v5151 = vpop.f32.mrf.mxu0
  %5152 = vmatprep.mubr.bf16.mxu0 0
  %5153 = vmatmul.mubr.bf16.gmra.mxu0 %v4885
  %v5154 = vpop.f32.mrf.mxu0
  %v5155 = vadd.f32 0.0, %v5154
  %v5156 = vpop.f32.mrf.mxu0
  %v5157 = vpop.f32.mrf.mxu0
  %v5158 = vadd.f32 0.0, %v5157
  %v5159 = vpop.f32.mrf.mxu0
  %5160 = vmatprep.mubr.bf16.mxu0 0
  %5161 = vmatmul.mubr.bf16.gmra.mxu0 %v4888
  %v5162 = vpop.f32.mrf.mxu0
  %v5163 = vadd.f32 0.0, %v5162
  %v5164 = vpop.f32.mrf.mxu0
  %v5165 = vpop.f32.mrf.mxu0
  %v5166 = vadd.f32 0.0, %v5165
  %v5167 = vpop.f32.mrf.mxu0
  %5168 = vmatprep.mubr.bf16.mxu0 0
  %5169 = vmatmul.mubr.bf16.gmra.mxu0 %v4891
  %v5170 = vpop.f32.mrf.mxu0
  %v5171 = vadd.f32 0.0, %v5170
  %v5172 = vpop.f32.mrf.mxu0
  %v5173 = vpop.f32.mrf.mxu0
  %v5174 = vadd.f32 0.0, %v5173
  %v5175 = vpop.f32.mrf.mxu0
  %5176 = vmatprep.mubr.bf16.mxu0 0
  %5177 = vmatmul.mubr.bf16.gmra.mxu0 %v4894
  %v5178 = vpop.f32.mrf.mxu0
  %v5179 = vadd.f32 0.0, %v5178
  %v5180 = vpop.f32.mrf.mxu0
  %v5181 = vpop.f32.mrf.mxu0
  %v5182 = vadd.f32 0.0, %v5181
  %v5183 = vpop.f32.mrf.mxu0
  %5184 = vmatprep.mubr.bf16.mxu0 0
  %5185 = vmatmul.mubr.bf16.gmra.mxu0 %v4897
  %v5186 = vpop.f32.mrf.mxu0
  %v5187 = vadd.f32 0.0, %v5186
  %v5188 = vpop.f32.mrf.mxu0
  %v5189 = vpop.f32.mrf.mxu0
  %v5190 = vadd.f32 0.0, %v5189
  %v5191 = vpop.f32.mrf.mxu0
  %5192 = vmatprep.mubr.bf16.mxu0 0
  %5193 = vmatmul.mubr.bf16.gmra.mxu0 %v4900
  %v5194 = vpop.f32.mrf.mxu0
  %v5195 = vadd.f32 0.0, %v5194
  %v5196 = vpop.f32.mrf.mxu0
  %v5197 = vpop.f32.mrf.mxu0
  %v5198 = vadd.f32 0.0, %v5197
  %v5199 = vpop.f32.mrf.mxu0
  %5200 = vmatprep.mubr.bf16.mxu0 0
  %5201 = vmatmul.mubr.bf16.gmra.mxu0 %v4903
  %v5202 = vpop.f32.mrf.mxu0
  %v5203 = vadd.f32 0.0, %v5202
  %v5204 = vpop.f32.mrf.mxu0
  %v5205 = vpop.f32.mrf.mxu0
  %v5206 = vadd.f32 0.0, %v5205
  %v5207 = vpop.f32.mrf.mxu0
  %5208 = vmatprep.mubr.bf16.mxu0 0
  %5209 = vmatmul.mubr.bf16.gmra.mxu0 %v4906
  %v5210 = vpop.f32.mrf.mxu0
  %v5211 = vadd.f32 0.0, %v5210
  %v5212 = vpop.f32.mrf.mxu0
  %v5213 = vpop.f32.mrf.mxu0
  %v5214 = vadd.f32 0.0, %v5213
  %v5215 = vpop.f32.mrf.mxu0
  %5216 = vmatprep.mubr.bf16.mxu0 0
  %5217 = vmatmul.mubr.bf16.gmra.mxu0 %v4909
  %v5218 = vpop.f32.mrf.mxu0
  %v5219 = vadd.f32 0.0, %v5218
  %v5220 = vpop.f32.mrf.mxu0
  %v5221 = vpop.f32.mrf.mxu0
  %v5222 = vadd.f32 0.0, %v5221
  %v5223 = vpop.f32.mrf.mxu0
  %5224 = vmatprep.mubr.bf16.mxu0 0
  %5225 = vmatmul.mubr.bf16.gmra.mxu0 %v4912
  %v5226 = vpop.f32.mrf.mxu0
  %v5227 = vadd.f32 0.0, %v5226
  %v5228 = vpop.f32.mrf.mxu0
  %v5229 = vpop.f32.mrf.mxu0
  %v5230 = vadd.f32 0.0, %v5229
  %v5231 = vpop.f32.mrf.mxu0
  %5232 = vmatprep.mubr.bf16.mxu0 0
  %5233 = vmatmul.mubr.bf16.gmra.mxu0 %v4915
  %v5234 = vpop.f32.mrf.mxu0
  %v5235 = vadd.f32 0.0, %v5234
  %v5236 = vpop.f32.mrf.mxu0
  %v5237 = vpop.f32.mrf.mxu0
  %v5238 = vadd.f32 0.0, %v5237
  %v5239 = vpop.f32.mrf.mxu0
  %5240 = vmatprep.mubr.bf16.mxu0 0
  %5241 = vmatmul.mubr.bf16.gmra.mxu0 %v4918
  %v5242 = vpop.f32.mrf.mxu0
  %v5243 = vadd.f32 0.0, %v5242
  %v5244 = vpop.f32.mrf.mxu0
  %v5245 = vpop.f32.mrf.mxu0
  %v5246 = vadd.f32 0.0, %v5245
  %v5247 = vpop.f32.mrf.mxu0
  %5248 = vmatprep.mubr.bf16.mxu0 0
  %5249 = vmatmul.mubr.bf16.gmra.mxu0 %v4921
  %v5250 = vpop.f32.mrf.mxu0
  %v5251 = vadd.f32 0.0, %v5250
  %v5252 = vpop.f32.mrf.mxu0
  %v5253 = vpop.f32.mrf.mxu0
  %v5254 = vadd.f32 0.0, %v5253
  %v5255 = vpop.f32.mrf.mxu0
  %5256 = vmatprep.mubr.bf16.mxu0 0
  %5257 = vmatmul.mubr.bf16.gmra.mxu0 %v4924
  %v5258 = vpop.f32.mrf.mxu0
  %v5259 = vadd.f32 0.0, %v5258
  %v5260 = vpop.f32.mrf.mxu0
  %v5261 = vpop.f32.mrf.mxu0
  %v5262 = vadd.f32 0.0, %v5261
  %v5263 = vpop.f32.mrf.mxu0
  %5264 = vmatprep.mubr.bf16.mxu0 0
  %5265 = vmatmul.mubr.bf16.gmra.mxu0 %v4927
  %v5266 = vpop.f32.mrf.mxu0
  %v5267 = vadd.f32 0.0, %v5266
  %v5268 = vpop.f32.mrf.mxu0
  %v5269 = vpop.f32.mrf.mxu0
  %v5270 = vadd.f32 0.0, %v5269
  %v5271 = vpop.f32.mrf.mxu0
  %5272 = vmatprep.mubr.bf16.mxu0 0
  %5273 = vmatmul.mubr.bf16.gmra.mxu0 %v4930
  %v5274 = vpop.f32.mrf.mxu0
  %v5275 = vadd.f32 0.0, %v5274
  %v5276 = vpop.f32.mrf.mxu0
  %v5277 = vpop.f32.mrf.mxu0
  %v5278 = vadd.f32 0.0, %v5277
  %v5279 = vpop.f32.mrf.mxu0
  %5280 = vmatprep.mubr.bf16.mxu0 0
  %5281 = vmatmul.mubr.bf16.gmra.mxu0 %v4933
  %v5282 = vpop.f32.mrf.mxu0
  %v5283 = vadd.f32 0.0, %v5282
  %v5284 = vpop.f32.mrf.mxu0
  %v5285 = vpop.f32.mrf.mxu0
  %v5286 = vadd.f32 0.0, %v5285
  %v5287 = vpop.f32.mrf.mxu0
  %5288 = vmatprep.mubr.bf16.mxu0 0
  %5289 = vmatmul.mubr.bf16.gmra.mxu0 %v4936
  %v5290 = vpop.f32.mrf.mxu0
  %v5291 = vadd.f32 0.0, %v5290
  %v5292 = vpop.f32.mrf.mxu0
  %v5293 = vpop.f32.mrf.mxu0
  %v5294 = vadd.f32 0.0, %v5293
  %v5295 = vpop.f32.mrf.mxu0
  %5296 = vmatprep.mubr.bf16.mxu0 0
  %5297 = vmatmul.mubr.bf16.gmra.mxu0 %v4939
  %v5298 = vpop.f32.mrf.mxu0
  %v5299 = vadd.f32 0.0, %v5298
  %v5300 = vpop.f32.mrf.mxu0
  %v5301 = vpop.f32.mrf.mxu0
  %v5302 = vpop.f32.mrf.mxu0
  %5303 = vdwg.mxu0
  %v5304 = vadd.f32 %v4613, %v4979
  %v5305 = vadd.f32 %v4614, %v4982
  %v5306 = vadd.f32 %v4615, %v4987
  %v5307 = vadd.f32 %v4616, %v4990
  %v5308 = vadd.f32 %v4617, %v4995
  %v5309 = vadd.f32 %v4618, %v4998
  %v5310 = vadd.f32 %v4619, %v5003
  %v5311 = vadd.f32 %v4620, %v5006
  %v5312 = vadd.f32 %v4621, %v5011
  %v5313 = vadd.f32 %v4622, %v5014
  %v5314 = vadd.f32 %v4623, %v5019
  %v5315 = vadd.f32 %v4624, %v5022
  %v5316 = vadd.f32 %v4625, %v5027
  %v5317 = vadd.f32 %v4626, %v5030
  %v5318 = vadd.f32 %v4627, %v5035
  %v5319 = vadd.f32 %v4628, %v5038
  %v5320 = vadd.f32 %v4629, %v5043
  %v5321 = vadd.f32 %v4630, %v5046
  %v5322 = vadd.f32 %v4631, %v5051
  %v5323 = vadd.f32 %v4632, %v5054
  %v5324 = vadd.f32 %v4633, %v5059
  %v5325 = vadd.f32 %v4634, %v5062
  %v5326 = vadd.f32 %v4635, %v5067
  %v5327 = vadd.f32 %v4636, %v5070
  %v5328 = vadd.f32 %v4637, %v5075
  %v5329 = vadd.f32 %v4638, %v5078
  %v5330 = vadd.f32 %v4639, %v5083
  %v5331 = vadd.f32 %v4640, %v5086
  %v5332 = vadd.f32 %v4641, %v5091
  %v5333 = vadd.f32 %v4642, %v5094
  %v5334 = vadd.f32 %v4643, %v5099
  %v5335 = vadd.f32 %v4644, %v5102
  %v5336 = vadd.f32 %v4645, %v5107
  %v5337 = vadd.f32 %v4646, %v5110
  %v5338 = vadd.f32 %v4647, %v5115
  %v5339 = vadd.f32 %v4648, %v5118
  %v5340 = vadd.f32 %v4649, %v5123
  %v5341 = vadd.f32 %v4650, %v5126
  %v5342 = vadd.f32 %v4651, %v5131
  %v5343 = vadd.f32 %v4652, %v5134
  %v5344 = vadd.f32 %v4653, %v5139
  %v5345 = vadd.f32 %v4654, %v5142
  %v5346 = vadd.f32 %v4655, %v5147
  %v5347 = vadd.f32 %v4656, %v5150
  %v5348 = vadd.f32 %v4657, %v5155
  %v5349 = vadd.f32 %v4658, %v5158
  %v5350 = vadd.f32 %v4659, %v5163
  %v5351 = vadd.f32 %v4660, %v5166
  %v5352 = vadd.f32 %v4661, %v5171
  %v5353 = vadd.f32 %v4662, %v5174
  %v5354 = vadd.f32 %v4663, %v5179
  %v5355 = vadd.f32 %v4664, %v5182
  %v5356 = vadd.f32 %v4665, %v5187
  %v5357 = vadd.f32 %v4666, %v5190
  %v5358 = vadd.f32 %v4667, %v5195
  %v5359 = vadd.f32 %v4668, %v5198
  %v5360 = vadd.f32 %v4669, %v5203
  %v5361 = vadd.f32 %v4670, %v5206
  %v5362 = vadd.f32 %v4671, %v5211
  %v5363 = vadd.f32 %v4672, %v5214
  %v5364 = vadd.f32 %v4673, %v5219
  %v5365 = vadd.f32 %v4674, %v5222
  %v5366 = vadd.f32 %v4675, %v5227
  %v5367 = vadd.f32 %v4676, %v5230
  %v5368 = vadd.f32 %v4677, %v5235
  %v5369 = vadd.f32 %v4678, %v5238
  %v5370 = vadd.f32 %v4679, %v5243
  %v5371 = vadd.f32 %v4680, %v5246
  %v5372 = vadd.f32 %v4681, %v5251
  %v5373 = vadd.f32 %v4682, %v5254
  %v5374 = vadd.f32 %v4683, %v5259
  %v5375 = vadd.f32 %v4684, %v5262
  %v5376 = vadd.f32 %v4685, %v5267
  %v5377 = vadd.f32 %v4686, %v5270
  %v5378 = vadd.f32 %v4687, %v5275
  %v5379 = vadd.f32 %v4688, %v5278
  %v5380 = vadd.f32 %v4689, %v5283
  %v5381 = vadd.f32 %v4690, %v5286
  %v5382 = vadd.f32 %v4691, %v5291
  %v5383 = vadd.f32 %v4692, %v5294
  %v5384 = vadd.f32 %v4693, %v5299
  %v5385 = vld [vmem:[%s0 + $0x26] sm:$0xff]
  %v5386 = vld [vmem:[%s0 + $0x2e] sm:$0xff]
  %v5387 = vld [vmem:[%s0 + $0x36] sm:$0xff]
  %v5388 = vld [vmem:[%s0 + $0x3e] sm:$0xff]
  %v5389 = vld [vmem:[%s0 + $0x46] sm:$0xff]
  %v5390 = vld [vmem:[%s0 + $0x4e] sm:$0xff]
  %v5391 = vld [vmem:[%s0 + $0x56] sm:$0xff]
  %v5392 = vld [vmem:[%s0 + $0x5e] sm:$0xff]
  %v5393 = vld [vmem:[%s0 + $0x66] sm:$0xff]
  %v5394 = vld [vmem:[%s0 + $0x6e] sm:$0xff]
  %v5395 = vld [vmem:[%s0 + $0x76] sm:$0xff]
  %v5396 = vld [vmem:[%s0 + $0x7e] sm:$0xff]
  %v5397 = vld [vmem:[%s0 + $0x86] sm:$0xff]
  %v5398 = vld [vmem:[%s0 + $0x8e] sm:$0xff]
  %v5399 = vld [vmem:[%s0 + $0x96] sm:$0xff]
  %v5400 = vld [vmem:[%s0 + $0x9e] sm:$0xff]
  %v5401 = vld [vmem:[%s0 + $0xa6] sm:$0xff]
  %v5402 = vld [vmem:[%s0 + $0xae] sm:$0xff]
  %v5403 = vld [vmem:[%s0 + $0xb6] sm:$0xff]
  %v5404 = vld [vmem:[%s0 + $0xbe] sm:$0xff]
  %v5405 = vld [vmem:[%s0 + $0xc6] sm:$0xff]
  %v5406 = vld [vmem:[%s0 + $0xce] sm:$0xff]
  %v5407 = vld [vmem:[%s0 + $0xd6] sm:$0xff]
  %v5408 = vld [vmem:[%s0 + $0xde] sm:$0xff]
  %v5409 = vld [vmem:[%s0 + $0xe6] sm:$0xff]
  %v5410 = vld [vmem:[%s0 + $0xee] sm:$0xff]
  %v5411 = vld [vmem:[%s0 + $0xf6] sm:$0xff]
  %v5412 = vld [vmem:[%s0 + $0xfe] sm:$0xff]
  %v5413 = vld [vmem:[%s0 + $0x106] sm:$0xff]
  %v5414 = vld [vmem:[%s0 + $0x10e] sm:$0xff]
  %v5415 = vld [vmem:[%s0 + $0x116] sm:$0xff]
  %v5416 = vld [vmem:[%s0 + $0x11e] sm:$0xff]
  %v5417 = vld [vmem:[%s0 + $0x126] sm:$0xff]
  %v5418 = vld [vmem:[%s0 + $0x12e] sm:$0xff]
  %v5419 = vld [vmem:[%s0 + $0x136] sm:$0xff]
  %v5420 = vld [vmem:[%s0 + $0x13e] sm:$0xff]
  %v5421 = vld [vmem:[%s0 + $0x146] sm:$0xff]
  %v5422 = vld [vmem:[%s0 + $0x14e] sm:$0xff]
  %v5423 = vld [vmem:[%s0 + $0x156] sm:$0xff]
  %v5424 = vld [vmem:[%s0 + $0x15e] sm:$0xff]
  %v5425 = vld [vmem:[%s0 + $0x166] sm:$0xff]
  %v5426 = vld [vmem:[%s0 + $0x16e] sm:$0xff]
  %v5427 = vld [vmem:[%s0 + $0x176] sm:$0xff]
  %v5428 = vld [vmem:[%s0 + $0x17e] sm:$0xff]
  %v5429 = vld [vmem:[%s0 + $0x186] sm:$0xff]
  %v5430 = vld [vmem:[%s0 + $0x18e] sm:$0xff]
  %v5431 = vld [vmem:[%s0 + $0x196] sm:$0xff]
  %v5432 = vld [vmem:[%s0 + $0x19e] sm:$0xff]
  %v5433 = vld [vmem:[%s0 + $0x1a6] sm:$0xff]
  %v5434 = vld [vmem:[%s0 + $0x1ae] sm:$0xff]
  %v5435 = vld [vmem:[%s0 + $0x1b6] sm:$0xff]
  %v5436 = vld [vmem:[%s0 + $0x1be] sm:$0xff]
  %v5437 = vld [vmem:[%s0 + $0x1c6] sm:$0xff]
  %v5438 = vld [vmem:[%s0 + $0x1ce] sm:$0xff]
  %v5439 = vld [vmem:[%s0 + $0x1d6] sm:$0xff]
  %v5440 = vld [vmem:[%s0 + $0x1de] sm:$0xff]
  %v5441 = vld [vmem:[%s0 + $0x1e6] sm:$0xff]
  %v5442 = vld [vmem:[%s0 + $0x1ee] sm:$0xff]
  %v5443 = vld [vmem:[%s0 + $0x1f6] sm:$0xff]
  %v5444 = vld [vmem:[%s0 + $0x1fe] sm:$0xff]
  %v5445 = vld [vmem:[%s0 + $0x206] sm:$0xff]
  %v5446 = vld [vmem:[%s0 + $0x20e] sm:$0xff]
  %v5447 = vld [vmem:[%s0 + $0x216] sm:$0xff]
  %v5448 = vld [vmem:[%s0 + $0x21e] sm:$0xff]
  %v5449 = vld [vmem:[%s0 + $0x226] sm:$0xff]
  %v5450 = vld [vmem:[%s0 + $0x22e] sm:$0xff]
  %v5451 = vld [vmem:[%s0 + $0x236] sm:$0xff]
  %v5452 = vld [vmem:[%s0 + $0x23e] sm:$0xff]
  %v5453 = vld [vmem:[%s0 + $0x246] sm:$0xff]
  %v5454 = vld [vmem:[%s0 + $0x24e] sm:$0xff]
  %v5455 = vld [vmem:[%s0 + $0x256] sm:$0xff]
  %v5456 = vld [vmem:[%s0 + $0x25e] sm:$0xff]
  %v5457 = vld [vmem:[%s0 + $0x266] sm:$0xff]
  %v5458 = vld [vmem:[%s0 + $0x26e] sm:$0xff]
  %v5459 = vld [vmem:[%s0 + $0x276] sm:$0xff]
  %v5460 = vld [vmem:[%s0 + $0x27e] sm:$0xff]
  %v5461 = vld [vmem:[%s0 + $0x286] sm:$0xff]
  %v5462 = vld [vmem:[%s0 + $0x28e] sm:$0xff]
  %v5463 = vld [vmem:[%s0 + $0x296] sm:$0xff]
  %v5464 = vld [vmem:[%s0 + $0x29e] sm:$0xff]
  %v5465 = vld [vmem:[%s0 + $0x2a6] sm:$0xff]
  %v5466 = vpack.c.bf16 %v5386, %v5385
  %v5467 = vpack.c.bf16 %v5388, %v5387
  %v5468 = vpack.c.bf16 %v5390, %v5389
  %v5469 = vpack.c.bf16 %v5392, %v5391
  %v5470 = vpack.c.bf16 %v5394, %v5393
  %v5471 = vpack.c.bf16 %v5396, %v5395
  %v5472 = vpack.c.bf16 %v5398, %v5397
  %v5473 = vpack.c.bf16 %v5400, %v5399
  %v5474 = vpack.c.bf16 %v5402, %v5401
  %v5475 = vpack.c.bf16 %v5404, %v5403
  %v5476 = vpack.c.bf16 %v5406, %v5405
  %v5477 = vpack.c.bf16 %v5408, %v5407
  %v5478 = vpack.c.bf16 %v5410, %v5409
  %v5479 = vpack.c.bf16 %v5412, %v5411
  %v5480 = vpack.c.bf16 %v5414, %v5413
  %v5481 = vpack.c.bf16 %v5416, %v5415
  %v5482 = vpack.c.bf16 %v5418, %v5417
  %v5483 = vpack.c.bf16 %v5420, %v5419
  %v5484 = vpack.c.bf16 %v5422, %v5421
  %v5485 = vpack.c.bf16 %v5424, %v5423
  %v5486 = vpack.c.bf16 %v5426, %v5425
  %v5487 = vpack.c.bf16 %v5428, %v5427
  %v5488 = vpack.c.bf16 %v5430, %v5429
  %v5489 = vpack.c.bf16 %v5432, %v5431
  %v5490 = vpack.c.bf16 %v5434, %v5433
  %v5491 = vpack.c.bf16 %v5436, %v5435
  %v5492 = vpack.c.bf16 %v5438, %v5437
  %v5493 = vpack.c.bf16 %v5440, %v5439
  %v5494 = vpack.c.bf16 %v5442, %v5441
  %v5495 = vpack.c.bf16 %v5444, %v5443
  %v5496 = vpack.c.bf16 %v5446, %v5445
  %v5497 = vpack.c.bf16 %v5448, %v5447
  %v5498 = vpack.c.bf16 %v5450, %v5449
  %v5499 = vpack.c.bf16 %v5452, %v5451
  %v5500 = vpack.c.bf16 %v5454, %v5453
  %v5501 = vpack.c.bf16 %v5456, %v5455
  %v5502 = vpack.c.bf16 %v5458, %v5457
  %v5503 = vpack.c.bf16 %v5460, %v5459
  %v5504 = vpack.c.bf16 %v5462, %v5461
  %v5505 = vpack.c.bf16 %v5464, %v5463
  %v5506 = vpack.c.bf16 %v5465, %v5465
  %s5507 = scalar_lea.vmem %s1, 16
  %v5508 = vld [vmem:[%s5507] sm:$0x3]
  %v5510 = vsel %vm262, %v5466, 0
  %v5513 = vsel %vm262, %v5467, 0
  %v5516 = vsel %vm262, %v5468, 0
  %v5519 = vsel %vm262, %v5469, 0
  %v5522 = vsel %vm262, %v5470, 0
  %v5525 = vsel %vm262, %v5471, 0
  %v5528 = vsel %vm262, %v5472, 0
  %v5531 = vsel %vm262, %v5473, 0
  %v5534 = vsel %vm262, %v5474, 0
  %v5537 = vsel %vm262, %v5475, 0
  %v5540 = vsel %vm262, %v5476, 0
  %v5543 = vsel %vm262, %v5477, 0
  %v5546 = vsel %vm262, %v5478, 0
  %v5549 = vsel %vm262, %v5479, 0
  %v5552 = vsel %vm262, %v5480, 0
  %v5555 = vsel %vm262, %v5481, 0
  %v5558 = vsel %vm262, %v5482, 0
  %v5561 = vsel %vm262, %v5483, 0
  %v5564 = vsel %vm262, %v5484, 0
  %v5567 = vsel %vm262, %v5485, 0
  %v5570 = vsel %vm262, %v5486, 0
  %v5573 = vsel %vm262, %v5487, 0
  %v5576 = vsel %vm262, %v5488, 0
  %v5579 = vsel %vm262, %v5489, 0
  %v5582 = vsel %vm262, %v5490, 0
  %v5585 = vsel %vm262, %v5491, 0
  %v5588 = vsel %vm262, %v5492, 0
  %v5591 = vsel %vm262, %v5493, 0
  %v5594 = vsel %vm262, %v5494, 0
  %v5597 = vsel %vm262, %v5495, 0
  %v5600 = vsel %vm262, %v5496, 0
  %v5603 = vsel %vm262, %v5497, 0
  %v5606 = vsel %vm262, %v5498, 0
  %v5609 = vsel %vm262, %v5499, 0
  %v5612 = vsel %vm262, %v5500, 0
  %v5615 = vsel %vm262, %v5501, 0
  %v5618 = vsel %vm262, %v5502, 0
  %v5621 = vsel %vm262, %v5503, 0
  %v5624 = vsel %vm262, %v5504, 0
  %v5627 = vsel %vm262, %v5505, 0
  %v5630 = vsel %vm262, %v5506, 0
  %v5633 = vand.u32 %v5508, %v389
  %5635 = vmatprep.subr.bf16.mxu0 0
  %5636 = vmatpush1.bf16.msra.mxu0 0
  %5637 = vmatprep.subr.bf16.mxu0 0
  %5638 = vmatpush1.bf16.msra.mxu0 0
  %5639 = vmatprep.subr.bf16.mxu0 0
  %5640 = vmatpush1.bf16.msra.mxu0 0
  %5641 = vmatprep.subr.bf16.mxu0 0
  %5642 = vmatpush1.bf16.msra.mxu0 0
  %5643 = vmatprep.subr.bf16.mxu0 0
  %5644 = vmatpush1.bf16.msra.mxu0 0
  %5645 = vmatprep.subr.bf16.mxu0 0
  %5646 = vmatpush1.bf16.msra.mxu0 0
  %5647 = vmatprep.subr.bf16.mxu0 0
  %5648 = vmatpush1.bf16.msra.mxu0 0
  %5649 = vmatprep.subr.bf16.mxu0 0
  %5650 = vmatpush1.bf16.msra.mxu0 %v5633
  %5651 = vmatprep.subr.bf16.mxu0 0
  %5652 = vmatpush2.bf16.msra.mxu0 0
  %5653 = vmatprep.subr.bf16.mxu0 0
  %5654 = vmatpush2.bf16.msra.mxu0 0
  %5655 = vmatprep.subr.bf16.mxu0 0
  %5656 = vmatpush2.bf16.msra.mxu0 0
  %5657 = vmatprep.subr.bf16.mxu0 0
  %5658 = vmatpush2.bf16.msra.mxu0 0
  %5659 = vmatprep.subr.bf16.mxu0 0
  %5660 = vmatpush2.bf16.msra.mxu0 0
  %5661 = vmatprep.subr.bf16.mxu0 0
  %5662 = vmatpush2.bf16.msra.mxu0 0
  %5663 = vmatprep.subr.bf16.mxu0 0
  %5664 = vmatpush2.bf16.msra.mxu0 0
  %5665 = vmatprep.subr.bf16.mxu0 0
  %5666 = vmatpush2.bf16.msra.mxu0 0
  %5667 = vmatprep.mubr.bf16.mxu0 0
  %5668 = vmatmul.mubr.bf16.gmra.mxu0 %v5510
  %v5669 = vpop.f32.mrf.mxu0
  %v5670 = vadd.f32 0.0, %v5669
  %v5671 = vpop.f32.mrf.mxu0
  %v5672 = vpop.f32.mrf.mxu0
  %v5673 = vadd.f32 0.0, %v5672
  %v5674 = vpop.f32.mrf.mxu0
  %5675 = vmatprep.mubr.bf16.mxu0 0
  %5676 = vmatmul.mubr.bf16.gmra.mxu0 %v5513
  %v5677 = vpop.f32.mrf.mxu0
  %v5678 = vadd.f32 0.0, %v5677
  %v5679 = vpop.f32.mrf.mxu0
  %v5680 = vpop.f32.mrf.mxu0
  %v5681 = vadd.f32 0.0, %v5680
  %v5682 = vpop.f32.mrf.mxu0
  %5683 = vmatprep.mubr.bf16.mxu0 0
  %5684 = vmatmul.mubr.bf16.gmra.mxu0 %v5516
  %v5685 = vpop.f32.mrf.mxu0
  %v5686 = vadd.f32 0.0, %v5685
  %v5687 = vpop.f32.mrf.mxu0
  %v5688 = vpop.f32.mrf.mxu0
  %v5689 = vadd.f32 0.0, %v5688
  %v5690 = vpop.f32.mrf.mxu0
  %5691 = vmatprep.mubr.bf16.mxu0 0
  %5692 = vmatmul.mubr.bf16.gmra.mxu0 %v5519
  %v5693 = vpop.f32.mrf.mxu0
  %v5694 = vadd.f32 0.0, %v5693
  %v5695 = vpop.f32.mrf.mxu0
  %v5696 = vpop.f32.mrf.mxu0
  %v5697 = vadd.f32 0.0, %v5696
  %v5698 = vpop.f32.mrf.mxu0
  %5699 = vmatprep.mubr.bf16.mxu0 0
  %5700 = vmatmul.mubr.bf16.gmra.mxu0 %v5522
  %v5701 = vpop.f32.mrf.mxu0
  %v5702 = vadd.f32 0.0, %v5701
  %v5703 = vpop.f32.mrf.mxu0
  %v5704 = vpop.f32.mrf.mxu0
  %v5705 = vadd.f32 0.0, %v5704
  %v5706 = vpop.f32.mrf.mxu0
  %5707 = vmatprep.mubr.bf16.mxu0 0
  %5708 = vmatmul.mubr.bf16.gmra.mxu0 %v5525
  %v5709 = vpop.f32.mrf.mxu0
  %v5710 = vadd.f32 0.0, %v5709
  %v5711 = vpop.f32.mrf.mxu0
  %v5712 = vpop.f32.mrf.mxu0
  %v5713 = vadd.f32 0.0, %v5712
  %v5714 = vpop.f32.mrf.mxu0
  %5715 = vmatprep.mubr.bf16.mxu0 0
  %5716 = vmatmul.mubr.bf16.gmra.mxu0 %v5528
  %v5717 = vpop.f32.mrf.mxu0
  %v5718 = vadd.f32 0.0, %v5717
  %v5719 = vpop.f32.mrf.mxu0
  %v5720 = vpop.f32.mrf.mxu0
  %v5721 = vadd.f32 0.0, %v5720
  %v5722 = vpop.f32.mrf.mxu0
  %5723 = vmatprep.mubr.bf16.mxu0 0
  %5724 = vmatmul.mubr.bf16.gmra.mxu0 %v5531
  %v5725 = vpop.f32.mrf.mxu0
  %v5726 = vadd.f32 0.0, %v5725
  %v5727 = vpop.f32.mrf.mxu0
  %v5728 = vpop.f32.mrf.mxu0
  %v5729 = vadd.f32 0.0, %v5728
  %v5730 = vpop.f32.mrf.mxu0
  %5731 = vmatprep.mubr.bf16.mxu0 0
  %5732 = vmatmul.mubr.bf16.gmra.mxu0 %v5534
  %v5733 = vpop.f32.mrf.mxu0
  %v5734 = vadd.f32 0.0, %v5733
  %v5735 = vpop.f32.mrf.mxu0
  %v5736 = vpop.f32.mrf.mxu0
  %v5737 = vadd.f32 0.0, %v5736
  %v5738 = vpop.f32.mrf.mxu0
  %5739 = vmatprep.mubr.bf16.mxu0 0
  %5740 = vmatmul.mubr.bf16.gmra.mxu0 %v5537
  %v5741 = vpop.f32.mrf.mxu0
  %v5742 = vadd.f32 0.0, %v5741
  %v5743 = vpop.f32.mrf.mxu0
  %v5744 = vpop.f32.mrf.mxu0
  %v5745 = vadd.f32 0.0, %v5744
  %v5746 = vpop.f32.mrf.mxu0
  %5747 = vmatprep.mubr.bf16.mxu0 0
  %5748 = vmatmul.mubr.bf16.gmra.mxu0 %v5540
  %v5749 = vpop.f32.mrf.mxu0
  %v5750 = vadd.f32 0.0, %v5749
  %v5751 = vpop.f32.mrf.mxu0
  %v5752 = vpop.f32.mrf.mxu0
  %v5753 = vadd.f32 0.0, %v5752
  %v5754 = vpop.f32.mrf.mxu0
  %5755 = vmatprep.mubr.bf16.mxu0 0
  %5756 = vmatmul.mubr.bf16.gmra.mxu0 %v5543
  %v5757 = vpop.f32.mrf.mxu0
  %v5758 = vadd.f32 0.0, %v5757
  %v5759 = vpop.f32.mrf.mxu0
  %v5760 = vpop.f32.mrf.mxu0
  %v5761 = vadd.f32 0.0, %v5760
  %v5762 = vpop.f32.mrf.mxu0
  %5763 = vmatprep.mubr.bf16.mxu0 0
  %5764 = vmatmul.mubr.bf16.gmra.mxu0 %v5546
  %v5765 = vpop.f32.mrf.mxu0
  %v5766 = vadd.f32 0.0, %v5765
  %v5767 = vpop.f32.mrf.mxu0
  %v5768 = vpop.f32.mrf.mxu0
  %v5769 = vadd.f32 0.0, %v5768
  %v5770 = vpop.f32.mrf.mxu0
  %5771 = vmatprep.mubr.bf16.mxu0 0
  %5772 = vmatmul.mubr.bf16.gmra.mxu0 %v5549
  %v5773 = vpop.f32.mrf.mxu0
  %v5774 = vadd.f32 0.0, %v5773
  %v5775 = vpop.f32.mrf.mxu0
  %v5776 = vpop.f32.mrf.mxu0
  %v5777 = vadd.f32 0.0, %v5776
  %v5778 = vpop.f32.mrf.mxu0
  %5779 = vmatprep.mubr.bf16.mxu0 0
  %5780 = vmatmul.mubr.bf16.gmra.mxu0 %v5552
  %v5781 = vpop.f32.mrf.mxu0
  %v5782 = vadd.f32 0.0, %v5781
  %v5783 = vpop.f32.mrf.mxu0
  %v5784 = vpop.f32.mrf.mxu0
  %v5785 = vadd.f32 0.0, %v5784
  %v5786 = vpop.f32.mrf.mxu0
  %5787 = vmatprep.mubr.bf16.mxu0 0
  %5788 = vmatmul.mubr.bf16.gmra.mxu0 %v5555
  %v5789 = vpop.f32.mrf.mxu0
  %v5790 = vadd.f32 0.0, %v5789
  %v5791 = vpop.f32.mrf.mxu0
  %v5792 = vpop.f32.mrf.mxu0
  %v5793 = vadd.f32 0.0, %v5792
  %v5794 = vpop.f32.mrf.mxu0
  %5795 = vmatprep.mubr.bf16.mxu0 0
  %5796 = vmatmul.mubr.bf16.gmra.mxu0 %v5558
  %v5797 = vpop.f32.mrf.mxu0
  %v5798 = vadd.f32 0.0, %v5797
  %v5799 = vpop.f32.mrf.mxu0
  %v5800 = vpop.f32.mrf.mxu0
  %v5801 = vadd.f32 0.0, %v5800
  %v5802 = vpop.f32.mrf.mxu0
  %5803 = vmatprep.mubr.bf16.mxu0 0
  %5804 = vmatmul.mubr.bf16.gmra.mxu0 %v5561
  %v5805 = vpop.f32.mrf.mxu0
  %v5806 = vadd.f32 0.0, %v5805
  %v5807 = vpop.f32.mrf.mxu0
  %v5808 = vpop.f32.mrf.mxu0
  %v5809 = vadd.f32 0.0, %v5808
  %v5810 = vpop.f32.mrf.mxu0
  %5811 = vmatprep.mubr.bf16.mxu0 0
  %5812 = vmatmul.mubr.bf16.gmra.mxu0 %v5564
  %v5813 = vpop.f32.mrf.mxu0
  %v5814 = vadd.f32 0.0, %v5813
  %v5815 = vpop.f32.mrf.mxu0
  %v5816 = vpop.f32.mrf.mxu0
  %v5817 = vadd.f32 0.0, %v5816
  %v5818 = vpop.f32.mrf.mxu0
  %5819 = vmatprep.mubr.bf16.mxu0 0
  %5820 = vmatmul.mubr.bf16.gmra.mxu0 %v5567
  %v5821 = vpop.f32.mrf.mxu0
  %v5822 = vadd.f32 0.0, %v5821
  %v5823 = vpop.f32.mrf.mxu0
  %v5824 = vpop.f32.mrf.mxu0
  %v5825 = vadd.f32 0.0, %v5824
  %v5826 = vpop.f32.mrf.mxu0
  %5827 = vmatprep.mubr.bf16.mxu0 0
  %5828 = vmatmul.mubr.bf16.gmra.mxu0 %v5570
  %v5829 = vpop.f32.mrf.mxu0
  %v5830 = vadd.f32 0.0, %v5829
  %v5831 = vpop.f32.mrf.mxu0
  %v5832 = vpop.f32.mrf.mxu0
  %v5833 = vadd.f32 0.0, %v5832
  %v5834 = vpop.f32.mrf.mxu0
  %5835 = vmatprep.mubr.bf16.mxu0 0
  %5836 = vmatmul.mubr.bf16.gmra.mxu0 %v5573
  %v5837 = vpop.f32.mrf.mxu0
  %v5838 = vadd.f32 0.0, %v5837
  %v5839 = vpop.f32.mrf.mxu0
  %v5840 = vpop.f32.mrf.mxu0
  %v5841 = vadd.f32 0.0, %v5840
  %v5842 = vpop.f32.mrf.mxu0
  %5843 = vmatprep.mubr.bf16.mxu0 0
  %5844 = vmatmul.mubr.bf16.gmra.mxu0 %v5576
  %v5845 = vpop.f32.mrf.mxu0
  %v5846 = vadd.f32 0.0, %v5845
  %v5847 = vpop.f32.mrf.mxu0
  %v5848 = vpop.f32.mrf.mxu0
  %v5849 = vadd.f32 0.0, %v5848
  %v5850 = vpop.f32.mrf.mxu0
  %5851 = vmatprep.mubr.bf16.mxu0 0
  %5852 = vmatmul.mubr.bf16.gmra.mxu0 %v5579
  %v5853 = vpop.f32.mrf.mxu0
  %v5854 = vadd.f32 0.0, %v5853
  %v5855 = vpop.f32.mrf.mxu0
  %v5856 = vpop.f32.mrf.mxu0
  %v5857 = vadd.f32 0.0, %v5856
  %v5858 = vpop.f32.mrf.mxu0
  %5859 = vmatprep.mubr.bf16.mxu0 0
  %5860 = vmatmul.mubr.bf16.gmra.mxu0 %v5582
  %v5861 = vpop.f32.mrf.mxu0
  %v5862 = vadd.f32 0.0, %v5861
  %v5863 = vpop.f32.mrf.mxu0
  %v5864 = vpop.f32.mrf.mxu0
  %v5865 = vadd.f32 0.0, %v5864
  %v5866 = vpop.f32.mrf.mxu0
  %5867 = vmatprep.mubr.bf16.mxu0 0
  %5868 = vmatmul.mubr.bf16.gmra.mxu0 %v5585
  %v5869 = vpop.f32.mrf.mxu0
  %v5870 = vadd.f32 0.0, %v5869
  %v5871 = vpop.f32.mrf.mxu0
  %v5872 = vpop.f32.mrf.mxu0
  %v5873 = vadd.f32 0.0, %v5872
  %v5874 = vpop.f32.mrf.mxu0
  %5875 = vmatprep.mubr.bf16.mxu0 0
  %5876 = vmatmul.mubr.bf16.gmra.mxu0 %v5588
  %v5877 = vpop.f32.mrf.mxu0
  %v5878 = vadd.f32 0.0, %v5877
  %v5879 = vpop.f32.mrf.mxu0
  %v5880 = vpop.f32.mrf.mxu0
  %v5881 = vadd.f32 0.0, %v5880
  %v5882 = vpop.f32.mrf.mxu0
  %5883 = vmatprep.mubr.bf16.mxu0 0
  %5884 = vmatmul.mubr.bf16.gmra.mxu0 %v5591
  %v5885 = vpop.f32.mrf.mxu0
  %v5886 = vadd.f32 0.0, %v5885
  %v5887 = vpop.f32.mrf.mxu0
  %v5888 = vpop.f32.mrf.mxu0
  %v5889 = vadd.f32 0.0, %v5888
  %v5890 = vpop.f32.mrf.mxu0
  %5891 = vmatprep.mubr.bf16.mxu0 0
  %5892 = vmatmul.mubr.bf16.gmra.mxu0 %v5594
  %v5893 = vpop.f32.mrf.mxu0
  %v5894 = vadd.f32 0.0, %v5893
  %v5895 = vpop.f32.mrf.mxu0
  %v5896 = vpop.f32.mrf.mxu0
  %v5897 = vadd.f32 0.0, %v5896
  %v5898 = vpop.f32.mrf.mxu0
  %5899 = vmatprep.mubr.bf16.mxu0 0
  %5900 = vmatmul.mubr.bf16.gmra.mxu0 %v5597
  %v5901 = vpop.f32.mrf.mxu0
  %v5902 = vadd.f32 0.0, %v5901
  %v5903 = vpop.f32.mrf.mxu0
  %v5904 = vpop.f32.mrf.mxu0
  %v5905 = vadd.f32 0.0, %v5904
  %v5906 = vpop.f32.mrf.mxu0
  %5907 = vmatprep.mubr.bf16.mxu0 0
  %5908 = vmatmul.mubr.bf16.gmra.mxu0 %v5600
  %v5909 = vpop.f32.mrf.mxu0
  %v5910 = vadd.f32 0.0, %v5909
  %v5911 = vpop.f32.mrf.mxu0
  %v5912 = vpop.f32.mrf.mxu0
  %v5913 = vadd.f32 0.0, %v5912
  %v5914 = vpop.f32.mrf.mxu0
  %5915 = vmatprep.mubr.bf16.mxu0 0
  %5916 = vmatmul.mubr.bf16.gmra.mxu0 %v5603
  %v5917 = vpop.f32.mrf.mxu0
  %v5918 = vadd.f32 0.0, %v5917
  %v5919 = vpop.f32.mrf.mxu0
  %v5920 = vpop.f32.mrf.mxu0
  %v5921 = vadd.f32 0.0, %v5920
  %v5922 = vpop.f32.mrf.mxu0
  %5923 = vmatprep.mubr.bf16.mxu0 0
  %5924 = vmatmul.mubr.bf16.gmra.mxu0 %v5606
  %v5925 = vpop.f32.mrf.mxu0
  %v5926 = vadd.f32 0.0, %v5925
  %v5927 = vpop.f32.mrf.mxu0
  %v5928 = vpop.f32.mrf.mxu0
  %v5929 = vadd.f32 0.0, %v5928
  %v5930 = vpop.f32.mrf.mxu0
  %5931 = vmatprep.mubr.bf16.mxu0 0
  %5932 = vmatmul.mubr.bf16.gmra.mxu0 %v5609
  %v5933 = vpop.f32.mrf.mxu0
  %v5934 = vadd.f32 0.0, %v5933
  %v5935 = vpop.f32.mrf.mxu0
  %v5936 = vpop.f32.mrf.mxu0
  %v5937 = vadd.f32 0.0, %v5936
  %v5938 = vpop.f32.mrf.mxu0
  %5939 = vmatprep.mubr.bf16.mxu0 0
  %5940 = vmatmul.mubr.bf16.gmra.mxu0 %v5612
  %v5941 = vpop.f32.mrf.mxu0
  %v5942 = vadd.f32 0.0, %v5941
  %v5943 = vpop.f32.mrf.mxu0
  %v5944 = vpop.f32.mrf.mxu0
  %v5945 = vadd.f32 0.0, %v5944
  %v5946 = vpop.f32.mrf.mxu0
  %5947 = vmatprep.mubr.bf16.mxu0 0
  %5948 = vmatmul.mubr.bf16.gmra.mxu0 %v5615
  %v5949 = vpop.f32.mrf.mxu0
  %v5950 = vadd.f32 0.0, %v5949
  %v5951 = vpop.f32.mrf.mxu0
  %v5952 = vpop.f32.mrf.mxu0
  %v5953 = vadd.f32 0.0, %v5952
  %v5954 = vpop.f32.mrf.mxu0
  %5955 = vmatprep.mubr.bf16.mxu0 0
  %5956 = vmatmul.mubr.bf16.gmra.mxu0 %v5618
  %v5957 = vpop.f32.mrf.mxu0
  %v5958 = vadd.f32 0.0, %v5957
  %v5959 = vpop.f32.mrf.mxu0
  %v5960 = vpop.f32.mrf.mxu0
  %v5961 = vadd.f32 0.0, %v5960
  %v5962 = vpop.f32.mrf.mxu0
  %5963 = vmatprep.mubr.bf16.mxu0 0
  %5964 = vmatmul.mubr.bf16.gmra.mxu0 %v5621
  %v5965 = vpop.f32.mrf.mxu0
  %v5966 = vadd.f32 0.0, %v5965
  %v5967 = vpop.f32.mrf.mxu0
  %v5968 = vpop.f32.mrf.mxu0
  %v5969 = vadd.f32 0.0, %v5968
  %v5970 = vpop.f32.mrf.mxu0
  %5971 = vmatprep.mubr.bf16.mxu0 0
  %5972 = vmatmul.mubr.bf16.gmra.mxu0 %v5624
  %v5973 = vpop.f32.mrf.mxu0
  %v5974 = vadd.f32 0.0, %v5973
  %v5975 = vpop.f32.mrf.mxu0
  %v5976 = vpop.f32.mrf.mxu0
  %v5977 = vadd.f32 0.0, %v5976
  %v5978 = vpop.f32.mrf.mxu0
  %5979 = vmatprep.mubr.bf16.mxu0 0
  %5980 = vmatmul.mubr.bf16.gmra.mxu0 %v5627
  %v5981 = vpop.f32.mrf.mxu0
  %v5982 = vadd.f32 0.0, %v5981
  %v5983 = vpop.f32.mrf.mxu0
  %v5984 = vpop.f32.mrf.mxu0
  %v5985 = vadd.f32 0.0, %v5984
  %v5986 = vpop.f32.mrf.mxu0
  %5987 = vmatprep.mubr.bf16.mxu0 0
  %5988 = vmatmul.mubr.bf16.gmra.mxu0 %v5630
  %v5989 = vpop.f32.mrf.mxu0
  %v5990 = vadd.f32 0.0, %v5989
  %v5991 = vpop.f32.mrf.mxu0
  %v5992 = vpop.f32.mrf.mxu0
  %v5993 = vpop.f32.mrf.mxu0
  %5994 = vdwg.mxu0
  %v5995 = vadd.f32 %v5304, %v5670
  %v5996 = vadd.f32 %v5305, %v5673
  %v5997 = vadd.f32 %v5306, %v5678
  %v5998 = vadd.f32 %v5307, %v5681
  %v5999 = vadd.f32 %v5308, %v5686
  %v6000 = vadd.f32 %v5309, %v5689
  %v6001 = vadd.f32 %v5310, %v5694
  %v6002 = vadd.f32 %v5311, %v5697
  %v6003 = vadd.f32 %v5312, %v5702
  %v6004 = vadd.f32 %v5313, %v5705
  %v6005 = vadd.f32 %v5314, %v5710
  %v6006 = vadd.f32 %v5315, %v5713
  %v6007 = vadd.f32 %v5316, %v5718
  %v6008 = vadd.f32 %v5317, %v5721
  %v6009 = vadd.f32 %v5318, %v5726
  %v6010 = vadd.f32 %v5319, %v5729
  %v6011 = vadd.f32 %v5320, %v5734
  %v6012 = vadd.f32 %v5321, %v5737
  %v6013 = vadd.f32 %v5322, %v5742
  %v6014 = vadd.f32 %v5323, %v5745
  %v6015 = vadd.f32 %v5324, %v5750
  %v6016 = vadd.f32 %v5325, %v5753
  %v6017 = vadd.f32 %v5326, %v5758
  %v6018 = vadd.f32 %v5327, %v5761
  %v6019 = vadd.f32 %v5328, %v5766
  %v6020 = vadd.f32 %v5329, %v5769
  %v6021 = vadd.f32 %v5330, %v5774
  %v6022 = vadd.f32 %v5331, %v5777
  %v6023 = vadd.f32 %v5332, %v5782
  %v6024 = vadd.f32 %v5333, %v5785
  %v6025 = vadd.f32 %v5334, %v5790
  %v6026 = vadd.f32 %v5335, %v5793
  %v6027 = vadd.f32 %v5336, %v5798
  %v6028 = vadd.f32 %v5337, %v5801
  %v6029 = vadd.f32 %v5338, %v5806
  %v6030 = vadd.f32 %v5339, %v5809
  %v6031 = vadd.f32 %v5340, %v5814
  %v6032 = vadd.f32 %v5341, %v5817
  %v6033 = vadd.f32 %v5342, %v5822
  %v6034 = vadd.f32 %v5343, %v5825
  %v6035 = vadd.f32 %v5344, %v5830
  %v6036 = vadd.f32 %v5345, %v5833
  %v6037 = vadd.f32 %v5346, %v5838
  %v6038 = vadd.f32 %v5347, %v5841
  %v6039 = vadd.f32 %v5348, %v5846
  %v6040 = vadd.f32 %v5349, %v5849
  %v6041 = vadd.f32 %v5350, %v5854
  %v6042 = vadd.f32 %v5351, %v5857
  %v6043 = vadd.f32 %v5352, %v5862
  %v6044 = vadd.f32 %v5353, %v5865
  %v6045 = vadd.f32 %v5354, %v5870
  %v6046 = vadd.f32 %v5355, %v5873
  %v6047 = vadd.f32 %v5356, %v5878
  %v6048 = vadd.f32 %v5357, %v5881
  %v6049 = vadd.f32 %v5358, %v5886
  %v6050 = vadd.f32 %v5359, %v5889
  %v6051 = vadd.f32 %v5360, %v5894
  %v6052 = vadd.f32 %v5361, %v5897
  %v6053 = vadd.f32 %v5362, %v5902
  %v6054 = vadd.f32 %v5363, %v5905
  %v6055 = vadd.f32 %v5364, %v5910
  %v6056 = vadd.f32 %v5365, %v5913
  %v6057 = vadd.f32 %v5366, %v5918
  %v6058 = vadd.f32 %v5367, %v5921
  %v6059 = vadd.f32 %v5368, %v5926
  %v6060 = vadd.f32 %v5369, %v5929
  %v6061 = vadd.f32 %v5370, %v5934
  %v6062 = vadd.f32 %v5371, %v5937
  %v6063 = vadd.f32 %v5372, %v5942
  %v6064 = vadd.f32 %v5373, %v5945
  %v6065 = vadd.f32 %v5374, %v5950
  %v6066 = vadd.f32 %v5375, %v5953
  %v6067 = vadd.f32 %v5376, %v5958
  %v6068 = vadd.f32 %v5377, %v5961
  %v6069 = vadd.f32 %v5378, %v5966
  %v6070 = vadd.f32 %v5379, %v5969
  %v6071 = vadd.f32 %v5380, %v5974
  %v6072 = vadd.f32 %v5381, %v5977
  %v6073 = vadd.f32 %v5382, %v5982
  %v6074 = vadd.f32 %v5383, %v5985
  %v6075 = vadd.f32 %v5384, %v5990
  %v6076 = vld [vmem:[%s2] sm:$0x1]
  %v6078 = vlaneseq
  %v6079 = vshrl.u32 %v6078, 7
  %v6080 = vsub.s32 0, %v6079
  %v6081 = vrot.slane %v6076, %v6080
  %v6083 = vadd.f32 %v5995, %v6081
  %v6084 = vadd.f32 %v5996, %v6081
  %v6085 = vadd.f32 %v5997, %v6081
  %v6086 = vadd.f32 %v5998, %v6081
  %v6087 = vadd.f32 %v5999, %v6081
  %v6088 = vadd.f32 %v6000, %v6081
  %v6089 = vadd.f32 %v6001, %v6081
  %v6090 = vadd.f32 %v6002, %v6081
  %v6091 = vadd.f32 %v6003, %v6081
  %v6092 = vadd.f32 %v6004, %v6081
  %v6093 = vadd.f32 %v6005, %v6081
  %v6094 = vadd.f32 %v6006, %v6081
  %v6095 = vadd.f32 %v6007, %v6081
  %v6096 = vadd.f32 %v6008, %v6081
  %v6097 = vadd.f32 %v6009, %v6081
  %v6098 = vadd.f32 %v6010, %v6081
  %v6099 = vadd.f32 %v6011, %v6081
  %v6100 = vadd.f32 %v6012, %v6081
  %v6101 = vadd.f32 %v6013, %v6081
  %v6102 = vadd.f32 %v6014, %v6081
  %v6103 = vadd.f32 %v6015, %v6081
  %v6104 = vadd.f32 %v6016, %v6081
  %v6105 = vadd.f32 %v6017, %v6081
  %v6106 = vadd.f32 %v6018, %v6081
  %v6107 = vadd.f32 %v6019, %v6081
  %v6108 = vadd.f32 %v6020, %v6081
  %v6109 = vadd.f32 %v6021, %v6081
  %v6110 = vadd.f32 %v6022, %v6081
  %v6111 = vadd.f32 %v6023, %v6081
  %v6112 = vadd.f32 %v6024, %v6081
  %v6113 = vadd.f32 %v6025, %v6081
  %v6114 = vadd.f32 %v6026, %v6081
  %v6115 = vadd.f32 %v6027, %v6081
  %v6116 = vadd.f32 %v6028, %v6081
  %v6117 = vadd.f32 %v6029, %v6081
  %v6118 = vadd.f32 %v6030, %v6081
  %v6119 = vadd.f32 %v6031, %v6081
  %v6120 = vadd.f32 %v6032, %v6081
  %v6121 = vadd.f32 %v6033, %v6081
  %v6122 = vadd.f32 %v6034, %v6081
  %v6123 = vadd.f32 %v6035, %v6081
  %v6124 = vadd.f32 %v6036, %v6081
  %v6125 = vadd.f32 %v6037, %v6081
  %v6126 = vadd.f32 %v6038, %v6081
  %v6127 = vadd.f32 %v6039, %v6081
  %v6128 = vadd.f32 %v6040, %v6081
  %v6129 = vadd.f32 %v6041, %v6081
  %v6130 = vadd.f32 %v6042, %v6081
  %v6131 = vadd.f32 %v6043, %v6081
  %v6132 = vadd.f32 %v6044, %v6081
  %v6133 = vadd.f32 %v6045, %v6081
  %v6134 = vadd.f32 %v6046, %v6081
  %v6135 = vadd.f32 %v6047, %v6081
  %v6136 = vadd.f32 %v6048, %v6081
  %v6137 = vadd.f32 %v6049, %v6081
  %v6138 = vadd.f32 %v6050, %v6081
  %v6139 = vadd.f32 %v6051, %v6081
  %v6140 = vadd.f32 %v6052, %v6081
  %v6141 = vadd.f32 %v6053, %v6081
  %v6142 = vadd.f32 %v6054, %v6081
  %v6143 = vadd.f32 %v6055, %v6081
  %v6144 = vadd.f32 %v6056, %v6081
  %v6145 = vadd.f32 %v6057, %v6081
  %v6146 = vadd.f32 %v6058, %v6081
  %v6147 = vadd.f32 %v6059, %v6081
  %v6148 = vadd.f32 %v6060, %v6081
  %v6149 = vadd.f32 %v6061, %v6081
  %v6150 = vadd.f32 %v6062, %v6081
  %v6151 = vadd.f32 %v6063, %v6081
  %v6152 = vadd.f32 %v6064, %v6081
  %v6153 = vadd.f32 %v6065, %v6081
  %v6154 = vadd.f32 %v6066, %v6081
  %v6155 = vadd.f32 %v6067, %v6081
  %v6156 = vadd.f32 %v6068, %v6081
  %v6157 = vadd.f32 %v6069, %v6081
  %v6158 = vadd.f32 %v6070, %v6081
  %v6159 = vadd.f32 %v6071, %v6081
  %v6160 = vadd.f32 %v6072, %v6081
  %v6161 = vadd.f32 %v6073, %v6081
  %v6162 = vadd.f32 %v6074, %v6081
  %v6163 = vadd.f32 %v6075, %v6081
  %v6164 = vmax.f32 %v6083, 0.0
  %v6165 = vmax.f32 %v6084, 0.0
  %v6166 = vmax.f32 %v6085, 0.0
  %v6167 = vmax.f32 %v6086, 0.0
  %v6168 = vmax.f32 %v6087, 0.0
  %v6169 = vmax.f32 %v6088, 0.0
  %v6170 = vmax.f32 %v6089, 0.0
  %v6171 = vmax.f32 %v6090, 0.0
  %v6172 = vmax.f32 %v6091, 0.0
  %v6173 = vmax.f32 %v6092, 0.0
  %v6174 = vmax.f32 %v6093, 0.0
  %v6175 = vmax.f32 %v6094, 0.0
  %v6176 = vmax.f32 %v6095, 0.0
  %v6177 = vmax.f32 %v6096, 0.0
  %v6178 = vmax.f32 %v6097, 0.0
  %v6179 = vmax.f32 %v6098, 0.0
  %v6180 = vmax.f32 %v6099, 0.0
  %v6181 = vmax.f32 %v6100, 0.0
  %v6182 = vmax.f32 %v6101, 0.0
  %v6183 = vmax.f32 %v6102, 0.0
  %v6184 = vmax.f32 %v6103, 0.0
  %v6185 = vmax.f32 %v6104, 0.0
  %v6186 = vmax.f32 %v6105, 0.0
  %v6187 = vmax.f32 %v6106, 0.0
  %v6188 = vmax.f32 %v6107, 0.0
  %v6189 = vmax.f32 %v6108, 0.0
  %v6190 = vmax.f32 %v6109, 0.0
  %v6191 = vmax.f32 %v6110, 0.0
  %v6192 = vmax.f32 %v6111, 0.0
  %v6193 = vmax.f32 %v6112, 0.0
  %v6194 = vmax.f32 %v6113, 0.0
  %v6195 = vmax.f32 %v6114, 0.0
  %v6196 = vmax.f32 %v6115, 0.0
  %v6197 = vmax.f32 %v6116, 0.0
  %v6198 = vmax.f32 %v6117, 0.0
  %v6199 = vmax.f32 %v6118, 0.0
  %v6200 = vmax.f32 %v6119, 0.0
  %v6201 = vmax.f32 %v6120, 0.0
  %v6202 = vmax.f32 %v6121, 0.0
  %v6203 = vmax.f32 %v6122, 0.0
  %v6204 = vmax.f32 %v6123, 0.0
  %v6205 = vmax.f32 %v6124, 0.0
  %v6206 = vmax.f32 %v6125, 0.0
  %v6207 = vmax.f32 %v6126, 0.0
  %v6208 = vmax.f32 %v6127, 0.0
  %v6209 = vmax.f32 %v6128, 0.0
  %v6210 = vmax.f32 %v6129, 0.0
  %v6211 = vmax.f32 %v6130, 0.0
  %v6212 = vmax.f32 %v6131, 0.0
  %v6213 = vmax.f32 %v6132, 0.0
  %v6214 = vmax.f32 %v6133, 0.0
  %v6215 = vmax.f32 %v6134, 0.0
  %v6216 = vmax.f32 %v6135, 0.0
  %v6217 = vmax.f32 %v6136, 0.0
  %v6218 = vmax.f32 %v6137, 0.0
  %v6219 = vmax.f32 %v6138, 0.0
  %v6220 = vmax.f32 %v6139, 0.0
  %v6221 = vmax.f32 %v6140, 0.0
  %v6222 = vmax.f32 %v6141, 0.0
  %v6223 = vmax.f32 %v6142, 0.0
  %v6224 = vmax.f32 %v6143, 0.0
  %v6225 = vmax.f32 %v6144, 0.0
  %v6226 = vmax.f32 %v6145, 0.0
  %v6227 = vmax.f32 %v6146, 0.0
  %v6228 = vmax.f32 %v6147, 0.0
  %v6229 = vmax.f32 %v6148, 0.0
  %v6230 = vmax.f32 %v6149, 0.0
  %v6231 = vmax.f32 %v6150, 0.0
  %v6232 = vmax.f32 %v6151, 0.0
  %v6233 = vmax.f32 %v6152, 0.0
  %v6234 = vmax.f32 %v6153, 0.0
  %v6235 = vmax.f32 %v6154, 0.0
  %v6236 = vmax.f32 %v6155, 0.0
  %v6237 = vmax.f32 %v6156, 0.0
  %v6238 = vmax.f32 %v6157, 0.0
  %v6239 = vmax.f32 %v6158, 0.0
  %v6240 = vmax.f32 %v6159, 0.0
  %v6241 = vmax.f32 %v6160, 0.0
  %v6242 = vmax.f32 %v6161, 0.0
  %v6243 = vmax.f32 %v6162, 0.0
  %v6244 = vmax.f32 %v6163, 0.0
  %vm6245 = vcmask 64512
  %6246 = vst.msk [vmem:[%s3] sm:$0xff] %vm6245, %v6164
  %6247 = vst.msk [vmem:[%s3 + $0x8] sm:$0xff] %vm6245, %v6165
  %6248 = vst.msk [vmem:[%s3 + $0x10] sm:$0xff] %vm6245, %v6166
  %6249 = vst.msk [vmem:[%s3 + $0x18] sm:$0xff] %vm6245, %v6167
  %6250 = vst.msk [vmem:[%s3 + $0x20] sm:$0xff] %vm6245, %v6168
  %6251 = vst.msk [vmem:[%s3 + $0x28] sm:$0xff] %vm6245, %v6169
  %6252 = vst.msk [vmem:[%s3 + $0x30] sm:$0xff] %vm6245, %v6170
  %6253 = vst.msk [vmem:[%s3 + $0x38] sm:$0xff] %vm6245, %v6171
  %6254 = vst.msk [vmem:[%s3 + $0x40] sm:$0xff] %vm6245, %v6172
  %6255 = vst.msk [vmem:[%s3 + $0x48] sm:$0xff] %vm6245, %v6173
  %6256 = vst.msk [vmem:[%s3 + $0x50] sm:$0xff] %vm6245, %v6174
  %6257 = vst.msk [vmem:[%s3 + $0x58] sm:$0xff] %vm6245, %v6175
  %6258 = vst.msk [vmem:[%s3 + $0x60] sm:$0xff] %vm6245, %v6176
  %6259 = vst.msk [vmem:[%s3 + $0x68] sm:$0xff] %vm6245, %v6177
  %6260 = vst.msk [vmem:[%s3 + $0x70] sm:$0xff] %vm6245, %v6178
  %6261 = vst.msk [vmem:[%s3 + $0x78] sm:$0xff] %vm6245, %v6179
  %6262 = vst.msk [vmem:[%s3 + $0x80] sm:$0xff] %vm6245, %v6180
  %6263 = vst.msk [vmem:[%s3 + $0x88] sm:$0xff] %vm6245, %v6181
  %6264 = vst.msk [vmem:[%s3 + $0x90] sm:$0xff] %vm6245, %v6182
  %6265 = vst.msk [vmem:[%s3 + $0x98] sm:$0xff] %vm6245, %v6183
  %6266 = vst.msk [vmem:[%s3 + $0xa0] sm:$0xff] %vm6245, %v6184
  %6267 = vst.msk [vmem:[%s3 + $0xa8] sm:$0xff] %vm6245, %v6185
  %6268 = vst.msk [vmem:[%s3 + $0xb0] sm:$0xff] %vm6245, %v6186
  %6269 = vst.msk [vmem:[%s3 + $0xb8] sm:$0xff] %vm6245, %v6187
  %6270 = vst.msk [vmem:[%s3 + $0xc0] sm:$0xff] %vm6245, %v6188
  %6271 = vst.msk [vmem:[%s3 + $0xc8] sm:$0xff] %vm6245, %v6189
  %6272 = vst.msk [vmem:[%s3 + $0xd0] sm:$0xff] %vm6245, %v6190
  %6273 = vst.msk [vmem:[%s3 + $0xd8] sm:$0xff] %vm6245, %v6191
  %6274 = vst.msk [vmem:[%s3 + $0xe0] sm:$0xff] %vm6245, %v6192
  %6275 = vst.msk [vmem:[%s3 + $0xe8] sm:$0xff] %vm6245, %v6193
  %6276 = vst.msk [vmem:[%s3 + $0xf0] sm:$0xff] %vm6245, %v6194
  %6277 = vst.msk [vmem:[%s3 + $0xf8] sm:$0xff] %vm6245, %v6195
  %6278 = vst.msk [vmem:[%s3 + $0x100] sm:$0xff] %vm6245, %v6196
  %6279 = vst.msk [vmem:[%s3 + $0x108] sm:$0xff] %vm6245, %v6197
  %6280 = vst.msk [vmem:[%s3 + $0x110] sm:$0xff] %vm6245, %v6198
  %6281 = vst.msk [vmem:[%s3 + $0x118] sm:$0xff] %vm6245, %v6199
  %6282 = vst.msk [vmem:[%s3 + $0x120] sm:$0xff] %vm6245, %v6200
  %6283 = vst.msk [vmem:[%s3 + $0x128] sm:$0xff] %vm6245, %v6201
  %6284 = vst.msk [vmem:[%s3 + $0x130] sm:$0xff] %vm6245, %v6202
  %6285 = vst.msk [vmem:[%s3 + $0x138] sm:$0xff] %vm6245, %v6203
  %6286 = vst.msk [vmem:[%s3 + $0x140] sm:$0xff] %vm6245, %v6204
  %6287 = vst.msk [vmem:[%s3 + $0x148] sm:$0xff] %vm6245, %v6205
  %6288 = vst.msk [vmem:[%s3 + $0x150] sm:$0xff] %vm6245, %v6206
  %6289 = vst.msk [vmem:[%s3 + $0x158] sm:$0xff] %vm6245, %v6207
  %6290 = vst.msk [vmem:[%s3 + $0x160] sm:$0xff] %vm6245, %v6208
  %6291 = vst.msk [vmem:[%s3 + $0x168] sm:$0xff] %vm6245, %v6209
  %6292 = vst.msk [vmem:[%s3 + $0x170] sm:$0xff] %vm6245, %v6210
  %6293 = vst.msk [vmem:[%s3 + $0x178] sm:$0xff] %vm6245, %v6211
  %6294 = vst.msk [vmem:[%s3 + $0x180] sm:$0xff] %vm6245, %v6212
  %6295 = vst.msk [vmem:[%s3 + $0x188] sm:$0xff] %vm6245, %v6213
  %6296 = vst.msk [vmem:[%s3 + $0x190] sm:$0xff] %vm6245, %v6214
  %6297 = vst.msk [vmem:[%s3 + $0x198] sm:$0xff] %vm6245, %v6215
  %6298 = vst.msk [vmem:[%s3 + $0x1a0] sm:$0xff] %vm6245, %v6216
  %6299 = vst.msk [vmem:[%s3 + $0x1a8] sm:$0xff] %vm6245, %v6217
  %6300 = vst.msk [vmem:[%s3 + $0x1b0] sm:$0xff] %vm6245, %v6218
  %6301 = vst.msk [vmem:[%s3 + $0x1b8] sm:$0xff] %vm6245, %v6219
  %6302 = vst.msk [vmem:[%s3 + $0x1c0] sm:$0xff] %vm6245, %v6220
  %6303 = vst.msk [vmem:[%s3 + $0x1c8] sm:$0xff] %vm6245, %v6221
  %6304 = vst.msk [vmem:[%s3 + $0x1d0] sm:$0xff] %vm6245, %v6222
  %6305 = vst.msk [vmem:[%s3 + $0x1d8] sm:$0xff] %vm6245, %v6223
  %6306 = vst.msk [vmem:[%s3 + $0x1e0] sm:$0xff] %vm6245, %v6224
  %6307 = vst.msk [vmem:[%s3 + $0x1e8] sm:$0xff] %vm6245, %v6225
  %6308 = vst.msk [vmem:[%s3 + $0x1f0] sm:$0xff] %vm6245, %v6226
  %6309 = vst.msk [vmem:[%s3 + $0x1f8] sm:$0xff] %vm6245, %v6227
  %6310 = vst.msk [vmem:[%s3 + $0x200] sm:$0xff] %vm6245, %v6228
  %6311 = vst.msk [vmem:[%s3 + $0x208] sm:$0xff] %vm6245, %v6229
  %6312 = vst.msk [vmem:[%s3 + $0x210] sm:$0xff] %vm6245, %v6230
  %6313 = vst.msk [vmem:[%s3 + $0x218] sm:$0xff] %vm6245, %v6231
  %6314 = vst.msk [vmem:[%s3 + $0x220] sm:$0xff] %vm6245, %v6232
  %6315 = vst.msk [vmem:[%s3 + $0x228] sm:$0xff] %vm6245, %v6233
  %6316 = vst.msk [vmem:[%s3 + $0x230] sm:$0xff] %vm6245, %v6234
  %6317 = vst.msk [vmem:[%s3 + $0x238] sm:$0xff] %vm6245, %v6235
  %6318 = vst.msk [vmem:[%s3 + $0x240] sm:$0xff] %vm6245, %v6236
  %6319 = vst.msk [vmem:[%s3 + $0x248] sm:$0xff] %vm6245, %v6237
  %6320 = vst.msk [vmem:[%s3 + $0x250] sm:$0xff] %vm6245, %v6238
  %6321 = vst.msk [vmem:[%s3 + $0x258] sm:$0xff] %vm6245, %v6239
  %6322 = vst.msk [vmem:[%s3 + $0x260] sm:$0xff] %vm6245, %v6240
  %6323 = vst.msk [vmem:[%s3 + $0x268] sm:$0xff] %vm6245, %v6241
  %6324 = vst.msk [vmem:[%s3 + $0x270] sm:$0xff] %vm6245, %v6242
  %6325 = vst.msk [vmem:[%s3 + $0x278] sm:$0xff] %vm6245, %v6243
  %6326 = vst.msk [vmem:[%s3 + $0x280] sm:$0xff] %vm6245, %v6244
  // Predicated region
  $region14: #{vqa_forward.3} parent=0 // pred_check
    _
  $region15: #{vqa_forward.3} parent=0 // pred_check_branch
    %6328 = sbr.rel (0) target = $region17
  $region16: #{vqa_forward.3} parent=0 // pred_region
    _
  $region17: #{vqa_forward.3} parent=0 // pred_fallthru
    _
  // Predicated region
  $region18: #{vqa_forward.3} parent=0 // pred_check
    _
  $region19: #{vqa_forward.3} parent=0 // pred_check_branch
    %6330 = sbr.rel (0) target = $region21
  $region20: #{vqa_forward.3} parent=0 // pred_region
    _
  $region21: #{vqa_forward.3} parent=0 // pred_fallthru
    _

</llo_original>
